<compile_context>
chip_gen: v7x
topology: tpu7x:2x2x1
jax: 0.10.0
libtpu: 0.0.40
codegen_flags: <defaults>
</compile_context>

<pallas_src>
import functools

import numpy as np
import jax
import jax.numpy as jnp
from jax import lax
from jax.experimental import pallas as pl
from jax.experimental.pallas import tpu as pltpu

# bf16 matmul operands (f32 accumulation): MXU-native on v6e/v7x, fine on v5e.
MATMUL_DTYPE = jnp.bfloat16


# --------------------- host-side weight / layout preparation ----------------

def _band_conv_weight(w, wdim):
    """(3,3,cin,cout) conv kernel -> (3, wdim*cin, wdim*cout) banded matrices.

    For vertical tap dh, entry [j*cin+ci, w*cout+co] holds w[dh, j-w+1, ci, co]
    (zero outside the 3-tap band), so a row-shifted activation (rows, wdim*cin)
    matmul'd with it gives that tap's full contribution to a 3x3 conv, padding=1
    (horizontal zero padding is implicit in the band edges).
    """
    kh, kw, cin, cout = w.shape
    ind = np.zeros((kw, wdim, wdim), np.float32)
    for dw in range(kw):
        for wp in range(wdim):
            src = wp + dw - 1
            if 0 <= src < wdim:
                ind[dw, src, wp] = 1.0
    wb = jnp.einsum("hdio,djw->hjiwo", w, jnp.asarray(ind))
    return wb.reshape(kh, wdim * cin, wdim * cout)


def _pool_row_mats(h, ho):
    """(3, ho, h): selects input row clip(2*ho-1+dh); clipping == -inf maxpool pad."""
    m = np.zeros((3, ho, h), np.float32)
    for dh in range(3):
        for o in range(ho):
            m[dh, o, min(max(2 * o - 1 + dh, 0), h - 1)] = 1.0
    return jnp.asarray(m)


def _pool_col_mats(w, wo, c):
    """(3, w*c, wo*c): selects input column-block clip(2*wo-1+dw) channel-wise."""
    m = np.zeros((3, w * c, wo * c), np.float32)
    eye = np.eye(c, dtype=np.float32)
    for dw in range(3):
        for o in range(wo):
            src = min(max(2 * o - 1 + dw, 0), w - 1)
            m[dw, src * c:(src + 1) * c, o * c:(o + 1) * c] = eye
    return jnp.asarray(m)


def _vq_fold(pw, pb, emb, num_discrete_latents):
    """Fold policy head + codebooks so VQ needs only per-(codebook,latent) matmuls.

    For r=(n,l):  dist_r = hid @ wd[r] + bd[r]  ==  ||e_n||^2 - 2 x_{n,l}.e_n
    (the +||x||^2 row constant is dropped -> argmin-equivalent), and
    one_hot @ qscat[r] scatters the chosen embedding row straight into la_q's
    original (n, d, l)-ordered columns.
    """
    pw_np = np.asarray(pw, np.float32)        # (F, A)
    pb_np = np.asarray(pb, np.float32)        # (A,)
    emb_np = np.asarray(emb, np.float32)      # (N, M, D)
    N, M, D = emb_np.shape
    L = num_discrete_latents
    F_, A = pw_np.shape
    NL = N * L
    wd = np.zeros((NL, F_, M), np.float32)
    bd = np.zeros((NL, M), np.float32)
    qs = np.zeros((NL, M, A), np.float32)
    for n in range(N):
        e = emb_np[n]                         # (M, D)
        e2 = np.sum(e * e, axis=1)            # (M,)
        for l in range(L):
            r = n * L + l
            cols = [n * D * L + d * L + l for d in range(D)]
            pwv = pw_np[:, cols]              # (F, D)
            pbv = pb_np[cols]                 # (D,)
            wd[r] = pwv @ (-2.0 * e.T)
            bd[r] = pbv @ (-2.0 * e.T) + e2
            for d in range(D):
                qs[r, :, cols[d]] = e[:, d]
    return (jnp.asarray(wd).astype(MATMUL_DTYPE), jnp.asarray(bd), jnp.asarray(qs))


def prepare_params(params, obs_channels, impala_scale, impala_channels, H, W, vq_cfg):
    """One-time layout transform of the raw params for the fused kernel."""
    prep = {"seqs": []}
    cin, h, w = obs_channels, H, W
    for seq_p, oc in zip(params["seqs"], impala_channels):
        cout = impala_scale * oc
        ho, wo = (h + 1) // 2, (w + 1) // 2
        cw_raw, cb_raw = seq_p["conv"]
        cw = _band_conv_weight(cw_raw, w)                        # (3, w*cin, w*cout)
        entry = {
            "cw": cw.reshape(3 * w * cin, w * cout).astype(MATMUL_DTYPE),
            "cb": jnp.tile(cb_raw, w)[None, :],                  # (1, w*cout) f32
            "prow": _pool_row_mats(h, ho).astype(MATMUL_DTYPE),  # (3, ho, h)
            "pcol": _pool_col_mats(w, wo, cout).astype(MATMUL_DTYPE),
        }
        rws, rbs = [], []
        for rkey in ("res0", "res1"):
            for (wr, br) in seq_p[rkey]:
                wb = _band_conv_weight(wr, wo)                   # (3, wo*cout, wo*cout)
                rws.append(wb.reshape(3 * wo * cout, wo * cout))
                rbs.append(jnp.tile(br, wo))
        entry["rw"] = jnp.stack(rws).astype(MATMUL_DTYPE)        # (4, 3*woC, woC)
        entry["rb"] = jnp.stack(rbs)                             # (4, woC) f32
        prep["seqs"].append(entry)
        cin, h, w = cout, ho, wo

    fw, fb = params["fc"]
    feats = fw.shape[1]
    # fc weights are synthetic -> reshape to (rows, row_width, F) matching the
    # (h, w*c) flatten order used by the kernel.
    prep["fcw"] = fw.reshape(h, w * cin, feats).astype(MATMUL_DTYPE)
    prep["fcb"] = fb[None, :]
    pw, pb = params["policy"]
    prep["pw"] = pw.astype(MATMUL_DTYPE)
    prep["pb"] = pb[None, :]

    wd, bd, qscat = _vq_fold(pw, pb, params["embedding"],
                             vq_cfg["num_discrete_latents"])
    prep["wd"], prep["bd"], prep["qscat"] = wd, bd, qscat
    return prep


# ------------------------------ the fused kernel -----------------------------

def _idm_kernel(*refs, n_seq, seq_meta, head_meta, vq_meta):
    """Whole IDM forward for one batch element (grid=(B,), batch axis parallel).

    refs layout (all static, see idm_fused):
      [0]                      x                       (1, H0, W0*Cin0) f32
      [1+6s .. 6+6s]           per seq: cw, cb, rw, rb, prow, pcol
      [1+6*n_seq .. +6]        fcw, fcb, pw, pb, wd, bd, qscat
      next 5                   outputs: la, la_q, qidx, sq_partial, counts
      next n_seq+2             scratch: im[0..n_seq], hrow
    """
    f32 = jnp.float32
    base = 1 + 6 * n_seq
    x_ref = refs[0]
    seq_refs = [refs[1 + 6 * s: 1 + 6 * (s + 1)] for s in range(n_seq)]
    fcw_ref, fcb_ref, pw_ref, pb_ref, wd_ref, bd_ref, qs_ref = refs[base: base + 7]
    la_ref, laq_ref, qix_ref, sqp_ref, cnt_ref = refs[base + 7: base + 12]
    im_refs = refs[base + 12: base + 13 + n_seq]
    hrow_ref = refs[base + 13 + n_seq]

    def conv3x3(act, im_ref, w, bias, hh, wc):
        """3x3 'same' conv on a (hh, wc=W*Cin) activation -> (hh, W*Cout).

        The three vertical taps are materialized as row-offset copies of `act`
        in the three lane-blocks of the scratch ((hh+2, 3*wc)); the read window
        rows [1, hh] then holds [act[r-1] | act[r] | act[r+1]] per row, so the
        whole conv is ONE lane-dense bf16 matmul with the K-stacked banded weight.
        """
        im_ref[pl.ds(2, hh), pl.ds(0, wc)] = act              # tap dh=0 -> act[r-1]
        im_ref[pl.ds(1, hh), pl.ds(wc, wc)] = act             # tap dh=1 -> act[r]
        im_ref[pl.ds(0, hh), pl.ds(2 * wc, wc)] = act         # tap dh=2 -> act[r+1]
        zrow = jnp.zeros((1, wc), f32)
        im_ref[pl.ds(1, 1), pl.ds(0, wc)] = zrow              # top zero padding row
        im_ref[pl.ds(hh, 1), pl.ds(2 * wc, wc)] = zrow        # bottom zero padding row
        xw = im_ref[pl.ds(1, hh), :].astype(MATMUL_DTYPE)     # (hh, 3*wc)
        return jnp.dot(xw, w, preferred_element_type=f32) + bias

    def maxpool(y, prow_ref, pcol_ref):
        """max_pool2d(kernel=3, stride=2, pad=1) via exact 0/1 bf16 selection matmuls."""
        yb = y.astype(MATMUL_DTYPE)
        colm = jnp.dot(yb, pcol_ref[0], preferred_element_type=f32)
        for dw in (1, 2):
            colm = jnp.maximum(colm, jnp.dot(yb, pcol_ref[dw],
                                             preferred_element_type=f32))
        cm = colm.astype(MATMUL_DTYPE)
        p = jnp.dot(prow_ref[0], cm, preferred_element_type=f32)
        for dh in (1, 2):
            p = jnp.maximum(p, jnp.dot(prow_ref[dh], cm, preferred_element_type=f32))
        return p

    # ---- Impala conv stack ---------------------------------------------------
    act = x_ref[0]                                            # (H0, W0*Cin0) f32
    for s in range(n_seq):
        cw_ref, cb_ref, rw_ref, rb_ref, prow_ref, pcol_ref = seq_refs[s]
        hh, wcin, ho, woc = seq_meta[s]
        y = conv3x3(act, im_refs[s], cw_ref[...], cb_ref[...], hh, wcin)
        p = maxpool(y, prow_ref, pcol_ref)
        for blk in range(2):                                  # 2 ImpalaResidualBlocks
            t = jnp.maximum(p, 0.0)
            t = conv3x3(t, im_refs[s + 1], rw_ref[2 * blk],
                        rb_ref[pl.ds(2 * blk, 1), :], ho, woc)
            t = jnp.maximum(t, 0.0)
            t = conv3x3(t, im_refs[s + 1], rw_ref[2 * blk + 1],
                        rb_ref[pl.ds(2 * blk + 1, 1), :], ho, woc)
            p = p + t
        act = p

    # ---- Flatten -> ReLU -> fc -> ReLU -> policy head --------------------------
    rows, wcl, _ = head_meta
    hrow_ref[...] = jnp.maximum(act, 0.0)                     # nn.ReLU after Flatten
    hid = fcb_ref[...]                                        # (1, F)
    for r in range(rows):                                     # direct row reads, no one-hot
        row = hrow_ref[pl.ds(r, 1), :].astype(MATMUL_DTYPE)
        hid = hid + jnp.dot(row, fcw_ref[r], preferred_element_type=f32)
    hid = jnp.maximum(hid, 0.0)                               # F.relu(fc(.))
    hb = hid.astype(MATMUL_DTYPE)
    la = jnp.dot(hb, pw_ref[...], preferred_element_type=f32) + pb_ref[...]
    la_ref[0] = la

    # ---- VQEmbeddingEMA (eval mode), this batch element ------------------------
    n_cb, m_emb, d_emb, n_lat = vq_meta
    a_dim = n_cb * d_emb * n_lat
    nl = n_cb * n_lat
    lane_m = lax.broadcasted_iota(jnp.int32, (1, m_emb), 1)
    lane_nm = lax.broadcasted_iota(jnp.int32, (1, n_cb * m_emb), 1)
    lane_nl = lax.broadcasted_iota(jnp.int32, (1, nl), 1)
    laq = jnp.zeros((1, a_dim), f32)
    cnt = jnp.zeros((1, n_cb * m_emb), f32)
    qix = jnp.zeros((1, nl), jnp.int32)
    for n in range(n_cb):
        for l in range(n_lat):
            r = n * n_lat + l
            # ||e||^2 - 2 x.e  (policy head folded into wd/bd; +||x||^2 is
            # row-constant and dropped -> argmin-equivalent).
            dist = (jnp.dot(hb, wd_ref[r], preferred_element_type=f32)
                    + bd_ref[pl.ds(r, 1), :])                 # (1, M)
            minv = jnp.min(dist, axis=-1, keepdims=True)
            idx = jnp.min(jnp.where(dist == minv, lane_m, m_emb),
                          axis=-1, keepdims=True)             # (1,1) first argmin
            oh = (lane_m == idx).astype(f32)                  # one-hot (1, M)
            laq = laq + jnp.dot(oh, qs_ref[r], preferred_element_type=f32)
            cnt = cnt + (lane_nm == (idx + n * m_emb)).astype(f32)
            qix = jnp.where(lane_nl == r, idx, qix)
    laq_ref[0] = laq                                          # straight-through value == q
    qix_ref[0] = qix
    cnt_ref[0] = cnt
    diff = la - laq
    sqp_ref[0] = jnp.sum(diff * diff, axis=-1, keepdims=True)


def idm_fused(x2d, prep, vq_cfg):
    """Single pallas_call running the whole IDM forward; grid=(B,) batch-parallel."""
    B, H0, WC0 = x2d.shape
    seqs = prep["seqs"]
    n_seq = len(seqs)
    seq_meta = []
    for e in seqs:
        hh = e["prow"].shape[2]
        ho = e["prow"].shape[1]
        wcin = e["cw"].shape[0] // 3
        woc = e["pcol"].shape[2]
        seq_meta.append((hh, wcin, ho, woc))
    rows, wcl, feats = prep["fcw"].shape
    A = prep["pw"].shape[1]
    N, M = vq_cfg["num_codebooks"], vq_cfg["num_embs"]
    D, L = vq_cfg["emb_dim"], vq_cfg["num_discrete_latents"]
    NL = N * L

    inputs = [x2d]
    in_specs = [pl.BlockSpec((1, H0, WC0), lambda b: (b, 0, 0))]

    def add_const(a):
        inputs.append(a)
        in_specs.append(pl.BlockSpec(a.shape, lambda b, _n=a.ndim: (0,) * _n))

    for e in seqs:
        for k in ("cw", "cb", "rw", "rb", "prow", "pcol"):
            add_const(e[k])
    for k in ("fcw", "fcb", "pw", "pb", "wd", "bd", "qscat"):
        add_const(prep[k])

    out_shape = (
        jax.ShapeDtypeStruct((B, 1, A), jnp.float32),        # la
        jax.ShapeDtypeStruct((B, 1, A), jnp.float32),        # la_q
        jax.ShapeDtypeStruct((B, 1, NL), jnp.int32),         # quantization indices
        jax.ShapeDtypeStruct((B, 1, 1), jnp.float32),        # per-batch sum((x-q)^2)
        jax.ShapeDtypeStruct((B, 1, N * M), jnp.float32),    # per-batch one-hot counts
    )

    def out_spec(last):
        return pl.BlockSpec((1, 1, last), lambda b: (b, 0, 0))

    out_specs = (out_spec(A), out_spec(A), out_spec(NL), out_spec(1), out_spec(N * M))

    # im-scratch levels: one at the input resolution of the first conv, then one per
    # pooled resolution (reused by that sequence's residual convs and the next
    # sequence's first conv).  All f32, a few KB each.
    scratch = [pltpu.VMEM((seq_meta[0][0] + 2, 3 * seq_meta[0][1]), jnp.float32)]
    for (hh, wcin, ho, woc) in seq_meta:
        scratch.append(pltpu.VMEM((ho + 2, 3 * woc), jnp.float32))
    scratch.append(pltpu.VMEM((rows, wcl), jnp.float32))     # head row scratch

    kernel = functools.partial(
        _idm_kernel, n_seq=n_seq, seq_meta=tuple(seq_meta),
        head_meta=(rows, wcl, feats), vq_meta=(N, M, D, L))

    return pl.pallas_call(
        kernel,
        out_shape=out_shape,
        grid=(B,),
        in_specs=in_specs,
        out_specs=out_specs,
        scratch_shapes=scratch,
        compiler_params=pltpu.CompilerParams(dimension_semantics=("parallel",)),
    )(*inputs)


# ------------------------------- IDM model ----------------------------------

def init_params(key, obs_channels, impala_scale, impala_channels,
                impala_features, action_dim, H, W, vq_cfg):
    keys = iter(jax.random.split(key, 64))

    def conv_param(cin, cout):
        scale = (2.0 / (9 * cin)) ** 0.5
        return (jax.random.normal(next(keys), (3, 3, cin, cout), jnp.float32) * scale,
                jnp.zeros((cout,), jnp.float32))

    params = {"seqs": []}
    cin, h, w = obs_channels, H, W
    for oc in impala_channels:
        cout = impala_scale * oc
        params["seqs"].append({
            "conv": conv_param(cin, cout),
            "res0": (conv_param(cout, cout), conv_param(cout, cout)),
            "res1": (conv_param(cout, cout), conv_param(cout, cout)),
        })
        cin, h, w = cout, (h + 1) // 2, (w + 1) // 2

    flat = cin * h * w
    params["fc"] = (jax.random.normal(next(keys), (flat, impala_features), jnp.float32)
                    * (2.0 / flat) ** 0.5,
                    jnp.zeros((impala_features,), jnp.float32))
    params["policy"] = (jax.random.normal(next(keys), (impala_features, action_dim),
                                          jnp.float32) * (1.0 / impala_features) ** 0.5,
                        jnp.zeros((action_dim,), jnp.float32))
    N, M, D = vq_cfg["num_codebooks"], vq_cfg["num_embs"], vq_cfg["emb_dim"]
    params["embedding"] = jax.random.uniform(next(keys), (N, M, D), jnp.float32,
                                             minval=-5.0 / M, maxval=5.0 / M)
    return params


def idm_forward(prep, x, vq_cfg):
    """x: (B, T, C, H, W) float32 (PyTorch NCHW-over-time convention)."""
    B, T, C, H, W = x.shape
    # merge_TC_dims, then NCHW -> (B, H, W*C) channel-within-column-block layout.
    x2d = x.reshape(B, T * C, H, W).transpose(0, 2, 3, 1).reshape(B, H, W * T * C)

    la3, laq3, qix3, sqp3, cnt3 = idm_fused(x2d, prep, vq_cfg)
    la, la_q = la3[:, 0, :], laq3[:, 0, :]

    N, M = vq_cfg["num_codebooks"], vq_cfg["num_embs"]
    D, L = vq_cfg["emb_dim"], vq_cfg["num_discrete_latents"]
    A = N * D * L
    # commitment_cost * mse(x, quantized): mean over B*N*L*D elements.
    vq_loss = vq_cfg["commitment_cost"] * jnp.sum(sqp3) / (B * A)
    # perplexity per codebook, summed over codebooks (matches reference .sum()).
    avg = jnp.sum(cnt3[:, 0, :], axis=0).reshape(N, M) / (B * L)
    vq_perp = jnp.sum(jnp.exp(-jnp.sum(avg * jnp.log(avg + 1e-10), axis=-1)))
    la_qinds = qix3[:, 0, :].reshape(B, N, L)[..., None]

    # TODO(synk): training-mode EMA codebook updates (ema_count / ema_weight /
    #             embedding rewrite) and the straight-through gradient are stateful /
    #             autodiff concerns; eval-mode forward only.
    action_dict = {"la": la, "la_q": la_q, "la_qinds": la_qinds}
    return action_dict, vq_loss, vq_perp


# --------------------------------- main --------------------------------------

if __name__ == "__main__":
    B, T, C, H, W = 2, 2, 2, 16, 16          # obs_shape passed to impala = (T*C, H, W)
    impala_scale = 1
    impala_channels = (16, 32, 32)
    impala_features = 64
    vq_cfg = dict(num_codebooks=2, num_embs=8, emb_dim=4,
                  num_discrete_latents=2, commitment_cost=0.25)
    action_dim = (vq_cfg["num_codebooks"] * vq_cfg["emb_dim"]
                  * vq_cfg["num_discrete_latents"])

    key = jax.random.PRNGKey(0)
    kp, kx = jax.random.split(key)
    params = init_params(kp, T * C, impala_scale, impala_channels,
                         impala_features, action_dim, H, W, vq_cfg)
    prep = prepare_params(params, T * C, impala_scale, impala_channels, H, W, vq_cfg)
    x = jax.random.normal(kx, (B, T, C, H, W), jnp.float32)

    fwd = jax.jit(functools.partial(idm_forward, vq_cfg=vq_cfg))
    action_dict, vq_loss, vq_perp = fwd(prep, x)
    jax.block_until_ready((action_dict, vq_loss, vq_perp))

    assert action_dict["la"].shape == (B, action_dim)
    assert action_dict["la_q"].shape == (B, action_dim)
    assert action_dict["la_qinds"].shape == (B, vq_cfg["num_codebooks"],
                                             vq_cfg["num_discrete_latents"], 1)
    assert vq_loss.shape == () and vq_perp.shape == ()
    print("KERNEL_OK")
</pallas_src>

<mosaic_0001>
module attributes {stable_mosaic.version = 11 : i64} {
  func.func @_idm_kernel(%arg0: i32, %arg1: memref<1x16x64xf32, #tpu.memory_space<vmem>>, %arg2: memref<192x256xbf16, #tpu.memory_space<vmem>>, %arg3: memref<1x256xf32, #tpu.memory_space<vmem>>, %arg4: memref<4x384x128xbf16, #tpu.memory_space<vmem>>, %arg5: memref<4x128xf32, #tpu.memory_space<vmem>>, %arg6: memref<3x8x16xbf16, #tpu.memory_space<vmem>>, %arg7: memref<3x256x128xbf16, #tpu.memory_space<vmem>>, %arg8: memref<384x256xbf16, #tpu.memory_space<vmem>>, %arg9: memref<1x256xf32, #tpu.memory_space<vmem>>, %arg10: memref<4x384x128xbf16, #tpu.memory_space<vmem>>, %arg11: memref<4x128xf32, #tpu.memory_space<vmem>>, %arg12: memref<3x4x8xbf16, #tpu.memory_space<vmem>>, %arg13: memref<3x256x128xbf16, #tpu.memory_space<vmem>>, %arg14: memref<384x128xbf16, #tpu.memory_space<vmem>>, %arg15: memref<1x128xf32, #tpu.memory_space<vmem>>, %arg16: memref<4x192x64xbf16, #tpu.memory_space<vmem>>, %arg17: memref<4x64xf32, #tpu.memory_space<vmem>>, %arg18: memref<3x2x4xbf16, #tpu.memory_space<vmem>>, %arg19: memref<3x128x64xbf16, #tpu.memory_space<vmem>>, %arg20: memref<2x64x64xbf16, #tpu.memory_space<vmem>>, %arg21: memref<1x64xf32, #tpu.memory_space<vmem>>, %arg22: memref<64x16xbf16, #tpu.memory_space<vmem>>, %arg23: memref<1x16xf32, #tpu.memory_space<vmem>>, %arg24: memref<4x64x8xbf16, #tpu.memory_space<vmem>>, %arg25: memref<4x8xf32, #tpu.memory_space<vmem>>, %arg26: memref<4x8x16xf32, #tpu.memory_space<vmem>>, %arg27: memref<1x1x16xf32, #tpu.memory_space<vmem>>, %arg28: memref<1x1x16xf32, #tpu.memory_space<vmem>>, %arg29: memref<1x1x4xi32, #tpu.memory_space<vmem>>, %arg30: memref<1x1x1xf32, #tpu.memory_space<vmem>>, %arg31: memref<1x1x16xf32, #tpu.memory_space<vmem>>, %arg32: memref<18x192xf32, #tpu.memory_space<vmem>>, %arg33: memref<10x384xf32, #tpu.memory_space<vmem>>, %arg34: memref<6x384xf32, #tpu.memory_space<vmem>>, %arg35: memref<4x192xf32, #tpu.memory_space<vmem>>, %arg36: memref<2x64xf32, #tpu.memory_space<vmem>>) attributes {dimension_semantics = [#tpu.dimension_semantics<parallel>], iteration_bounds = array<i64: 2>, scalar_prefetch = 0 : i64, scratch_operands = 5 : i64, tpu.core_type = #tpu.core_type<tc>, window_params = [{transform_indices = @transform_0, window_bounds = array<i64: 1, 16, 64>}, {pipeline_mode = #tpu.pipeline_mode<synchronous>, transform_indices = @transform_1, window_bounds = array<i64: 192, 256>}, {pipeline_mode = #tpu.pipeline_mode<synchronous>, transform_indices = @transform_2, window_bounds = array<i64: 1, 256>}, {pipeline_mode = #tpu.pipeline_mode<synchronous>, transform_indices = @transform_3, window_bounds = array<i64: 4, 384, 128>}, {pipeline_mode = #tpu.pipeline_mode<synchronous>, transform_indices = @transform_4, window_bounds = array<i64: 4, 128>}, {pipeline_mode = #tpu.pipeline_mode<synchronous>, transform_indices = @transform_5, window_bounds = array<i64: 3, 8, 16>}, {pipeline_mode = #tpu.pipeline_mode<synchronous>, transform_indices = @transform_6, window_bounds = array<i64: 3, 256, 128>}, {pipeline_mode = #tpu.pipeline_mode<synchronous>, transform_indices = @transform_7, window_bounds = array<i64: 384, 256>}, {pipeline_mode = #tpu.pipeline_mode<synchronous>, transform_indices = @transform_8, window_bounds = array<i64: 1, 256>}, {pipeline_mode = #tpu.pipeline_mode<synchronous>, transform_indices = @transform_9, window_bounds = array<i64: 4, 384, 128>}, {pipeline_mode = #tpu.pipeline_mode<synchronous>, transform_indices = @transform_10, window_bounds = array<i64: 4, 128>}, {pipeline_mode = #tpu.pipeline_mode<synchronous>, transform_indices = @transform_11, window_bounds = array<i64: 3, 4, 8>}, {pipeline_mode = #tpu.pipeline_mode<synchronous>, transform_indices = @transform_12, window_bounds = array<i64: 3, 256, 128>}, {pipeline_mode = #tpu.pipeline_mode<synchronous>, transform_indices = @transform_13, window_bounds = array<i64: 384, 128>}, {pipeline_mode = #tpu.pipeline_mode<synchronous>, transform_indices = @transform_14, window_bounds = array<i64: 1, 128>}, {pipeline_mode = #tpu.pipeline_mode<synchronous>, transform_indices = @transform_15, window_bounds = array<i64: 4, 192, 64>}, {pipeline_mode = #tpu.pipeline_mode<synchronous>, transform_indices = @transform_16, window_bounds = array<i64: 4, 64>}, {pipeline_mode = #tpu.pipeline_mode<synchronous>, transform_indices = @transform_17, window_bounds = array<i64: 3, 2, 4>}, {pipeline_mode = #tpu.pipeline_mode<synchronous>, transform_indices = @transform_18, window_bounds = array<i64: 3, 128, 64>}, {pipeline_mode = #tpu.pipeline_mode<synchronous>, transform_indices = @transform_19, window_bounds = array<i64: 2, 64, 64>}, {pipeline_mode = #tpu.pipeline_mode<synchronous>, transform_indices = @transform_20, window_bounds = array<i64: 1, 64>}, {pipeline_mode = #tpu.pipeline_mode<synchronous>, transform_indices = @transform_21, window_bounds = array<i64: 64, 16>}, {pipeline_mode = #tpu.pipeline_mode<synchronous>, transform_indices = @transform_22, window_bounds = array<i64: 1, 16>}, {pipeline_mode = #tpu.pipeline_mode<synchronous>, transform_indices = @transform_23, window_bounds = array<i64: 4, 64, 8>}, {pipeline_mode = #tpu.pipeline_mode<synchronous>, transform_indices = @transform_24, window_bounds = array<i64: 4, 8>}, {pipeline_mode = #tpu.pipeline_mode<synchronous>, transform_indices = @transform_25, window_bounds = array<i64: 4, 8, 16>}, {transform_indices = @transform_26, window_bounds = array<i64: 1, 1, 16>}, {transform_indices = @transform_27, window_bounds = array<i64: 1, 1, 16>}, {transform_indices = @transform_28, window_bounds = array<i64: 1, 1, 4>}, {transform_indices = @transform_29, window_bounds = array<i64: 1, 1, 1>}, {transform_indices = @transform_30, window_bounds = array<i64: 1, 1, 16>}]} {
    %c0 = arith.constant 0 : index
    %c0_0 = arith.constant 0 : index
    %c0_1 = arith.constant 0 : index
    %0 = vector.load %arg1[%c0, %c0_0, %c0_1] : memref<1x16x64xf32, #tpu.memory_space<vmem>>, vector<1x16x64xf32>
    %1 = vector.shape_cast %0 : vector<1x16x64xf32> to vector<16x64xf32>
    %c0_2 = arith.constant 0 : index
    %c0_3 = arith.constant 0 : index
    %2 = vector.load %arg2[%c0_2, %c0_3] : memref<192x256xbf16, #tpu.memory_space<vmem>>, vector<192x256xbf16>
    %c0_4 = arith.constant 0 : index
    %c0_5 = arith.constant 0 : index
    %3 = vector.load %arg3[%c0_4, %c0_5] : memref<1x256xf32, #tpu.memory_space<vmem>>, vector<1x256xf32>
    %c2 = arith.constant 2 : index
    %c0_6 = arith.constant 0 : index
    %4 = vector.load %arg32[%c2, %c0_6] : memref<18x192xf32, #tpu.memory_space<vmem>>, vector<16x64xf32>
    tpu.vector_store %arg32[%c2, %c0_6], %1 {strides = array<i32>} : memref<18x192xf32, #tpu.memory_space<vmem>>, vector<16x64xf32>,
    %c1 = arith.constant 1 : index
    %c64 = arith.constant 64 : index
    %5 = vector.load %arg32[%c1, %c64] : memref<18x192xf32, #tpu.memory_space<vmem>>, vector<16x64xf32>
    tpu.vector_store %arg32[%c1, %c64], %1 {strides = array<i32>} : memref<18x192xf32, #tpu.memory_space<vmem>>, vector<16x64xf32>,
    %c0_7 = arith.constant 0 : index
    %c128 = arith.constant 128 : index
    %6 = vector.load %arg32[%c0_7, %c128] : memref<18x192xf32, #tpu.memory_space<vmem>>, vector<16x64xf32>
    tpu.vector_store %arg32[%c0_7, %c128], %1 {strides = array<i32>} : memref<18x192xf32, #tpu.memory_space<vmem>>, vector<16x64xf32>,
    %cst = arith.constant 0.000000e+00 : f32
    %7 = vector.broadcast %cst : f32 to vector<1x64xf32>
    %c1_8 = arith.constant 1 : index
    %c0_9 = arith.constant 0 : index
    %8 = vector.load %arg32[%c1_8, %c0_9] : memref<18x192xf32, #tpu.memory_space<vmem>>, vector<1x64xf32>
    tpu.vector_store %arg32[%c1_8, %c0_9], %7 {strides = array<i32>} : memref<18x192xf32, #tpu.memory_space<vmem>>, vector<1x64xf32>,
    %c16 = arith.constant 16 : index
    %c128_10 = arith.constant 128 : index
    %9 = vector.load %arg32[%c16, %c128_10] : memref<18x192xf32, #tpu.memory_space<vmem>>, vector<1x64xf32>
    tpu.vector_store %arg32[%c16, %c128_10], %7 {strides = array<i32>} : memref<18x192xf32, #tpu.memory_space<vmem>>, vector<1x64xf32>,
    %c1_11 = arith.constant 1 : index
    %c0_12 = arith.constant 0 : index
    %10 = vector.load %arg32[%c1_11, %c0_12] : memref<18x192xf32, #tpu.memory_space<vmem>>, vector<16x192xf32>
    %11 = arith.truncf %10 : vector<16x192xf32> to vector<16x192xbf16>
    %cst_13 = arith.constant dense<0.000000e+00> : vector<16x256xf32>
    %12 = tpu.matmul %11, %2, %cst_13 {dimension_numbers = #tpu.dot_dimension_numbers<[1], [0], [0], [1], [0, 0, 1, 1], [], []>} : vector<16x192xbf16>, vector<192x256xbf16>, vector<16x256xf32> -> vector<16x256xf32>
    %13 = vector.broadcast %3 : vector<1x256xf32> to vector<16x256xf32>
    %14 = arith.addf %12, %13 : vector<16x256xf32>
    %15 = arith.truncf %14 : vector<16x256xf32> to vector<16x256xbf16>
    %c0_14 = arith.constant 0 : index
    %c0_15 = arith.constant 0 : index
    %c0_16 = arith.constant 0 : index
    %16 = vector.load %arg7[%c0_14, %c0_15, %c0_16] : memref<3x256x128xbf16, #tpu.memory_space<vmem>>, vector<1x256x128xbf16>
    %17 = vector.shape_cast %16 : vector<1x256x128xbf16> to vector<256x128xbf16>
    %cst_17 = arith.constant dense<0.000000e+00> : vector<16x128xf32>
    %18 = tpu.matmul %15, %17, %cst_17 {dimension_numbers = #tpu.dot_dimension_numbers<[1], [0], [0], [1], [0, 0, 1, 1], [], []>} : vector<16x256xbf16>, vector<256x128xbf16>, vector<16x128xf32> -> vector<16x128xf32>
    %c1_18 = arith.constant 1 : index
    %c0_19 = arith.constant 0 : index
    %c0_20 = arith.constant 0 : index
    %19 = vector.load %arg7[%c1_18, %c0_19, %c0_20] : memref<3x256x128xbf16, #tpu.memory_space<vmem>>, vector<1x256x128xbf16>
    %20 = vector.shape_cast %19 : vector<1x256x128xbf16> to vector<256x128xbf16>
    %cst_21 = arith.constant dense<0.000000e+00> : vector<16x128xf32>
    %21 = tpu.matmul %15, %20, %cst_21 {dimension_numbers = #tpu.dot_dimension_numbers<[1], [0], [0], [1], [0, 0, 1, 1], [], []>} : vector<16x256xbf16>, vector<256x128xbf16>, vector<16x128xf32> -> vector<16x128xf32>
    %22 = arith.maximumf %18, %21 : vector<16x128xf32>
    %c2_22 = arith.constant 2 : index
    %c0_23 = arith.constant 0 : index
    %c0_24 = arith.constant 0 : index
    %23 = vector.load %arg7[%c2_22, %c0_23, %c0_24] : memref<3x256x128xbf16, #tpu.memory_space<vmem>>, vector<1x256x128xbf16>
    %24 = vector.shape_cast %23 : vector<1x256x128xbf16> to vector<256x128xbf16>
    %cst_25 = arith.constant dense<0.000000e+00> : vector<16x128xf32>
    %25 = tpu.matmul %15, %24, %cst_25 {dimension_numbers = #tpu.dot_dimension_numbers<[1], [0], [0], [1], [0, 0, 1, 1], [], []>} : vector<16x256xbf16>, vector<256x128xbf16>, vector<16x128xf32> -> vector<16x128xf32>
    %26 = arith.maximumf %22, %25 : vector<16x128xf32>
    %27 = arith.truncf %26 : vector<16x128xf32> to vector<16x128xbf16>
    %c0_26 = arith.constant 0 : index
    %c0_27 = arith.constant 0 : index
    %c0_28 = arith.constant 0 : index
    %28 = vector.load %arg6[%c0_26, %c0_27, %c0_28] : memref<3x8x16xbf16, #tpu.memory_space<vmem>>, vector<1x8x16xbf16>
    %29 = vector.shape_cast %28 : vector<1x8x16xbf16> to vector<8x16xbf16>
    %cst_29 = arith.constant dense<0.000000e+00> : vector<8x128xf32>
    %30 = tpu.matmul %29, %27, %cst_29 {dimension_numbers = #tpu.dot_dimension_numbers<[1], [0], [0], [1], [0, 0, 1, 1], [], []>} : vector<8x16xbf16>, vector<16x128xbf16>, vector<8x128xf32> -> vector<8x128xf32>
    %c1_30 = arith.constant 1 : index
    %c0_31 = arith.constant 0 : index
    %c0_32 = arith.constant 0 : index
    %31 = vector.load %arg6[%c1_30, %c0_31, %c0_32] : memref<3x8x16xbf16, #tpu.memory_space<vmem>>, vector<1x8x16xbf16>
    %32 = vector.shape_cast %31 : vector<1x8x16xbf16> to vector<8x16xbf16>
    %cst_33 = arith.constant dense<0.000000e+00> : vector<8x128xf32>
    %33 = tpu.matmul %32, %27, %cst_33 {dimension_numbers = #tpu.dot_dimension_numbers<[1], [0], [0], [1], [0, 0, 1, 1], [], []>} : vector<8x16xbf16>, vector<16x128xbf16>, vector<8x128xf32> -> vector<8x128xf32>
    %34 = arith.maximumf %30, %33 : vector<8x128xf32>
    %c2_34 = arith.constant 2 : index
    %c0_35 = arith.constant 0 : index
    %c0_36 = arith.constant 0 : index
    %35 = vector.load %arg6[%c2_34, %c0_35, %c0_36] : memref<3x8x16xbf16, #tpu.memory_space<vmem>>, vector<1x8x16xbf16>
    %36 = vector.shape_cast %35 : vector<1x8x16xbf16> to vector<8x16xbf16>
    %cst_37 = arith.constant dense<0.000000e+00> : vector<8x128xf32>
    %37 = tpu.matmul %36, %27, %cst_37 {dimension_numbers = #tpu.dot_dimension_numbers<[1], [0], [0], [1], [0, 0, 1, 1], [], []>} : vector<8x16xbf16>, vector<16x128xbf16>, vector<8x128xf32> -> vector<8x128xf32>
    %38 = arith.maximumf %34, %37 : vector<8x128xf32>
    %cst_38 = arith.constant 0.000000e+00 : f32
    %39 = vector.broadcast %cst_38 : f32 to vector<8x128xf32>
    %40 = arith.maximumf %38, %39 : vector<8x128xf32>
    %c0_39 = arith.constant 0 : index
    %c0_40 = arith.constant 0 : index
    %c0_41 = arith.constant 0 : index
    %41 = vector.load %arg4[%c0_39, %c0_40, %c0_41] : memref<4x384x128xbf16, #tpu.memory_space<vmem>>, vector<1x384x128xbf16>
    %42 = vector.shape_cast %41 : vector<1x384x128xbf16> to vector<384x128xbf16>
    %c0_42 = arith.constant 0 : index
    %c0_43 = arith.constant 0 : index
    %43 = vector.load %arg5[%c0_42, %c0_43] : memref<4x128xf32, #tpu.memory_space<vmem>>, vector<1x128xf32>
    %c2_44 = arith.constant 2 : index
    %c0_45 = arith.constant 0 : index
    %44 = vector.load %arg33[%c2_44, %c0_45] : memref<10x384xf32, #tpu.memory_space<vmem>>, vector<8x128xf32>
    tpu.vector_store %arg33[%c2_44, %c0_45], %40 {strides = array<i32>} : memref<10x384xf32, #tpu.memory_space<vmem>>, vector<8x128xf32>,
    %c1_46 = arith.constant 1 : index
    %c128_47 = arith.constant 128 : index
    %45 = vector.load %arg33[%c1_46, %c128_47] : memref<10x384xf32, #tpu.memory_space<vmem>>, vector<8x128xf32>
    tpu.vector_store %arg33[%c1_46, %c128_47], %40 {strides = array<i32>} : memref<10x384xf32, #tpu.memory_space<vmem>>, vector<8x128xf32>,
    %c0_48 = arith.constant 0 : index
    %c256 = arith.constant 256 : index
    %46 = vector.load %arg33[%c0_48, %c256] : memref<10x384xf32, #tpu.memory_space<vmem>>, vector<8x128xf32>
    tpu.vector_store %arg33[%c0_48, %c256], %40 {strides = array<i32>} : memref<10x384xf32, #tpu.memory_space<vmem>>, vector<8x128xf32>,
    %cst_49 = arith.constant 0.000000e+00 : f32
    %47 = vector.broadcast %cst_49 : f32 to vector<1x128xf32>
    %c1_50 = arith.constant 1 : index
    %c0_51 = arith.constant 0 : index
    %48 = vector.load %arg33[%c1_50, %c0_51] : memref<10x384xf32, #tpu.memory_space<vmem>>, vector<1x128xf32>
    tpu.vector_store %arg33[%c1_50, %c0_51], %47 {strides = array<i32>} : memref<10x384xf32, #tpu.memory_space<vmem>>, vector<1x128xf32>,
    %c8 = arith.constant 8 : index
    %c256_52 = arith.constant 256 : index
    %49 = vector.load %arg33[%c8, %c256_52] : memref<10x384xf32, #tpu.memory_space<vmem>>, vector<1x128xf32>
    tpu.vector_store %arg33[%c8, %c256_52], %47 {strides = array<i32>} : memref<10x384xf32, #tpu.memory_space<vmem>>, vector<1x128xf32>,
    %c1_53 = arith.constant 1 : index
    %c0_54 = arith.constant 0 : index
    %50 = vector.load %arg33[%c1_53, %c0_54] : memref<10x384xf32, #tpu.memory_space<vmem>>, vector<8x384xf32>
    %51 = arith.truncf %50 : vector<8x384xf32> to vector<8x384xbf16>
    %cst_55 = arith.constant dense<0.000000e+00> : vector<8x128xf32>
    %52 = tpu.matmul %51, %42, %cst_55 {dimension_numbers = #tpu.dot_dimension_numbers<[1], [0], [0], [1], [0, 0, 1, 1], [], []>} : vector<8x384xbf16>, vector<384x128xbf16>, vector<8x128xf32> -> vector<8x128xf32>
    %53 = vector.broadcast %43 : vector<1x128xf32> to vector<8x128xf32>
    %54 = arith.addf %52, %53 : vector<8x128xf32>
    %cst_56 = arith.constant 0.000000e+00 : f32
    %55 = vector.broadcast %cst_56 : f32 to vector<8x128xf32>
    %56 = arith.maximumf %54, %55 : vector<8x128xf32>
    %c1_57 = arith.constant 1 : index
    %c0_58 = arith.constant 0 : index
    %c0_59 = arith.constant 0 : index
    %57 = vector.load %arg4[%c1_57, %c0_58, %c0_59] : memref<4x384x128xbf16, #tpu.memory_space<vmem>>, vector<1x384x128xbf16>
    %58 = vector.shape_cast %57 : vector<1x384x128xbf16> to vector<384x128xbf16>
    %c1_60 = arith.constant 1 : index
    %c0_61 = arith.constant 0 : index
    %59 = vector.load %arg5[%c1_60, %c0_61] : memref<4x128xf32, #tpu.memory_space<vmem>>, vector<1x128xf32>
    %c2_62 = arith.constant 2 : index
    %c0_63 = arith.constant 0 : index
    %60 = vector.load %arg33[%c2_62, %c0_63] : memref<10x384xf32, #tpu.memory_space<vmem>>, vector<8x128xf32>
    tpu.vector_store %arg33[%c2_62, %c0_63], %56 {strides = array<i32>} : memref<10x384xf32, #tpu.memory_space<vmem>>, vector<8x128xf32>,
    %c1_64 = arith.constant 1 : index
    %c128_65 = arith.constant 128 : index
    %61 = vector.load %arg33[%c1_64, %c128_65] : memref<10x384xf32, #tpu.memory_space<vmem>>, vector<8x128xf32>
    tpu.vector_store %arg33[%c1_64, %c128_65], %56 {strides = array<i32>} : memref<10x384xf32, #tpu.memory_space<vmem>>, vector<8x128xf32>,
    %c0_66 = arith.constant 0 : index
    %c256_67 = arith.constant 256 : index
    %62 = vector.load %arg33[%c0_66, %c256_67] : memref<10x384xf32, #tpu.memory_space<vmem>>, vector<8x128xf32>
    tpu.vector_store %arg33[%c0_66, %c256_67], %56 {strides = array<i32>} : memref<10x384xf32, #tpu.memory_space<vmem>>, vector<8x128xf32>,
    %cst_68 = arith.constant 0.000000e+00 : f32
    %63 = vector.broadcast %cst_68 : f32 to vector<1x128xf32>
    %c1_69 = arith.constant 1 : index
    %c0_70 = arith.constant 0 : index
    %64 = vector.load %arg33[%c1_69, %c0_70] : memref<10x384xf32, #tpu.memory_space<vmem>>, vector<1x128xf32>
    tpu.vector_store %arg33[%c1_69, %c0_70], %63 {strides = array<i32>} : memref<10x384xf32, #tpu.memory_space<vmem>>, vector<1x128xf32>,
    %c8_71 = arith.constant 8 : index
    %c256_72 = arith.constant 256 : index
    %65 = vector.load %arg33[%c8_71, %c256_72] : memref<10x384xf32, #tpu.memory_space<vmem>>, vector<1x128xf32>
    tpu.vector_store %arg33[%c8_71, %c256_72], %63 {strides = array<i32>} : memref<10x384xf32, #tpu.memory_space<vmem>>, vector<1x128xf32>,
    %c1_73 = arith.constant 1 : index
    %c0_74 = arith.constant 0 : index
    %66 = vector.load %arg33[%c1_73, %c0_74] : memref<10x384xf32, #tpu.memory_space<vmem>>, vector<8x384xf32>
    %67 = arith.truncf %66 : vector<8x384xf32> to vector<8x384xbf16>
    %cst_75 = arith.constant dense<0.000000e+00> : vector<8x128xf32>
    %68 = tpu.matmul %67, %58, %cst_75 {dimension_numbers = #tpu.dot_dimension_numbers<[1], [0], [0], [1], [0, 0, 1, 1], [], []>} : vector<8x384xbf16>, vector<384x128xbf16>, vector<8x128xf32> -> vector<8x128xf32>
    %69 = vector.broadcast %59 : vector<1x128xf32> to vector<8x128xf32>
    %70 = arith.addf %68, %69 : vector<8x128xf32>
    %71 = arith.addf %38, %70 : vector<8x128xf32>
    %cst_76 = arith.constant 0.000000e+00 : f32
    %72 = vector.broadcast %cst_76 : f32 to vector<8x128xf32>
    %73 = arith.maximumf %71, %72 : vector<8x128xf32>
    %c2_77 = arith.constant 2 : index
    %c0_78 = arith.constant 0 : index
    %c0_79 = arith.constant 0 : index
    %74 = vector.load %arg4[%c2_77, %c0_78, %c0_79] : memref<4x384x128xbf16, #tpu.memory_space<vmem>>, vector<1x384x128xbf16>
    %75 = vector.shape_cast %74 : vector<1x384x128xbf16> to vector<384x128xbf16>
    %c2_80 = arith.constant 2 : index
    %c0_81 = arith.constant 0 : index
    %76 = vector.load %arg5[%c2_80, %c0_81] : memref<4x128xf32, #tpu.memory_space<vmem>>, vector<1x128xf32>
    %c2_82 = arith.constant 2 : index
    %c0_83 = arith.constant 0 : index
    %77 = vector.load %arg33[%c2_82, %c0_83] : memref<10x384xf32, #tpu.memory_space<vmem>>, vector<8x128xf32>
    tpu.vector_store %arg33[%c2_82, %c0_83], %73 {strides = array<i32>} : memref<10x384xf32, #tpu.memory_space<vmem>>, vector<8x128xf32>,
    %c1_84 = arith.constant 1 : index
    %c128_85 = arith.constant 128 : index
    %78 = vector.load %arg33[%c1_84, %c128_85] : memref<10x384xf32, #tpu.memory_space<vmem>>, vector<8x128xf32>
    tpu.vector_store %arg33[%c1_84, %c128_85], %73 {strides = array<i32>} : memref<10x384xf32, #tpu.memory_space<vmem>>, vector<8x128xf32>,
    %c0_86 = arith.constant 0 : index
    %c256_87 = arith.constant 256 : index
    %79 = vector.load %arg33[%c0_86, %c256_87] : memref<10x384xf32, #tpu.memory_space<vmem>>, vector<8x128xf32>
    tpu.vector_store %arg33[%c0_86, %c256_87], %73 {strides = array<i32>} : memref<10x384xf32, #tpu.memory_space<vmem>>, vector<8x128xf32>,
    %cst_88 = arith.constant 0.000000e+00 : f32
    %80 = vector.broadcast %cst_88 : f32 to vector<1x128xf32>
    %c1_89 = arith.constant 1 : index
    %c0_90 = arith.constant 0 : index
    %81 = vector.load %arg33[%c1_89, %c0_90] : memref<10x384xf32, #tpu.memory_space<vmem>>, vector<1x128xf32>
    tpu.vector_store %arg33[%c1_89, %c0_90], %80 {strides = array<i32>} : memref<10x384xf32, #tpu.memory_space<vmem>>, vector<1x128xf32>,
    %c8_91 = arith.constant 8 : index
    %c256_92 = arith.constant 256 : index
    %82 = vector.load %arg33[%c8_91, %c256_92] : memref<10x384xf32, #tpu.memory_space<vmem>>, vector<1x128xf32>
    tpu.vector_store %arg33[%c8_91, %c256_92], %80 {strides = array<i32>} : memref<10x384xf32, #tpu.memory_space<vmem>>, vector<1x128xf32>,
    %c1_93 = arith.constant 1 : index
    %c0_94 = arith.constant 0 : index
    %83 = vector.load %arg33[%c1_93, %c0_94] : memref<10x384xf32, #tpu.memory_space<vmem>>, vector<8x384xf32>
    %84 = arith.truncf %83 : vector<8x384xf32> to vector<8x384xbf16>
    %cst_95 = arith.constant dense<0.000000e+00> : vector<8x128xf32>
    %85 = tpu.matmul %84, %75, %cst_95 {dimension_numbers = #tpu.dot_dimension_numbers<[1], [0], [0], [1], [0, 0, 1, 1], [], []>} : vector<8x384xbf16>, vector<384x128xbf16>, vector<8x128xf32> -> vector<8x128xf32>
    %86 = vector.broadcast %76 : vector<1x128xf32> to vector<8x128xf32>
    %87 = arith.addf %85, %86 : vector<8x128xf32>
    %cst_96 = arith.constant 0.000000e+00 : f32
    %88 = vector.broadcast %cst_96 : f32 to vector<8x128xf32>
    %89 = arith.maximumf %87, %88 : vector<8x128xf32>
    %c3 = arith.constant 3 : index
    %c0_97 = arith.constant 0 : index
    %c0_98 = arith.constant 0 : index
    %90 = vector.load %arg4[%c3, %c0_97, %c0_98] : memref<4x384x128xbf16, #tpu.memory_space<vmem>>, vector<1x384x128xbf16>
    %91 = vector.shape_cast %90 : vector<1x384x128xbf16> to vector<384x128xbf16>
    %c3_99 = arith.constant 3 : index
    %c0_100 = arith.constant 0 : index
    %92 = vector.load %arg5[%c3_99, %c0_100] : memref<4x128xf32, #tpu.memory_space<vmem>>, vector<1x128xf32>
    %c2_101 = arith.constant 2 : index
    %c0_102 = arith.constant 0 : index
    %93 = vector.load %arg33[%c2_101, %c0_102] : memref<10x384xf32, #tpu.memory_space<vmem>>, vector<8x128xf32>
    tpu.vector_store %arg33[%c2_101, %c0_102], %89 {strides = array<i32>} : memref<10x384xf32, #tpu.memory_space<vmem>>, vector<8x128xf32>,
    %c1_103 = arith.constant 1 : index
    %c128_104 = arith.constant 128 : index
    %94 = vector.load %arg33[%c1_103, %c128_104] : memref<10x384xf32, #tpu.memory_space<vmem>>, vector<8x128xf32>
    tpu.vector_store %arg33[%c1_103, %c128_104], %89 {strides = array<i32>} : memref<10x384xf32, #tpu.memory_space<vmem>>, vector<8x128xf32>,
    %c0_105 = arith.constant 0 : index
    %c256_106 = arith.constant 256 : index
    %95 = vector.load %arg33[%c0_105, %c256_106] : memref<10x384xf32, #tpu.memory_space<vmem>>, vector<8x128xf32>
    tpu.vector_store %arg33[%c0_105, %c256_106], %89 {strides = array<i32>} : memref<10x384xf32, #tpu.memory_space<vmem>>, vector<8x128xf32>,
    %cst_107 = arith.constant 0.000000e+00 : f32
    %96 = vector.broadcast %cst_107 : f32 to vector<1x128xf32>
    %c1_108 = arith.constant 1 : index
    %c0_109 = arith.constant 0 : index
    %97 = vector.load %arg33[%c1_108, %c0_109] : memref<10x384xf32, #tpu.memory_space<vmem>>, vector<1x128xf32>
    tpu.vector_store %arg33[%c1_108, %c0_109], %96 {strides = array<i32>} : memref<10x384xf32, #tpu.memory_space<vmem>>, vector<1x128xf32>,
    %c8_110 = arith.constant 8 : index
    %c256_111 = arith.constant 256 : index
    %98 = vector.load %arg33[%c8_110, %c256_111] : memref<10x384xf32, #tpu.memory_space<vmem>>, vector<1x128xf32>
    tpu.vector_store %arg33[%c8_110, %c256_111], %96 {strides = array<i32>} : memref<10x384xf32, #tpu.memory_space<vmem>>, vector<1x128xf32>,
    %c1_112 = arith.constant 1 : index
    %c0_113 = arith.constant 0 : index
    %99 = vector.load %arg33[%c1_112, %c0_113] : memref<10x384xf32, #tpu.memory_space<vmem>>, vector<8x384xf32>
    %100 = arith.truncf %99 : vector<8x384xf32> to vector<8x384xbf16>
    %cst_114 = arith.constant dense<0.000000e+00> : vector<8x128xf32>
    %101 = tpu.matmul %100, %91, %cst_114 {dimension_numbers = #tpu.dot_dimension_numbers<[1], [0], [0], [1], [0, 0, 1, 1], [], []>} : vector<8x384xbf16>, vector<384x128xbf16>, vector<8x128xf32> -> vector<8x128xf32>
    %102 = vector.broadcast %92 : vector<1x128xf32> to vector<8x128xf32>
    %103 = arith.addf %101, %102 : vector<8x128xf32>
    %104 = arith.addf %71, %103 : vector<8x128xf32>
    %c0_115 = arith.constant 0 : index
    %c0_116 = arith.constant 0 : index
    %105 = vector.load %arg8[%c0_115, %c0_116] : memref<384x256xbf16, #tpu.memory_space<vmem>>, vector<384x256xbf16>
    %c0_117 = arith.constant 0 : index
    %c0_118 = arith.constant 0 : index
    %106 = vector.load %arg9[%c0_117, %c0_118] : memref<1x256xf32, #tpu.memory_space<vmem>>, vector<1x256xf32>
    %c2_119 = arith.constant 2 : index
    %c0_120 = arith.constant 0 : index
    %107 = vector.load %arg33[%c2_119, %c0_120] : memref<10x384xf32, #tpu.memory_space<vmem>>, vector<8x128xf32>
    tpu.vector_store %arg33[%c2_119, %c0_120], %104 {strides = array<i32>} : memref<10x384xf32, #tpu.memory_space<vmem>>, vector<8x128xf32>,
    %c1_121 = arith.constant 1 : index
    %c128_122 = arith.constant 128 : index
    %108 = vector.load %arg33[%c1_121, %c128_122] : memref<10x384xf32, #tpu.memory_space<vmem>>, vector<8x128xf32>
    tpu.vector_store %arg33[%c1_121, %c128_122], %104 {strides = array<i32>} : memref<10x384xf32, #tpu.memory_space<vmem>>, vector<8x128xf32>,
    %c0_123 = arith.constant 0 : index
    %c256_124 = arith.constant 256 : index
    %109 = vector.load %arg33[%c0_123, %c256_124] : memref<10x384xf32, #tpu.memory_space<vmem>>, vector<8x128xf32>
    tpu.vector_store %arg33[%c0_123, %c256_124], %104 {strides = array<i32>} : memref<10x384xf32, #tpu.memory_space<vmem>>, vector<8x128xf32>,
    %cst_125 = arith.constant 0.000000e+00 : f32
    %110 = vector.broadcast %cst_125 : f32 to vector<1x128xf32>
    %c1_126 = arith.constant 1 : index
    %c0_127 = arith.constant 0 : index
    %111 = vector.load %arg33[%c1_126, %c0_127] : memref<10x384xf32, #tpu.memory_space<vmem>>, vector<1x128xf32>
    tpu.vector_store %arg33[%c1_126, %c0_127], %110 {strides = array<i32>} : memref<10x384xf32, #tpu.memory_space<vmem>>, vector<1x128xf32>,
    %c8_128 = arith.constant 8 : index
    %c256_129 = arith.constant 256 : index
    %112 = vector.load %arg33[%c8_128, %c256_129] : memref<10x384xf32, #tpu.memory_space<vmem>>, vector<1x128xf32>
    tpu.vector_store %arg33[%c8_128, %c256_129], %110 {strides = array<i32>} : memref<10x384xf32, #tpu.memory_space<vmem>>, vector<1x128xf32>,
    %c1_130 = arith.constant 1 : index
    %c0_131 = arith.constant 0 : index
    %113 = vector.load %arg33[%c1_130, %c0_131] : memref<10x384xf32, #tpu.memory_space<vmem>>, vector<8x384xf32>
    %114 = arith.truncf %113 : vector<8x384xf32> to vector<8x384xbf16>
    %cst_132 = arith.constant dense<0.000000e+00> : vector<8x256xf32>
    %115 = tpu.matmul %114, %105, %cst_132 {dimension_numbers = #tpu.dot_dimension_numbers<[1], [0], [0], [1], [0, 0, 1, 1], [], []>} : vector<8x384xbf16>, vector<384x256xbf16>, vector<8x256xf32> -> vector<8x256xf32>
    %116 = vector.broadcast %106 : vector<1x256xf32> to vector<8x256xf32>
    %117 = arith.addf %115, %116 : vector<8x256xf32>
    %118 = arith.truncf %117 : vector<8x256xf32> to vector<8x256xbf16>
    %c0_133 = arith.constant 0 : index
    %c0_134 = arith.constant 0 : index
    %c0_135 = arith.constant 0 : index
    %119 = vector.load %arg13[%c0_133, %c0_134, %c0_135] : memref<3x256x128xbf16, #tpu.memory_space<vmem>>, vector<1x256x128xbf16>
    %120 = vector.shape_cast %119 : vector<1x256x128xbf16> to vector<256x128xbf16>
    %cst_136 = arith.constant dense<0.000000e+00> : vector<8x128xf32>
    %121 = tpu.matmul %118, %120, %cst_136 {dimension_numbers = #tpu.dot_dimension_numbers<[1], [0], [0], [1], [0, 0, 1, 1], [], []>} : vector<8x256xbf16>, vector<256x128xbf16>, vector<8x128xf32> -> vector<8x128xf32>
    %c1_137 = arith.constant 1 : index
    %c0_138 = arith.constant 0 : index
    %c0_139 = arith.constant 0 : index
    %122 = vector.load %arg13[%c1_137, %c0_138, %c0_139] : memref<3x256x128xbf16, #tpu.memory_space<vmem>>, vector<1x256x128xbf16>
    %123 = vector.shape_cast %122 : vector<1x256x128xbf16> to vector<256x128xbf16>
    %cst_140 = arith.constant dense<0.000000e+00> : vector<8x128xf32>
    %124 = tpu.matmul %118, %123, %cst_140 {dimension_numbers = #tpu.dot_dimension_numbers<[1], [0], [0], [1], [0, 0, 1, 1], [], []>} : vector<8x256xbf16>, vector<256x128xbf16>, vector<8x128xf32> -> vector<8x128xf32>
    %125 = arith.maximumf %121, %124 : vector<8x128xf32>
    %c2_141 = arith.constant 2 : index
    %c0_142 = arith.constant 0 : index
    %c0_143 = arith.constant 0 : index
    %126 = vector.load %arg13[%c2_141, %c0_142, %c0_143] : memref<3x256x128xbf16, #tpu.memory_space<vmem>>, vector<1x256x128xbf16>
    %127 = vector.shape_cast %126 : vector<1x256x128xbf16> to vector<256x128xbf16>
    %cst_144 = arith.constant dense<0.000000e+00> : vector<8x128xf32>
    %128 = tpu.matmul %118, %127, %cst_144 {dimension_numbers = #tpu.dot_dimension_numbers<[1], [0], [0], [1], [0, 0, 1, 1], [], []>} : vector<8x256xbf16>, vector<256x128xbf16>, vector<8x128xf32> -> vector<8x128xf32>
    %129 = arith.maximumf %125, %128 : vector<8x128xf32>
    %130 = arith.truncf %129 : vector<8x128xf32> to vector<8x128xbf16>
    %c0_145 = arith.constant 0 : index
    %c0_146 = arith.constant 0 : index
    %c0_147 = arith.constant 0 : index
    %131 = vector.load %arg12[%c0_145, %c0_146, %c0_147] : memref<3x4x8xbf16, #tpu.memory_space<vmem>>, vector<1x4x8xbf16>
    %132 = vector.shape_cast %131 : vector<1x4x8xbf16> to vector<4x8xbf16>
    %cst_148 = arith.constant dense<0.000000e+00> : vector<4x128xf32>
    %133 = tpu.matmul %132, %130, %cst_148 {dimension_numbers = #tpu.dot_dimension_numbers<[1], [0], [0], [1], [0, 0, 1, 1], [], []>} : vector<4x8xbf16>, vector<8x128xbf16>, vector<4x128xf32> -> vector<4x128xf32>
    %c1_149 = arith.constant 1 : index
    %c0_150 = arith.constant 0 : index
    %c0_151 = arith.constant 0 : index
    %134 = vector.load %arg12[%c1_149, %c0_150, %c0_151] : memref<3x4x8xbf16, #tpu.memory_space<vmem>>, vector<1x4x8xbf16>
    %135 = vector.shape_cast %134 : vector<1x4x8xbf16> to vector<4x8xbf16>
    %cst_152 = arith.constant dense<0.000000e+00> : vector<4x128xf32>
    %136 = tpu.matmul %135, %130, %cst_152 {dimension_numbers = #tpu.dot_dimension_numbers<[1], [0], [0], [1], [0, 0, 1, 1], [], []>} : vector<4x8xbf16>, vector<8x128xbf16>, vector<4x128xf32> -> vector<4x128xf32>
    %137 = arith.maximumf %133, %136 : vector<4x128xf32>
    %c2_153 = arith.constant 2 : index
    %c0_154 = arith.constant 0 : index
    %c0_155 = arith.constant 0 : index
    %138 = vector.load %arg12[%c2_153, %c0_154, %c0_155] : memref<3x4x8xbf16, #tpu.memory_space<vmem>>, vector<1x4x8xbf16>
    %139 = vector.shape_cast %138 : vector<1x4x8xbf16> to vector<4x8xbf16>
    %cst_156 = arith.constant dense<0.000000e+00> : vector<4x128xf32>
    %140 = tpu.matmul %139, %130, %cst_156 {dimension_numbers = #tpu.dot_dimension_numbers<[1], [0], [0], [1], [0, 0, 1, 1], [], []>} : vector<4x8xbf16>, vector<8x128xbf16>, vector<4x128xf32> -> vector<4x128xf32>
    %141 = arith.maximumf %137, %140 : vector<4x128xf32>
    %cst_157 = arith.constant 0.000000e+00 : f32
    %142 = vector.broadcast %cst_157 : f32 to vector<4x128xf32>
    %143 = arith.maximumf %141, %142 : vector<4x128xf32>
    %c0_158 = arith.constant 0 : index
    %c0_159 = arith.constant 0 : index
    %c0_160 = arith.constant 0 : index
    %144 = vector.load %arg10[%c0_158, %c0_159, %c0_160] : memref<4x384x128xbf16, #tpu.memory_space<vmem>>, vector<1x384x128xbf16>
    %145 = vector.shape_cast %144 : vector<1x384x128xbf16> to vector<384x128xbf16>
    %c0_161 = arith.constant 0 : index
    %c0_162 = arith.constant 0 : index
    %146 = vector.load %arg11[%c0_161, %c0_162] : memref<4x128xf32, #tpu.memory_space<vmem>>, vector<1x128xf32>
    %c2_163 = arith.constant 2 : index
    %c0_164 = arith.constant 0 : index
    %147 = vector.load %arg34[%c2_163, %c0_164] : memref<6x384xf32, #tpu.memory_space<vmem>>, vector<4x128xf32>
    tpu.vector_store %arg34[%c2_163, %c0_164], %143 {strides = array<i32>} : memref<6x384xf32, #tpu.memory_space<vmem>>, vector<4x128xf32>,
    %c1_165 = arith.constant 1 : index
    %c128_166 = arith.constant 128 : index
    %148 = vector.load %arg34[%c1_165, %c128_166] : memref<6x384xf32, #tpu.memory_space<vmem>>, vector<4x128xf32>
    tpu.vector_store %arg34[%c1_165, %c128_166], %143 {strides = array<i32>} : memref<6x384xf32, #tpu.memory_space<vmem>>, vector<4x128xf32>,
    %c0_167 = arith.constant 0 : index
    %c256_168 = arith.constant 256 : index
    %149 = vector.load %arg34[%c0_167, %c256_168] : memref<6x384xf32, #tpu.memory_space<vmem>>, vector<4x128xf32>
    tpu.vector_store %arg34[%c0_167, %c256_168], %143 {strides = array<i32>} : memref<6x384xf32, #tpu.memory_space<vmem>>, vector<4x128xf32>,
    %cst_169 = arith.constant 0.000000e+00 : f32
    %150 = vector.broadcast %cst_169 : f32 to vector<1x128xf32>
    %c1_170 = arith.constant 1 : index
    %c0_171 = arith.constant 0 : index
    %151 = vector.load %arg34[%c1_170, %c0_171] : memref<6x384xf32, #tpu.memory_space<vmem>>, vector<1x128xf32>
    tpu.vector_store %arg34[%c1_170, %c0_171], %150 {strides = array<i32>} : memref<6x384xf32, #tpu.memory_space<vmem>>, vector<1x128xf32>,
    %c4 = arith.constant 4 : index
    %c256_172 = arith.constant 256 : index
    %152 = vector.load %arg34[%c4, %c256_172] : memref<6x384xf32, #tpu.memory_space<vmem>>, vector<1x128xf32>
    tpu.vector_store %arg34[%c4, %c256_172], %150 {strides = array<i32>} : memref<6x384xf32, #tpu.memory_space<vmem>>, vector<1x128xf32>,
    %c1_173 = arith.constant 1 : index
    %c0_174 = arith.constant 0 : index
    %153 = vector.load %arg34[%c1_173, %c0_174] : memref<6x384xf32, #tpu.memory_space<vmem>>, vector<4x384xf32>
    %154 = arith.truncf %153 : vector<4x384xf32> to vector<4x384xbf16>
    %cst_175 = arith.constant dense<0.000000e+00> : vector<4x128xf32>
    %155 = tpu.matmul %154, %145, %cst_175 {dimension_numbers = #tpu.dot_dimension_numbers<[1], [0], [0], [1], [0, 0, 1, 1], [], []>} : vector<4x384xbf16>, vector<384x128xbf16>, vector<4x128xf32> -> vector<4x128xf32>
    %156 = vector.broadcast %146 : vector<1x128xf32> to vector<4x128xf32>
    %157 = arith.addf %155, %156 : vector<4x128xf32>
    %cst_176 = arith.constant 0.000000e+00 : f32
    %158 = vector.broadcast %cst_176 : f32 to vector<4x128xf32>
    %159 = arith.maximumf %157, %158 : vector<4x128xf32>
    %c1_177 = arith.constant 1 : index
    %c0_178 = arith.constant 0 : index
    %c0_179 = arith.constant 0 : index
    %160 = vector.load %arg10[%c1_177, %c0_178, %c0_179] : memref<4x384x128xbf16, #tpu.memory_space<vmem>>, vector<1x384x128xbf16>
    %161 = vector.shape_cast %160 : vector<1x384x128xbf16> to vector<384x128xbf16>
    %c1_180 = arith.constant 1 : index
    %c0_181 = arith.constant 0 : index
    %162 = vector.load %arg11[%c1_180, %c0_181] : memref<4x128xf32, #tpu.memory_space<vmem>>, vector<1x128xf32>
    %c2_182 = arith.constant 2 : index
    %c0_183 = arith.constant 0 : index
    %163 = vector.load %arg34[%c2_182, %c0_183] : memref<6x384xf32, #tpu.memory_space<vmem>>, vector<4x128xf32>
    tpu.vector_store %arg34[%c2_182, %c0_183], %159 {strides = array<i32>} : memref<6x384xf32, #tpu.memory_space<vmem>>, vector<4x128xf32>,
    %c1_184 = arith.constant 1 : index
    %c128_185 = arith.constant 128 : index
    %164 = vector.load %arg34[%c1_184, %c128_185] : memref<6x384xf32, #tpu.memory_space<vmem>>, vector<4x128xf32>
    tpu.vector_store %arg34[%c1_184, %c128_185], %159 {strides = array<i32>} : memref<6x384xf32, #tpu.memory_space<vmem>>, vector<4x128xf32>,
    %c0_186 = arith.constant 0 : index
    %c256_187 = arith.constant 256 : index
    %165 = vector.load %arg34[%c0_186, %c256_187] : memref<6x384xf32, #tpu.memory_space<vmem>>, vector<4x128xf32>
    tpu.vector_store %arg34[%c0_186, %c256_187], %159 {strides = array<i32>} : memref<6x384xf32, #tpu.memory_space<vmem>>, vector<4x128xf32>,
    %cst_188 = arith.constant 0.000000e+00 : f32
    %166 = vector.broadcast %cst_188 : f32 to vector<1x128xf32>
    %c1_189 = arith.constant 1 : index
    %c0_190 = arith.constant 0 : index
    %167 = vector.load %arg34[%c1_189, %c0_190] : memref<6x384xf32, #tpu.memory_space<vmem>>, vector<1x128xf32>
    tpu.vector_store %arg34[%c1_189, %c0_190], %166 {strides = array<i32>} : memref<6x384xf32, #tpu.memory_space<vmem>>, vector<1x128xf32>,
    %c4_191 = arith.constant 4 : index
    %c256_192 = arith.constant 256 : index
    %168 = vector.load %arg34[%c4_191, %c256_192] : memref<6x384xf32, #tpu.memory_space<vmem>>, vector<1x128xf32>
    tpu.vector_store %arg34[%c4_191, %c256_192], %166 {strides = array<i32>} : memref<6x384xf32, #tpu.memory_space<vmem>>, vector<1x128xf32>,
    %c1_193 = arith.constant 1 : index
    %c0_194 = arith.constant 0 : index
    %169 = vector.load %arg34[%c1_193, %c0_194] : memref<6x384xf32, #tpu.memory_space<vmem>>, vector<4x384xf32>
    %170 = arith.truncf %169 : vector<4x384xf32> to vector<4x384xbf16>
    %cst_195 = arith.constant dense<0.000000e+00> : vector<4x128xf32>
    %171 = tpu.matmul %170, %161, %cst_195 {dimension_numbers = #tpu.dot_dimension_numbers<[1], [0], [0], [1], [0, 0, 1, 1], [], []>} : vector<4x384xbf16>, vector<384x128xbf16>, vector<4x128xf32> -> vector<4x128xf32>
    %172 = vector.broadcast %162 : vector<1x128xf32> to vector<4x128xf32>
    %173 = arith.addf %171, %172 : vector<4x128xf32>
    %174 = arith.addf %141, %173 : vector<4x128xf32>
    %cst_196 = arith.constant 0.000000e+00 : f32
    %175 = vector.broadcast %cst_196 : f32 to vector<4x128xf32>
    %176 = arith.maximumf %174, %175 : vector<4x128xf32>
    %c2_197 = arith.constant 2 : index
    %c0_198 = arith.constant 0 : index
    %c0_199 = arith.constant 0 : index
    %177 = vector.load %arg10[%c2_197, %c0_198, %c0_199] : memref<4x384x128xbf16, #tpu.memory_space<vmem>>, vector<1x384x128xbf16>
    %178 = vector.shape_cast %177 : vector<1x384x128xbf16> to vector<384x128xbf16>
    %c2_200 = arith.constant 2 : index
    %c0_201 = arith.constant 0 : index
    %179 = vector.load %arg11[%c2_200, %c0_201] : memref<4x128xf32, #tpu.memory_space<vmem>>, vector<1x128xf32>
    %c2_202 = arith.constant 2 : index
    %c0_203 = arith.constant 0 : index
    %180 = vector.load %arg34[%c2_202, %c0_203] : memref<6x384xf32, #tpu.memory_space<vmem>>, vector<4x128xf32>
    tpu.vector_store %arg34[%c2_202, %c0_203], %176 {strides = array<i32>} : memref<6x384xf32, #tpu.memory_space<vmem>>, vector<4x128xf32>,
    %c1_204 = arith.constant 1 : index
    %c128_205 = arith.constant 128 : index
    %181 = vector.load %arg34[%c1_204, %c128_205] : memref<6x384xf32, #tpu.memory_space<vmem>>, vector<4x128xf32>
    tpu.vector_store %arg34[%c1_204, %c128_205], %176 {strides = array<i32>} : memref<6x384xf32, #tpu.memory_space<vmem>>, vector<4x128xf32>,
    %c0_206 = arith.constant 0 : index
    %c256_207 = arith.constant 256 : index
    %182 = vector.load %arg34[%c0_206, %c256_207] : memref<6x384xf32, #tpu.memory_space<vmem>>, vector<4x128xf32>
    tpu.vector_store %arg34[%c0_206, %c256_207], %176 {strides = array<i32>} : memref<6x384xf32, #tpu.memory_space<vmem>>, vector<4x128xf32>,
    %cst_208 = arith.constant 0.000000e+00 : f32
    %183 = vector.broadcast %cst_208 : f32 to vector<1x128xf32>
    %c1_209 = arith.constant 1 : index
    %c0_210 = arith.constant 0 : index
    %184 = vector.load %arg34[%c1_209, %c0_210] : memref<6x384xf32, #tpu.memory_space<vmem>>, vector<1x128xf32>
    tpu.vector_store %arg34[%c1_209, %c0_210], %183 {strides = array<i32>} : memref<6x384xf32, #tpu.memory_space<vmem>>, vector<1x128xf32>,
    %c4_211 = arith.constant 4 : index
    %c256_212 = arith.constant 256 : index
    %185 = vector.load %arg34[%c4_211, %c256_212] : memref<6x384xf32, #tpu.memory_space<vmem>>, vector<1x128xf32>
    tpu.vector_store %arg34[%c4_211, %c256_212], %183 {strides = array<i32>} : memref<6x384xf32, #tpu.memory_space<vmem>>, vector<1x128xf32>,
    %c1_213 = arith.constant 1 : index
    %c0_214 = arith.constant 0 : index
    %186 = vector.load %arg34[%c1_213, %c0_214] : memref<6x384xf32, #tpu.memory_space<vmem>>, vector<4x384xf32>
    %187 = arith.truncf %186 : vector<4x384xf32> to vector<4x384xbf16>
    %cst_215 = arith.constant dense<0.000000e+00> : vector<4x128xf32>
    %188 = tpu.matmul %187, %178, %cst_215 {dimension_numbers = #tpu.dot_dimension_numbers<[1], [0], [0], [1], [0, 0, 1, 1], [], []>} : vector<4x384xbf16>, vector<384x128xbf16>, vector<4x128xf32> -> vector<4x128xf32>
    %189 = vector.broadcast %179 : vector<1x128xf32> to vector<4x128xf32>
    %190 = arith.addf %188, %189 : vector<4x128xf32>
    %cst_216 = arith.constant 0.000000e+00 : f32
    %191 = vector.broadcast %cst_216 : f32 to vector<4x128xf32>
    %192 = arith.maximumf %190, %191 : vector<4x128xf32>
    %c3_217 = arith.constant 3 : index
    %c0_218 = arith.constant 0 : index
    %c0_219 = arith.constant 0 : index
    %193 = vector.load %arg10[%c3_217, %c0_218, %c0_219] : memref<4x384x128xbf16, #tpu.memory_space<vmem>>, vector<1x384x128xbf16>
    %194 = vector.shape_cast %193 : vector<1x384x128xbf16> to vector<384x128xbf16>
    %c3_220 = arith.constant 3 : index
    %c0_221 = arith.constant 0 : index
    %195 = vector.load %arg11[%c3_220, %c0_221] : memref<4x128xf32, #tpu.memory_space<vmem>>, vector<1x128xf32>
    %c2_222 = arith.constant 2 : index
    %c0_223 = arith.constant 0 : index
    %196 = vector.load %arg34[%c2_222, %c0_223] : memref<6x384xf32, #tpu.memory_space<vmem>>, vector<4x128xf32>
    tpu.vector_store %arg34[%c2_222, %c0_223], %192 {strides = array<i32>} : memref<6x384xf32, #tpu.memory_space<vmem>>, vector<4x128xf32>,
    %c1_224 = arith.constant 1 : index
    %c128_225 = arith.constant 128 : index
    %197 = vector.load %arg34[%c1_224, %c128_225] : memref<6x384xf32, #tpu.memory_space<vmem>>, vector<4x128xf32>
    tpu.vector_store %arg34[%c1_224, %c128_225], %192 {strides = array<i32>} : memref<6x384xf32, #tpu.memory_space<vmem>>, vector<4x128xf32>,
    %c0_226 = arith.constant 0 : index
    %c256_227 = arith.constant 256 : index
    %198 = vector.load %arg34[%c0_226, %c256_227] : memref<6x384xf32, #tpu.memory_space<vmem>>, vector<4x128xf32>
    tpu.vector_store %arg34[%c0_226, %c256_227], %192 {strides = array<i32>} : memref<6x384xf32, #tpu.memory_space<vmem>>, vector<4x128xf32>,
    %cst_228 = arith.constant 0.000000e+00 : f32
    %199 = vector.broadcast %cst_228 : f32 to vector<1x128xf32>
    %c1_229 = arith.constant 1 : index
    %c0_230 = arith.constant 0 : index
    %200 = vector.load %arg34[%c1_229, %c0_230] : memref<6x384xf32, #tpu.memory_space<vmem>>, vector<1x128xf32>
    tpu.vector_store %arg34[%c1_229, %c0_230], %199 {strides = array<i32>} : memref<6x384xf32, #tpu.memory_space<vmem>>, vector<1x128xf32>,
    %c4_231 = arith.constant 4 : index
    %c256_232 = arith.constant 256 : index
    %201 = vector.load %arg34[%c4_231, %c256_232] : memref<6x384xf32, #tpu.memory_space<vmem>>, vector<1x128xf32>
    tpu.vector_store %arg34[%c4_231, %c256_232], %199 {strides = array<i32>} : memref<6x384xf32, #tpu.memory_space<vmem>>, vector<1x128xf32>,
    %c1_233 = arith.constant 1 : index
    %c0_234 = arith.constant 0 : index
    %202 = vector.load %arg34[%c1_233, %c0_234] : memref<6x384xf32, #tpu.memory_space<vmem>>, vector<4x384xf32>
    %203 = arith.truncf %202 : vector<4x384xf32> to vector<4x384xbf16>
    %cst_235 = arith.constant dense<0.000000e+00> : vector<4x128xf32>
    %204 = tpu.matmul %203, %194, %cst_235 {dimension_numbers = #tpu.dot_dimension_numbers<[1], [0], [0], [1], [0, 0, 1, 1], [], []>} : vector<4x384xbf16>, vector<384x128xbf16>, vector<4x128xf32> -> vector<4x128xf32>
    %205 = vector.broadcast %195 : vector<1x128xf32> to vector<4x128xf32>
    %206 = arith.addf %204, %205 : vector<4x128xf32>
    %207 = arith.addf %174, %206 : vector<4x128xf32>
    %c0_236 = arith.constant 0 : index
    %c0_237 = arith.constant 0 : index
    %208 = vector.load %arg14[%c0_236, %c0_237] : memref<384x128xbf16, #tpu.memory_space<vmem>>, vector<384x128xbf16>
    %c0_238 = arith.constant 0 : index
    %c0_239 = arith.constant 0 : index
    %209 = vector.load %arg15[%c0_238, %c0_239] : memref<1x128xf32, #tpu.memory_space<vmem>>, vector<1x128xf32>
    %c2_240 = arith.constant 2 : index
    %c0_241 = arith.constant 0 : index
    %210 = vector.load %arg34[%c2_240, %c0_241] : memref<6x384xf32, #tpu.memory_space<vmem>>, vector<4x128xf32>
    tpu.vector_store %arg34[%c2_240, %c0_241], %207 {strides = array<i32>} : memref<6x384xf32, #tpu.memory_space<vmem>>, vector<4x128xf32>,
    %c1_242 = arith.constant 1 : index
    %c128_243 = arith.constant 128 : index
    %211 = vector.load %arg34[%c1_242, %c128_243] : memref<6x384xf32, #tpu.memory_space<vmem>>, vector<4x128xf32>
    tpu.vector_store %arg34[%c1_242, %c128_243], %207 {strides = array<i32>} : memref<6x384xf32, #tpu.memory_space<vmem>>, vector<4x128xf32>,
    %c0_244 = arith.constant 0 : index
    %c256_245 = arith.constant 256 : index
    %212 = vector.load %arg34[%c0_244, %c256_245] : memref<6x384xf32, #tpu.memory_space<vmem>>, vector<4x128xf32>
    tpu.vector_store %arg34[%c0_244, %c256_245], %207 {strides = array<i32>} : memref<6x384xf32, #tpu.memory_space<vmem>>, vector<4x128xf32>,
    %cst_246 = arith.constant 0.000000e+00 : f32
    %213 = vector.broadcast %cst_246 : f32 to vector<1x128xf32>
    %c1_247 = arith.constant 1 : index
    %c0_248 = arith.constant 0 : index
    %214 = vector.load %arg34[%c1_247, %c0_248] : memref<6x384xf32, #tpu.memory_space<vmem>>, vector<1x128xf32>
    tpu.vector_store %arg34[%c1_247, %c0_248], %213 {strides = array<i32>} : memref<6x384xf32, #tpu.memory_space<vmem>>, vector<1x128xf32>,
    %c4_249 = arith.constant 4 : index
    %c256_250 = arith.constant 256 : index
    %215 = vector.load %arg34[%c4_249, %c256_250] : memref<6x384xf32, #tpu.memory_space<vmem>>, vector<1x128xf32>
    tpu.vector_store %arg34[%c4_249, %c256_250], %213 {strides = array<i32>} : memref<6x384xf32, #tpu.memory_space<vmem>>, vector<1x128xf32>,
    %c1_251 = arith.constant 1 : index
    %c0_252 = arith.constant 0 : index
    %216 = vector.load %arg34[%c1_251, %c0_252] : memref<6x384xf32, #tpu.memory_space<vmem>>, vector<4x384xf32>
    %217 = arith.truncf %216 : vector<4x384xf32> to vector<4x384xbf16>
    %cst_253 = arith.constant dense<0.000000e+00> : vector<4x128xf32>
    %218 = tpu.matmul %217, %208, %cst_253 {dimension_numbers = #tpu.dot_dimension_numbers<[1], [0], [0], [1], [0, 0, 1, 1], [], []>} : vector<4x384xbf16>, vector<384x128xbf16>, vector<4x128xf32> -> vector<4x128xf32>
    %219 = vector.broadcast %209 : vector<1x128xf32> to vector<4x128xf32>
    %220 = arith.addf %218, %219 : vector<4x128xf32>
    %221 = arith.truncf %220 : vector<4x128xf32> to vector<4x128xbf16>
    %c0_254 = arith.constant 0 : index
    %c0_255 = arith.constant 0 : index
    %c0_256 = arith.constant 0 : index
    %222 = vector.load %arg19[%c0_254, %c0_255, %c0_256] : memref<3x128x64xbf16, #tpu.memory_space<vmem>>, vector<1x128x64xbf16>
    %223 = vector.shape_cast %222 : vector<1x128x64xbf16> to vector<128x64xbf16>
    %cst_257 = arith.constant dense<0.000000e+00> : vector<4x64xf32>
    %224 = tpu.matmul %221, %223, %cst_257 {dimension_numbers = #tpu.dot_dimension_numbers<[1], [0], [0], [1], [0, 0, 1, 1], [], []>} : vector<4x128xbf16>, vector<128x64xbf16>, vector<4x64xf32> -> vector<4x64xf32>
    %c1_258 = arith.constant 1 : index
    %c0_259 = arith.constant 0 : index
    %c0_260 = arith.constant 0 : index
    %225 = vector.load %arg19[%c1_258, %c0_259, %c0_260] : memref<3x128x64xbf16, #tpu.memory_space<vmem>>, vector<1x128x64xbf16>
    %226 = vector.shape_cast %225 : vector<1x128x64xbf16> to vector<128x64xbf16>
    %cst_261 = arith.constant dense<0.000000e+00> : vector<4x64xf32>
    %227 = tpu.matmul %221, %226, %cst_261 {dimension_numbers = #tpu.dot_dimension_numbers<[1], [0], [0], [1], [0, 0, 1, 1], [], []>} : vector<4x128xbf16>, vector<128x64xbf16>, vector<4x64xf32> -> vector<4x64xf32>
    %228 = arith.maximumf %224, %227 : vector<4x64xf32>
    %c2_262 = arith.constant 2 : index
    %c0_263 = arith.constant 0 : index
    %c0_264 = arith.constant 0 : index
    %229 = vector.load %arg19[%c2_262, %c0_263, %c0_264] : memref<3x128x64xbf16, #tpu.memory_space<vmem>>, vector<1x128x64xbf16>
    %230 = vector.shape_cast %229 : vector<1x128x64xbf16> to vector<128x64xbf16>
    %cst_265 = arith.constant dense<0.000000e+00> : vector<4x64xf32>
    %231 = tpu.matmul %221, %230, %cst_265 {dimension_numbers = #tpu.dot_dimension_numbers<[1], [0], [0], [1], [0, 0, 1, 1], [], []>} : vector<4x128xbf16>, vector<128x64xbf16>, vector<4x64xf32> -> vector<4x64xf32>
    %232 = arith.maximumf %228, %231 : vector<4x64xf32>
    %233 = arith.truncf %232 : vector<4x64xf32> to vector<4x64xbf16>
    %c0_266 = arith.constant 0 : index
    %c0_267 = arith.constant 0 : index
    %c0_268 = arith.constant 0 : index
    %234 = vector.load %arg18[%c0_266, %c0_267, %c0_268] : memref<3x2x4xbf16, #tpu.memory_space<vmem>>, vector<1x2x4xbf16>
    %235 = vector.shape_cast %234 : vector<1x2x4xbf16> to vector<2x4xbf16>
    %cst_269 = arith.constant dense<0.000000e+00> : vector<2x64xf32>
    %236 = tpu.matmul %235, %233, %cst_269 {dimension_numbers = #tpu.dot_dimension_numbers<[1], [0], [0], [1], [0, 0, 1, 1], [], []>} : vector<2x4xbf16>, vector<4x64xbf16>, vector<2x64xf32> -> vector<2x64xf32>
    %c1_270 = arith.constant 1 : index
    %c0_271 = arith.constant 0 : index
    %c0_272 = arith.constant 0 : index
    %237 = vector.load %arg18[%c1_270, %c0_271, %c0_272] : memref<3x2x4xbf16, #tpu.memory_space<vmem>>, vector<1x2x4xbf16>
    %238 = vector.shape_cast %237 : vector<1x2x4xbf16> to vector<2x4xbf16>
    %cst_273 = arith.constant dense<0.000000e+00> : vector<2x64xf32>
    %239 = tpu.matmul %238, %233, %cst_273 {dimension_numbers = #tpu.dot_dimension_numbers<[1], [0], [0], [1], [0, 0, 1, 1], [], []>} : vector<2x4xbf16>, vector<4x64xbf16>, vector<2x64xf32> -> vector<2x64xf32>
    %240 = arith.maximumf %236, %239 : vector<2x64xf32>
    %c2_274 = arith.constant 2 : index
    %c0_275 = arith.constant 0 : index
    %c0_276 = arith.constant 0 : index
    %241 = vector.load %arg18[%c2_274, %c0_275, %c0_276] : memref<3x2x4xbf16, #tpu.memory_space<vmem>>, vector<1x2x4xbf16>
    %242 = vector.shape_cast %241 : vector<1x2x4xbf16> to vector<2x4xbf16>
    %cst_277 = arith.constant dense<0.000000e+00> : vector<2x64xf32>
    %243 = tpu.matmul %242, %233, %cst_277 {dimension_numbers = #tpu.dot_dimension_numbers<[1], [0], [0], [1], [0, 0, 1, 1], [], []>} : vector<2x4xbf16>, vector<4x64xbf16>, vector<2x64xf32> -> vector<2x64xf32>
    %244 = arith.maximumf %240, %243 : vector<2x64xf32>
    %cst_278 = arith.constant 0.000000e+00 : f32
    %245 = vector.broadcast %cst_278 : f32 to vector<2x64xf32>
    %246 = arith.maximumf %244, %245 : vector<2x64xf32>
    %c0_279 = arith.constant 0 : index
    %c0_280 = arith.constant 0 : index
    %c0_281 = arith.constant 0 : index
    %247 = vector.load %arg16[%c0_279, %c0_280, %c0_281] : memref<4x192x64xbf16, #tpu.memory_space<vmem>>, vector<1x192x64xbf16>
    %248 = vector.shape_cast %247 : vector<1x192x64xbf16> to vector<192x64xbf16>
    %c0_282 = arith.constant 0 : index
    %c0_283 = arith.constant 0 : index
    %249 = vector.load %arg17[%c0_282, %c0_283] : memref<4x64xf32, #tpu.memory_space<vmem>>, vector<1x64xf32>
    %c2_284 = arith.constant 2 : index
    %c0_285 = arith.constant 0 : index
    %250 = vector.load %arg35[%c2_284, %c0_285] : memref<4x192xf32, #tpu.memory_space<vmem>>, vector<2x64xf32>
    tpu.vector_store %arg35[%c2_284, %c0_285], %246 {strides = array<i32>} : memref<4x192xf32, #tpu.memory_space<vmem>>, vector<2x64xf32>,
    %c1_286 = arith.constant 1 : index
    %c64_287 = arith.constant 64 : index
    %251 = vector.load %arg35[%c1_286, %c64_287] : memref<4x192xf32, #tpu.memory_space<vmem>>, vector<2x64xf32>
    tpu.vector_store %arg35[%c1_286, %c64_287], %246 {strides = array<i32>} : memref<4x192xf32, #tpu.memory_space<vmem>>, vector<2x64xf32>,
    %c0_288 = arith.constant 0 : index
    %c128_289 = arith.constant 128 : index
    %252 = vector.load %arg35[%c0_288, %c128_289] : memref<4x192xf32, #tpu.memory_space<vmem>>, vector<2x64xf32>
    tpu.vector_store %arg35[%c0_288, %c128_289], %246 {strides = array<i32>} : memref<4x192xf32, #tpu.memory_space<vmem>>, vector<2x64xf32>,
    %cst_290 = arith.constant 0.000000e+00 : f32
    %253 = vector.broadcast %cst_290 : f32 to vector<1x64xf32>
    %c1_291 = arith.constant 1 : index
    %c0_292 = arith.constant 0 : index
    %254 = vector.load %arg35[%c1_291, %c0_292] : memref<4x192xf32, #tpu.memory_space<vmem>>, vector<1x64xf32>
    tpu.vector_store %arg35[%c1_291, %c0_292], %253 {strides = array<i32>} : memref<4x192xf32, #tpu.memory_space<vmem>>, vector<1x64xf32>,
    %c2_293 = arith.constant 2 : index
    %c128_294 = arith.constant 128 : index
    %255 = vector.load %arg35[%c2_293, %c128_294] : memref<4x192xf32, #tpu.memory_space<vmem>>, vector<1x64xf32>
    tpu.vector_store %arg35[%c2_293, %c128_294], %253 {strides = array<i32>} : memref<4x192xf32, #tpu.memory_space<vmem>>, vector<1x64xf32>,
    %c1_295 = arith.constant 1 : index
    %c0_296 = arith.constant 0 : index
    %256 = vector.load %arg35[%c1_295, %c0_296] : memref<4x192xf32, #tpu.memory_space<vmem>>, vector<2x192xf32>
    %257 = arith.truncf %256 : vector<2x192xf32> to vector<2x192xbf16>
    %cst_297 = arith.constant dense<0.000000e+00> : vector<2x64xf32>
    %258 = tpu.matmul %257, %248, %cst_297 {dimension_numbers = #tpu.dot_dimension_numbers<[1], [0], [0], [1], [0, 0, 1, 1], [], []>} : vector<2x192xbf16>, vector<192x64xbf16>, vector<2x64xf32> -> vector<2x64xf32>
    %259 = vector.broadcast %249 : vector<1x64xf32> to vector<2x64xf32>
    %260 = arith.addf %258, %259 : vector<2x64xf32>
    %cst_298 = arith.constant 0.000000e+00 : f32
    %261 = vector.broadcast %cst_298 : f32 to vector<2x64xf32>
    %262 = arith.maximumf %260, %261 : vector<2x64xf32>
    %c1_299 = arith.constant 1 : index
    %c0_300 = arith.constant 0 : index
    %c0_301 = arith.constant 0 : index
    %263 = vector.load %arg16[%c1_299, %c0_300, %c0_301] : memref<4x192x64xbf16, #tpu.memory_space<vmem>>, vector<1x192x64xbf16>
    %264 = vector.shape_cast %263 : vector<1x192x64xbf16> to vector<192x64xbf16>
    %c1_302 = arith.constant 1 : index
    %c0_303 = arith.constant 0 : index
    %265 = vector.load %arg17[%c1_302, %c0_303] : memref<4x64xf32, #tpu.memory_space<vmem>>, vector<1x64xf32>
    %c2_304 = arith.constant 2 : index
    %c0_305 = arith.constant 0 : index
    %266 = vector.load %arg35[%c2_304, %c0_305] : memref<4x192xf32, #tpu.memory_space<vmem>>, vector<2x64xf32>
    tpu.vector_store %arg35[%c2_304, %c0_305], %262 {strides = array<i32>} : memref<4x192xf32, #tpu.memory_space<vmem>>, vector<2x64xf32>,
    %c1_306 = arith.constant 1 : index
    %c64_307 = arith.constant 64 : index
    %267 = vector.load %arg35[%c1_306, %c64_307] : memref<4x192xf32, #tpu.memory_space<vmem>>, vector<2x64xf32>
    tpu.vector_store %arg35[%c1_306, %c64_307], %262 {strides = array<i32>} : memref<4x192xf32, #tpu.memory_space<vmem>>, vector<2x64xf32>,
    %c0_308 = arith.constant 0 : index
    %c128_309 = arith.constant 128 : index
    %268 = vector.load %arg35[%c0_308, %c128_309] : memref<4x192xf32, #tpu.memory_space<vmem>>, vector<2x64xf32>
    tpu.vector_store %arg35[%c0_308, %c128_309], %262 {strides = array<i32>} : memref<4x192xf32, #tpu.memory_space<vmem>>, vector<2x64xf32>,
    %cst_310 = arith.constant 0.000000e+00 : f32
    %269 = vector.broadcast %cst_310 : f32 to vector<1x64xf32>
    %c1_311 = arith.constant 1 : index
    %c0_312 = arith.constant 0 : index
    %270 = vector.load %arg35[%c1_311, %c0_312] : memref<4x192xf32, #tpu.memory_space<vmem>>, vector<1x64xf32>
    tpu.vector_store %arg35[%c1_311, %c0_312], %269 {strides = array<i32>} : memref<4x192xf32, #tpu.memory_space<vmem>>, vector<1x64xf32>,
    %c2_313 = arith.constant 2 : index
    %c128_314 = arith.constant 128 : index
    %271 = vector.load %arg35[%c2_313, %c128_314] : memref<4x192xf32, #tpu.memory_space<vmem>>, vector<1x64xf32>
    tpu.vector_store %arg35[%c2_313, %c128_314], %269 {strides = array<i32>} : memref<4x192xf32, #tpu.memory_space<vmem>>, vector<1x64xf32>,
    %c1_315 = arith.constant 1 : index
    %c0_316 = arith.constant 0 : index
    %272 = vector.load %arg35[%c1_315, %c0_316] : memref<4x192xf32, #tpu.memory_space<vmem>>, vector<2x192xf32>
    %273 = arith.truncf %272 : vector<2x192xf32> to vector<2x192xbf16>
    %cst_317 = arith.constant dense<0.000000e+00> : vector<2x64xf32>
    %274 = tpu.matmul %273, %264, %cst_317 {dimension_numbers = #tpu.dot_dimension_numbers<[1], [0], [0], [1], [0, 0, 1, 1], [], []>} : vector<2x192xbf16>, vector<192x64xbf16>, vector<2x64xf32> -> vector<2x64xf32>
    %275 = vector.broadcast %265 : vector<1x64xf32> to vector<2x64xf32>
    %276 = arith.addf %274, %275 : vector<2x64xf32>
    %277 = arith.addf %244, %276 : vector<2x64xf32>
    %cst_318 = arith.constant 0.000000e+00 : f32
    %278 = vector.broadcast %cst_318 : f32 to vector<2x64xf32>
    %279 = arith.maximumf %277, %278 : vector<2x64xf32>
    %c2_319 = arith.constant 2 : index
    %c0_320 = arith.constant 0 : index
    %c0_321 = arith.constant 0 : index
    %280 = vector.load %arg16[%c2_319, %c0_320, %c0_321] : memref<4x192x64xbf16, #tpu.memory_space<vmem>>, vector<1x192x64xbf16>
    %281 = vector.shape_cast %280 : vector<1x192x64xbf16> to vector<192x64xbf16>
    %c2_322 = arith.constant 2 : index
    %c0_323 = arith.constant 0 : index
    %282 = vector.load %arg17[%c2_322, %c0_323] : memref<4x64xf32, #tpu.memory_space<vmem>>, vector<1x64xf32>
    %c2_324 = arith.constant 2 : index
    %c0_325 = arith.constant 0 : index
    %283 = vector.load %arg35[%c2_324, %c0_325] : memref<4x192xf32, #tpu.memory_space<vmem>>, vector<2x64xf32>
    tpu.vector_store %arg35[%c2_324, %c0_325], %279 {strides = array<i32>} : memref<4x192xf32, #tpu.memory_space<vmem>>, vector<2x64xf32>,
    %c1_326 = arith.constant 1 : index
    %c64_327 = arith.constant 64 : index
    %284 = vector.load %arg35[%c1_326, %c64_327] : memref<4x192xf32, #tpu.memory_space<vmem>>, vector<2x64xf32>
    tpu.vector_store %arg35[%c1_326, %c64_327], %279 {strides = array<i32>} : memref<4x192xf32, #tpu.memory_space<vmem>>, vector<2x64xf32>,
    %c0_328 = arith.constant 0 : index
    %c128_329 = arith.constant 128 : index
    %285 = vector.load %arg35[%c0_328, %c128_329] : memref<4x192xf32, #tpu.memory_space<vmem>>, vector<2x64xf32>
    tpu.vector_store %arg35[%c0_328, %c128_329], %279 {strides = array<i32>} : memref<4x192xf32, #tpu.memory_space<vmem>>, vector<2x64xf32>,
    %cst_330 = arith.constant 0.000000e+00 : f32
    %286 = vector.broadcast %cst_330 : f32 to vector<1x64xf32>
    %c1_331 = arith.constant 1 : index
    %c0_332 = arith.constant 0 : index
    %287 = vector.load %arg35[%c1_331, %c0_332] : memref<4x192xf32, #tpu.memory_space<vmem>>, vector<1x64xf32>
    tpu.vector_store %arg35[%c1_331, %c0_332], %286 {strides = array<i32>} : memref<4x192xf32, #tpu.memory_space<vmem>>, vector<1x64xf32>,
    %c2_333 = arith.constant 2 : index
    %c128_334 = arith.constant 128 : index
    %288 = vector.load %arg35[%c2_333, %c128_334] : memref<4x192xf32, #tpu.memory_space<vmem>>, vector<1x64xf32>
    tpu.vector_store %arg35[%c2_333, %c128_334], %286 {strides = array<i32>} : memref<4x192xf32, #tpu.memory_space<vmem>>, vector<1x64xf32>,
    %c1_335 = arith.constant 1 : index
    %c0_336 = arith.constant 0 : index
    %289 = vector.load %arg35[%c1_335, %c0_336] : memref<4x192xf32, #tpu.memory_space<vmem>>, vector<2x192xf32>
    %290 = arith.truncf %289 : vector<2x192xf32> to vector<2x192xbf16>
    %cst_337 = arith.constant dense<0.000000e+00> : vector<2x64xf32>
    %291 = tpu.matmul %290, %281, %cst_337 {dimension_numbers = #tpu.dot_dimension_numbers<[1], [0], [0], [1], [0, 0, 1, 1], [], []>} : vector<2x192xbf16>, vector<192x64xbf16>, vector<2x64xf32> -> vector<2x64xf32>
    %292 = vector.broadcast %282 : vector<1x64xf32> to vector<2x64xf32>
    %293 = arith.addf %291, %292 : vector<2x64xf32>
    %cst_338 = arith.constant 0.000000e+00 : f32
    %294 = vector.broadcast %cst_338 : f32 to vector<2x64xf32>
    %295 = arith.maximumf %293, %294 : vector<2x64xf32>
    %c3_339 = arith.constant 3 : index
    %c0_340 = arith.constant 0 : index
    %c0_341 = arith.constant 0 : index
    %296 = vector.load %arg16[%c3_339, %c0_340, %c0_341] : memref<4x192x64xbf16, #tpu.memory_space<vmem>>, vector<1x192x64xbf16>
    %297 = vector.shape_cast %296 : vector<1x192x64xbf16> to vector<192x64xbf16>
    %c3_342 = arith.constant 3 : index
    %c0_343 = arith.constant 0 : index
    %298 = vector.load %arg17[%c3_342, %c0_343] : memref<4x64xf32, #tpu.memory_space<vmem>>, vector<1x64xf32>
    %c2_344 = arith.constant 2 : index
    %c0_345 = arith.constant 0 : index
    %299 = vector.load %arg35[%c2_344, %c0_345] : memref<4x192xf32, #tpu.memory_space<vmem>>, vector<2x64xf32>
    tpu.vector_store %arg35[%c2_344, %c0_345], %295 {strides = array<i32>} : memref<4x192xf32, #tpu.memory_space<vmem>>, vector<2x64xf32>,
    %c1_346 = arith.constant 1 : index
    %c64_347 = arith.constant 64 : index
    %300 = vector.load %arg35[%c1_346, %c64_347] : memref<4x192xf32, #tpu.memory_space<vmem>>, vector<2x64xf32>
    tpu.vector_store %arg35[%c1_346, %c64_347], %295 {strides = array<i32>} : memref<4x192xf32, #tpu.memory_space<vmem>>, vector<2x64xf32>,
    %c0_348 = arith.constant 0 : index
    %c128_349 = arith.constant 128 : index
    %301 = vector.load %arg35[%c0_348, %c128_349] : memref<4x192xf32, #tpu.memory_space<vmem>>, vector<2x64xf32>
    tpu.vector_store %arg35[%c0_348, %c128_349], %295 {strides = array<i32>} : memref<4x192xf32, #tpu.memory_space<vmem>>, vector<2x64xf32>,
    %cst_350 = arith.constant 0.000000e+00 : f32
    %302 = vector.broadcast %cst_350 : f32 to vector<1x64xf32>
    %c1_351 = arith.constant 1 : index
    %c0_352 = arith.constant 0 : index
    %303 = vector.load %arg35[%c1_351, %c0_352] : memref<4x192xf32, #tpu.memory_space<vmem>>, vector<1x64xf32>
    tpu.vector_store %arg35[%c1_351, %c0_352], %302 {strides = array<i32>} : memref<4x192xf32, #tpu.memory_space<vmem>>, vector<1x64xf32>,
    %c2_353 = arith.constant 2 : index
    %c128_354 = arith.constant 128 : index
    %304 = vector.load %arg35[%c2_353, %c128_354] : memref<4x192xf32, #tpu.memory_space<vmem>>, vector<1x64xf32>
    tpu.vector_store %arg35[%c2_353, %c128_354], %302 {strides = array<i32>} : memref<4x192xf32, #tpu.memory_space<vmem>>, vector<1x64xf32>,
    %c1_355 = arith.constant 1 : index
    %c0_356 = arith.constant 0 : index
    %305 = vector.load %arg35[%c1_355, %c0_356] : memref<4x192xf32, #tpu.memory_space<vmem>>, vector<2x192xf32>
    %306 = arith.truncf %305 : vector<2x192xf32> to vector<2x192xbf16>
    %cst_357 = arith.constant dense<0.000000e+00> : vector<2x64xf32>
    %307 = tpu.matmul %306, %297, %cst_357 {dimension_numbers = #tpu.dot_dimension_numbers<[1], [0], [0], [1], [0, 0, 1, 1], [], []>} : vector<2x192xbf16>, vector<192x64xbf16>, vector<2x64xf32> -> vector<2x64xf32>
    %308 = vector.broadcast %298 : vector<1x64xf32> to vector<2x64xf32>
    %309 = arith.addf %307, %308 : vector<2x64xf32>
    %310 = arith.addf %277, %309 : vector<2x64xf32>
    %cst_358 = arith.constant 0.000000e+00 : f32
    %311 = vector.broadcast %cst_358 : f32 to vector<2x64xf32>
    %312 = arith.maximumf %310, %311 : vector<2x64xf32>
    %c0_359 = arith.constant 0 : index
    %c0_360 = arith.constant 0 : index
    %313 = vector.load %arg36[%c0_359, %c0_360] : memref<2x64xf32, #tpu.memory_space<vmem>>, vector<2x64xf32>
    tpu.vector_store %arg36[%c0_359, %c0_360], %312 {strides = array<i32>} : memref<2x64xf32, #tpu.memory_space<vmem>>, vector<2x64xf32>,
    %c0_361 = arith.constant 0 : index
    %c0_362 = arith.constant 0 : index
    %314 = vector.load %arg21[%c0_361, %c0_362] : memref<1x64xf32, #tpu.memory_space<vmem>>, vector<1x64xf32>
    %c0_363 = arith.constant 0 : index
    %c0_364 = arith.constant 0 : index
    %315 = vector.load %arg36[%c0_363, %c0_364] : memref<2x64xf32, #tpu.memory_space<vmem>>, vector<1x64xf32>
    %316 = arith.truncf %315 : vector<1x64xf32> to vector<1x64xbf16>
    %c0_365 = arith.constant 0 : index
    %c0_366 = arith.constant 0 : index
    %c0_367 = arith.constant 0 : index
    %317 = vector.load %arg20[%c0_365, %c0_366, %c0_367] : memref<2x64x64xbf16, #tpu.memory_space<vmem>>, vector<1x64x64xbf16>
    %318 = vector.shape_cast %317 : vector<1x64x64xbf16> to vector<64x64xbf16>
    %cst_368 = arith.constant dense<0.000000e+00> : vector<1x64xf32>
    %319 = tpu.matmul %316, %318, %cst_368 {dimension_numbers = #tpu.dot_dimension_numbers<[1], [0], [0], [1], [0, 0, 1, 1], [], []>} : vector<1x64xbf16>, vector<64x64xbf16>, vector<1x64xf32> -> vector<1x64xf32>
    %320 = arith.addf %314, %319 : vector<1x64xf32>
    %c1_369 = arith.constant 1 : index
    %c0_370 = arith.constant 0 : index
    %321 = vector.load %arg36[%c1_369, %c0_370] : memref<2x64xf32, #tpu.memory_space<vmem>>, vector<1x64xf32>
    %322 = arith.truncf %321 : vector<1x64xf32> to vector<1x64xbf16>
    %c1_371 = arith.constant 1 : index
    %c0_372 = arith.constant 0 : index
    %c0_373 = arith.constant 0 : index
    %323 = vector.load %arg20[%c1_371, %c0_372, %c0_373] : memref<2x64x64xbf16, #tpu.memory_space<vmem>>, vector<1x64x64xbf16>
    %324 = vector.shape_cast %323 : vector<1x64x64xbf16> to vector<64x64xbf16>
    %cst_374 = arith.constant dense<0.000000e+00> : vector<1x64xf32>
    %325 = tpu.matmul %322, %324, %cst_374 {dimension_numbers = #tpu.dot_dimension_numbers<[1], [0], [0], [1], [0, 0, 1, 1], [], []>} : vector<1x64xbf16>, vector<64x64xbf16>, vector<1x64xf32> -> vector<1x64xf32>
    %326 = arith.addf %320, %325 : vector<1x64xf32>
    %cst_375 = arith.constant 0.000000e+00 : f32
    %327 = vector.broadcast %cst_375 : f32 to vector<1x64xf32>
    %328 = arith.maximumf %326, %327 : vector<1x64xf32>
    %329 = arith.truncf %328 : vector<1x64xf32> to vector<1x64xbf16>
    %c0_376 = arith.constant 0 : index
    %c0_377 = arith.constant 0 : index
    %330 = vector.load %arg22[%c0_376, %c0_377] : memref<64x16xbf16, #tpu.memory_space<vmem>>, vector<64x16xbf16>
    %cst_378 = arith.constant dense<0.000000e+00> : vector<1x16xf32>
    %331 = tpu.matmul %329, %330, %cst_378 {dimension_numbers = #tpu.dot_dimension_numbers<[1], [0], [0], [1], [0, 0, 1, 1], [], []>} : vector<1x64xbf16>, vector<64x16xbf16>, vector<1x16xf32> -> vector<1x16xf32>
    %c0_379 = arith.constant 0 : index
    %c0_380 = arith.constant 0 : index
    %332 = vector.load %arg23[%c0_379, %c0_380] : memref<1x16xf32, #tpu.memory_space<vmem>>, vector<1x16xf32>
    %333 = arith.addf %331, %332 : vector<1x16xf32>
    %c0_381 = arith.constant 0 : index
    %c0_382 = arith.constant 0 : index
    %c0_383 = arith.constant 0 : index
    %334 = vector.load %arg27[%c0_381, %c0_382, %c0_383] : memref<1x1x16xf32, #tpu.memory_space<vmem>>, vector<1x1x16xf32>
    %335 = vector.shape_cast %334 : vector<1x1x16xf32> to vector<1x16xf32>
    %336 = vector.shape_cast %333 : vector<1x16xf32> to vector<1x1x16xf32>
    tpu.vector_store %arg27[%c0_381, %c0_382, %c0_383], %336 {strides = array<i32>} : memref<1x1x16xf32, #tpu.memory_space<vmem>>, vector<1x1x16xf32>,
    %337 = tpu.iota {dimensions = array<i32: 1>} : vector<1x8xi32>
    %338 = tpu.iota {dimensions = array<i32: 1>} : vector<1x16xi32>
    %339 = tpu.iota {dimensions = array<i32: 1>} : vector<1x4xi32>
    %cst_384 = arith.constant 0.000000e+00 : f32
    %340 = vector.broadcast %cst_384 : f32 to vector<1x16xf32>
    %cst_385 = arith.constant 0.000000e+00 : f32
    %341 = vector.broadcast %cst_385 : f32 to vector<1x16xf32>
    %c0_i32 = arith.constant 0 : i32
    %342 = vector.broadcast %c0_i32 : i32 to vector<1x4xi32>
    %c0_386 = arith.constant 0 : index
    %c0_387 = arith.constant 0 : index
    %c0_388 = arith.constant 0 : index
    %343 = vector.load %arg24[%c0_386, %c0_387, %c0_388] : memref<4x64x8xbf16, #tpu.memory_space<vmem>>, vector<1x64x8xbf16>
    %344 = vector.shape_cast %343 : vector<1x64x8xbf16> to vector<64x8xbf16>
    %cst_389 = arith.constant dense<0.000000e+00> : vector<1x8xf32>
    %345 = tpu.matmul %329, %344, %cst_389 {dimension_numbers = #tpu.dot_dimension_numbers<[1], [0], [0], [1], [0, 0, 1, 1], [], []>} : vector<1x64xbf16>, vector<64x8xbf16>, vector<1x8xf32> -> vector<1x8xf32>
    %c0_390 = arith.constant 0 : index
    %c0_391 = arith.constant 0 : index
    %346 = vector.load %arg25[%c0_390, %c0_391] : memref<4x8xf32, #tpu.memory_space<vmem>>, vector<1x8xf32>
    %347 = arith.addf %345, %346 : vector<1x8xf32>
    %cst_392 = arith.constant dense<0x7F800000> : vector<1xf32>
    %348 = vector.multi_reduction <minimumf>, %347, %cst_392 [1] : vector<1x8xf32> to vector<1xf32>
    %349 = vector.shape_cast %348 : vector<1xf32> to vector<1x1xf32>
    %350 = vector.broadcast %349 : vector<1x1xf32> to vector<1x8xf32>
    %351 = arith.cmpf oeq, %347, %350 : vector<1x8xf32>
    %c8_i32 = arith.constant 8 : i32
    %352 = vector.broadcast %c8_i32 : i32 to vector<1x8xi32>
    %353 = arith.select %351, %337, %352 : vector<1x8xi1>, vector<1x8xi32>
    %cst_393 = arith.constant dense<2147483647> : vector<1xi32>
    %354 = vector.multi_reduction <minsi>, %353, %cst_393 [1] : vector<1x8xi32> to vector<1xi32>
    %355 = vector.shape_cast %354 : vector<1xi32> to vector<1x1xi32>
    %356 = vector.broadcast %355 : vector<1x1xi32> to vector<1x8xi32>
    %357 = arith.cmpi eq, %337, %356 : vector<1x8xi32>
    %358 = arith.extui %357 : vector<1x8xi1> to vector<1x8xi32>
    %359 = arith.sitofp %358 : vector<1x8xi32> to vector<1x8xf32>
    %c0_394 = arith.constant 0 : index
    %c0_395 = arith.constant 0 : index
    %c0_396 = arith.constant 0 : index
    %360 = vector.load %arg26[%c0_394, %c0_395, %c0_396] : memref<4x8x16xf32, #tpu.memory_space<vmem>>, vector<1x8x16xf32>
    %361 = vector.shape_cast %360 : vector<1x8x16xf32> to vector<8x16xf32>
    %cst_397 = arith.constant dense<0.000000e+00> : vector<1x16xf32>
    %362 = tpu.matmul %359, %361, %cst_397 {dimension_numbers = #tpu.dot_dimension_numbers<[1], [0], [0], [1], [0, 0, 1, 1], [], []>} : vector<1x8xf32>, vector<8x16xf32>, vector<1x16xf32> -> vector<1x16xf32>
    %363 = arith.addf %340, %362 : vector<1x16xf32>
    %c0_i32_398 = arith.constant 0 : i32
    %364 = vector.broadcast %c0_i32_398 : i32 to vector<1x1xi32>
    %365 = arith.addi %355, %364 : vector<1x1xi32>
    %366 = vector.broadcast %365 : vector<1x1xi32> to vector<1x16xi32>
    %367 = arith.cmpi eq, %338, %366 : vector<1x16xi32>
    %368 = arith.extui %367 : vector<1x16xi1> to vector<1x16xi32>
    %369 = arith.sitofp %368 : vector<1x16xi32> to vector<1x16xf32>
    %370 = arith.addf %341, %369 : vector<1x16xf32>
    %c0_i32_399 = arith.constant 0 : i32
    %371 = vector.broadcast %c0_i32_399 : i32 to vector<1x4xi32>
    %372 = arith.cmpi eq, %339, %371 : vector<1x4xi32>
    %373 = vector.shape_cast %355 : vector<1x1xi32> to vector<1x1xi32>
    %374 = vector.broadcast %373 : vector<1x1xi32> to vector<1x4xi32>
    %375 = arith.select %372, %374, %342 : vector<1x4xi1>, vector<1x4xi32>
    %c1_400 = arith.constant 1 : index
    %c0_401 = arith.constant 0 : index
    %c0_402 = arith.constant 0 : index
    %376 = vector.load %arg24[%c1_400, %c0_401, %c0_402] : memref<4x64x8xbf16, #tpu.memory_space<vmem>>, vector<1x64x8xbf16>
    %377 = vector.shape_cast %376 : vector<1x64x8xbf16> to vector<64x8xbf16>
    %cst_403 = arith.constant dense<0.000000e+00> : vector<1x8xf32>
    %378 = tpu.matmul %329, %377, %cst_403 {dimension_numbers = #tpu.dot_dimension_numbers<[1], [0], [0], [1], [0, 0, 1, 1], [], []>} : vector<1x64xbf16>, vector<64x8xbf16>, vector<1x8xf32> -> vector<1x8xf32>
    %c1_404 = arith.constant 1 : index
    %c0_405 = arith.constant 0 : index
    %379 = vector.load %arg25[%c1_404, %c0_405] : memref<4x8xf32, #tpu.memory_space<vmem>>, vector<1x8xf32>
    %380 = arith.addf %378, %379 : vector<1x8xf32>
    %cst_406 = arith.constant dense<0x7F800000> : vector<1xf32>
    %381 = vector.multi_reduction <minimumf>, %380, %cst_406 [1] : vector<1x8xf32> to vector<1xf32>
    %382 = vector.shape_cast %381 : vector<1xf32> to vector<1x1xf32>
    %383 = vector.broadcast %382 : vector<1x1xf32> to vector<1x8xf32>
    %384 = arith.cmpf oeq, %380, %383 : vector<1x8xf32>
    %c8_i32_407 = arith.constant 8 : i32
    %385 = vector.broadcast %c8_i32_407 : i32 to vector<1x8xi32>
    %386 = arith.select %384, %337, %385 : vector<1x8xi1>, vector<1x8xi32>
    %cst_408 = arith.constant dense<2147483647> : vector<1xi32>
    %387 = vector.multi_reduction <minsi>, %386, %cst_408 [1] : vector<1x8xi32> to vector<1xi32>
    %388 = vector.shape_cast %387 : vector<1xi32> to vector<1x1xi32>
    %389 = vector.broadcast %388 : vector<1x1xi32> to vector<1x8xi32>
    %390 = arith.cmpi eq, %337, %389 : vector<1x8xi32>
    %391 = arith.extui %390 : vector<1x8xi1> to vector<1x8xi32>
    %392 = arith.sitofp %391 : vector<1x8xi32> to vector<1x8xf32>
    %c1_409 = arith.constant 1 : index
    %c0_410 = arith.constant 0 : index
    %c0_411 = arith.constant 0 : index
    %393 = vector.load %arg26[%c1_409, %c0_410, %c0_411] : memref<4x8x16xf32, #tpu.memory_space<vmem>>, vector<1x8x16xf32>
    %394 = vector.shape_cast %393 : vector<1x8x16xf32> to vector<8x16xf32>
    %cst_412 = arith.constant dense<0.000000e+00> : vector<1x16xf32>
    %395 = tpu.matmul %392, %394, %cst_412 {dimension_numbers = #tpu.dot_dimension_numbers<[1], [0], [0], [1], [0, 0, 1, 1], [], []>} : vector<1x8xf32>, vector<8x16xf32>, vector<1x16xf32> -> vector<1x16xf32>
    %396 = arith.addf %363, %395 : vector<1x16xf32>
    %c0_i32_413 = arith.constant 0 : i32
    %397 = vector.broadcast %c0_i32_413 : i32 to vector<1x1xi32>
    %398 = arith.addi %388, %397 : vector<1x1xi32>
    %399 = vector.broadcast %398 : vector<1x1xi32> to vector<1x16xi32>
    %400 = arith.cmpi eq, %338, %399 : vector<1x16xi32>
    %401 = arith.extui %400 : vector<1x16xi1> to vector<1x16xi32>
    %402 = arith.sitofp %401 : vector<1x16xi32> to vector<1x16xf32>
    %403 = arith.addf %370, %402 : vector<1x16xf32>
    %c1_i32 = arith.constant 1 : i32
    %404 = vector.broadcast %c1_i32 : i32 to vector<1x4xi32>
    %405 = arith.cmpi eq, %339, %404 : vector<1x4xi32>
    %406 = vector.shape_cast %388 : vector<1x1xi32> to vector<1x1xi32>
    %407 = vector.broadcast %406 : vector<1x1xi32> to vector<1x4xi32>
    %408 = arith.select %405, %407, %375 : vector<1x4xi1>, vector<1x4xi32>
    %c2_414 = arith.constant 2 : index
    %c0_415 = arith.constant 0 : index
    %c0_416 = arith.constant 0 : index
    %409 = vector.load %arg24[%c2_414, %c0_415, %c0_416] : memref<4x64x8xbf16, #tpu.memory_space<vmem>>, vector<1x64x8xbf16>
    %410 = vector.shape_cast %409 : vector<1x64x8xbf16> to vector<64x8xbf16>
    %cst_417 = arith.constant dense<0.000000e+00> : vector<1x8xf32>
    %411 = tpu.matmul %329, %410, %cst_417 {dimension_numbers = #tpu.dot_dimension_numbers<[1], [0], [0], [1], [0, 0, 1, 1], [], []>} : vector<1x64xbf16>, vector<64x8xbf16>, vector<1x8xf32> -> vector<1x8xf32>
    %c2_418 = arith.constant 2 : index
    %c0_419 = arith.constant 0 : index
    %412 = vector.load %arg25[%c2_418, %c0_419] : memref<4x8xf32, #tpu.memory_space<vmem>>, vector<1x8xf32>
    %413 = arith.addf %411, %412 : vector<1x8xf32>
    %cst_420 = arith.constant dense<0x7F800000> : vector<1xf32>
    %414 = vector.multi_reduction <minimumf>, %413, %cst_420 [1] : vector<1x8xf32> to vector<1xf32>
    %415 = vector.shape_cast %414 : vector<1xf32> to vector<1x1xf32>
    %416 = vector.broadcast %415 : vector<1x1xf32> to vector<1x8xf32>
    %417 = arith.cmpf oeq, %413, %416 : vector<1x8xf32>
    %c8_i32_421 = arith.constant 8 : i32
    %418 = vector.broadcast %c8_i32_421 : i32 to vector<1x8xi32>
    %419 = arith.select %417, %337, %418 : vector<1x8xi1>, vector<1x8xi32>
    %cst_422 = arith.constant dense<2147483647> : vector<1xi32>
    %420 = vector.multi_reduction <minsi>, %419, %cst_422 [1] : vector<1x8xi32> to vector<1xi32>
    %421 = vector.shape_cast %420 : vector<1xi32> to vector<1x1xi32>
    %422 = vector.broadcast %421 : vector<1x1xi32> to vector<1x8xi32>
    %423 = arith.cmpi eq, %337, %422 : vector<1x8xi32>
    %424 = arith.extui %423 : vector<1x8xi1> to vector<1x8xi32>
    %425 = arith.sitofp %424 : vector<1x8xi32> to vector<1x8xf32>
    %c2_423 = arith.constant 2 : index
    %c0_424 = arith.constant 0 : index
    %c0_425 = arith.constant 0 : index
    %426 = vector.load %arg26[%c2_423, %c0_424, %c0_425] : memref<4x8x16xf32, #tpu.memory_space<vmem>>, vector<1x8x16xf32>
    %427 = vector.shape_cast %426 : vector<1x8x16xf32> to vector<8x16xf32>
    %cst_426 = arith.constant dense<0.000000e+00> : vector<1x16xf32>
    %428 = tpu.matmul %425, %427, %cst_426 {dimension_numbers = #tpu.dot_dimension_numbers<[1], [0], [0], [1], [0, 0, 1, 1], [], []>} : vector<1x8xf32>, vector<8x16xf32>, vector<1x16xf32> -> vector<1x16xf32>
    %429 = arith.addf %396, %428 : vector<1x16xf32>
    %c8_i32_427 = arith.constant 8 : i32
    %430 = vector.broadcast %c8_i32_427 : i32 to vector<1x1xi32>
    %431 = arith.addi %421, %430 : vector<1x1xi32>
    %432 = vector.broadcast %431 : vector<1x1xi32> to vector<1x16xi32>
    %433 = arith.cmpi eq, %338, %432 : vector<1x16xi32>
    %434 = arith.extui %433 : vector<1x16xi1> to vector<1x16xi32>
    %435 = arith.sitofp %434 : vector<1x16xi32> to vector<1x16xf32>
    %436 = arith.addf %403, %435 : vector<1x16xf32>
    %c2_i32 = arith.constant 2 : i32
    %437 = vector.broadcast %c2_i32 : i32 to vector<1x4xi32>
    %438 = arith.cmpi eq, %339, %437 : vector<1x4xi32>
    %439 = vector.shape_cast %421 : vector<1x1xi32> to vector<1x1xi32>
    %440 = vector.broadcast %439 : vector<1x1xi32> to vector<1x4xi32>
    %441 = arith.select %438, %440, %408 : vector<1x4xi1>, vector<1x4xi32>
    %c3_428 = arith.constant 3 : index
    %c0_429 = arith.constant 0 : index
    %c0_430 = arith.constant 0 : index
    %442 = vector.load %arg24[%c3_428, %c0_429, %c0_430] : memref<4x64x8xbf16, #tpu.memory_space<vmem>>, vector<1x64x8xbf16>
    %443 = vector.shape_cast %442 : vector<1x64x8xbf16> to vector<64x8xbf16>
    %cst_431 = arith.constant dense<0.000000e+00> : vector<1x8xf32>
    %444 = tpu.matmul %329, %443, %cst_431 {dimension_numbers = #tpu.dot_dimension_numbers<[1], [0], [0], [1], [0, 0, 1, 1], [], []>} : vector<1x64xbf16>, vector<64x8xbf16>, vector<1x8xf32> -> vector<1x8xf32>
    %c3_432 = arith.constant 3 : index
    %c0_433 = arith.constant 0 : index
    %445 = vector.load %arg25[%c3_432, %c0_433] : memref<4x8xf32, #tpu.memory_space<vmem>>, vector<1x8xf32>
    %446 = arith.addf %444, %445 : vector<1x8xf32>
    %cst_434 = arith.constant dense<0x7F800000> : vector<1xf32>
    %447 = vector.multi_reduction <minimumf>, %446, %cst_434 [1] : vector<1x8xf32> to vector<1xf32>
    %448 = vector.shape_cast %447 : vector<1xf32> to vector<1x1xf32>
    %449 = vector.broadcast %448 : vector<1x1xf32> to vector<1x8xf32>
    %450 = arith.cmpf oeq, %446, %449 : vector<1x8xf32>
    %c8_i32_435 = arith.constant 8 : i32
    %451 = vector.broadcast %c8_i32_435 : i32 to vector<1x8xi32>
    %452 = arith.select %450, %337, %451 : vector<1x8xi1>, vector<1x8xi32>
    %cst_436 = arith.constant dense<2147483647> : vector<1xi32>
    %453 = vector.multi_reduction <minsi>, %452, %cst_436 [1] : vector<1x8xi32> to vector<1xi32>
    %454 = vector.shape_cast %453 : vector<1xi32> to vector<1x1xi32>
    %455 = vector.broadcast %454 : vector<1x1xi32> to vector<1x8xi32>
    %456 = arith.cmpi eq, %337, %455 : vector<1x8xi32>
    %457 = arith.extui %456 : vector<1x8xi1> to vector<1x8xi32>
    %458 = arith.sitofp %457 : vector<1x8xi32> to vector<1x8xf32>
    %c3_437 = arith.constant 3 : index
    %c0_438 = arith.constant 0 : index
    %c0_439 = arith.constant 0 : index
    %459 = vector.load %arg26[%c3_437, %c0_438, %c0_439] : memref<4x8x16xf32, #tpu.memory_space<vmem>>, vector<1x8x16xf32>
    %460 = vector.shape_cast %459 : vector<1x8x16xf32> to vector<8x16xf32>
    %cst_440 = arith.constant dense<0.000000e+00> : vector<1x16xf32>
    %461 = tpu.matmul %458, %460, %cst_440 {dimension_numbers = #tpu.dot_dimension_numbers<[1], [0], [0], [1], [0, 0, 1, 1], [], []>} : vector<1x8xf32>, vector<8x16xf32>, vector<1x16xf32> -> vector<1x16xf32>
    %462 = arith.addf %429, %461 : vector<1x16xf32>
    %c8_i32_441 = arith.constant 8 : i32
    %463 = vector.broadcast %c8_i32_441 : i32 to vector<1x1xi32>
    %464 = arith.addi %454, %463 : vector<1x1xi32>
    %465 = vector.broadcast %464 : vector<1x1xi32> to vector<1x16xi32>
    %466 = arith.cmpi eq, %338, %465 : vector<1x16xi32>
    %467 = arith.extui %466 : vector<1x16xi1> to vector<1x16xi32>
    %468 = arith.sitofp %467 : vector<1x16xi32> to vector<1x16xf32>
    %469 = arith.addf %436, %468 : vector<1x16xf32>
    %c3_i32 = arith.constant 3 : i32
    %470 = vector.broadcast %c3_i32 : i32 to vector<1x4xi32>
    %471 = arith.cmpi eq, %339, %470 : vector<1x4xi32>
    %472 = vector.shape_cast %454 : vector<1x1xi32> to vector<1x1xi32>
    %473 = vector.broadcast %472 : vector<1x1xi32> to vector<1x4xi32>
    %474 = arith.select %471, %473, %441 : vector<1x4xi1>, vector<1x4xi32>
    %c0_442 = arith.constant 0 : index
    %c0_443 = arith.constant 0 : index
    %c0_444 = arith.constant 0 : index
    %475 = vector.load %arg28[%c0_442, %c0_443, %c0_444] : memref<1x1x16xf32, #tpu.memory_space<vmem>>, vector<1x1x16xf32>
    %476 = vector.shape_cast %475 : vector<1x1x16xf32> to vector<1x16xf32>
    %477 = vector.shape_cast %462 : vector<1x16xf32> to vector<1x1x16xf32>
    tpu.vector_store %arg28[%c0_442, %c0_443, %c0_444], %477 {strides = array<i32>} : memref<1x1x16xf32, #tpu.memory_space<vmem>>, vector<1x1x16xf32>,
    %c0_445 = arith.constant 0 : index
    %c0_446 = arith.constant 0 : index
    %c0_447 = arith.constant 0 : index
    %478 = vector.load %arg29[%c0_445, %c0_446, %c0_447] : memref<1x1x4xi32, #tpu.memory_space<vmem>>, vector<1x1x4xi32>
    %479 = vector.shape_cast %478 : vector<1x1x4xi32> to vector<1x4xi32>
    %480 = vector.shape_cast %474 : vector<1x4xi32> to vector<1x1x4xi32>
    tpu.vector_store %arg29[%c0_445, %c0_446, %c0_447], %480 {strides = array<i32>} : memref<1x1x4xi32, #tpu.memory_space<vmem>>, vector<1x1x4xi32>,
    %c0_448 = arith.constant 0 : index
    %c0_449 = arith.constant 0 : index
    %c0_450 = arith.constant 0 : index
    %481 = vector.load %arg31[%c0_448, %c0_449, %c0_450] : memref<1x1x16xf32, #tpu.memory_space<vmem>>, vector<1x1x16xf32>
    %482 = vector.shape_cast %481 : vector<1x1x16xf32> to vector<1x16xf32>
    %483 = vector.shape_cast %469 : vector<1x16xf32> to vector<1x1x16xf32>
    tpu.vector_store %arg31[%c0_448, %c0_449, %c0_450], %483 {strides = array<i32>} : memref<1x1x16xf32, #tpu.memory_space<vmem>>, vector<1x1x16xf32>,
    %484 = arith.subf %333, %462 : vector<1x16xf32>
    %485 = arith.mulf %484, %484 : vector<1x16xf32>
    %cst_451 = arith.constant dense<0.000000e+00> : vector<1xf32>
    %486 = vector.multi_reduction <add>, %485, %cst_451 [1] : vector<1x16xf32> to vector<1xf32>
    %487 = vector.shape_cast %486 : vector<1xf32> to vector<1x1xf32>
    %c0_452 = arith.constant 0 : index
    %c0_453 = arith.constant 0 : index
    %c0_454 = arith.constant 0 : index
    %488 = vector.load %arg30[%c0_452, %c0_453, %c0_454] : memref<1x1x1xf32, #tpu.memory_space<vmem>>, vector<1x1x1xf32>
    %489 = vector.shape_cast %488 : vector<1x1x1xf32> to vector<1x1xf32>
    %490 = vector.shape_cast %487 : vector<1x1xf32> to vector<1x1x1xf32>
    tpu.vector_store %arg30[%c0_452, %c0_453, %c0_454], %490 {strides = array<i32>} : memref<1x1x1xf32, #tpu.memory_space<vmem>>, vector<1x1x1xf32>,
    return
  }
  func.func @transform_0(%arg0: i32) -> (i32, i32, i32) {
    %c0_i32 = arith.constant 0 : i32
    %c0_i32_0 = arith.constant 0 : i32
    %c0_i32_1 = arith.constant 0 : i32
    return %arg0, %c0_i32, %c0_i32_0 : i32, i32, i32
  }
  func.func @transform_1(%arg0: i32) -> (i32, i32) {
    %c0_i32 = arith.constant 0 : i32
    %c0_i32_0 = arith.constant 0 : i32
    %c0_i32_1 = arith.constant 0 : i32
    return %c0_i32, %c0_i32_0 : i32, i32
  }
  func.func @transform_2(%arg0: i32) -> (i32, i32) {
    %c0_i32 = arith.constant 0 : i32
    %c0_i32_0 = arith.constant 0 : i32
    %c0_i32_1 = arith.constant 0 : i32
    return %c0_i32, %c0_i32_0 : i32, i32
  }
  func.func @transform_3(%arg0: i32) -> (i32, i32, i32) {
    %c0_i32 = arith.constant 0 : i32
    %c0_i32_0 = arith.constant 0 : i32
    %c0_i32_1 = arith.constant 0 : i32
    %c0_i32_2 = arith.constant 0 : i32
    return %c0_i32, %c0_i32_0, %c0_i32_1 : i32, i32, i32
  }
  func.func @transform_4(%arg0: i32) -> (i32, i32) {
    %c0_i32 = arith.constant 0 : i32
    %c0_i32_0 = arith.constant 0 : i32
    %c0_i32_1 = arith.constant 0 : i32
    return %c0_i32, %c0_i32_0 : i32, i32
  }
  func.func @transform_5(%arg0: i32) -> (i32, i32, i32) {
    %c0_i32 = arith.constant 0 : i32
    %c0_i32_0 = arith.constant 0 : i32
    %c0_i32_1 = arith.constant 0 : i32
    %c0_i32_2 = arith.constant 0 : i32
    return %c0_i32, %c0_i32_0, %c0_i32_1 : i32, i32, i32
  }
  func.func @transform_6(%arg0: i32) -> (i32, i32, i32) {
    %c0_i32 = arith.constant 0 : i32
    %c0_i32_0 = arith.constant 0 : i32
    %c0_i32_1 = arith.constant 0 : i32
    %c0_i32_2 = arith.constant 0 : i32
    return %c0_i32, %c0_i32_0, %c0_i32_1 : i32, i32, i32
  }
  func.func @transform_7(%arg0: i32) -> (i32, i32) {
    %c0_i32 = arith.constant 0 : i32
    %c0_i32_0 = arith.constant 0 : i32
    %c0_i32_1 = arith.constant 0 : i32
    return %c0_i32, %c0_i32_0 : i32, i32
  }
  func.func @transform_8(%arg0: i32) -> (i32, i32) {
    %c0_i32 = arith.constant 0 : i32
    %c0_i32_0 = arith.constant 0 : i32
    %c0_i32_1 = arith.constant 0 : i32
    return %c0_i32, %c0_i32_0 : i32, i32
  }
  func.func @transform_9(%arg0: i32) -> (i32, i32, i32) {
    %c0_i32 = arith.constant 0 : i32
    %c0_i32_0 = arith.constant 0 : i32
    %c0_i32_1 = arith.constant 0 : i32
    %c0_i32_2 = arith.constant 0 : i32
    return %c0_i32, %c0_i32_0, %c0_i32_1 : i32, i32, i32
  }
  func.func @transform_10(%arg0: i32) -> (i32, i32) {
    %c0_i32 = arith.constant 0 : i32
    %c0_i32_0 = arith.constant 0 : i32
    %c0_i32_1 = arith.constant 0 : i32
    return %c0_i32, %c0_i32_0 : i32, i32
  }
  func.func @transform_11(%arg0: i32) -> (i32, i32, i32) {
    %c0_i32 = arith.constant 0 : i32
    %c0_i32_0 = arith.constant 0 : i32
    %c0_i32_1 = arith.constant 0 : i32
    %c0_i32_2 = arith.constant 0 : i32
    return %c0_i32, %c0_i32_0, %c0_i32_1 : i32, i32, i32
  }
  func.func @transform_12(%arg0: i32) -> (i32, i32, i32) {
    %c0_i32 = arith.constant 0 : i32
    %c0_i32_0 = arith.constant 0 : i32
    %c0_i32_1 = arith.constant 0 : i32
    %c0_i32_2 = arith.constant 0 : i32
    return %c0_i32, %c0_i32_0, %c0_i32_1 : i32, i32, i32
  }
  func.func @transform_13(%arg0: i32) -> (i32, i32) {
    %c0_i32 = arith.constant 0 : i32
    %c0_i32_0 = arith.constant 0 : i32
    %c0_i32_1 = arith.constant 0 : i32
    return %c0_i32, %c0_i32_0 : i32, i32
  }
  func.func @transform_14(%arg0: i32) -> (i32, i32) {
    %c0_i32 = arith.constant 0 : i32
    %c0_i32_0 = arith.constant 0 : i32
    %c0_i32_1 = arith.constant 0 : i32
    return %c0_i32, %c0_i32_0 : i32, i32
  }
  func.func @transform_15(%arg0: i32) -> (i32, i32, i32) {
    %c0_i32 = arith.constant 0 : i32
    %c0_i32_0 = arith.constant 0 : i32
    %c0_i32_1 = arith.constant 0 : i32
    %c0_i32_2 = arith.constant 0 : i32
    return %c0_i32, %c0_i32_0, %c0_i32_1 : i32, i32, i32
  }
  func.func @transform_16(%arg0: i32) -> (i32, i32) {
    %c0_i32 = arith.constant 0 : i32
    %c0_i32_0 = arith.constant 0 : i32
    %c0_i32_1 = arith.constant 0 : i32
    return %c0_i32, %c0_i32_0 : i32, i32
  }
  func.func @transform_17(%arg0: i32) -> (i32, i32, i32) {
    %c0_i32 = arith.constant 0 : i32
    %c0_i32_0 = arith.constant 0 : i32
    %c0_i32_1 = arith.constant 0 : i32
    %c0_i32_2 = arith.constant 0 : i32
    return %c0_i32, %c0_i32_0, %c0_i32_1 : i32, i32, i32
  }
  func.func @transform_18(%arg0: i32) -> (i32, i32, i32) {
    %c0_i32 = arith.constant 0 : i32
    %c0_i32_0 = arith.constant 0 : i32
    %c0_i32_1 = arith.constant 0 : i32
    %c0_i32_2 = arith.constant 0 : i32
    return %c0_i32, %c0_i32_0, %c0_i32_1 : i32, i32, i32
  }
  func.func @transform_19(%arg0: i32) -> (i32, i32, i32) {
    %c0_i32 = arith.constant 0 : i32
    %c0_i32_0 = arith.constant 0 : i32
    %c0_i32_1 = arith.constant 0 : i32
    %c0_i32_2 = arith.constant 0 : i32
    return %c0_i32, %c0_i32_0, %c0_i32_1 : i32, i32, i32
  }
  func.func @transform_20(%arg0: i32) -> (i32, i32) {
    %c0_i32 = arith.constant 0 : i32
    %c0_i32_0 = arith.constant 0 : i32
    %c0_i32_1 = arith.constant 0 : i32
    return %c0_i32, %c0_i32_0 : i32, i32
  }
  func.func @transform_21(%arg0: i32) -> (i32, i32) {
    %c0_i32 = arith.constant 0 : i32
    %c0_i32_0 = arith.constant 0 : i32
    %c0_i32_1 = arith.constant 0 : i32
    return %c0_i32, %c0_i32_0 : i32, i32
  }
  func.func @transform_22(%arg0: i32) -> (i32, i32) {
    %c0_i32 = arith.constant 0 : i32
    %c0_i32_0 = arith.constant 0 : i32
    %c0_i32_1 = arith.constant 0 : i32
    return %c0_i32, %c0_i32_0 : i32, i32
  }
  func.func @transform_23(%arg0: i32) -> (i32, i32, i32) {
    %c0_i32 = arith.constant 0 : i32
    %c0_i32_0 = arith.constant 0 : i32
    %c0_i32_1 = arith.constant 0 : i32
    %c0_i32_2 = arith.constant 0 : i32
    return %c0_i32, %c0_i32_0, %c0_i32_1 : i32, i32, i32
  }
  func.func @transform_24(%arg0: i32) -> (i32, i32) {
    %c0_i32 = arith.constant 0 : i32
    %c0_i32_0 = arith.constant 0 : i32
    %c0_i32_1 = arith.constant 0 : i32
    return %c0_i32, %c0_i32_0 : i32, i32
  }
  func.func @transform_25(%arg0: i32) -> (i32, i32, i32) {
    %c0_i32 = arith.constant 0 : i32
    %c0_i32_0 = arith.constant 0 : i32
    %c0_i32_1 = arith.constant 0 : i32
    %c0_i32_2 = arith.constant 0 : i32
    return %c0_i32, %c0_i32_0, %c0_i32_1 : i32, i32, i32
  }
  func.func @transform_26(%arg0: i32) -> (i32, i32, i32) {
    %c0_i32 = arith.constant 0 : i32
    %c0_i32_0 = arith.constant 0 : i32
    %c0_i32_1 = arith.constant 0 : i32
    return %arg0, %c0_i32, %c0_i32_0 : i32, i32, i32
  }
  func.func @transform_27(%arg0: i32) -> (i32, i32, i32) {
    %c0_i32 = arith.constant 0 : i32
    %c0_i32_0 = arith.constant 0 : i32
    %c0_i32_1 = arith.constant 0 : i32
    return %arg0, %c0_i32, %c0_i32_0 : i32, i32, i32
  }
  func.func @transform_28(%arg0: i32) -> (i32, i32, i32) {
    %c0_i32 = arith.constant 0 : i32
    %c0_i32_0 = arith.constant 0 : i32
    %c0_i32_1 = arith.constant 0 : i32
    return %arg0, %c0_i32, %c0_i32_0 : i32, i32, i32
  }
  func.func @transform_29(%arg0: i32) -> (i32, i32, i32) {
    %c0_i32 = arith.constant 0 : i32
    %c0_i32_0 = arith.constant 0 : i32
    %c0_i32_1 = arith.constant 0 : i32
    return %arg0, %c0_i32, %c0_i32_0 : i32, i32, i32
  }
  func.func @transform_30(%arg0: i32) -> (i32, i32, i32) {
    %c0_i32 = arith.constant 0 : i32
    %c0_i32_0 = arith.constant 0 : i32
    %c0_i32_1 = arith.constant 0 : i32
    return %arg0, %c0_i32, %c0_i32_0 : i32, i32, i32
  }
}

</mosaic_0001>

<llo_original>
// kernel: squeeze.7
$region0: #{squeeze.7}
  %s0 = inlined_call_operand.vmem [shape: s32[2,4], index: 0, kind: input, shape index: {}]
  %s1 = inlined_call_operand.hbm [shape: s32[2,2,2,1], index: 1, kind: output, shape index: {}]
  $region1: #{squeeze.7} parent=0
    #allocation0 [shape = 'u8[2048]{0}', space=vmem, size = 0x800, scoped, tag = 'operand span for operand 1']
    #allocation1 [shape = 's32[1]{0}', space=sflag, size = 0x4, scoped, tag = 'scoped memory for squeeze.7']
    #allocation2 [shape = 'u8[8192]{0}', space=vmem, size = 0x2000, scoped, tag = 'scoped mem for output reshape']
    #allocation3 [shape = 'u8[4096]{0}', space=vmem, size = 0x1000, scoped, tag = 'scoped mem for input reshape']
    %2 = vsyncpa [#allocation1], 0
    %s4 = sshllo.u32 0, 2
    %v5 = vld [vmem:[%s0] sm:%s4]
    %6 = vst [vmem:[#allocation3] sm:%s4] %v5
    %v7 = vld [vmem:[#allocation3] sm:$0x3]
    %vm8 = vcmask 15360
    %9 = vst.msk [vmem:[#allocation2] ss:$8 sm:$0x3] %vm8, %v7
    %v10 = vld [vmem:[#allocation3] sm:$0x3]
    %11 = vrot.lane.b32.xlu0 %v10, 126
    %v12 = vpop.permute.xlu0 %11
    %vm13 = vcmask 15360
    %s14 = scalar_lea.vmem [#allocation2], 1
    %15 = vst.msk [vmem:[%s14] ss:$8 sm:$0x3] %vm13, %v12
    %s17 = sshllo.u32 0, 2
    %v19 = vld [vmem:[#allocation2] sm:%s17]
    %s20 = sshllo.u32 0, 2
    %21 = vst [vmem:[#allocation0] sm:%s20] %v19
    %s22 = scalar_lea.vmem [#allocation2], 8
    %v23 = vld [vmem:[%s22] sm:%s17]
    %s24 = sshllo.u32 0, 2
    %s25 = scalar_lea.vmem [#allocation0], 2
    %26 = vst [vmem:[%s25] sm:%s24] %v23
    %s28 = ssub.s32 64, 64
    %29 = vsyncadd [#allocation1], %s28
    %s31 = sshll.u32 [#allocation0], 4
    %s32 = int_to_ptr.vmem [resolvable:$true] %s31
    %34 = dma.vmem_to_hbm [thread:$0]  %s32, 64, %s1, [#allocation1]
    %35 = dma.done [#allocation1], 64
    %36 = vsyncpa [#allocation1], 1

// kernel: idm_forward.1
$region0: #{idm_forward.1}
  #allocation0 [shape = 'u32[]', space=smem, size = 0x4, offset = 0x4, fixed_abs, tag = 'smem constant byte address 0x4 - core index']
  #allocation1 [shape = 'u32[144,128]{1,0:T(1,128)}', space=vmem, size = 0x12000, scoped, tag = 'internal scratch']
  #allocation2 [shape = 'f32[18,192]{1,0:T(8,128)}', space=vmem, size = 0x6000, scoped, tag = 'scratch operand']
  #allocation3 [shape = 'f32[10,384]{1,0:T(8,128)}', space=vmem, size = 0x6000, scoped, tag = 'scratch operand']
  #allocation4 [shape = 'f32[6,384]{1,0:T(8,128)}', space=vmem, size = 0x3000, scoped, tag = 'scratch operand']
  #allocation5 [shape = 'f32[4,192]{1,0:T(4,128)}', space=vmem, size = 0x1000, scoped, tag = 'scratch operand']
  #allocation6 [shape = 'f32[2,64]{1,0:T(2,128)}', space=vmem, size = 0x400, scoped, tag = 'scratch operand']
  %s0 = inlined_call_operand.smem [shape: u32[31], index: -1, kind: input, shape index: {}]
  %s1 = sld [smem:[%s0]]
  %s2 = scalar_lea.smem %s0, 1
  %s3 = sld [smem:[%s2]]
  %s4 = scalar_lea.smem %s0, 2
  %s5 = sld [smem:[%s4]]
  %s6 = scalar_lea.smem %s0, 3
  %s7 = sld [smem:[%s6]]
  %s8 = scalar_lea.smem %s0, 4
  %s9 = sld [smem:[%s8]]
  %s10 = scalar_lea.smem %s0, 5
  %s11 = sld [smem:[%s10]]
  %s12 = scalar_lea.smem %s0, 6
  %s13 = sld [smem:[%s12]]
  %s14 = scalar_lea.smem %s0, 7
  %s15 = sld [smem:[%s14]]
  %s16 = scalar_lea.smem %s0, 8
  %s17 = sld [smem:[%s16]]
  %s18 = scalar_lea.smem %s0, 9
  %s19 = sld [smem:[%s18]]
  %s20 = scalar_lea.smem %s0, 10
  %s21 = sld [smem:[%s20]]
  %s22 = scalar_lea.smem %s0, 11
  %s23 = sld [smem:[%s22]]
  %s24 = scalar_lea.smem %s0, 12
  %s25 = sld [smem:[%s24]]
  %s26 = scalar_lea.smem %s0, 13
  %s27 = sld [smem:[%s26]]
  %s28 = scalar_lea.smem %s0, 14
  %s29 = sld [smem:[%s28]]
  %s30 = scalar_lea.smem %s0, 15
  %s31 = sld [smem:[%s30]]
  %s32 = scalar_lea.smem %s0, 16
  %s33 = sld [smem:[%s32]]
  %s34 = scalar_lea.smem %s0, 17
  %s35 = sld [smem:[%s34]]
  %s36 = scalar_lea.smem %s0, 18
  %s37 = sld [smem:[%s36]]
  %s38 = scalar_lea.smem %s0, 19
  %s39 = sld [smem:[%s38]]
  %s40 = scalar_lea.smem %s0, 20
  %s41 = sld [smem:[%s40]]
  %s42 = scalar_lea.smem %s0, 21
  %s43 = sld [smem:[%s42]]
  %s44 = scalar_lea.smem %s0, 22
  %s45 = sld [smem:[%s44]]
  %s46 = scalar_lea.smem %s0, 23
  %s47 = sld [smem:[%s46]]
  %s48 = scalar_lea.smem %s0, 24
  %s49 = sld [smem:[%s48]]
  %s50 = scalar_lea.smem %s0, 25
  %s51 = sld [smem:[%s50]]
  %s52 = scalar_lea.smem %s0, 26
  %s53 = sld [smem:[%s52]]
  %s54 = scalar_lea.smem %s0, 27
  %s55 = sld [smem:[%s54]]
  %s56 = scalar_lea.smem %s0, 28
  %s57 = sld [smem:[%s56]]
  %s58 = scalar_lea.smem %s0, 29
  %s59 = sld [smem:[%s58]]
  %s60 = scalar_lea.smem %s0, 30
  %s61 = sld [smem:[%s60]]
  %62 = xla_tuple %s53, %s55, %s57, %s59, %s61
  %s63 = sld [smem:[#allocation0]]
  $region233: #{idm_forward.1} parent=0
    _
  %s65 = ssub.s32 1, %s63
  %s66 = scalar_select 0, %s65, %s63
  $region1: #{idm_forward.1} parent=0
    #allocation7 [shape = 'u8[98304]{0}', space=vmem, size = 0x18000, scoped, tag = 'input window, operand 1, single buffered']
    #allocation8 [shape = 's32[2]{0}', space=sflag, size = 0x8, scoped, tag = 'scoped memory for idm_forward.1']
    #allocation9 [shape = 's32[2]{0}', space=sflag, size = 0x8, scoped, tag = 'scoped memory for idm_forward.1']
    #allocation10 [shape = 'u8[1024]{0}', space=vmem, size = 0x400, scoped, tag = 'input window, operand 2, single buffered']
    #allocation11 [shape = 's32[1]{0}', space=sflag, size = 0x4, scoped, tag = 'scoped memory for idm_forward.1']
    #allocation12 [shape = 'u8[6144]{0}', space=vmem, size = 0x1800, scoped, tag = 'input window, operand 5, single buffered']
    #allocation13 [shape = 'u8[196608]{0}', space=vmem, size = 0x30000, scoped, tag = 'input window, operand 6, single buffered']
    #allocation14 [shape = 's32[1]{0}', space=sflag, size = 0x4, scoped, tag = 'scoped memory for idm_forward.1']
    #allocation15 [shape = 'u8[196608]{0}', space=vmem, size = 0x30000, scoped, tag = 'input window, operand 7, single buffered']
    #allocation16 [shape = 'u8[1024]{0}', space=vmem, size = 0x400, scoped, tag = 'input window, operand 8, single buffered']
    #allocation17 [shape = 's32[1]{0}', space=sflag, size = 0x4, scoped, tag = 'scoped memory for idm_forward.1']
    #allocation18 [shape = 'u8[2048]{0}', space=vmem, size = 0x800, scoped, tag = 'input window, operand 10, single buffered']
    #allocation19 [shape = 'u8[3072]{0}', space=vmem, size = 0xc00, scoped, tag = 'input window, operand 11, single buffered']
    #allocation20 [shape = 's32[1]{0}', space=sflag, size = 0x4, scoped, tag = 'scoped memory for idm_forward.1']
    #allocation21 [shape = 'u8[196608]{0}', space=vmem, size = 0x30000, scoped, tag = 'input window, operand 12, single buffered']
    #allocation22 [shape = 'u8[98304]{0}', space=vmem, size = 0x18000, scoped, tag = 'input window, operand 13, single buffered']
    #allocation23 [shape = 's32[1]{0}', space=sflag, size = 0x4, scoped, tag = 'scoped memory for idm_forward.1']
    #allocation24 [shape = 'u8[512]{0}', space=vmem, size = 0x400, scoped, tag = 'input window, operand 14, single buffered']
    #allocation25 [shape = 'u8[2048]{0}', space=vmem, size = 0x800, scoped, tag = 'input window, operand 16, single buffered']
    #allocation26 [shape = 's32[1]{0}', space=sflag, size = 0x4, scoped, tag = 'scoped memory for idm_forward.1']
    #allocation27 [shape = 'u8[1536]{0}', space=vmem, size = 0x800, scoped, tag = 'input window, operand 17, single buffered']
    #allocation28 [shape = 'u8[32768]{0}', space=vmem, size = 0x8000, scoped, tag = 'input window, operand 19, single buffered']
    #allocation29 [shape = 's32[1]{0}', space=sflag, size = 0x4, scoped, tag = 'scoped memory for idm_forward.1']
    #allocation30 [shape = 'u8[512]{0}', space=vmem, size = 0x400, scoped, tag = 'input window, operand 20, single buffered']
    #allocation31 [shape = 'u8[512]{0}', space=vmem, size = 0x400, scoped, tag = 'input window, operand 22, single buffered']
    #allocation32 [shape = 's32[1]{0}', space=sflag, size = 0x4, scoped, tag = 'scoped memory for idm_forward.1']
    #allocation33 [shape = 'u8[1024]{0}', space=vmem, size = 0x400, scoped, tag = 'output window, operand 0']
    #allocation34 [shape = 'u8[1024]{0}', space=vmem, size = 0x400, scoped, tag = 'output window, operand 1']
    #allocation35 [shape = 's32[2]{0}', space=sflag, size = 0x8, scoped, tag = 'scoped memory for idm_forward.1']
    %67 = vsyncpa [#allocation8], 0
    %68 = vsyncpa [#allocation11], 0
    %69 = vsyncpa [#allocation14], 0
    %70 = vsyncpa [#allocation17], 0
    %71 = vsyncpa [#allocation20], 0
    %72 = vsyncpa [#allocation23], 0
    %73 = vsyncpa [#allocation26], 0
    %74 = vsyncpa [#allocation29], 0
    %75 = vsyncpa [#allocation32], 0
    %76 = vsyncpa [#allocation9], 0
    %s77 = scalar_lea.sflag [#allocation9], 1
    %78 = vsyncpa %s77, 0
    %79 = vsyncpa [#allocation35], 0
    %s80 = scalar_lea.sflag [#allocation35], 1
    %81 = vsyncpa %s80, 0
    loop: start=0, step=1, limit=4
    $region2: #{idm_forward.1} parent=1 // loop_pre_header
      _
    $region3: #{idm_forward.1} parent=1 // loop_header
      %s83 = sphi 0, %s87
      %p84 = scmp.ge.s32.totalorder %s83, 4
      %s93 = sphi 0, %s95
      %s96 = sphi 0, %s93
      %s97 = sphi 0, %s96
      %s113 = sphi 0, %s97
      %s117 = sphi 0, %s117
      %s119 = sphi 0, %s117
      %s120 = sphi 0, %s119
      %s134 = sphi 0, %s120
      %s138 = sphi 0, %s138
      %s140 = sphi 0, %s138
      %s141 = sphi 0, %s140
      %s155 = sphi 0, %s141
      %s159 = sphi 0, %s159
      %s161 = sphi 0, %s159
      %s162 = sphi 0, %s161
      %s176 = sphi 0, %s162
      %s180 = sphi 0, %s180
      %s182 = sphi 0, %s180
      %s183 = sphi 0, %s182
      %s197 = sphi 0, %s183
      %s201 = sphi 0, %s201
      %s203 = sphi 0, %s201
      %s204 = sphi 0, %s203
      %s218 = sphi 0, %s204
      %s222 = sphi 0, %s222
      %s224 = sphi 0, %s222
      %s225 = sphi 0, %s224
      %s239 = sphi 0, %s225
      %s243 = sphi 0, %s243
      %s245 = sphi 0, %s243
      %s246 = sphi 0, %s245
      %s260 = sphi 0, %s246
      %s264 = sphi 0, %s264
      %s266 = sphi 0, %s264
      %s267 = sphi 0, %s266
      %s281 = sphi 0, %s267
      %s285 = sphi 0, %s285
      %s287 = sphi 0, %s285
      %s288 = sphi 0, %s287
      %s302 = sphi 0, %s288
      %s306 = sphi 0, %s306
      %s308 = sphi 0, %s306
      %s309 = sphi 0, %s308
      %s323 = sphi 0, %s309
      %s327 = sphi 0, %s327
      %s329 = sphi 0, %s327
      %s330 = sphi 0, %s329
      %s344 = sphi 0, %s330
      %s348 = sphi 0, %s348
      %s350 = sphi 0, %s348
      %s351 = sphi 0, %s350
      %s365 = sphi 0, %s351
      %s369 = sphi 0, %s369
      %s371 = sphi 0, %s369
      %s372 = sphi 0, %s371
      %s386 = sphi 0, %s372
      %s390 = sphi 0, %s390
      %s392 = sphi 0, %s390
      %s393 = sphi 0, %s392
      %s407 = sphi 0, %s393
      %s411 = sphi 0, %s411
      %s413 = sphi 0, %s411
      %s414 = sphi 0, %s413
      %s428 = sphi 0, %s414
      %s432 = sphi 0, %s432
      %s434 = sphi 0, %s432
      %s435 = sphi 0, %s434
      %s449 = sphi 0, %s435
      %s453 = sphi 0, %s453
      %s455 = sphi 0, %s453
      %s456 = sphi 0, %s455
      %s470 = sphi 0, %s456
      %s474 = sphi 0, %s474
      %s476 = sphi 0, %s474
      %s477 = sphi 0, %s476
      %s491 = sphi 0, %s477
      %s495 = sphi 0, %s495
      %s497 = sphi 0, %s495
      %s498 = sphi 0, %s497
      %s512 = sphi 0, %s498
      %s516 = sphi 0, %s516
      %s518 = sphi 0, %s516
      %s519 = sphi 0, %s518
      %s533 = sphi 0, %s519
      %s537 = sphi 0, %s537
      %s539 = sphi 0, %s537
      %s540 = sphi 0, %s539
      %s554 = sphi 0, %s540
      %s558 = sphi 0, %s558
      %s560 = sphi 0, %s558
      %s561 = sphi 0, %s560
      %s575 = sphi 0, %s561
      %s579 = sphi 0, %s579
      %s581 = sphi 0, %s579
      %s582 = sphi 0, %s581
      %s596 = sphi 0, %s582
      %s600 = sphi 0, %s600
      %s602 = sphi 0, %s600
      %s603 = sphi 0, %s602
      %s617 = sphi 0, %s603
      %s621 = sphi 0, %s621
      %s623 = sphi 0, %s621
      %s624 = sphi 0, %s623
      %s638 = sphi 0, %s624
      %s644 = sphi 0, %s646
      %s647 = sphi 0, %s644
      %s648 = sphi 0, %s647
      %s664 = sphi 0, %s648
      %s670 = sphi 0, %s672
      %s673 = sphi 0, %s670
      %s674 = sphi 0, %s673
      %s690 = sphi 0, %s674
      %s696 = sphi 0, %s698
      %s699 = sphi 0, %s696
      %s700 = sphi 0, %s699
      %s716 = sphi 0, %s700
      %s722 = sphi 0, %s724
      %s725 = sphi 0, %s722
      %s726 = sphi 0, %s725
      %s742 = sphi 0, %s726
      %s748 = sphi 0, %s750
      %s751 = sphi 0, %s748
      %s752 = sphi 0, %s751
      %s768 = sphi 0, %s752
    $region4: #{idm_forward.1} parent=1 // loop_header_branch
      %86 = sbr.rel (%p84) target = $region8
    $region5: #{idm_forward.1} parent=1 // loop_body
      %s88 = ssub.s32 %s83, 1
      %s89 = ssub.s32 %s83, 2
      %s90 = sadd.s32 %s83, 1
      %s91 = ssub.s32 %s83, %s90
      %p92 = scmp.eq.s32.totalorder %s91, 0
      %s94 = sadd.s32 %s93, 1
      %s95 = scalar_select %p92, %s93, %s94
      %p98 = pneg %p92
      %p99 = scmp.eq.s32.totalorder %s83, 1
      %p100 = por %p98, %p99
      %p101 = scmp.ne.s32.totalorder %s93, %s96
      %p102 = scmp.eq.s32.totalorder %s83, 0
      %p103 = por %p101, %p102
      %p104 = scmp.ne.s32.totalorder %s93, %s96
      %p105 = scmp.eq.s32.totalorder %s88, 1
      %p106 = por %p104, %p105
      %p107 = scmp.ne.s32.totalorder %s96, %s97
      %p108 = scmp.eq.s32.totalorder %s88, 0
      %p109 = por %p107, %p108
      %p110 = scmp.ne.s32.totalorder %s96, %s97
      %p111 = scmp.eq.s32.totalorder %s89, 1
      %p112 = por %p110, %p111
      %p114 = scmp.ne.s32.totalorder %s97, %s113
      %p115 = scmp.eq.s32.totalorder %s89, 0
      %p116 = por %p114, %p115
      %s118 = sadd.s32 %s117, 1
      %p121 = scmp.eq.s32.totalorder %s83, 1
      %p122 = scmp.ne.s32.totalorder %s117, %s119
      %p123 = scmp.eq.s32.totalorder %s83, 0
      %p124 = por %p122, %p123
      %p125 = scmp.ne.s32.totalorder %s117, %s119
      %p126 = scmp.eq.s32.totalorder %s88, 1
      %p127 = por %p125, %p126
      %p128 = scmp.ne.s32.totalorder %s119, %s120
      %p129 = scmp.eq.s32.totalorder %s88, 0
      %p130 = por %p128, %p129
      %p131 = scmp.ne.s32.totalorder %s119, %s120
      %p132 = scmp.eq.s32.totalorder %s89, 1
      %p133 = por %p131, %p132
      %p135 = scmp.ne.s32.totalorder %s120, %s134
      %p136 = scmp.eq.s32.totalorder %s89, 0
      %p137 = por %p135, %p136
      %s139 = sadd.s32 %s138, 1
      %p142 = scmp.eq.s32.totalorder %s83, 1
      %p143 = scmp.ne.s32.totalorder %s138, %s140
      %p144 = scmp.eq.s32.totalorder %s83, 0
      %p145 = por %p143, %p144
      %p146 = scmp.ne.s32.totalorder %s138, %s140
      %p147 = scmp.eq.s32.totalorder %s88, 1
      %p148 = por %p146, %p147
      %p149 = scmp.ne.s32.totalorder %s140, %s141
      %p150 = scmp.eq.s32.totalorder %s88, 0
      %p151 = por %p149, %p150
      %p152 = scmp.ne.s32.totalorder %s140, %s141
      %p153 = scmp.eq.s32.totalorder %s89, 1
      %p154 = por %p152, %p153
      %p156 = scmp.ne.s32.totalorder %s141, %s155
      %p157 = scmp.eq.s32.totalorder %s89, 0
      %p158 = por %p156, %p157
      %s160 = sadd.s32 %s159, 1
      %p163 = scmp.eq.s32.totalorder %s83, 1
      %p164 = scmp.ne.s32.totalorder %s159, %s161
      %p165 = scmp.eq.s32.totalorder %s83, 0
      %p166 = por %p164, %p165
      %p167 = scmp.ne.s32.totalorder %s159, %s161
      %p168 = scmp.eq.s32.totalorder %s88, 1
      %p169 = por %p167, %p168
      %p170 = scmp.ne.s32.totalorder %s161, %s162
      %p171 = scmp.eq.s32.totalorder %s88, 0
      %p172 = por %p170, %p171
      %p173 = scmp.ne.s32.totalorder %s161, %s162
      %p174 = scmp.eq.s32.totalorder %s89, 1
      %p175 = por %p173, %p174
      %p177 = scmp.ne.s32.totalorder %s162, %s176
      %p178 = scmp.eq.s32.totalorder %s89, 0
      %p179 = por %p177, %p178
      %s181 = sadd.s32 %s180, 1
      %p184 = scmp.eq.s32.totalorder %s83, 1
      %p185 = scmp.ne.s32.totalorder %s180, %s182
      %p186 = scmp.eq.s32.totalorder %s83, 0
      %p187 = por %p185, %p186
      %p188 = scmp.ne.s32.totalorder %s180, %s182
      %p189 = scmp.eq.s32.totalorder %s88, 1
      %p190 = por %p188, %p189
      %p191 = scmp.ne.s32.totalorder %s182, %s183
      %p192 = scmp.eq.s32.totalorder %s88, 0
      %p193 = por %p191, %p192
      %p194 = scmp.ne.s32.totalorder %s182, %s183
      %p195 = scmp.eq.s32.totalorder %s89, 1
      %p196 = por %p194, %p195
      %p198 = scmp.ne.s32.totalorder %s183, %s197
      %p199 = scmp.eq.s32.totalorder %s89, 0
      %p200 = por %p198, %p199
      %s202 = sadd.s32 %s201, 1
      %p205 = scmp.eq.s32.totalorder %s83, 1
      %p206 = scmp.ne.s32.totalorder %s201, %s203
      %p207 = scmp.eq.s32.totalorder %s83, 0
      %p208 = por %p206, %p207
      %p209 = scmp.ne.s32.totalorder %s201, %s203
      %p210 = scmp.eq.s32.totalorder %s88, 1
      %p211 = por %p209, %p210
      %p212 = scmp.ne.s32.totalorder %s203, %s204
      %p213 = scmp.eq.s32.totalorder %s88, 0
      %p214 = por %p212, %p213
      %p215 = scmp.ne.s32.totalorder %s203, %s204
      %p216 = scmp.eq.s32.totalorder %s89, 1
      %p217 = por %p215, %p216
      %p219 = scmp.ne.s32.totalorder %s204, %s218
      %p220 = scmp.eq.s32.totalorder %s89, 0
      %p221 = por %p219, %p220
      %s223 = sadd.s32 %s222, 1
      %p226 = scmp.eq.s32.totalorder %s83, 1
      %p227 = scmp.ne.s32.totalorder %s222, %s224
      %p228 = scmp.eq.s32.totalorder %s83, 0
      %p229 = por %p227, %p228
      %p230 = scmp.ne.s32.totalorder %s222, %s224
      %p231 = scmp.eq.s32.totalorder %s88, 1
      %p232 = por %p230, %p231
      %p233 = scmp.ne.s32.totalorder %s224, %s225
      %p234 = scmp.eq.s32.totalorder %s88, 0
      %p235 = por %p233, %p234
      %p236 = scmp.ne.s32.totalorder %s224, %s225
      %p237 = scmp.eq.s32.totalorder %s89, 1
      %p238 = por %p236, %p237
      %p240 = scmp.ne.s32.totalorder %s225, %s239
      %p241 = scmp.eq.s32.totalorder %s89, 0
      %p242 = por %p240, %p241
      %s244 = sadd.s32 %s243, 1
      %p247 = scmp.eq.s32.totalorder %s83, 1
      %p248 = scmp.ne.s32.totalorder %s243, %s245
      %p249 = scmp.eq.s32.totalorder %s83, 0
      %p250 = por %p248, %p249
      %p251 = scmp.ne.s32.totalorder %s243, %s245
      %p252 = scmp.eq.s32.totalorder %s88, 1
      %p253 = por %p251, %p252
      %p254 = scmp.ne.s32.totalorder %s245, %s246
      %p255 = scmp.eq.s32.totalorder %s88, 0
      %p256 = por %p254, %p255
      %p257 = scmp.ne.s32.totalorder %s245, %s246
      %p258 = scmp.eq.s32.totalorder %s89, 1
      %p259 = por %p257, %p258
      %p261 = scmp.ne.s32.totalorder %s246, %s260
      %p262 = scmp.eq.s32.totalorder %s89, 0
      %p263 = por %p261, %p262
      %s265 = sadd.s32 %s264, 1
      %p268 = scmp.eq.s32.totalorder %s83, 1
      %p269 = scmp.ne.s32.totalorder %s264, %s266
      %p270 = scmp.eq.s32.totalorder %s83, 0
      %p271 = por %p269, %p270
      %p272 = scmp.ne.s32.totalorder %s264, %s266
      %p273 = scmp.eq.s32.totalorder %s88, 1
      %p274 = por %p272, %p273
      %p275 = scmp.ne.s32.totalorder %s266, %s267
      %p276 = scmp.eq.s32.totalorder %s88, 0
      %p277 = por %p275, %p276
      %p278 = scmp.ne.s32.totalorder %s266, %s267
      %p279 = scmp.eq.s32.totalorder %s89, 1
      %p280 = por %p278, %p279
      %p282 = scmp.ne.s32.totalorder %s267, %s281
      %p283 = scmp.eq.s32.totalorder %s89, 0
      %p284 = por %p282, %p283
      %s286 = sadd.s32 %s285, 1
      %p289 = scmp.eq.s32.totalorder %s83, 1
      %p290 = scmp.ne.s32.totalorder %s285, %s287
      %p291 = scmp.eq.s32.totalorder %s83, 0
      %p292 = por %p290, %p291
      %p293 = scmp.ne.s32.totalorder %s285, %s287
      %p294 = scmp.eq.s32.totalorder %s88, 1
      %p295 = por %p293, %p294
      %p296 = scmp.ne.s32.totalorder %s287, %s288
      %p297 = scmp.eq.s32.totalorder %s88, 0
      %p298 = por %p296, %p297
      %p299 = scmp.ne.s32.totalorder %s287, %s288
      %p300 = scmp.eq.s32.totalorder %s89, 1
      %p301 = por %p299, %p300
      %p303 = scmp.ne.s32.totalorder %s288, %s302
      %p304 = scmp.eq.s32.totalorder %s89, 0
      %p305 = por %p303, %p304
      %s307 = sadd.s32 %s306, 1
      %p310 = scmp.eq.s32.totalorder %s83, 1
      %p311 = scmp.ne.s32.totalorder %s306, %s308
      %p312 = scmp.eq.s32.totalorder %s83, 0
      %p313 = por %p311, %p312
      %p314 = scmp.ne.s32.totalorder %s306, %s308
      %p315 = scmp.eq.s32.totalorder %s88, 1
      %p316 = por %p314, %p315
      %p317 = scmp.ne.s32.totalorder %s308, %s309
      %p318 = scmp.eq.s32.totalorder %s88, 0
      %p319 = por %p317, %p318
      %p320 = scmp.ne.s32.totalorder %s308, %s309
      %p321 = scmp.eq.s32.totalorder %s89, 1
      %p322 = por %p320, %p321
      %p324 = scmp.ne.s32.totalorder %s309, %s323
      %p325 = scmp.eq.s32.totalorder %s89, 0
      %p326 = por %p324, %p325
      %s328 = sadd.s32 %s327, 1
      %p331 = scmp.eq.s32.totalorder %s83, 1
      %p332 = scmp.ne.s32.totalorder %s327, %s329
      %p333 = scmp.eq.s32.totalorder %s83, 0
      %p334 = por %p332, %p333
      %p335 = scmp.ne.s32.totalorder %s327, %s329
      %p336 = scmp.eq.s32.totalorder %s88, 1
      %p337 = por %p335, %p336
      %p338 = scmp.ne.s32.totalorder %s329, %s330
      %p339 = scmp.eq.s32.totalorder %s88, 0
      %p340 = por %p338, %p339
      %p341 = scmp.ne.s32.totalorder %s329, %s330
      %p342 = scmp.eq.s32.totalorder %s89, 1
      %p343 = por %p341, %p342
      %p345 = scmp.ne.s32.totalorder %s330, %s344
      %p346 = scmp.eq.s32.totalorder %s89, 0
      %p347 = por %p345, %p346
      %s349 = sadd.s32 %s348, 1
      %p352 = scmp.eq.s32.totalorder %s83, 1
      %p353 = scmp.ne.s32.totalorder %s348, %s350
      %p354 = scmp.eq.s32.totalorder %s83, 0
      %p355 = por %p353, %p354
      %p356 = scmp.ne.s32.totalorder %s348, %s350
      %p357 = scmp.eq.s32.totalorder %s88, 1
      %p358 = por %p356, %p357
      %p359 = scmp.ne.s32.totalorder %s350, %s351
      %p360 = scmp.eq.s32.totalorder %s88, 0
      %p361 = por %p359, %p360
      %p362 = scmp.ne.s32.totalorder %s350, %s351
      %p363 = scmp.eq.s32.totalorder %s89, 1
      %p364 = por %p362, %p363
      %p366 = scmp.ne.s32.totalorder %s351, %s365
      %p367 = scmp.eq.s32.totalorder %s89, 0
      %p368 = por %p366, %p367
      %s370 = sadd.s32 %s369, 1
      %p373 = scmp.eq.s32.totalorder %s83, 1
      %p374 = scmp.ne.s32.totalorder %s369, %s371
      %p375 = scmp.eq.s32.totalorder %s83, 0
      %p376 = por %p374, %p375
      %p377 = scmp.ne.s32.totalorder %s369, %s371
      %p378 = scmp.eq.s32.totalorder %s88, 1
      %p379 = por %p377, %p378
      %p380 = scmp.ne.s32.totalorder %s371, %s372
      %p381 = scmp.eq.s32.totalorder %s88, 0
      %p382 = por %p380, %p381
      %p383 = scmp.ne.s32.totalorder %s371, %s372
      %p384 = scmp.eq.s32.totalorder %s89, 1
      %p385 = por %p383, %p384
      %p387 = scmp.ne.s32.totalorder %s372, %s386
      %p388 = scmp.eq.s32.totalorder %s89, 0
      %p389 = por %p387, %p388
      %s391 = sadd.s32 %s390, 1
      %p394 = scmp.eq.s32.totalorder %s83, 1
      %p395 = scmp.ne.s32.totalorder %s390, %s392
      %p396 = scmp.eq.s32.totalorder %s83, 0
      %p397 = por %p395, %p396
      %p398 = scmp.ne.s32.totalorder %s390, %s392
      %p399 = scmp.eq.s32.totalorder %s88, 1
      %p400 = por %p398, %p399
      %p401 = scmp.ne.s32.totalorder %s392, %s393
      %p402 = scmp.eq.s32.totalorder %s88, 0
      %p403 = por %p401, %p402
      %p404 = scmp.ne.s32.totalorder %s392, %s393
      %p405 = scmp.eq.s32.totalorder %s89, 1
      %p406 = por %p404, %p405
      %p408 = scmp.ne.s32.totalorder %s393, %s407
      %p409 = scmp.eq.s32.totalorder %s89, 0
      %p410 = por %p408, %p409
      %s412 = sadd.s32 %s411, 1
      %p415 = scmp.eq.s32.totalorder %s83, 1
      %p416 = scmp.ne.s32.totalorder %s411, %s413
      %p417 = scmp.eq.s32.totalorder %s83, 0
      %p418 = por %p416, %p417
      %p419 = scmp.ne.s32.totalorder %s411, %s413
      %p420 = scmp.eq.s32.totalorder %s88, 1
      %p421 = por %p419, %p420
      %p422 = scmp.ne.s32.totalorder %s413, %s414
      %p423 = scmp.eq.s32.totalorder %s88, 0
      %p424 = por %p422, %p423
      %p425 = scmp.ne.s32.totalorder %s413, %s414
      %p426 = scmp.eq.s32.totalorder %s89, 1
      %p427 = por %p425, %p426
      %p429 = scmp.ne.s32.totalorder %s414, %s428
      %p430 = scmp.eq.s32.totalorder %s89, 0
      %p431 = por %p429, %p430
      %s433 = sadd.s32 %s432, 1
      %p436 = scmp.eq.s32.totalorder %s83, 1
      %p437 = scmp.ne.s32.totalorder %s432, %s434
      %p438 = scmp.eq.s32.totalorder %s83, 0
      %p439 = por %p437, %p438
      %p440 = scmp.ne.s32.totalorder %s432, %s434
      %p441 = scmp.eq.s32.totalorder %s88, 1
      %p442 = por %p440, %p441
      %p443 = scmp.ne.s32.totalorder %s434, %s435
      %p444 = scmp.eq.s32.totalorder %s88, 0
      %p445 = por %p443, %p444
      %p446 = scmp.ne.s32.totalorder %s434, %s435
      %p447 = scmp.eq.s32.totalorder %s89, 1
      %p448 = por %p446, %p447
      %p450 = scmp.ne.s32.totalorder %s435, %s449
      %p451 = scmp.eq.s32.totalorder %s89, 0
      %p452 = por %p450, %p451
      %s454 = sadd.s32 %s453, 1
      %p457 = scmp.eq.s32.totalorder %s83, 1
      %p458 = scmp.ne.s32.totalorder %s453, %s455
      %p459 = scmp.eq.s32.totalorder %s83, 0
      %p460 = por %p458, %p459
      %p461 = scmp.ne.s32.totalorder %s453, %s455
      %p462 = scmp.eq.s32.totalorder %s88, 1
      %p463 = por %p461, %p462
      %p464 = scmp.ne.s32.totalorder %s455, %s456
      %p465 = scmp.eq.s32.totalorder %s88, 0
      %p466 = por %p464, %p465
      %p467 = scmp.ne.s32.totalorder %s455, %s456
      %p468 = scmp.eq.s32.totalorder %s89, 1
      %p469 = por %p467, %p468
      %p471 = scmp.ne.s32.totalorder %s456, %s470
      %p472 = scmp.eq.s32.totalorder %s89, 0
      %p473 = por %p471, %p472
      %s475 = sadd.s32 %s474, 1
      %p478 = scmp.eq.s32.totalorder %s83, 1
      %p479 = scmp.ne.s32.totalorder %s474, %s476
      %p480 = scmp.eq.s32.totalorder %s83, 0
      %p481 = por %p479, %p480
      %p482 = scmp.ne.s32.totalorder %s474, %s476
      %p483 = scmp.eq.s32.totalorder %s88, 1
      %p484 = por %p482, %p483
      %p485 = scmp.ne.s32.totalorder %s476, %s477
      %p486 = scmp.eq.s32.totalorder %s88, 0
      %p487 = por %p485, %p486
      %p488 = scmp.ne.s32.totalorder %s476, %s477
      %p489 = scmp.eq.s32.totalorder %s89, 1
      %p490 = por %p488, %p489
      %p492 = scmp.ne.s32.totalorder %s477, %s491
      %p493 = scmp.eq.s32.totalorder %s89, 0
      %p494 = por %p492, %p493
      %s496 = sadd.s32 %s495, 1
      %p499 = scmp.eq.s32.totalorder %s83, 1
      %p500 = scmp.ne.s32.totalorder %s495, %s497
      %p501 = scmp.eq.s32.totalorder %s83, 0
      %p502 = por %p500, %p501
      %p503 = scmp.ne.s32.totalorder %s495, %s497
      %p504 = scmp.eq.s32.totalorder %s88, 1
      %p505 = por %p503, %p504
      %p506 = scmp.ne.s32.totalorder %s497, %s498
      %p507 = scmp.eq.s32.totalorder %s88, 0
      %p508 = por %p506, %p507
      %p509 = scmp.ne.s32.totalorder %s497, %s498
      %p510 = scmp.eq.s32.totalorder %s89, 1
      %p511 = por %p509, %p510
      %p513 = scmp.ne.s32.totalorder %s498, %s512
      %p514 = scmp.eq.s32.totalorder %s89, 0
      %p515 = por %p513, %p514
      %s517 = sadd.s32 %s516, 1
      %p520 = scmp.eq.s32.totalorder %s83, 1
      %p521 = scmp.ne.s32.totalorder %s516, %s518
      %p522 = scmp.eq.s32.totalorder %s83, 0
      %p523 = por %p521, %p522
      %p524 = scmp.ne.s32.totalorder %s516, %s518
      %p525 = scmp.eq.s32.totalorder %s88, 1
      %p526 = por %p524, %p525
      %p527 = scmp.ne.s32.totalorder %s518, %s519
      %p528 = scmp.eq.s32.totalorder %s88, 0
      %p529 = por %p527, %p528
      %p530 = scmp.ne.s32.totalorder %s518, %s519
      %p531 = scmp.eq.s32.totalorder %s89, 1
      %p532 = por %p530, %p531
      %p534 = scmp.ne.s32.totalorder %s519, %s533
      %p535 = scmp.eq.s32.totalorder %s89, 0
      %p536 = por %p534, %p535
      %s538 = sadd.s32 %s537, 1
      %p541 = scmp.eq.s32.totalorder %s83, 1
      %p542 = scmp.ne.s32.totalorder %s537, %s539
      %p543 = scmp.eq.s32.totalorder %s83, 0
      %p544 = por %p542, %p543
      %p545 = scmp.ne.s32.totalorder %s537, %s539
      %p546 = scmp.eq.s32.totalorder %s88, 1
      %p547 = por %p545, %p546
      %p548 = scmp.ne.s32.totalorder %s539, %s540
      %p549 = scmp.eq.s32.totalorder %s88, 0
      %p550 = por %p548, %p549
      %p551 = scmp.ne.s32.totalorder %s539, %s540
      %p552 = scmp.eq.s32.totalorder %s89, 1
      %p553 = por %p551, %p552
      %p555 = scmp.ne.s32.totalorder %s540, %s554
      %p556 = scmp.eq.s32.totalorder %s89, 0
      %p557 = por %p555, %p556
      %s559 = sadd.s32 %s558, 1
      %p562 = scmp.eq.s32.totalorder %s83, 1
      %p563 = scmp.ne.s32.totalorder %s558, %s560
      %p564 = scmp.eq.s32.totalorder %s83, 0
      %p565 = por %p563, %p564
      %p566 = scmp.ne.s32.totalorder %s558, %s560
      %p567 = scmp.eq.s32.totalorder %s88, 1
      %p568 = por %p566, %p567
      %p569 = scmp.ne.s32.totalorder %s560, %s561
      %p570 = scmp.eq.s32.totalorder %s88, 0
      %p571 = por %p569, %p570
      %p572 = scmp.ne.s32.totalorder %s560, %s561
      %p573 = scmp.eq.s32.totalorder %s89, 1
      %p574 = por %p572, %p573
      %p576 = scmp.ne.s32.totalorder %s561, %s575
      %p577 = scmp.eq.s32.totalorder %s89, 0
      %p578 = por %p576, %p577
      %s580 = sadd.s32 %s579, 1
      %p583 = scmp.eq.s32.totalorder %s83, 1
      %p584 = scmp.ne.s32.totalorder %s579, %s581
      %p585 = scmp.eq.s32.totalorder %s83, 0
      %p586 = por %p584, %p585
      %p587 = scmp.ne.s32.totalorder %s579, %s581
      %p588 = scmp.eq.s32.totalorder %s88, 1
      %p589 = por %p587, %p588
      %p590 = scmp.ne.s32.totalorder %s581, %s582
      %p591 = scmp.eq.s32.totalorder %s88, 0
      %p592 = por %p590, %p591
      %p593 = scmp.ne.s32.totalorder %s581, %s582
      %p594 = scmp.eq.s32.totalorder %s89, 1
      %p595 = por %p593, %p594
      %p597 = scmp.ne.s32.totalorder %s582, %s596
      %p598 = scmp.eq.s32.totalorder %s89, 0
      %p599 = por %p597, %p598
      %s601 = sadd.s32 %s600, 1
      %p604 = scmp.eq.s32.totalorder %s83, 1
      %p605 = scmp.ne.s32.totalorder %s600, %s602
      %p606 = scmp.eq.s32.totalorder %s83, 0
      %p607 = por %p605, %p606
      %p608 = scmp.ne.s32.totalorder %s600, %s602
      %p609 = scmp.eq.s32.totalorder %s88, 1
      %p610 = por %p608, %p609
      %p611 = scmp.ne.s32.totalorder %s602, %s603
      %p612 = scmp.eq.s32.totalorder %s88, 0
      %p613 = por %p611, %p612
      %p614 = scmp.ne.s32.totalorder %s602, %s603
      %p615 = scmp.eq.s32.totalorder %s89, 1
      %p616 = por %p614, %p615
      %p618 = scmp.ne.s32.totalorder %s603, %s617
      %p619 = scmp.eq.s32.totalorder %s89, 0
      %p620 = por %p618, %p619
      %s622 = sadd.s32 %s621, 1
      %p625 = scmp.eq.s32.totalorder %s83, 1
      %p626 = scmp.ne.s32.totalorder %s621, %s623
      %p627 = scmp.eq.s32.totalorder %s83, 0
      %p628 = por %p626, %p627
      %p629 = scmp.ne.s32.totalorder %s621, %s623
      %p630 = scmp.eq.s32.totalorder %s88, 1
      %p631 = por %p629, %p630
      %p632 = scmp.ne.s32.totalorder %s623, %s624
      %p633 = scmp.eq.s32.totalorder %s88, 0
      %p634 = por %p632, %p633
      %p635 = scmp.ne.s32.totalorder %s623, %s624
      %p636 = scmp.eq.s32.totalorder %s89, 1
      %p637 = por %p635, %p636
      %p639 = scmp.ne.s32.totalorder %s624, %s638
      %p640 = scmp.eq.s32.totalorder %s89, 0
      %p641 = por %p639, %p640
      %s642 = ssub.s32 %s83, %s90
      %p643 = scmp.eq.s32.totalorder %s642, 0
      %s645 = sadd.s32 %s644, 1
      %s646 = scalar_select %p643, %s644, %s645
      %p649 = pneg %p643
      %p650 = scmp.eq.s32.totalorder %s83, 1
      %p651 = por %p649, %p650
      %p652 = scmp.ne.s32.totalorder %s644, %s647
      %p653 = scmp.eq.s32.totalorder %s83, 0
      %p654 = por %p652, %p653
      %p655 = scmp.ne.s32.totalorder %s644, %s647
      %p656 = scmp.eq.s32.totalorder %s88, 1
      %p657 = por %p655, %p656
      %p658 = scmp.ne.s32.totalorder %s647, %s648
      %p659 = scmp.eq.s32.totalorder %s88, 0
      %p660 = por %p658, %p659
      %p661 = scmp.ne.s32.totalorder %s647, %s648
      %p662 = scmp.eq.s32.totalorder %s89, 1
      %p663 = por %p661, %p662
      %p665 = scmp.ne.s32.totalorder %s648, %s664
      %p666 = scmp.eq.s32.totalorder %s89, 0
      %p667 = por %p665, %p666
      %s668 = ssub.s32 %s83, %s90
      %p669 = scmp.eq.s32.totalorder %s668, 0
      %s671 = sadd.s32 %s670, 1
      %s672 = scalar_select %p669, %s670, %s671
      %p675 = pneg %p669
      %p676 = scmp.eq.s32.totalorder %s83, 1
      %p677 = por %p675, %p676
      %p678 = scmp.ne.s32.totalorder %s670, %s673
      %p679 = scmp.eq.s32.totalorder %s83, 0
      %p680 = por %p678, %p679
      %p681 = scmp.ne.s32.totalorder %s670, %s673
      %p682 = scmp.eq.s32.totalorder %s88, 1
      %p683 = por %p681, %p682
      %p684 = scmp.ne.s32.totalorder %s673, %s674
      %p685 = scmp.eq.s32.totalorder %s88, 0
      %p686 = por %p684, %p685
      %p687 = scmp.ne.s32.totalorder %s673, %s674
      %p688 = scmp.eq.s32.totalorder %s89, 1
      %p689 = por %p687, %p688
      %p691 = scmp.ne.s32.totalorder %s674, %s690
      %p692 = scmp.eq.s32.totalorder %s89, 0
      %p693 = por %p691, %p692
      %s694 = ssub.s32 %s83, %s90
      %p695 = scmp.eq.s32.totalorder %s694, 0
      %s697 = sadd.s32 %s696, 1
      %s698 = scalar_select %p695, %s696, %s697
      %p701 = pneg %p695
      %p702 = scmp.eq.s32.totalorder %s83, 1
      %p703 = por %p701, %p702
      %p704 = scmp.ne.s32.totalorder %s696, %s699
      %p705 = scmp.eq.s32.totalorder %s83, 0
      %p706 = por %p704, %p705
      %p707 = scmp.ne.s32.totalorder %s696, %s699
      %p708 = scmp.eq.s32.totalorder %s88, 1
      %p709 = por %p707, %p708
      %p710 = scmp.ne.s32.totalorder %s699, %s700
      %p711 = scmp.eq.s32.totalorder %s88, 0
      %p712 = por %p710, %p711
      %p713 = scmp.ne.s32.totalorder %s699, %s700
      %p714 = scmp.eq.s32.totalorder %s89, 1
      %p715 = por %p713, %p714
      %p717 = scmp.ne.s32.totalorder %s700, %s716
      %p718 = scmp.eq.s32.totalorder %s89, 0
      %p719 = por %p717, %p718
      %s720 = ssub.s32 %s83, %s90
      %p721 = scmp.eq.s32.totalorder %s720, 0
      %s723 = sadd.s32 %s722, 1
      %s724 = scalar_select %p721, %s722, %s723
      %p727 = pneg %p721
      %p728 = scmp.eq.s32.totalorder %s83, 1
      %p729 = por %p727, %p728
      %p730 = scmp.ne.s32.totalorder %s722, %s725
      %p731 = scmp.eq.s32.totalorder %s83, 0
      %p732 = por %p730, %p731
      %p733 = scmp.ne.s32.totalorder %s722, %s725
      %p734 = scmp.eq.s32.totalorder %s88, 1
      %p735 = por %p733, %p734
      %p736 = scmp.ne.s32.totalorder %s725, %s726
      %p737 = scmp.eq.s32.totalorder %s88, 0
      %p738 = por %p736, %p737
      %p739 = scmp.ne.s32.totalorder %s725, %s726
      %p740 = scmp.eq.s32.totalorder %s89, 1
      %p741 = por %p739, %p740
      %p743 = scmp.ne.s32.totalorder %s726, %s742
      %p744 = scmp.eq.s32.totalorder %s89, 0
      %p745 = por %p743, %p744
      %s746 = ssub.s32 %s83, %s90
      %p747 = scmp.eq.s32.totalorder %s746, 0
      %s749 = sadd.s32 %s748, 1
      %s750 = scalar_select %p747, %s748, %s749
      %p753 = pneg %p747
      %p754 = scmp.eq.s32.totalorder %s83, 1
      %p755 = por %p753, %p754
      %p756 = scmp.ne.s32.totalorder %s748, %s751
      %p757 = scmp.eq.s32.totalorder %s83, 0
      %p758 = por %p756, %p757
      %p759 = scmp.ne.s32.totalorder %s748, %s751
      %p760 = scmp.eq.s32.totalorder %s88, 1
      %p761 = por %p759, %p760
      %p762 = scmp.ne.s32.totalorder %s751, %s752
      %p763 = scmp.eq.s32.totalorder %s88, 0
      %p764 = por %p762, %p763
      %p765 = scmp.ne.s32.totalorder %s751, %s752
      %p766 = scmp.eq.s32.totalorder %s89, 1
      %p767 = por %p765, %p766
      %p769 = scmp.ne.s32.totalorder %s752, %s768
      %p770 = scmp.eq.s32.totalorder %s89, 0
      %p771 = por %p769, %p770
      %p772 = scmp.le.s32.totalorder 1, %s83
      %p773 = scmp.lt.s32.totalorder %s83, 3
      %p774 = pnand %p772, %p773
      %p775 = pneg %p774
      // Predicated region
      $region9: #{idm_forward.1} parent=5 // pred_check
        _
      $region10: #{idm_forward.1} parent=5 // pred_check_branch
        %777 = sbr.rel (%p774) target = $region12
      $region11: #{idm_forward.1} parent=5 // pred_region
        %s778 = ssub.s32 %s83, 1
        // Predicated region
        $region13: #{idm_forward.1} parent=11 // pred_check
          %p779 = pneg %p130
        $region14: #{idm_forward.1} parent=11 // pred_check_branch
          %781 = sbr.rel (%p779) target = $region16
        $region15: #{idm_forward.1} parent=11 // pred_region
          %s783 = ssub.s32 3072, 3072
          %784 = vsyncadd [#allocation8], %s783
          %s785 = sshll.u32 [#allocation7], 4
          %s786 = int_to_ptr.vmem [resolvable:$true] %s785
          %791 = dma.hbm_to_vmem [thread:$0]  %s3, 3072, %s786, [#allocation8], 128, 128, 8
        $region16: #{idm_forward.1} parent=11 // pred_fallthru
          _
        // Predicated region
        $region17: #{idm_forward.1} parent=11 // pred_check
          %p792 = pneg %p151
        $region18: #{idm_forward.1} parent=11 // pred_check_branch
          %794 = sbr.rel (%p792) target = $region20
        $region19: #{idm_forward.1} parent=11 // pred_region
          %s796 = ssub.s32 32, 32
          %797 = vsyncadd [#allocation11], %s796
          %s799 = sshll.u32 [#allocation10], 4
          %s800 = int_to_ptr.vmem [resolvable:$true] %s799
          %802 = dma.hbm_to_vmem [thread:$0]  %s5, 32, %s800, [#allocation11]
        $region20: #{idm_forward.1} parent=11 // pred_fallthru
          _
        // Predicated region
        $region21: #{idm_forward.1} parent=11 // pred_check
          %p803 = pneg %p172
        $region22: #{idm_forward.1} parent=11 // pred_check_branch
          %805 = sbr.rel (%p803) target = $region24
        $region23: #{idm_forward.1} parent=11 // pred_region
          _
        $region24: #{idm_forward.1} parent=11 // pred_fallthru
          _
        // Predicated region
        $region25: #{idm_forward.1} parent=11 // pred_check
          %p806 = pneg %p193
        $region26: #{idm_forward.1} parent=11 // pred_check_branch
          %808 = sbr.rel (%p806) target = $region28
        $region27: #{idm_forward.1} parent=11 // pred_region
          _
        $region28: #{idm_forward.1} parent=11 // pred_fallthru
          _
        // Predicated region
        $region29: #{idm_forward.1} parent=11 // pred_check
          %p809 = pneg %p214
        $region30: #{idm_forward.1} parent=11 // pred_check_branch
          %811 = sbr.rel (%p809) target = $region32
        $region31: #{idm_forward.1} parent=11 // pred_region
          %s813 = ssub.s32 192, 192
          %814 = vsyncadd [#allocation11], %s813
          %s815 = sshll.u32 [#allocation12], 4
          %s816 = int_to_ptr.vmem [resolvable:$true] %s815
          %821 = dma.hbm_to_vmem [thread:$0]  %s11, 192, %s816, [#allocation11], 64, 64, 4
        $region32: #{idm_forward.1} parent=11 // pred_fallthru
          _
        // Predicated region
        $region33: #{idm_forward.1} parent=11 // pred_check
          %p822 = pneg %p235
        $region34: #{idm_forward.1} parent=11 // pred_check_branch
          %824 = sbr.rel (%p822) target = $region36
        $region35: #{idm_forward.1} parent=11 // pred_region
          %s826 = ssub.s32 6144, 6144
          %827 = vsyncadd [#allocation14], %s826
          %s828 = sshll.u32 [#allocation13], 4
          %s829 = int_to_ptr.vmem [resolvable:$true] %s828
          %834 = dma.hbm_to_vmem [thread:$0]  %s13, 6144, %s829, [#allocation14], 64, 64, 4
        $region36: #{idm_forward.1} parent=11 // pred_fallthru
          _
        // Predicated region
        $region37: #{idm_forward.1} parent=11 // pred_check
          %p835 = pneg %p256
        $region38: #{idm_forward.1} parent=11 // pred_check_branch
          %837 = sbr.rel (%p835) target = $region40
        $region39: #{idm_forward.1} parent=11 // pred_region
          %s839 = ssub.s32 6144, 6144
          %840 = vsyncadd [#allocation14], %s839
          %s841 = sshll.u32 [#allocation15], 4
          %s842 = int_to_ptr.vmem [resolvable:$true] %s841
          %847 = dma.hbm_to_vmem [thread:$0]  %s15, 6144, %s842, [#allocation14], 128, 128, 8
        $region40: #{idm_forward.1} parent=11 // pred_fallthru
          _
        // Predicated region
        $region41: #{idm_forward.1} parent=11 // pred_check
          %p848 = pneg %p277
        $region42: #{idm_forward.1} parent=11 // pred_check_branch
          %850 = sbr.rel (%p848) target = $region44
        $region43: #{idm_forward.1} parent=11 // pred_region
          %s852 = ssub.s32 32, 32
          %853 = vsyncadd [#allocation17], %s852
          %s855 = sshll.u32 [#allocation16], 4
          %s856 = int_to_ptr.vmem [resolvable:$true] %s855
          %858 = dma.hbm_to_vmem [thread:$0]  %s17, 32, %s856, [#allocation17]
        $region44: #{idm_forward.1} parent=11 // pred_fallthru
          _
        // Predicated region
        $region45: #{idm_forward.1} parent=11 // pred_check
          %p859 = pneg %p298
        $region46: #{idm_forward.1} parent=11 // pred_check_branch
          %861 = sbr.rel (%p859) target = $region48
        $region47: #{idm_forward.1} parent=11 // pred_region
          _
        $region48: #{idm_forward.1} parent=11 // pred_fallthru
          _
        // Predicated region
        $region49: #{idm_forward.1} parent=11 // pred_check
          %p862 = pneg %p319
        $region50: #{idm_forward.1} parent=11 // pred_check_branch
          %864 = sbr.rel (%p862) target = $region52
        $region51: #{idm_forward.1} parent=11 // pred_region
          %s866 = ssub.s32 64, 64
          %867 = vsyncadd [#allocation17], %s866
          %s869 = sshll.u32 [#allocation18], 4
          %s870 = int_to_ptr.vmem [resolvable:$true] %s869
          %872 = dma.hbm_to_vmem [thread:$0]  %s21, 64, %s870, [#allocation17]
        $region52: #{idm_forward.1} parent=11 // pred_fallthru
          _
        // Predicated region
        $region53: #{idm_forward.1} parent=11 // pred_check
          %p873 = pneg %p340
        $region54: #{idm_forward.1} parent=11 // pred_check_branch
          %875 = sbr.rel (%p873) target = $region56
        $region55: #{idm_forward.1} parent=11 // pred_region
          %s877 = ssub.s32 96, 96
          %878 = vsyncadd [#allocation20], %s877
          %s879 = sshll.u32 [#allocation19], 4
          %s880 = int_to_ptr.vmem [resolvable:$true] %s879
          %885 = dma.hbm_to_vmem [thread:$0]  %s23, 96, %s880, [#allocation20], 32, 32, 2
        $region56: #{idm_forward.1} parent=11 // pred_fallthru
          _
        // Predicated region
        $region57: #{idm_forward.1} parent=11 // pred_check
          %p886 = pneg %p361
        $region58: #{idm_forward.1} parent=11 // pred_check_branch
          %888 = sbr.rel (%p886) target = $region60
        $region59: #{idm_forward.1} parent=11 // pred_region
          %s890 = ssub.s32 6144, 6144
          %891 = vsyncadd [#allocation20], %s890
          %s892 = sshll.u32 [#allocation21], 4
          %s893 = int_to_ptr.vmem [resolvable:$true] %s892
          %898 = dma.hbm_to_vmem [thread:$0]  %s25, 6144, %s893, [#allocation20], 64, 64, 4
        $region60: #{idm_forward.1} parent=11 // pred_fallthru
          _
        // Predicated region
        $region61: #{idm_forward.1} parent=11 // pred_check
          %p899 = pneg %p382
        $region62: #{idm_forward.1} parent=11 // pred_check_branch
          %901 = sbr.rel (%p899) target = $region64
        $region63: #{idm_forward.1} parent=11 // pred_region
          %s903 = ssub.s32 3072, 3072
          %904 = vsyncadd [#allocation23], %s903
          %s905 = sshll.u32 [#allocation22], 4
          %s906 = int_to_ptr.vmem [resolvable:$true] %s905
          %911 = dma.hbm_to_vmem [thread:$0]  %s27, 3072, %s906, [#allocation23], 64, 64, 4
        $region64: #{idm_forward.1} parent=11 // pred_fallthru
          _
        // Predicated region
        $region65: #{idm_forward.1} parent=11 // pred_check
          %p912 = pneg %p403
        $region66: #{idm_forward.1} parent=11 // pred_check_branch
          %914 = sbr.rel (%p912) target = $region68
        $region67: #{idm_forward.1} parent=11 // pred_region
          %s916 = ssub.s32 16, 16
          %917 = vsyncadd [#allocation23], %s916
          %s919 = sshll.u32 [#allocation24], 4
          %s920 = int_to_ptr.vmem [resolvable:$true] %s919
          %922 = dma.hbm_to_vmem [thread:$0]  %s29, 16, %s920, [#allocation23]
        $region68: #{idm_forward.1} parent=11 // pred_fallthru
          _
        // Predicated region
        $region69: #{idm_forward.1} parent=11 // pred_check
          %p923 = pneg %p424
        $region70: #{idm_forward.1} parent=11 // pred_check_branch
          %925 = sbr.rel (%p923) target = $region72
        $region71: #{idm_forward.1} parent=11 // pred_region
          _
        $region72: #{idm_forward.1} parent=11 // pred_fallthru
          _
        // Predicated region
        $region73: #{idm_forward.1} parent=11 // pred_check
          %p926 = pneg %p445
        $region74: #{idm_forward.1} parent=11 // pred_check_branch
          %928 = sbr.rel (%p926) target = $region76
        $region75: #{idm_forward.1} parent=11 // pred_region
          %s930 = ssub.s32 64, 64
          %931 = vsyncadd [#allocation26], %s930
          %s933 = sshll.u32 [#allocation25], 4
          %s934 = int_to_ptr.vmem [resolvable:$true] %s933
          %936 = dma.hbm_to_vmem [thread:$0]  %s33, 64, %s934, [#allocation26]
        $region76: #{idm_forward.1} parent=11 // pred_fallthru
          _
        // Predicated region
        $region77: #{idm_forward.1} parent=11 // pred_check
          %p937 = pneg %p466
        $region78: #{idm_forward.1} parent=11 // pred_check_branch
          %939 = sbr.rel (%p937) target = $region80
        $region79: #{idm_forward.1} parent=11 // pred_region
          %s941 = ssub.s32 48, 48
          %942 = vsyncadd [#allocation26], %s941
          %s943 = sshll.u32 [#allocation27], 4
          %s944 = int_to_ptr.vmem [resolvable:$true] %s943
          %949 = dma.hbm_to_vmem [thread:$0]  %s35, 48, %s944, [#allocation26], 16, 16, 1
        $region80: #{idm_forward.1} parent=11 // pred_fallthru
          _
        // Predicated region
        $region81: #{idm_forward.1} parent=11 // pred_check
          %p950 = pneg %p487
        $region82: #{idm_forward.1} parent=11 // pred_check_branch
          %952 = sbr.rel (%p950) target = $region84
        $region83: #{idm_forward.1} parent=11 // pred_region
          _
        $region84: #{idm_forward.1} parent=11 // pred_fallthru
          _
        // Predicated region
        $region85: #{idm_forward.1} parent=11 // pred_check
          %p953 = pneg %p508
        $region86: #{idm_forward.1} parent=11 // pred_check_branch
          %955 = sbr.rel (%p953) target = $region88
        $region87: #{idm_forward.1} parent=11 // pred_region
          %s957 = ssub.s32 1024, 1024
          %958 = vsyncadd [#allocation29], %s957
          %s959 = sshll.u32 [#allocation28], 4
          %s960 = int_to_ptr.vmem [resolvable:$true] %s959
          %965 = dma.hbm_to_vmem [thread:$0]  %s39, 1024, %s960, [#allocation29], 64, 64, 4
        $region88: #{idm_forward.1} parent=11 // pred_fallthru
          _
        // Predicated region
        $region89: #{idm_forward.1} parent=11 // pred_check
          %p966 = pneg %p529
        $region90: #{idm_forward.1} parent=11 // pred_check_branch
          %968 = sbr.rel (%p966) target = $region92
        $region91: #{idm_forward.1} parent=11 // pred_region
          %s970 = ssub.s32 16, 16
          %971 = vsyncadd [#allocation29], %s970
          %s973 = sshll.u32 [#allocation30], 4
          %s974 = int_to_ptr.vmem [resolvable:$true] %s973
          %976 = dma.hbm_to_vmem [thread:$0]  %s41, 16, %s974, [#allocation29]
        $region92: #{idm_forward.1} parent=11 // pred_fallthru
          _
        // Predicated region
        $region93: #{idm_forward.1} parent=11 // pred_check
          %p977 = pneg %p550
        $region94: #{idm_forward.1} parent=11 // pred_check_branch
          %979 = sbr.rel (%p977) target = $region96
        $region95: #{idm_forward.1} parent=11 // pred_region
          _
        $region96: #{idm_forward.1} parent=11 // pred_fallthru
          _
        // Predicated region
        $region97: #{idm_forward.1} parent=11 // pred_check
          %p980 = pneg %p571
        $region98: #{idm_forward.1} parent=11 // pred_check_branch
          %982 = sbr.rel (%p980) target = $region100
        $region99: #{idm_forward.1} parent=11 // pred_region
          %s984 = ssub.s32 16, 16
          %985 = vsyncadd [#allocation32], %s984
          %s987 = sshll.u32 [#allocation31], 4
          %s988 = int_to_ptr.vmem [resolvable:$true] %s987
          %990 = dma.hbm_to_vmem [thread:$0]  %s45, 16, %s988, [#allocation32]
        $region100: #{idm_forward.1} parent=11 // pred_fallthru
          _
        // Predicated region
        $region101: #{idm_forward.1} parent=11 // pred_check
          %p991 = pneg %p592
        $region102: #{idm_forward.1} parent=11 // pred_check_branch
          %993 = sbr.rel (%p991) target = $region104
        $region103: #{idm_forward.1} parent=11 // pred_region
          _
        $region104: #{idm_forward.1} parent=11 // pred_fallthru
          _
        // Predicated region
        $region105: #{idm_forward.1} parent=11 // pred_check
          %p994 = pneg %p613
        $region106: #{idm_forward.1} parent=11 // pred_check_branch
          %996 = sbr.rel (%p994) target = $region108
        $region107: #{idm_forward.1} parent=11 // pred_region
          _
        $region108: #{idm_forward.1} parent=11 // pred_fallthru
          _
        // Predicated region
        $region109: #{idm_forward.1} parent=11 // pred_check
          %p997 = pneg %p634
        $region110: #{idm_forward.1} parent=11 // pred_check_branch
          %999 = sbr.rel (%p997) target = $region112
        $region111: #{idm_forward.1} parent=11 // pred_region
          _
        $region112: #{idm_forward.1} parent=11 // pred_fallthru
          _
      $region12: #{idm_forward.1} parent=5 // pred_fallthru
        _
      %p1000 = scmp.lt.s32.totalorder %s83, 2
      // Predicated region
      $region113: #{idm_forward.1} parent=5 // pred_check
        %p1001 = pneg %p1000
      $region114: #{idm_forward.1} parent=5 // pred_check_branch
        %1003 = sbr.rel (%p1001) target = $region116
      $region115: #{idm_forward.1} parent=5 // pred_region
        // Predicated region
        $region117: #{idm_forward.1} parent=115 // pred_check
          %p1004 = pneg %p103
        $region118: #{idm_forward.1} parent=115 // pred_check_branch
          %1006 = sbr.rel (%p1004) target = $region120
        $region119: #{idm_forward.1} parent=115 // pred_region
          %p1007 = scmp.lt.s32.totalorder %s83, 1
          %s1008 = scalar_select %p1007, %s83, 1
          %s1009 = smul.addr %s1008, 2
          %s1010 = smul.addr %s1009, 8
          %s1011 = scalar_lea.vmem %s1, %s1010
        $region120: #{idm_forward.1} parent=115 // pred_fallthru
          _
      $region116: #{idm_forward.1} parent=5 // pred_fallthru
        _
      %p1012 = scmp.le.s32.totalorder 1, %s83
      %p1013 = scmp.lt.s32.totalorder %s83, 3
      %p1014 = pnand %p1012, %p1013
      %p1015 = pneg %p1014
      // Predicated region
      $region121: #{idm_forward.1} parent=5 // pred_check
        _
      $region122: #{idm_forward.1} parent=5 // pred_check_branch
        %1017 = sbr.rel (%p1014) target = $region124
      $region123: #{idm_forward.1} parent=5 // pred_region
        %s1018 = ssub.s32 %s83, 1
        // Predicated region
        $region125: #{idm_forward.1} parent=123 // pred_check
          %p1019 = pneg %p130
        $region126: #{idm_forward.1} parent=123 // pred_check_branch
          %1021 = sbr.rel (%p1019) target = $region128
        $region127: #{idm_forward.1} parent=123 // pred_region
          %1022 = dma.done [#allocation8], 3072
        $region128: #{idm_forward.1} parent=123 // pred_fallthru
          _
        // Predicated region
        $region129: #{idm_forward.1} parent=123 // pred_check
          %p1023 = pneg %p151
        $region130: #{idm_forward.1} parent=123 // pred_check_branch
          %1025 = sbr.rel (%p1023) target = $region132
        $region131: #{idm_forward.1} parent=123 // pred_region
          %1026 = dma.done [#allocation11], 32
        $region132: #{idm_forward.1} parent=123 // pred_fallthru
          _
        // Predicated region
        $region133: #{idm_forward.1} parent=123 // pred_check
          %p1027 = pneg %p214
        $region134: #{idm_forward.1} parent=123 // pred_check_branch
          %1029 = sbr.rel (%p1027) target = $region136
        $region135: #{idm_forward.1} parent=123 // pred_region
          %1030 = dma.done [#allocation11], 192
        $region136: #{idm_forward.1} parent=123 // pred_fallthru
          _
        // Predicated region
        $region137: #{idm_forward.1} parent=123 // pred_check
          %p1031 = pneg %p235
        $region138: #{idm_forward.1} parent=123 // pred_check_branch
          %1033 = sbr.rel (%p1031) target = $region140
        $region139: #{idm_forward.1} parent=123 // pred_region
          %1034 = dma.done [#allocation14], 6144
        $region140: #{idm_forward.1} parent=123 // pred_fallthru
          _
        // Predicated region
        $region141: #{idm_forward.1} parent=123 // pred_check
          %p1035 = pneg %p256
        $region142: #{idm_forward.1} parent=123 // pred_check_branch
          %1037 = sbr.rel (%p1035) target = $region144
        $region143: #{idm_forward.1} parent=123 // pred_region
          %1038 = dma.done [#allocation14], 6144
        $region144: #{idm_forward.1} parent=123 // pred_fallthru
          _
        // Predicated region
        $region145: #{idm_forward.1} parent=123 // pred_check
          %p1039 = pneg %p277
        $region146: #{idm_forward.1} parent=123 // pred_check_branch
          %1041 = sbr.rel (%p1039) target = $region148
        $region147: #{idm_forward.1} parent=123 // pred_region
          %1042 = dma.done [#allocation17], 32
        $region148: #{idm_forward.1} parent=123 // pred_fallthru
          _
        // Predicated region
        $region149: #{idm_forward.1} parent=123 // pred_check
          %p1043 = pneg %p319
        $region150: #{idm_forward.1} parent=123 // pred_check_branch
          %1045 = sbr.rel (%p1043) target = $region152
        $region151: #{idm_forward.1} parent=123 // pred_region
          %1046 = dma.done [#allocation17], 64
        $region152: #{idm_forward.1} parent=123 // pred_fallthru
          _
        // Predicated region
        $region153: #{idm_forward.1} parent=123 // pred_check
          %p1047 = pneg %p340
        $region154: #{idm_forward.1} parent=123 // pred_check_branch
          %1049 = sbr.rel (%p1047) target = $region156
        $region155: #{idm_forward.1} parent=123 // pred_region
          %1050 = dma.done [#allocation20], 96
        $region156: #{idm_forward.1} parent=123 // pred_fallthru
          _
        // Predicated region
        $region157: #{idm_forward.1} parent=123 // pred_check
          %p1051 = pneg %p361
        $region158: #{idm_forward.1} parent=123 // pred_check_branch
          %1053 = sbr.rel (%p1051) target = $region160
        $region159: #{idm_forward.1} parent=123 // pred_region
          %1054 = dma.done [#allocation20], 6144
        $region160: #{idm_forward.1} parent=123 // pred_fallthru
          _
        // Predicated region
        $region161: #{idm_forward.1} parent=123 // pred_check
          %p1055 = pneg %p382
        $region162: #{idm_forward.1} parent=123 // pred_check_branch
          %1057 = sbr.rel (%p1055) target = $region164
        $region163: #{idm_forward.1} parent=123 // pred_region
          %1058 = dma.done [#allocation23], 3072
        $region164: #{idm_forward.1} parent=123 // pred_fallthru
          _
        // Predicated region
        $region165: #{idm_forward.1} parent=123 // pred_check
          %p1059 = pneg %p403
        $region166: #{idm_forward.1} parent=123 // pred_check_branch
          %1061 = sbr.rel (%p1059) target = $region168
        $region167: #{idm_forward.1} parent=123 // pred_region
          %1062 = dma.done [#allocation23], 16
        $region168: #{idm_forward.1} parent=123 // pred_fallthru
          _
        // Predicated region
        $region169: #{idm_forward.1} parent=123 // pred_check
          %p1063 = pneg %p445
        $region170: #{idm_forward.1} parent=123 // pred_check_branch
          %1065 = sbr.rel (%p1063) target = $region172
        $region171: #{idm_forward.1} parent=123 // pred_region
          %1066 = dma.done [#allocation26], 64
        $region172: #{idm_forward.1} parent=123 // pred_fallthru
          _
        // Predicated region
        $region173: #{idm_forward.1} parent=123 // pred_check
          %p1067 = pneg %p466
        $region174: #{idm_forward.1} parent=123 // pred_check_branch
          %1069 = sbr.rel (%p1067) target = $region176
        $region175: #{idm_forward.1} parent=123 // pred_region
          %1070 = dma.done [#allocation26], 48
        $region176: #{idm_forward.1} parent=123 // pred_fallthru
          _
        // Predicated region
        $region177: #{idm_forward.1} parent=123 // pred_check
          %p1071 = pneg %p508
        $region178: #{idm_forward.1} parent=123 // pred_check_branch
          %1073 = sbr.rel (%p1071) target = $region180
        $region179: #{idm_forward.1} parent=123 // pred_region
          %1074 = dma.done [#allocation29], 1024
        $region180: #{idm_forward.1} parent=123 // pred_fallthru
          _
        // Predicated region
        $region181: #{idm_forward.1} parent=123 // pred_check
          %p1075 = pneg %p529
        $region182: #{idm_forward.1} parent=123 // pred_check_branch
          %1077 = sbr.rel (%p1075) target = $region184
        $region183: #{idm_forward.1} parent=123 // pred_region
          %1078 = dma.done [#allocation29], 16
        $region184: #{idm_forward.1} parent=123 // pred_fallthru
          _
        // Predicated region
        $region185: #{idm_forward.1} parent=123 // pred_check
          %p1079 = pneg %p571
        $region186: #{idm_forward.1} parent=123 // pred_check_branch
          %1081 = sbr.rel (%p1079) target = $region188
        $region187: #{idm_forward.1} parent=123 // pred_region
          %1082 = dma.done [#allocation32], 16
        $region188: #{idm_forward.1} parent=123 // pred_fallthru
          _
        %p1083 = scmp.lt.s32.totalorder %s88, 1
        %s1084 = scalar_select %p1083, %s88, 1
        %s1085 = smul.addr %s1084, 2
        %s1086 = smul.addr %s1085, 8
        %s1087 = scalar_lea.vmem %s1, %s1086
        %p1088 = pneg %p109
        %p1089 = pneg %p106
        %p1090 = pneg %p130
        %p1091 = pneg %p127
        %p1092 = pneg %p151
        %p1093 = pneg %p148
        %p1094 = pneg %p172
        %p1095 = pneg %p169
        %p1096 = pneg %p193
        %p1097 = pneg %p190
        %p1098 = pneg %p214
        %p1099 = pneg %p211
        %p1100 = pneg %p235
        %p1101 = pneg %p232
        %p1102 = pneg %p256
        %p1103 = pneg %p253
        %p1104 = pneg %p277
        %p1105 = pneg %p274
        %p1106 = pneg %p298
        %p1107 = pneg %p295
        %p1108 = pneg %p319
        %p1109 = pneg %p316
        %p1110 = pneg %p340
        %p1111 = pneg %p337
        %p1112 = pneg %p361
        %p1113 = pneg %p358
        %p1114 = pneg %p382
        %p1115 = pneg %p379
        %p1116 = pneg %p403
        %p1117 = pneg %p400
        %p1118 = pneg %p424
        %p1119 = pneg %p421
        %p1120 = pneg %p445
        %p1121 = pneg %p442
        %p1122 = pneg %p466
        %p1123 = pneg %p463
        %p1124 = pneg %p487
        %p1125 = pneg %p484
        %p1126 = pneg %p508
        %p1127 = pneg %p505
        %p1128 = pneg %p529
        %p1129 = pneg %p526
        %p1130 = pneg %p550
        %p1131 = pneg %p547
        %p1132 = pneg %p571
        %p1133 = pneg %p568
        %p1134 = pneg %p592
        %p1135 = pneg %p589
        %p1136 = pneg %p613
        %p1137 = pneg %p610
        %p1138 = pneg %p634
        %p1139 = pneg %p631
        %p1140 = pneg %p660
        %p1141 = pneg %p657
        %s1142 = sand.u32 %s647, 1
        %s1143 = scalar_lea.sflag [#allocation9], %s1142
        %s1144 = sand.u32 %s647, 1
        %s1145 = scalar_lea.vmem [#allocation33], %s1144
        %p1146 = pneg %p686
        %p1147 = pneg %p683
        %s1148 = sand.u32 %s673, 1
        %s1149 = scalar_lea.sflag [#allocation35], %s1148
        %s1150 = sand.u32 %s673, 1
        %s1151 = scalar_lea.vmem [#allocation34], %s1150
        %p1152 = pneg %p712
        %p1153 = pneg %p709
        %p1154 = scmp.lt.s32.totalorder %s88, 1
        %s1155 = scalar_select %p1154, %s88, 1
        %s1156 = scalar_lea.vmem %s57, %s1155
        %p1157 = pneg %p738
        %p1158 = pneg %p735
        %p1159 = scmp.lt.s32.totalorder %s88, 1
        %s1160 = scalar_select %p1159, %s88, 1
        %s1161 = scalar_lea.vmem %s59, %s1160
        %p1162 = pneg %p764
        %p1163 = pneg %p761
        %p1164 = scmp.lt.s32.totalorder %s88, 1
        %s1165 = scalar_select %p1164, %s88, 1
        %s1166 = scalar_lea.vmem %s61, %s1165
        %p1167 = scmp.lt.s32.totalorder %s88, 1
        %s1168 = scalar_select %p1167, %s88, 1
        %s1169 = smul.addr %s1168, 2
        %s1170 = smul.addr %s1169, 8
        %s1171 = scalar_lea.vmem %s1, %s1170
        %p1172 = scmp.lt.s32.totalorder %s88, 1
        %s1173 = scalar_select %p1172, %s88, 1
        %s1174 = scalar_lea.vmem %s57, %s1173
        %p1175 = scmp.lt.s32.totalorder %s88, 1
        %s1176 = scalar_select %p1175, %s88, 1
        %s1177 = scalar_lea.vmem %s59, %s1176
        %p1178 = scmp.lt.s32.totalorder %s88, 1
        %s1179 = scalar_select %p1178, %s88, 1
        %s1180 = scalar_lea.vmem %s61, %s1179
        %v1182 = vld [vmem:[%s1171] sm:$0xff]
        %v1183 = vld [vmem:[%s1171 + $0x8] sm:$0xff]
        %v1184 = vld [vmem:[#allocation7] sm:$0xff]
        %v1185 = vld [vmem:[#allocation7 + $0x8] sm:$0xff]
        %v1186 = vld [vmem:[#allocation7 + $0x10] sm:$0xff]
        %v1187 = vld [vmem:[#allocation7 + $0x18] sm:$0xff]
        %v1188 = vld [vmem:[#allocation7 + $0x20] sm:$0xff]
        %v1189 = vld [vmem:[#allocation7 + $0x28] sm:$0xff]
        %v1190 = vld [vmem:[#allocation7 + $0x30] sm:$0xff]
        %v1191 = vld [vmem:[#allocation7 + $0x38] sm:$0xff]
        %v1192 = vld [vmem:[#allocation7 + $0x40] sm:$0xff]
        %v1193 = vld [vmem:[#allocation7 + $0x48] sm:$0xff]
        %v1194 = vld [vmem:[#allocation7 + $0x50] sm:$0xff]
        %v1195 = vld [vmem:[#allocation7 + $0x58] sm:$0xff]
        %v1196 = vld [vmem:[#allocation7 + $0x60] sm:$0xff]
        %v1197 = vld [vmem:[#allocation7 + $0x68] sm:$0xff]
        %v1198 = vld [vmem:[#allocation7 + $0x70] sm:$0xff]
        %v1199 = vld [vmem:[#allocation7 + $0x78] sm:$0xff]
        %v1200 = vld [vmem:[#allocation7 + $0x80] sm:$0xff]
        %v1201 = vld [vmem:[#allocation7 + $0x88] sm:$0xff]
        %v1202 = vld [vmem:[#allocation7 + $0x90] sm:$0xff]
        %v1203 = vld [vmem:[#allocation7 + $0x98] sm:$0xff]
        %v1204 = vld [vmem:[#allocation7 + $0xa0] sm:$0xff]
        %v1205 = vld [vmem:[#allocation7 + $0xa8] sm:$0xff]
        %v1206 = vld [vmem:[#allocation7 + $0xb0] sm:$0xff]
        %v1207 = vld [vmem:[#allocation7 + $0xb8] sm:$0xff]
        %v1208 = vld [vmem:[#allocation10] sm:$0x3]
        %vm1211 = vcmask 1041408
        %v1212 = vrot.slane %v1182, 6
        %v1213 = vrot.slane %v1183, 6
        %v1214 = vsel %vm1211, %v1212, %v1213
        %vm1218 = vcmask 523266
        %1219 = vst.msk [vmem:[#allocation2] sm:$0xfc] %vm1218, %v1212
        %vm1220 = vcmask 523264
        %1221 = vst.msk [vmem:[#allocation2 + $0x10] sm:$0xff] %vm1220, %v1214
        %vm1222 = vcmask 517120
        %1223 = vst.msk [vmem:[#allocation2 + $0x20] sm:$0x3] %vm1222, %v1213
        %vm1224 = vcmask 1040384
        %v1225 = vrot.slane %v1182, 7
        %v1226 = vrot.slane %v1183, 7
        %v1227 = vsel %vm1224, %v1225, %v1226
        %1228 = vrot.lane.b32.xlu0 %v1225, 64
        %v1229 = vpop.permute.xlu0 %1228
        %1230 = vrot.lane.b32.xlu0 %v1227, 64
        %v1231 = vpop.permute.xlu0 %1230
        %1232 = vrot.lane.b32.xlu0 %v1226, 64
        %v1233 = vpop.permute.xlu0 %1232
        %vm1237 = vcmask 1048065
        %1238 = vst.msk [vmem:[#allocation2] sm:$0xfe] %vm1237, %v1229
        %vm1239 = vcmask 1048064
        %1240 = vst.msk [vmem:[#allocation2 + $0x10] sm:$0xff] %vm1239, %v1231
        %vm1241 = vcmask 1040896
        %1242 = vst.msk [vmem:[#allocation2 + $0x20] sm:$0x1] %vm1241, %v1233
        %1243 = vst.msk [vmem:[#allocation2 + $0x8] sm:$0xff] %vm1220, %v1182
        %1244 = vst.msk [vmem:[#allocation2 + $0x18] sm:$0xff] %vm1220, %v1183
        %vm1245 = vcmask 516096
        %1246 = vst.msk [vmem:[#allocation2 + $0x1] sm:$0x1] %vm1245, 0.0
        %1247 = vst.msk [vmem:[#allocation2 + $0x28] sm:$0x1] %vm1245, 0.0
        %v1248 = vld [vmem:[#allocation2] sm:$0xfe]
        %v1249 = vld [vmem:[#allocation2 + $0x8] sm:$0xfe]
        %v1250 = vld [vmem:[#allocation2 + $0x10] sm:$0xff]
        %v1251 = vld [vmem:[#allocation2 + $0x18] sm:$0xff]
        %v1252 = vld [vmem:[#allocation2 + $0x20] sm:$0x1]
        %v1253 = vld [vmem:[#allocation2 + $0x28] sm:$0x1]
        %v1254 = vpack.c.bf16 %v1250, %v1248
        %v1255 = vpack.c.bf16 %v1251, %v1249
        %v1256 = vpack.c.bf16 %v1252, %v1252
        %v1257 = vpack.c.bf16 %v1253, %v1253
        %v1259 = vlaneseq
        %v1260 = vshrl.u32 %v1259, 7
        %v1261 = vsub.s32 0, %v1260
        %v1262 = vrot.slane %v1208, %v1261
        %v1263 = vlaneseq
        %v1264 = vshrl.u32 %v1263, 7
        %v1265 = vsub.s32 1, %v1264
        %v1266 = vrot.slane %v1208, %v1265
        %vm1269 = vsmask.f32 7424
        %v1271 = vshrl.u32 %v1254, 16
        %v1273 = vshll.u32 %v1254, 16
        %v1275 = vrot.slane %v1273, 1
        %v1276 = vor.u32 %v1271, %v1275
        %v1278 = vshll.u32 %v1256, 16
        %v1280 = vrot.slane %v1278, 1
        %v1281 = vsel %vm1269, %v1276, %v1280
        %v1283 = vshrl.u32 %v1255, 16
        %v1285 = vshll.u32 %v1255, 16
        %v1287 = vrot.slane %v1285, 1
        %v1288 = vor.u32 %v1283, %v1287
        %v1290 = vshll.u32 %v1257, 16
        %v1292 = vrot.slane %v1290, 1
        %v1293 = vsel %vm1269, %v1288, %v1292
        %v1319 = vunpack.c.l.b16 %v1184
        %v1320 = vunpack.c.h.b16 %v1184
        %v1321 = vunpack.c.l.b16 %v1185
        %v1322 = vunpack.c.h.b16 %v1185
        %v1323 = vunpack.c.l.b16 %v1186
        %v1324 = vunpack.c.h.b16 %v1186
        %v1325 = vunpack.c.l.b16 %v1187
        %v1326 = vunpack.c.h.b16 %v1187
        %v1327 = vunpack.c.l.b16 %v1188
        %v1328 = vunpack.c.h.b16 %v1188
        %v1329 = vunpack.c.l.b16 %v1189
        %v1330 = vunpack.c.h.b16 %v1189
        %v1331 = vunpack.c.l.b16 %v1190
        %v1332 = vunpack.c.h.b16 %v1190
        %v1333 = vunpack.c.l.b16 %v1191
        %v1334 = vunpack.c.h.b16 %v1191
        %v1335 = vunpack.c.l.b16 %v1192
        %v1336 = vunpack.c.h.b16 %v1192
        %v1337 = vunpack.c.l.b16 %v1193
        %v1338 = vunpack.c.h.b16 %v1193
        %v1339 = vunpack.c.l.b16 %v1194
        %v1340 = vunpack.c.h.b16 %v1194
        %v1341 = vunpack.c.l.b16 %v1195
        %v1342 = vunpack.c.h.b16 %v1195
        %v1343 = vunpack.c.l.b16 %v1196
        %v1344 = vunpack.c.h.b16 %v1196
        %v1345 = vunpack.c.l.b16 %v1197
        %v1346 = vunpack.c.h.b16 %v1197
        %v1347 = vunpack.c.l.b16 %v1198
        %v1348 = vunpack.c.h.b16 %v1198
        %v1349 = vunpack.c.l.b16 %v1199
        %v1350 = vunpack.c.h.b16 %v1199
        %v1351 = vunpack.c.l.b16 %v1200
        %v1352 = vunpack.c.h.b16 %v1200
        %v1353 = vunpack.c.l.b16 %v1201
        %v1354 = vunpack.c.h.b16 %v1201
        %v1355 = vunpack.c.l.b16 %v1202
        %v1356 = vunpack.c.h.b16 %v1202
        %v1357 = vunpack.c.l.b16 %v1203
        %v1358 = vunpack.c.h.b16 %v1203
        %v1359 = vunpack.c.l.b16 %v1204
        %v1360 = vunpack.c.h.b16 %v1204
        %v1361 = vunpack.c.l.b16 %v1205
        %v1362 = vunpack.c.h.b16 %v1205
        %v1363 = vunpack.c.l.b16 %v1206
        %v1364 = vunpack.c.h.b16 %v1206
        %v1365 = vunpack.c.l.b16 %v1207
        %v1366 = vunpack.c.h.b16 %v1207
        %v1367 = vpack.c.b16 %v1321, %v1319
        %v1368 = vpack.c.b16 %v1322, %v1320
        %v1369 = vpack.c.b16 %v1325, %v1323
        %v1370 = vpack.c.b16 %v1326, %v1324
        %v1371 = vpack.c.b16 %v1329, %v1327
        %v1372 = vpack.c.b16 %v1330, %v1328
        %v1373 = vpack.c.b16 %v1333, %v1331
        %v1374 = vpack.c.b16 %v1334, %v1332
        %v1375 = vpack.c.b16 %v1337, %v1335
        %v1376 = vpack.c.b16 %v1338, %v1336
        %v1377 = vpack.c.b16 %v1341, %v1339
        %v1378 = vpack.c.b16 %v1342, %v1340
        %v1379 = vpack.c.b16 %v1345, %v1343
        %v1380 = vpack.c.b16 %v1346, %v1344
        %v1381 = vpack.c.b16 %v1349, %v1347
        %v1382 = vpack.c.b16 %v1350, %v1348
        %v1383 = vpack.c.b16 %v1353, %v1351
        %v1384 = vpack.c.b16 %v1354, %v1352
        %v1385 = vpack.c.b16 %v1357, %v1355
        %v1386 = vpack.c.b16 %v1358, %v1356
        %v1387 = vpack.c.b16 %v1361, %v1359
        %v1388 = vpack.c.b16 %v1362, %v1360
        %v1389 = vpack.c.b16 %v1365, %v1363
        %v1390 = vpack.c.b16 %v1366, %v1364
        %v1416 = vsel %vm1220, %v1293, 0
        %1418 = vmatprep.subr.bf16.mxu0 %v1368
        %1419 = vmatpush1.bf16.msra.mxu0 %v1367
        %1420 = vmatprep.subr.bf16.mxu0 %v1370
        %1421 = vmatpush1.bf16.msra.mxu0 %v1369
        %1422 = vmatprep.subr.bf16.mxu0 %v1372
        %1423 = vmatpush1.bf16.msra.mxu0 %v1371
        %1424 = vmatprep.subr.bf16.mxu0 %v1374
        %1425 = vmatpush1.bf16.msra.mxu0 %v1373
        %1426 = vmatprep.subr.bf16.mxu0 %v1376
        %1427 = vmatpush1.bf16.msra.mxu0 %v1375
        %1428 = vmatprep.subr.bf16.mxu0 %v1378
        %1429 = vmatpush1.bf16.msra.mxu0 %v1377
        %1430 = vmatprep.subr.bf16.mxu0 %v1380
        %1431 = vmatpush1.bf16.msra.mxu0 %v1379
        %1432 = vmatprep.subr.bf16.mxu0 %v1382
        %1433 = vmatpush1.bf16.msra.mxu0 %v1381
        %1434 = vmatprep.subr.bf16.mxu0 %v1384
        %1435 = vmatpush1.bf16.msra.mxu0 %v1383
        %1436 = vmatprep.subr.bf16.mxu0 %v1386
        %1437 = vmatpush1.bf16.msra.mxu0 %v1385
        %1438 = vmatprep.subr.bf16.mxu0 %v1388
        %1439 = vmatpush1.bf16.msra.mxu0 %v1387
        %1440 = vmatprep.subr.bf16.mxu0 %v1390
        %1441 = vmatpush1.bf16.msra.mxu0 %v1389
        %1442 = vmatprep.subr.bf16.mxu0 0
        %1443 = vmatpush1.bf16.msra.mxu0 0
        %1444 = vmatprep.subr.bf16.mxu0 0
        %1445 = vmatpush1.bf16.msra.mxu0 0
        %1446 = vmatprep.subr.bf16.mxu0 0
        %1447 = vmatpush1.bf16.msra.mxu0 0
        %1448 = vmatprep.subr.bf16.mxu0 0
        %1449 = vmatpush1.bf16.msra.mxu0 0
        %1450 = vmatprep.mubr.bf16.mxu0 %v1416
        %1451 = vmatmul.mubr.bf16.gmra.mrb[0].mxu0 %v1281
        %v1452 = vpop.f32.mrb[0].mxu0
        %v1453 = vadd.f32 %v1262, %v1452
        %v1454 = vpop.f32.mrb[0].mxu0
        %v1455 = vadd.f32 %v1266, %v1454
        %v1456 = vpop.f32.mrb[0].mxu0
        %v1457 = vadd.f32 %v1262, %v1456
        %v1458 = vpop.f32.mrb[0].mxu0
        %v1459 = vadd.f32 %v1266, %v1458
        %1460 = vdwg.mxu0
        %v1461 = vpack.c.bf16 %v1457, %v1453
        %v1462 = vpack.c.bf16 %v1459, %v1455
        %v1463 = vld [vmem:[#allocation13] sm:$0xf]
        %v1464 = vld [vmem:[#allocation13 + $0x4] sm:$0xf]
        %v1465 = vld [vmem:[#allocation13 + $0x8] sm:$0xf]
        %v1466 = vld [vmem:[#allocation13 + $0xc] sm:$0xf]
        %v1467 = vld [vmem:[#allocation13 + $0x10] sm:$0xf]
        %v1468 = vld [vmem:[#allocation13 + $0x14] sm:$0xf]
        %v1469 = vld [vmem:[#allocation13 + $0x18] sm:$0xf]
        %v1470 = vld [vmem:[#allocation13 + $0x1c] sm:$0xf]
        %v1471 = vld [vmem:[#allocation13 + $0x20] sm:$0xf]
        %v1472 = vld [vmem:[#allocation13 + $0x24] sm:$0xf]
        %v1473 = vld [vmem:[#allocation13 + $0x28] sm:$0xf]
        %v1474 = vld [vmem:[#allocation13 + $0x2c] sm:$0xf]
        %v1475 = vld [vmem:[#allocation13 + $0x30] sm:$0xf]
        %v1476 = vld [vmem:[#allocation13 + $0x34] sm:$0xf]
        %v1477 = vld [vmem:[#allocation13 + $0x38] sm:$0xf]
        %v1478 = vld [vmem:[#allocation13 + $0x3c] sm:$0xf]
        %v1479 = vld [vmem:[#allocation13 + $0x40] sm:$0xf]
        %v1480 = vld [vmem:[#allocation13 + $0x44] sm:$0xf]
        %v1481 = vld [vmem:[#allocation13 + $0x48] sm:$0xf]
        %v1482 = vld [vmem:[#allocation13 + $0x4c] sm:$0xf]
        %v1483 = vld [vmem:[#allocation13 + $0x50] sm:$0xf]
        %v1484 = vld [vmem:[#allocation13 + $0x54] sm:$0xf]
        %v1485 = vld [vmem:[#allocation13 + $0x58] sm:$0xf]
        %v1486 = vld [vmem:[#allocation13 + $0x5c] sm:$0xf]
        %v1487 = vld [vmem:[#allocation13 + $0x60] sm:$0xf]
        %v1488 = vld [vmem:[#allocation13 + $0x64] sm:$0xf]
        %v1489 = vld [vmem:[#allocation13 + $0x68] sm:$0xf]
        %v1490 = vld [vmem:[#allocation13 + $0x6c] sm:$0xf]
        %v1491 = vld [vmem:[#allocation13 + $0x70] sm:$0xf]
        %v1492 = vld [vmem:[#allocation13 + $0x74] sm:$0xf]
        %v1493 = vld [vmem:[#allocation13 + $0x78] sm:$0xf]
        %v1494 = vld [vmem:[#allocation13 + $0x7c] sm:$0xf]
        %v1527 = vunpack.c.l.b16 %v1463
        %v1528 = vunpack.c.l.b16 %v1464
        %v1529 = vunpack.c.l.b16 %v1465
        %v1530 = vunpack.c.l.b16 %v1466
        %v1531 = vunpack.c.l.b16 %v1467
        %v1532 = vunpack.c.l.b16 %v1468
        %v1533 = vunpack.c.l.b16 %v1469
        %v1534 = vunpack.c.l.b16 %v1470
        %v1535 = vunpack.c.l.b16 %v1471
        %v1536 = vunpack.c.l.b16 %v1472
        %v1537 = vunpack.c.l.b16 %v1473
        %v1538 = vunpack.c.l.b16 %v1474
        %v1539 = vunpack.c.l.b16 %v1475
        %v1540 = vunpack.c.l.b16 %v1476
        %v1541 = vunpack.c.l.b16 %v1477
        %v1542 = vunpack.c.l.b16 %v1478
        %v1543 = vunpack.c.l.b16 %v1479
        %v1544 = vunpack.c.l.b16 %v1480
        %v1545 = vunpack.c.l.b16 %v1481
        %v1546 = vunpack.c.l.b16 %v1482
        %v1547 = vunpack.c.l.b16 %v1483
        %v1548 = vunpack.c.l.b16 %v1484
        %v1549 = vunpack.c.l.b16 %v1485
        %v1550 = vunpack.c.l.b16 %v1486
        %v1551 = vunpack.c.l.b16 %v1487
        %v1552 = vunpack.c.l.b16 %v1488
        %v1553 = vunpack.c.l.b16 %v1489
        %v1554 = vunpack.c.l.b16 %v1490
        %v1555 = vunpack.c.l.b16 %v1491
        %v1556 = vunpack.c.l.b16 %v1492
        %v1557 = vunpack.c.l.b16 %v1493
        %v1558 = vunpack.c.l.b16 %v1494
        %v1559 = vpack.c.b16 %v1528, %v1527
        %v1560 = vpack.c.b16 %v1530, %v1529
        %v1561 = vpack.c.b16 %v1532, %v1531
        %v1562 = vpack.c.b16 %v1534, %v1533
        %v1563 = vpack.c.b16 %v1536, %v1535
        %v1564 = vpack.c.b16 %v1538, %v1537
        %v1565 = vpack.c.b16 %v1540, %v1539
        %v1566 = vpack.c.b16 %v1542, %v1541
        %v1567 = vpack.c.b16 %v1544, %v1543
        %v1568 = vpack.c.b16 %v1546, %v1545
        %v1569 = vpack.c.b16 %v1548, %v1547
        %v1570 = vpack.c.b16 %v1550, %v1549
        %v1571 = vpack.c.b16 %v1552, %v1551
        %v1572 = vpack.c.b16 %v1554, %v1553
        %v1573 = vpack.c.b16 %v1556, %v1555
        %v1574 = vpack.c.b16 %v1558, %v1557
        %1591 = vmatprep.subr.bf16.mxu0 0
        %1592 = vmatpush1.bf16.msra.mxu0 %v1559
        %1593 = vmatprep.subr.bf16.mxu0 0
        %1594 = vmatpush1.bf16.msra.mxu0 %v1560
        %1595 = vmatprep.subr.bf16.mxu0 0
        %1596 = vmatpush1.bf16.msra.mxu0 %v1561
        %1597 = vmatprep.subr.bf16.mxu0 0
        %1598 = vmatpush1.bf16.msra.mxu0 %v1562
        %1599 = vmatprep.subr.bf16.mxu0 0
        %1600 = vmatpush1.bf16.msra.mxu0 %v1563
        %1601 = vmatprep.subr.bf16.mxu0 0
        %1602 = vmatpush1.bf16.msra.mxu0 %v1564
        %1603 = vmatprep.subr.bf16.mxu0 0
        %1604 = vmatpush1.bf16.msra.mxu0 %v1565
        %1605 = vmatprep.subr.bf16.mxu0 0
        %1606 = vmatpush1.bf16.msra.mxu0 %v1566
        %1607 = vmatprep.subr.bf16.mxu0 0
        %1608 = vmatpush1.bf16.msra.mxu0 %v1567
        %1609 = vmatprep.subr.bf16.mxu0 0
        %1610 = vmatpush1.bf16.msra.mxu0 %v1568
        %1611 = vmatprep.subr.bf16.mxu0 0
        %1612 = vmatpush1.bf16.msra.mxu0 %v1569
        %1613 = vmatprep.subr.bf16.mxu0 0
        %1614 = vmatpush1.bf16.msra.mxu0 %v1570
        %1615 = vmatprep.subr.bf16.mxu0 0
        %1616 = vmatpush1.bf16.msra.mxu0 %v1571
        %1617 = vmatprep.subr.bf16.mxu0 0
        %1618 = vmatpush1.bf16.msra.mxu0 %v1572
        %1619 = vmatprep.subr.bf16.mxu0 0
        %1620 = vmatpush1.bf16.msra.mxu0 %v1573
        %1621 = vmatprep.subr.bf16.mxu0 0
        %1622 = vmatpush1.bf16.msra.mxu0 %v1574
        %1623 = vmatprep.mubr.bf16.mxu0 %v1462
        %1624 = vmatmul.mubr.bf16.gmra.mrb[0].mxu0 %v1461
        %v1625 = vpop.f32.mrb[0].mxu0
        %v1626 = vadd.f32 0.0, %v1625
        %v1627 = vpop.f32.mrb[0].mxu0
        %v1628 = vpop.f32.mrb[0].mxu0
        %v1629 = vadd.f32 0.0, %v1628
        %v1630 = vpop.f32.mrb[0].mxu0
        %1631 = vdwg.mxu0
        %s1632 = scalar_lea.vmem [#allocation13], 128
        %v1633 = vld [vmem:[%s1632] sm:$0xf]
        %v1634 = vld [vmem:[%s1632 + $0x4] sm:$0xf]
        %v1635 = vld [vmem:[%s1632 + $0x8] sm:$0xf]
        %v1636 = vld [vmem:[%s1632 + $0xc] sm:$0xf]
        %v1637 = vld [vmem:[%s1632 + $0x10] sm:$0xf]
        %v1638 = vld [vmem:[%s1632 + $0x14] sm:$0xf]
        %v1639 = vld [vmem:[%s1632 + $0x18] sm:$0xf]
        %v1640 = vld [vmem:[%s1632 + $0x1c] sm:$0xf]
        %v1641 = vld [vmem:[%s1632 + $0x20] sm:$0xf]
        %v1642 = vld [vmem:[%s1632 + $0x24] sm:$0xf]
        %v1643 = vld [vmem:[%s1632 + $0x28] sm:$0xf]
        %v1644 = vld [vmem:[%s1632 + $0x2c] sm:$0xf]
        %v1645 = vld [vmem:[%s1632 + $0x30] sm:$0xf]
        %v1646 = vld [vmem:[%s1632 + $0x34] sm:$0xf]
        %v1647 = vld [vmem:[%s1632 + $0x38] sm:$0xf]
        %v1648 = vld [vmem:[%s1632 + $0x3c] sm:$0xf]
        %v1649 = vld [vmem:[%s1632 + $0x40] sm:$0xf]
        %v1650 = vld [vmem:[%s1632 + $0x44] sm:$0xf]
        %v1651 = vld [vmem:[%s1632 + $0x48] sm:$0xf]
        %v1652 = vld [vmem:[%s1632 + $0x4c] sm:$0xf]
        %v1653 = vld [vmem:[%s1632 + $0x50] sm:$0xf]
        %v1654 = vld [vmem:[%s1632 + $0x54] sm:$0xf]
        %v1655 = vld [vmem:[%s1632 + $0x58] sm:$0xf]
        %v1656 = vld [vmem:[%s1632 + $0x5c] sm:$0xf]
        %v1657 = vld [vmem:[%s1632 + $0x60] sm:$0xf]
        %v1658 = vld [vmem:[%s1632 + $0x64] sm:$0xf]
        %v1659 = vld [vmem:[%s1632 + $0x68] sm:$0xf]
        %v1660 = vld [vmem:[%s1632 + $0x6c] sm:$0xf]
        %v1661 = vld [vmem:[%s1632 + $0x70] sm:$0xf]
        %v1662 = vld [vmem:[%s1632 + $0x74] sm:$0xf]
        %v1663 = vld [vmem:[%s1632 + $0x78] sm:$0xf]
        %v1664 = vld [vmem:[%s1632 + $0x7c] sm:$0xf]
        %v1697 = vunpack.c.l.b16 %v1633
        %v1698 = vunpack.c.l.b16 %v1634
        %v1699 = vunpack.c.l.b16 %v1635
        %v1700 = vunpack.c.l.b16 %v1636
        %v1701 = vunpack.c.l.b16 %v1637
        %v1702 = vunpack.c.l.b16 %v1638
        %v1703 = vunpack.c.l.b16 %v1639
        %v1704 = vunpack.c.l.b16 %v1640
        %v1705 = vunpack.c.l.b16 %v1641
        %v1706 = vunpack.c.l.b16 %v1642
        %v1707 = vunpack.c.l.b16 %v1643
        %v1708 = vunpack.c.l.b16 %v1644
        %v1709 = vunpack.c.l.b16 %v1645
        %v1710 = vunpack.c.l.b16 %v1646
        %v1711 = vunpack.c.l.b16 %v1647
        %v1712 = vunpack.c.l.b16 %v1648
        %v1713 = vunpack.c.l.b16 %v1649
        %v1714 = vunpack.c.l.b16 %v1650
        %v1715 = vunpack.c.l.b16 %v1651
        %v1716 = vunpack.c.l.b16 %v1652
        %v1717 = vunpack.c.l.b16 %v1653
        %v1718 = vunpack.c.l.b16 %v1654
        %v1719 = vunpack.c.l.b16 %v1655
        %v1720 = vunpack.c.l.b16 %v1656
        %v1721 = vunpack.c.l.b16 %v1657
        %v1722 = vunpack.c.l.b16 %v1658
        %v1723 = vunpack.c.l.b16 %v1659
        %v1724 = vunpack.c.l.b16 %v1660
        %v1725 = vunpack.c.l.b16 %v1661
        %v1726 = vunpack.c.l.b16 %v1662
        %v1727 = vunpack.c.l.b16 %v1663
        %v1728 = vunpack.c.l.b16 %v1664
        %v1729 = vpack.c.b16 %v1698, %v1697
        %v1730 = vpack.c.b16 %v1700, %v1699
        %v1731 = vpack.c.b16 %v1702, %v1701
        %v1732 = vpack.c.b16 %v1704, %v1703
        %v1733 = vpack.c.b16 %v1706, %v1705
        %v1734 = vpack.c.b16 %v1708, %v1707
        %v1735 = vpack.c.b16 %v1710, %v1709
        %v1736 = vpack.c.b16 %v1712, %v1711
        %v1737 = vpack.c.b16 %v1714, %v1713
        %v1738 = vpack.c.b16 %v1716, %v1715
        %v1739 = vpack.c.b16 %v1718, %v1717
        %v1740 = vpack.c.b16 %v1720, %v1719
        %v1741 = vpack.c.b16 %v1722, %v1721
        %v1742 = vpack.c.b16 %v1724, %v1723
        %v1743 = vpack.c.b16 %v1726, %v1725
        %v1744 = vpack.c.b16 %v1728, %v1727
        %1761 = vmatprep.subr.bf16.mxu0 0
        %1762 = vmatpush1.bf16.msra.mxu0 %v1729
        %1763 = vmatprep.subr.bf16.mxu0 0
        %1764 = vmatpush1.bf16.msra.mxu0 %v1730
        %1765 = vmatprep.subr.bf16.mxu0 0
        %1766 = vmatpush1.bf16.msra.mxu0 %v1731
        %1767 = vmatprep.subr.bf16.mxu0 0
        %1768 = vmatpush1.bf16.msra.mxu0 %v1732
        %1769 = vmatprep.subr.bf16.mxu0 0
        %1770 = vmatpush1.bf16.msra.mxu0 %v1733
        %1771 = vmatprep.subr.bf16.mxu0 0
        %1772 = vmatpush1.bf16.msra.mxu0 %v1734
        %1773 = vmatprep.subr.bf16.mxu0 0
        %1774 = vmatpush1.bf16.msra.mxu0 %v1735
        %1775 = vmatprep.subr.bf16.mxu0 0
        %1776 = vmatpush1.bf16.msra.mxu0 %v1736
        %1777 = vmatprep.subr.bf16.mxu0 0
        %1778 = vmatpush1.bf16.msra.mxu0 %v1737
        %1779 = vmatprep.subr.bf16.mxu0 0
        %1780 = vmatpush1.bf16.msra.mxu0 %v1738
        %1781 = vmatprep.subr.bf16.mxu0 0
        %1782 = vmatpush1.bf16.msra.mxu0 %v1739
        %1783 = vmatprep.subr.bf16.mxu0 0
        %1784 = vmatpush1.bf16.msra.mxu0 %v1740
        %1785 = vmatprep.subr.bf16.mxu0 0
        %1786 = vmatpush1.bf16.msra.mxu0 %v1741
        %1787 = vmatprep.subr.bf16.mxu0 0
        %1788 = vmatpush1.bf16.msra.mxu0 %v1742
        %1789 = vmatprep.subr.bf16.mxu0 0
        %1790 = vmatpush1.bf16.msra.mxu0 %v1743
        %1791 = vmatprep.subr.bf16.mxu0 0
        %1792 = vmatpush1.bf16.msra.mxu0 %v1744
        %1793 = vmatprep.mubr.bf16.mxu0 %v1462
        %1794 = vmatmul.mubr.bf16.gmra.mrb[0].mxu0 %v1461
        %v1795 = vpop.f32.mrb[0].mxu0
        %v1796 = vadd.f32 0.0, %v1795
        %v1797 = vpop.f32.mrb[0].mxu0
        %v1798 = vpop.f32.mrb[0].mxu0
        %v1799 = vadd.f32 0.0, %v1798
        %v1800 = vpop.f32.mrb[0].mxu0
        %1801 = vdwg.mxu0
        %v1802 = vmax.f32 %v1626, %v1796
        %v1803 = vmax.f32 %v1629, %v1799
        %s1804 = scalar_lea.vmem [#allocation13], 256
        %v1805 = vld [vmem:[%s1804] sm:$0xf]
        %v1806 = vld [vmem:[%s1804 + $0x4] sm:$0xf]
        %v1807 = vld [vmem:[%s1804 + $0x8] sm:$0xf]
        %v1808 = vld [vmem:[%s1804 + $0xc] sm:$0xf]
        %v1809 = vld [vmem:[%s1804 + $0x10] sm:$0xf]
        %v1810 = vld [vmem:[%s1804 + $0x14] sm:$0xf]
        %v1811 = vld [vmem:[%s1804 + $0x18] sm:$0xf]
        %v1812 = vld [vmem:[%s1804 + $0x1c] sm:$0xf]
        %v1813 = vld [vmem:[%s1804 + $0x20] sm:$0xf]
        %v1814 = vld [vmem:[%s1804 + $0x24] sm:$0xf]
        %v1815 = vld [vmem:[%s1804 + $0x28] sm:$0xf]
        %v1816 = vld [vmem:[%s1804 + $0x2c] sm:$0xf]
        %v1817 = vld [vmem:[%s1804 + $0x30] sm:$0xf]
        %v1818 = vld [vmem:[%s1804 + $0x34] sm:$0xf]
        %v1819 = vld [vmem:[%s1804 + $0x38] sm:$0xf]
        %v1820 = vld [vmem:[%s1804 + $0x3c] sm:$0xf]
        %v1821 = vld [vmem:[%s1804 + $0x40] sm:$0xf]
        %v1822 = vld [vmem:[%s1804 + $0x44] sm:$0xf]
        %v1823 = vld [vmem:[%s1804 + $0x48] sm:$0xf]
        %v1824 = vld [vmem:[%s1804 + $0x4c] sm:$0xf]
        %v1825 = vld [vmem:[%s1804 + $0x50] sm:$0xf]
        %v1826 = vld [vmem:[%s1804 + $0x54] sm:$0xf]
        %v1827 = vld [vmem:[%s1804 + $0x58] sm:$0xf]
        %v1828 = vld [vmem:[%s1804 + $0x5c] sm:$0xf]
        %v1829 = vld [vmem:[%s1804 + $0x60] sm:$0xf]
        %v1830 = vld [vmem:[%s1804 + $0x64] sm:$0xf]
        %v1831 = vld [vmem:[%s1804 + $0x68] sm:$0xf]
        %v1832 = vld [vmem:[%s1804 + $0x6c] sm:$0xf]
        %v1833 = vld [vmem:[%s1804 + $0x70] sm:$0xf]
        %v1834 = vld [vmem:[%s1804 + $0x74] sm:$0xf]
        %v1835 = vld [vmem:[%s1804 + $0x78] sm:$0xf]
        %v1836 = vld [vmem:[%s1804 + $0x7c] sm:$0xf]
        %v1869 = vunpack.c.l.b16 %v1805
        %v1870 = vunpack.c.l.b16 %v1806
        %v1871 = vunpack.c.l.b16 %v1807
        %v1872 = vunpack.c.l.b16 %v1808
        %v1873 = vunpack.c.l.b16 %v1809
        %v1874 = vunpack.c.l.b16 %v1810
        %v1875 = vunpack.c.l.b16 %v1811
        %v1876 = vunpack.c.l.b16 %v1812
        %v1877 = vunpack.c.l.b16 %v1813
        %v1878 = vunpack.c.l.b16 %v1814
        %v1879 = vunpack.c.l.b16 %v1815
        %v1880 = vunpack.c.l.b16 %v1816
        %v1881 = vunpack.c.l.b16 %v1817
        %v1882 = vunpack.c.l.b16 %v1818
        %v1883 = vunpack.c.l.b16 %v1819
        %v1884 = vunpack.c.l.b16 %v1820
        %v1885 = vunpack.c.l.b16 %v1821
        %v1886 = vunpack.c.l.b16 %v1822
        %v1887 = vunpack.c.l.b16 %v1823
        %v1888 = vunpack.c.l.b16 %v1824
        %v1889 = vunpack.c.l.b16 %v1825
        %v1890 = vunpack.c.l.b16 %v1826
        %v1891 = vunpack.c.l.b16 %v1827
        %v1892 = vunpack.c.l.b16 %v1828
        %v1893 = vunpack.c.l.b16 %v1829
        %v1894 = vunpack.c.l.b16 %v1830
        %v1895 = vunpack.c.l.b16 %v1831
        %v1896 = vunpack.c.l.b16 %v1832
        %v1897 = vunpack.c.l.b16 %v1833
        %v1898 = vunpack.c.l.b16 %v1834
        %v1899 = vunpack.c.l.b16 %v1835
        %v1900 = vunpack.c.l.b16 %v1836
        %v1901 = vpack.c.b16 %v1870, %v1869
        %v1902 = vpack.c.b16 %v1872, %v1871
        %v1903 = vpack.c.b16 %v1874, %v1873
        %v1904 = vpack.c.b16 %v1876, %v1875
        %v1905 = vpack.c.b16 %v1878, %v1877
        %v1906 = vpack.c.b16 %v1880, %v1879
        %v1907 = vpack.c.b16 %v1882, %v1881
        %v1908 = vpack.c.b16 %v1884, %v1883
        %v1909 = vpack.c.b16 %v1886, %v1885
        %v1910 = vpack.c.b16 %v1888, %v1887
        %v1911 = vpack.c.b16 %v1890, %v1889
        %v1912 = vpack.c.b16 %v1892, %v1891
        %v1913 = vpack.c.b16 %v1894, %v1893
        %v1914 = vpack.c.b16 %v1896, %v1895
        %v1915 = vpack.c.b16 %v1898, %v1897
        %v1916 = vpack.c.b16 %v1900, %v1899
        %1933 = vmatprep.subr.bf16.mxu0 0
        %1934 = vmatpush1.bf16.msra.mxu0 %v1901
        %1935 = vmatprep.subr.bf16.mxu0 0
        %1936 = vmatpush1.bf16.msra.mxu0 %v1902
        %1937 = vmatprep.subr.bf16.mxu0 0
        %1938 = vmatpush1.bf16.msra.mxu0 %v1903
        %1939 = vmatprep.subr.bf16.mxu0 0
        %1940 = vmatpush1.bf16.msra.mxu0 %v1904
        %1941 = vmatprep.subr.bf16.mxu0 0
        %1942 = vmatpush1.bf16.msra.mxu0 %v1905
        %1943 = vmatprep.subr.bf16.mxu0 0
        %1944 = vmatpush1.bf16.msra.mxu0 %v1906
        %1945 = vmatprep.subr.bf16.mxu0 0
        %1946 = vmatpush1.bf16.msra.mxu0 %v1907
        %1947 = vmatprep.subr.bf16.mxu0 0
        %1948 = vmatpush1.bf16.msra.mxu0 %v1908
        %1949 = vmatprep.subr.bf16.mxu0 0
        %1950 = vmatpush1.bf16.msra.mxu0 %v1909
        %1951 = vmatprep.subr.bf16.mxu0 0
        %1952 = vmatpush1.bf16.msra.mxu0 %v1910
        %1953 = vmatprep.subr.bf16.mxu0 0
        %1954 = vmatpush1.bf16.msra.mxu0 %v1911
        %1955 = vmatprep.subr.bf16.mxu0 0
        %1956 = vmatpush1.bf16.msra.mxu0 %v1912
        %1957 = vmatprep.subr.bf16.mxu0 0
        %1958 = vmatpush1.bf16.msra.mxu0 %v1913
        %1959 = vmatprep.subr.bf16.mxu0 0
        %1960 = vmatpush1.bf16.msra.mxu0 %v1914
        %1961 = vmatprep.subr.bf16.mxu0 0
        %1962 = vmatpush1.bf16.msra.mxu0 %v1915
        %1963 = vmatprep.subr.bf16.mxu0 0
        %1964 = vmatpush1.bf16.msra.mxu0 %v1916
        %1965 = vmatprep.mubr.bf16.mxu0 %v1462
        %1966 = vmatmul.mubr.bf16.gmra.mrb[0].mxu0 %v1461
        %v1967 = vpop.f32.mrb[0].mxu0
        %v1968 = vadd.f32 0.0, %v1967
        %v1969 = vpop.f32.mrb[0].mxu0
        %v1970 = vpop.f32.mrb[0].mxu0
        %v1971 = vadd.f32 0.0, %v1970
        %v1972 = vpop.f32.mrb[0].mxu0
        %1973 = vdwg.mxu0
        %v1974 = vmax.f32 %v1802, %v1968
        %v1975 = vmax.f32 %v1803, %v1971
        %v1976 = vpack.c.bf16 %v1975, %v1974
        %v1977 = vld [vmem:[#allocation12] sm:$0xf]
        %vm1978 = vcmask 130048
        %v1980 = vsel %vm1978, %v1977, 0
        %1982 = vmatprep.subr.bf16.mxu0 0
        %1983 = vmatpush1.bf16.msra.mxu0 %v1976
        %1984 = vmatprep.subr.bf16.mxu0 0
        %1985 = vmatpush1.bf16.msra.mxu0 0
        %1986 = vmatprep.subr.bf16.mxu0 0
        %1987 = vmatpush1.bf16.msra.mxu0 0
        %1988 = vmatprep.subr.bf16.mxu0 0
        %1989 = vmatpush1.bf16.msra.mxu0 0
        %1990 = vmatprep.subr.bf16.mxu0 0
        %1991 = vmatpush1.bf16.msra.mxu0 0
        %1992 = vmatprep.subr.bf16.mxu0 0
        %1993 = vmatpush1.bf16.msra.mxu0 0
        %1994 = vmatprep.subr.bf16.mxu0 0
        %1995 = vmatpush1.bf16.msra.mxu0 0
        %1996 = vmatprep.subr.bf16.mxu0 0
        %1997 = vmatpush1.bf16.msra.mxu0 0
        %1998 = vmatprep.subr.bf16.mxu0 0
        %1999 = vmatpush1.bf16.msra.mxu0 0
        %2000 = vmatprep.subr.bf16.mxu0 0
        %2001 = vmatpush1.bf16.msra.mxu0 0
        %2002 = vmatprep.subr.bf16.mxu0 0
        %2003 = vmatpush1.bf16.msra.mxu0 0
        %2004 = vmatprep.subr.bf16.mxu0 0
        %2005 = vmatpush1.bf16.msra.mxu0 0
        %2006 = vmatprep.subr.bf16.mxu0 0
        %2007 = vmatpush1.bf16.msra.mxu0 0
        %2008 = vmatprep.subr.bf16.mxu0 0
        %2009 = vmatpush1.bf16.msra.mxu0 0
        %2010 = vmatprep.subr.bf16.mxu0 0
        %2011 = vmatpush1.bf16.msra.mxu0 0
        %2012 = vmatprep.subr.bf16.mxu0 0
        %2013 = vmatpush1.bf16.msra.mxu0 0
        %2014 = vmatprep.mubr.bf16.mxu0 0
        %2015 = vmatmul.mubr.bf16.gmra.mrb[0].mxu0 %v1980
        %v2016 = vpop.f32.mrb[0].mxu0
        %v2017 = vadd.f32 0.0, %v2016
        %v2018 = vpop.f32.mrb[0].mxu0
        %v2019 = vpop.f32.mrb[0].mxu0
        %v2020 = vpop.f32.mrb[0].mxu0
        %2021 = vdwg.mxu0
        %s2022 = scalar_lea.vmem [#allocation12], 4
        %v2023 = vld [vmem:[%s2022] sm:$0xf]
        %v2025 = vsel %vm1978, %v2023, 0
        %2027 = vmatprep.subr.bf16.mxu0 0
        %2028 = vmatpush1.bf16.msra.mxu0 %v1976
        %2029 = vmatprep.subr.bf16.mxu0 0
        %2030 = vmatpush1.bf16.msra.mxu0 0
        %2031 = vmatprep.subr.bf16.mxu0 0
        %2032 = vmatpush1.bf16.msra.mxu0 0
        %2033 = vmatprep.subr.bf16.mxu0 0
        %2034 = vmatpush1.bf16.msra.mxu0 0
        %2035 = vmatprep.subr.bf16.mxu0 0
        %2036 = vmatpush1.bf16.msra.mxu0 0
        %2037 = vmatprep.subr.bf16.mxu0 0
        %2038 = vmatpush1.bf16.msra.mxu0 0
        %2039 = vmatprep.subr.bf16.mxu0 0
        %2040 = vmatpush1.bf16.msra.mxu0 0
        %2041 = vmatprep.subr.bf16.mxu0 0
        %2042 = vmatpush1.bf16.msra.mxu0 0
        %2043 = vmatprep.subr.bf16.mxu0 0
        %2044 = vmatpush1.bf16.msra.mxu0 0
        %2045 = vmatprep.subr.bf16.mxu0 0
        %2046 = vmatpush1.bf16.msra.mxu0 0
        %2047 = vmatprep.subr.bf16.mxu0 0
        %2048 = vmatpush1.bf16.msra.mxu0 0
        %2049 = vmatprep.subr.bf16.mxu0 0
        %2050 = vmatpush1.bf16.msra.mxu0 0
        %2051 = vmatprep.subr.bf16.mxu0 0
        %2052 = vmatpush1.bf16.msra.mxu0 0
        %2053 = vmatprep.subr.bf16.mxu0 0
        %2054 = vmatpush1.bf16.msra.mxu0 0
        %2055 = vmatprep.subr.bf16.mxu0 0
        %2056 = vmatpush1.bf16.msra.mxu0 0
        %2057 = vmatprep.subr.bf16.mxu0 0
        %2058 = vmatpush1.bf16.msra.mxu0 0
        %2059 = vmatprep.mubr.bf16.mxu0 0
        %2060 = vmatmul.mubr.bf16.gmra.mrb[0].mxu0 %v2025
        %v2061 = vpop.f32.mrb[0].mxu0
        %v2062 = vadd.f32 0.0, %v2061
        %v2063 = vpop.f32.mrb[0].mxu0
        %v2064 = vpop.f32.mrb[0].mxu0
        %v2065 = vpop.f32.mrb[0].mxu0
        %2066 = vdwg.mxu0
        %v2067 = vmax.f32 %v2017, %v2062
        %s2068 = scalar_lea.vmem [#allocation12], 8
        %v2069 = vld [vmem:[%s2068] sm:$0xf]
        %v2071 = vsel %vm1978, %v2069, 0
        %2073 = vmatprep.subr.bf16.mxu0 0
        %2074 = vmatpush1.bf16.msra.mxu0 %v1976
        %2075 = vmatprep.subr.bf16.mxu0 0
        %2076 = vmatpush1.bf16.msra.mxu0 0
        %2077 = vmatprep.subr.bf16.mxu0 0
        %2078 = vmatpush1.bf16.msra.mxu0 0
        %2079 = vmatprep.subr.bf16.mxu0 0
        %2080 = vmatpush1.bf16.msra.mxu0 0
        %2081 = vmatprep.subr.bf16.mxu0 0
        %2082 = vmatpush1.bf16.msra.mxu0 0
        %2083 = vmatprep.subr.bf16.mxu0 0
        %2084 = vmatpush1.bf16.msra.mxu0 0
        %2085 = vmatprep.subr.bf16.mxu0 0
        %2086 = vmatpush1.bf16.msra.mxu0 0
        %2087 = vmatprep.subr.bf16.mxu0 0
        %2088 = vmatpush1.bf16.msra.mxu0 0
        %2089 = vmatprep.subr.bf16.mxu0 0
        %2090 = vmatpush1.bf16.msra.mxu0 0
        %2091 = vmatprep.subr.bf16.mxu0 0
        %2092 = vmatpush1.bf16.msra.mxu0 0
        %2093 = vmatprep.subr.bf16.mxu0 0
        %2094 = vmatpush1.bf16.msra.mxu0 0
        %2095 = vmatprep.subr.bf16.mxu0 0
        %2096 = vmatpush1.bf16.msra.mxu0 0
        %2097 = vmatprep.subr.bf16.mxu0 0
        %2098 = vmatpush1.bf16.msra.mxu0 0
        %2099 = vmatprep.subr.bf16.mxu0 0
        %2100 = vmatpush1.bf16.msra.mxu0 0
        %2101 = vmatprep.subr.bf16.mxu0 0
        %2102 = vmatpush1.bf16.msra.mxu0 0
        %2103 = vmatprep.subr.bf16.mxu0 0
        %2104 = vmatpush1.bf16.msra.mxu0 0
        %2105 = vmatprep.mubr.bf16.mxu0 0
        %2106 = vmatmul.mubr.bf16.gmra.mrb[0].mxu0 %v2071
        %v2107 = vpop.f32.mrb[0].mxu0
        %v2108 = vadd.f32 0.0, %v2107
        %v2109 = vpop.f32.mrb[0].mxu0
        %v2110 = vpop.f32.mrb[0].mxu0
        %v2111 = vpop.f32.mrb[0].mxu0
        %2112 = vdwg.mxu0
        %v2113 = vmax.f32 %v2067, %v2108
        %v2114 = vmax.f32 %v2113, 0.0
        %v2115 = vld [vmem:[%s7] sm:$0xf]
        %v2116 = vld [vmem:[%s7 + $0x4] sm:$0xf]
        %v2117 = vld [vmem:[%s7 + $0x8] sm:$0xf]
        %v2118 = vld [vmem:[%s7 + $0xc] sm:$0xf]
        %v2119 = vld [vmem:[%s7 + $0x10] sm:$0xf]
        %v2120 = vld [vmem:[%s7 + $0x14] sm:$0xf]
        %v2121 = vld [vmem:[%s7 + $0x18] sm:$0xf]
        %v2122 = vld [vmem:[%s7 + $0x1c] sm:$0xf]
        %v2123 = vld [vmem:[%s7 + $0x20] sm:$0xf]
        %v2124 = vld [vmem:[%s7 + $0x24] sm:$0xf]
        %v2125 = vld [vmem:[%s7 + $0x28] sm:$0xf]
        %v2126 = vld [vmem:[%s7 + $0x2c] sm:$0xf]
        %v2127 = vld [vmem:[%s7 + $0x30] sm:$0xf]
        %v2128 = vld [vmem:[%s7 + $0x34] sm:$0xf]
        %v2129 = vld [vmem:[%s7 + $0x38] sm:$0xf]
        %v2130 = vld [vmem:[%s7 + $0x3c] sm:$0xf]
        %v2131 = vld [vmem:[%s7 + $0x40] sm:$0xf]
        %v2132 = vld [vmem:[%s7 + $0x44] sm:$0xf]
        %v2133 = vld [vmem:[%s7 + $0x48] sm:$0xf]
        %v2134 = vld [vmem:[%s7 + $0x4c] sm:$0xf]
        %v2135 = vld [vmem:[%s7 + $0x50] sm:$0xf]
        %v2136 = vld [vmem:[%s7 + $0x54] sm:$0xf]
        %v2137 = vld [vmem:[%s7 + $0x58] sm:$0xf]
        %v2138 = vld [vmem:[%s7 + $0x5c] sm:$0xf]
        %v2139 = vld [vmem:[%s7 + $0x60] sm:$0xf]
        %v2140 = vld [vmem:[%s7 + $0x64] sm:$0xf]
        %v2141 = vld [vmem:[%s7 + $0x68] sm:$0xf]
        %v2142 = vld [vmem:[%s7 + $0x6c] sm:$0xf]
        %v2143 = vld [vmem:[%s7 + $0x70] sm:$0xf]
        %v2144 = vld [vmem:[%s7 + $0x74] sm:$0xf]
        %v2145 = vld [vmem:[%s7 + $0x78] sm:$0xf]
        %v2146 = vld [vmem:[%s7 + $0x7c] sm:$0xf]
        %v2147 = vld [vmem:[%s7 + $0x80] sm:$0xf]
        %v2148 = vld [vmem:[%s7 + $0x84] sm:$0xf]
        %v2149 = vld [vmem:[%s7 + $0x88] sm:$0xf]
        %v2150 = vld [vmem:[%s7 + $0x8c] sm:$0xf]
        %v2151 = vld [vmem:[%s7 + $0x90] sm:$0xf]
        %v2152 = vld [vmem:[%s7 + $0x94] sm:$0xf]
        %v2153 = vld [vmem:[%s7 + $0x98] sm:$0xf]
        %v2154 = vld [vmem:[%s7 + $0x9c] sm:$0xf]
        %v2155 = vld [vmem:[%s7 + $0xa0] sm:$0xf]
        %v2156 = vld [vmem:[%s7 + $0xa4] sm:$0xf]
        %v2157 = vld [vmem:[%s7 + $0xa8] sm:$0xf]
        %v2158 = vld [vmem:[%s7 + $0xac] sm:$0xf]
        %v2159 = vld [vmem:[%s7 + $0xb0] sm:$0xf]
        %v2160 = vld [vmem:[%s7 + $0xb4] sm:$0xf]
        %v2161 = vld [vmem:[%s7 + $0xb8] sm:$0xf]
        %v2162 = vld [vmem:[%s7 + $0xbc] sm:$0xf]
        %v2163 = vld [vmem:[%s9] sm:$0x1]
        %v2165 = vrot.slane %v2114, 6
        %2167 = vst [vmem:[#allocation3] sm:$0xfc] %v2165
        %2168 = vst [vmem:[#allocation3 + $0x18] sm:$0x3] %v2165
        %v2169 = vrot.slane %v2114, 7
        %2171 = vst [vmem:[#allocation3 + $0x8] sm:$0xfe] %v2169
        %2172 = vst [vmem:[#allocation3 + $0x20] sm:$0x1] %v2169
        %2173 = vst [vmem:[#allocation3 + $0x10] sm:$0xff] %v2114
        %2174 = vst [vmem:[#allocation3 + $0x1] sm:$0x1] 0.0
        %2175 = vst [vmem:[#allocation3 + $0x28] sm:$0x1] 0.0
        %v2176 = vld [vmem:[#allocation3] sm:$0xfe]
        %v2177 = vld [vmem:[#allocation3 + $0x8] sm:$0xfe]
        %v2178 = vld [vmem:[#allocation3 + $0x10] sm:$0xfe]
        %v2179 = vld [vmem:[#allocation3 + $0x18] sm:$0x1]
        %v2180 = vld [vmem:[#allocation3 + $0x20] sm:$0x1]
        %v2181 = vld [vmem:[#allocation3 + $0x28] sm:$0x1]
        %v2182 = vpack.c.bf16 %v2179, %v2176
        %v2183 = vpack.c.bf16 %v2180, %v2177
        %v2184 = vpack.c.bf16 %v2181, %v2178
        %v2185 = vlaneseq
        %v2186 = vshrl.u32 %v2185, 7
        %v2187 = vsub.s32 0, %v2186
        %v2188 = vrot.slane %v2163, %v2187
        %v2190 = vshrl.u32 %v2182, 16
        %v2192 = vshll.u32 %v2182, 16
        %v2194 = vrot.slane %v2192, 1
        %v2195 = vor.u32 %v2190, %v2194
        %v2197 = vshrl.u32 %v2183, 16
        %v2199 = vshll.u32 %v2183, 16
        %v2201 = vrot.slane %v2199, 1
        %v2202 = vor.u32 %v2197, %v2201
        %v2204 = vshrl.u32 %v2184, 16
        %v2206 = vshll.u32 %v2184, 16
        %v2208 = vrot.slane %v2206, 1
        %v2209 = vor.u32 %v2204, %v2208
        %v2261 = vunpack.c.l.b16 %v2115
        %v2262 = vunpack.c.l.b16 %v2116
        %v2263 = vunpack.c.l.b16 %v2117
        %v2264 = vunpack.c.l.b16 %v2118
        %v2265 = vunpack.c.l.b16 %v2119
        %v2266 = vunpack.c.l.b16 %v2120
        %v2267 = vunpack.c.l.b16 %v2121
        %v2268 = vunpack.c.l.b16 %v2122
        %v2269 = vunpack.c.l.b16 %v2123
        %v2270 = vunpack.c.l.b16 %v2124
        %v2271 = vunpack.c.l.b16 %v2125
        %v2272 = vunpack.c.l.b16 %v2126
        %v2273 = vunpack.c.l.b16 %v2127
        %v2274 = vunpack.c.l.b16 %v2128
        %v2275 = vunpack.c.l.b16 %v2129
        %v2276 = vunpack.c.l.b16 %v2130
        %v2277 = vunpack.c.l.b16 %v2131
        %v2278 = vunpack.c.l.b16 %v2132
        %v2279 = vunpack.c.l.b16 %v2133
        %v2280 = vunpack.c.l.b16 %v2134
        %v2281 = vunpack.c.l.b16 %v2135
        %v2282 = vunpack.c.l.b16 %v2136
        %v2283 = vunpack.c.l.b16 %v2137
        %v2284 = vunpack.c.l.b16 %v2138
        %v2285 = vunpack.c.l.b16 %v2139
        %v2286 = vunpack.c.l.b16 %v2140
        %v2287 = vunpack.c.l.b16 %v2141
        %v2288 = vunpack.c.l.b16 %v2142
        %v2289 = vunpack.c.l.b16 %v2143
        %v2290 = vunpack.c.l.b16 %v2144
        %v2291 = vunpack.c.l.b16 %v2145
        %v2292 = vunpack.c.l.b16 %v2146
        %v2293 = vunpack.c.l.b16 %v2147
        %v2294 = vunpack.c.l.b16 %v2148
        %v2295 = vunpack.c.l.b16 %v2149
        %v2296 = vunpack.c.l.b16 %v2150
        %v2297 = vunpack.c.l.b16 %v2151
        %v2298 = vunpack.c.l.b16 %v2152
        %v2299 = vunpack.c.l.b16 %v2153
        %v2300 = vunpack.c.l.b16 %v2154
        %v2301 = vunpack.c.l.b16 %v2155
        %v2302 = vunpack.c.l.b16 %v2156
        %v2303 = vunpack.c.l.b16 %v2157
        %v2304 = vunpack.c.l.b16 %v2158
        %v2305 = vunpack.c.l.b16 %v2159
        %v2306 = vunpack.c.l.b16 %v2160
        %v2307 = vunpack.c.l.b16 %v2161
        %v2308 = vunpack.c.l.b16 %v2162
        %v2309 = vpack.c.b16 %v2262, %v2261
        %v2310 = vpack.c.b16 %v2264, %v2263
        %v2311 = vpack.c.b16 %v2266, %v2265
        %v2312 = vpack.c.b16 %v2268, %v2267
        %v2313 = vpack.c.b16 %v2270, %v2269
        %v2314 = vpack.c.b16 %v2272, %v2271
        %v2315 = vpack.c.b16 %v2274, %v2273
        %v2316 = vpack.c.b16 %v2276, %v2275
        %v2317 = vpack.c.b16 %v2278, %v2277
        %v2318 = vpack.c.b16 %v2280, %v2279
        %v2319 = vpack.c.b16 %v2282, %v2281
        %v2320 = vpack.c.b16 %v2284, %v2283
        %v2321 = vpack.c.b16 %v2286, %v2285
        %v2322 = vpack.c.b16 %v2288, %v2287
        %v2323 = vpack.c.b16 %v2290, %v2289
        %v2324 = vpack.c.b16 %v2292, %v2291
        %v2325 = vpack.c.b16 %v2294, %v2293
        %v2326 = vpack.c.b16 %v2296, %v2295
        %v2327 = vpack.c.b16 %v2298, %v2297
        %v2328 = vpack.c.b16 %v2300, %v2299
        %v2329 = vpack.c.b16 %v2302, %v2301
        %v2330 = vpack.c.b16 %v2304, %v2303
        %v2331 = vpack.c.b16 %v2306, %v2305
        %v2332 = vpack.c.b16 %v2308, %v2307
        %2357 = vmatprep.subr.bf16.mxu0 0
        %2358 = vmatpush1.bf16.msra.mxu0 %v2309
        %2359 = vmatprep.subr.bf16.mxu0 0
        %2360 = vmatpush1.bf16.msra.mxu0 %v2310
        %2361 = vmatprep.subr.bf16.mxu0 0
        %2362 = vmatpush1.bf16.msra.mxu0 %v2311
        %2363 = vmatprep.subr.bf16.mxu0 0
        %2364 = vmatpush1.bf16.msra.mxu0 %v2312
        %2365 = vmatprep.subr.bf16.mxu0 0
        %2366 = vmatpush1.bf16.msra.mxu0 %v2313
        %2367 = vmatprep.subr.bf16.mxu0 0
        %2368 = vmatpush1.bf16.msra.mxu0 %v2314
        %2369 = vmatprep.subr.bf16.mxu0 0
        %2370 = vmatpush1.bf16.msra.mxu0 %v2315
        %2371 = vmatprep.subr.bf16.mxu0 0
        %2372 = vmatpush1.bf16.msra.mxu0 %v2316
        %2373 = vmatprep.subr.bf16.mxu0 0
        %2374 = vmatpush1.bf16.msra.mxu0 %v2317
        %2375 = vmatprep.subr.bf16.mxu0 0
        %2376 = vmatpush1.bf16.msra.mxu0 %v2318
        %2377 = vmatprep.subr.bf16.mxu0 0
        %2378 = vmatpush1.bf16.msra.mxu0 %v2319
        %2379 = vmatprep.subr.bf16.mxu0 0
        %2380 = vmatpush1.bf16.msra.mxu0 %v2320
        %2381 = vmatprep.subr.bf16.mxu0 0
        %2382 = vmatpush1.bf16.msra.mxu0 %v2321
        %2383 = vmatprep.subr.bf16.mxu0 0
        %2384 = vmatpush1.bf16.msra.mxu0 %v2322
        %2385 = vmatprep.subr.bf16.mxu0 0
        %2386 = vmatpush1.bf16.msra.mxu0 %v2323
        %2387 = vmatprep.subr.bf16.mxu0 0
        %2388 = vmatpush1.bf16.msra.mxu0 %v2324
        %2389 = vmatprep.mubr.bf16.mxu0 %v2202
        %2390 = vmatmul.mubr.bf16.gmra.mrb[0].mxu0 %v2195
        %v2391 = vpop.f32.mrb[0].mxu0
        %v2392 = vadd.f32 %v2188, %v2391
        %v2393 = vpop.f32.mrb[0].mxu0
        %v2394 = vpop.f32.mrb[0].mxu0
        %v2395 = vpop.f32.mrb[0].mxu0
        %2396 = vdwg.mxu0
        %2397 = vmatprep.subr.bf16.mxu0 0
        %2398 = vmatpush1.bf16.msra.mxu0 %v2325
        %2399 = vmatprep.subr.bf16.mxu0 0
        %2400 = vmatpush1.bf16.msra.mxu0 %v2326
        %2401 = vmatprep.subr.bf16.mxu0 0
        %2402 = vmatpush1.bf16.msra.mxu0 %v2327
        %2403 = vmatprep.subr.bf16.mxu0 0
        %2404 = vmatpush1.bf16.msra.mxu0 %v2328
        %2405 = vmatprep.subr.bf16.mxu0 0
        %2406 = vmatpush1.bf16.msra.mxu0 %v2329
        %2407 = vmatprep.subr.bf16.mxu0 0
        %2408 = vmatpush1.bf16.msra.mxu0 %v2330
        %2409 = vmatprep.subr.bf16.mxu0 0
        %2410 = vmatpush1.bf16.msra.mxu0 %v2331
        %2411 = vmatprep.subr.bf16.mxu0 0
        %2412 = vmatpush1.bf16.msra.mxu0 %v2332
        %2413 = vmatprep.subr.bf16.mxu0 0
        %2414 = vmatpush1.bf16.msra.mxu0 0
        %2415 = vmatprep.subr.bf16.mxu0 0
        %2416 = vmatpush1.bf16.msra.mxu0 0
        %2417 = vmatprep.subr.bf16.mxu0 0
        %2418 = vmatpush1.bf16.msra.mxu0 0
        %2419 = vmatprep.subr.bf16.mxu0 0
        %2420 = vmatpush1.bf16.msra.mxu0 0
        %2421 = vmatprep.subr.bf16.mxu0 0
        %2422 = vmatpush1.bf16.msra.mxu0 0
        %2423 = vmatprep.subr.bf16.mxu0 0
        %2424 = vmatpush1.bf16.msra.mxu0 0
        %2425 = vmatprep.subr.bf16.mxu0 0
        %2426 = vmatpush1.bf16.msra.mxu0 0
        %2427 = vmatprep.subr.bf16.mxu0 0
        %2428 = vmatpush1.bf16.msra.mxu0 0
        %2429 = vmatprep.mubr.bf16.mxu0 0
        %2430 = vmatmul.mubr.bf16.gmra.mrb[0].mxu0 %v2209
        %v2431 = vpop.f32.mrb[0].mxu0
        %v2432 = vadd.f32 %v2392, %v2431
        %v2433 = vpop.f32.mrb[0].mxu0
        %v2434 = vpop.f32.mrb[0].mxu0
        %v2435 = vpop.f32.mrb[0].mxu0
        %2436 = vdwg.mxu0
        %v2437 = vmax.f32 %v2432, 0.0
        %s2438 = scalar_lea.vmem %s7, 192
        %v2439 = vld [vmem:[%s2438] sm:$0xf]
        %v2440 = vld [vmem:[%s2438 + $0x4] sm:$0xf]
        %v2441 = vld [vmem:[%s2438 + $0x8] sm:$0xf]
        %v2442 = vld [vmem:[%s2438 + $0xc] sm:$0xf]
        %v2443 = vld [vmem:[%s2438 + $0x10] sm:$0xf]
        %v2444 = vld [vmem:[%s2438 + $0x14] sm:$0xf]
        %v2445 = vld [vmem:[%s2438 + $0x18] sm:$0xf]
        %v2446 = vld [vmem:[%s2438 + $0x1c] sm:$0xf]
        %v2447 = vld [vmem:[%s2438 + $0x20] sm:$0xf]
        %v2448 = vld [vmem:[%s2438 + $0x24] sm:$0xf]
        %v2449 = vld [vmem:[%s2438 + $0x28] sm:$0xf]
        %v2450 = vld [vmem:[%s2438 + $0x2c] sm:$0xf]
        %v2451 = vld [vmem:[%s2438 + $0x30] sm:$0xf]
        %v2452 = vld [vmem:[%s2438 + $0x34] sm:$0xf]
        %v2453 = vld [vmem:[%s2438 + $0x38] sm:$0xf]
        %v2454 = vld [vmem:[%s2438 + $0x3c] sm:$0xf]
        %v2455 = vld [vmem:[%s2438 + $0x40] sm:$0xf]
        %v2456 = vld [vmem:[%s2438 + $0x44] sm:$0xf]
        %v2457 = vld [vmem:[%s2438 + $0x48] sm:$0xf]
        %v2458 = vld [vmem:[%s2438 + $0x4c] sm:$0xf]
        %v2459 = vld [vmem:[%s2438 + $0x50] sm:$0xf]
        %v2460 = vld [vmem:[%s2438 + $0x54] sm:$0xf]
        %v2461 = vld [vmem:[%s2438 + $0x58] sm:$0xf]
        %v2462 = vld [vmem:[%s2438 + $0x5c] sm:$0xf]
        %v2463 = vld [vmem:[%s2438 + $0x60] sm:$0xf]
        %v2464 = vld [vmem:[%s2438 + $0x64] sm:$0xf]
        %v2465 = vld [vmem:[%s2438 + $0x68] sm:$0xf]
        %v2466 = vld [vmem:[%s2438 + $0x6c] sm:$0xf]
        %v2467 = vld [vmem:[%s2438 + $0x70] sm:$0xf]
        %v2468 = vld [vmem:[%s2438 + $0x74] sm:$0xf]
        %v2469 = vld [vmem:[%s2438 + $0x78] sm:$0xf]
        %v2470 = vld [vmem:[%s2438 + $0x7c] sm:$0xf]
        %v2471 = vld [vmem:[%s2438 + $0x80] sm:$0xf]
        %v2472 = vld [vmem:[%s2438 + $0x84] sm:$0xf]
        %v2473 = vld [vmem:[%s2438 + $0x88] sm:$0xf]
        %v2474 = vld [vmem:[%s2438 + $0x8c] sm:$0xf]
        %v2475 = vld [vmem:[%s2438 + $0x90] sm:$0xf]
        %v2476 = vld [vmem:[%s2438 + $0x94] sm:$0xf]
        %v2477 = vld [vmem:[%s2438 + $0x98] sm:$0xf]
        %v2478 = vld [vmem:[%s2438 + $0x9c] sm:$0xf]
        %v2479 = vld [vmem:[%s2438 + $0xa0] sm:$0xf]
        %v2480 = vld [vmem:[%s2438 + $0xa4] sm:$0xf]
        %v2481 = vld [vmem:[%s2438 + $0xa8] sm:$0xf]
        %v2482 = vld [vmem:[%s2438 + $0xac] sm:$0xf]
        %v2483 = vld [vmem:[%s2438 + $0xb0] sm:$0xf]
        %v2484 = vld [vmem:[%s2438 + $0xb4] sm:$0xf]
        %v2485 = vld [vmem:[%s2438 + $0xb8] sm:$0xf]
        %v2486 = vld [vmem:[%s2438 + $0xbc] sm:$0xf]
        %v2487 = vld [vmem:[%s9 + $0x1] sm:$0x1]
        %v2489 = vrot.slane %v2437, 6
        %2491 = vst [vmem:[#allocation3] sm:$0xfc] %v2489
        %2492 = vst [vmem:[#allocation3 + $0x18] sm:$0x3] %v2489
        %v2493 = vrot.slane %v2437, 7
        %2495 = vst [vmem:[#allocation3 + $0x8] sm:$0xfe] %v2493
        %2496 = vst [vmem:[#allocation3 + $0x20] sm:$0x1] %v2493
        %2497 = vst [vmem:[#allocation3 + $0x10] sm:$0xff] %v2437
        %2498 = vst [vmem:[#allocation3 + $0x1] sm:$0x1] 0.0
        %2499 = vst [vmem:[#allocation3 + $0x28] sm:$0x1] 0.0
        %v2500 = vld [vmem:[#allocation3] sm:$0xfe]
        %v2501 = vld [vmem:[#allocation3 + $0x8] sm:$0xfe]
        %v2502 = vld [vmem:[#allocation3 + $0x10] sm:$0xfe]
        %v2503 = vld [vmem:[#allocation3 + $0x18] sm:$0x1]
        %v2504 = vld [vmem:[#allocation3 + $0x20] sm:$0x1]
        %v2505 = vld [vmem:[#allocation3 + $0x28] sm:$0x1]
        %v2506 = vpack.c.bf16 %v2503, %v2500
        %v2507 = vpack.c.bf16 %v2504, %v2501
        %v2508 = vpack.c.bf16 %v2505, %v2502
        %v2509 = vlaneseq
        %v2510 = vshrl.u32 %v2509, 7
        %v2511 = vsub.s32 0, %v2510
        %v2512 = vrot.slane %v2487, %v2511
        %v2514 = vshrl.u32 %v2506, 16
        %v2516 = vshll.u32 %v2506, 16
        %v2518 = vrot.slane %v2516, 1
        %v2519 = vor.u32 %v2514, %v2518
        %v2521 = vshrl.u32 %v2507, 16
        %v2523 = vshll.u32 %v2507, 16
        %v2525 = vrot.slane %v2523, 1
        %v2526 = vor.u32 %v2521, %v2525
        %v2528 = vshrl.u32 %v2508, 16
        %v2530 = vshll.u32 %v2508, 16
        %v2532 = vrot.slane %v2530, 1
        %v2533 = vor.u32 %v2528, %v2532
        %v2585 = vunpack.c.l.b16 %v2439
        %v2586 = vunpack.c.l.b16 %v2440
        %v2587 = vunpack.c.l.b16 %v2441
        %v2588 = vunpack.c.l.b16 %v2442
        %v2589 = vunpack.c.l.b16 %v2443
        %v2590 = vunpack.c.l.b16 %v2444
        %v2591 = vunpack.c.l.b16 %v2445
        %v2592 = vunpack.c.l.b16 %v2446
        %v2593 = vunpack.c.l.b16 %v2447
        %v2594 = vunpack.c.l.b16 %v2448
        %v2595 = vunpack.c.l.b16 %v2449
        %v2596 = vunpack.c.l.b16 %v2450
        %v2597 = vunpack.c.l.b16 %v2451
        %v2598 = vunpack.c.l.b16 %v2452
        %v2599 = vunpack.c.l.b16 %v2453
        %v2600 = vunpack.c.l.b16 %v2454
        %v2601 = vunpack.c.l.b16 %v2455
        %v2602 = vunpack.c.l.b16 %v2456
        %v2603 = vunpack.c.l.b16 %v2457
        %v2604 = vunpack.c.l.b16 %v2458
        %v2605 = vunpack.c.l.b16 %v2459
        %v2606 = vunpack.c.l.b16 %v2460
        %v2607 = vunpack.c.l.b16 %v2461
        %v2608 = vunpack.c.l.b16 %v2462
        %v2609 = vunpack.c.l.b16 %v2463
        %v2610 = vunpack.c.l.b16 %v2464
        %v2611 = vunpack.c.l.b16 %v2465
        %v2612 = vunpack.c.l.b16 %v2466
        %v2613 = vunpack.c.l.b16 %v2467
        %v2614 = vunpack.c.l.b16 %v2468
        %v2615 = vunpack.c.l.b16 %v2469
        %v2616 = vunpack.c.l.b16 %v2470
        %v2617 = vunpack.c.l.b16 %v2471
        %v2618 = vunpack.c.l.b16 %v2472
        %v2619 = vunpack.c.l.b16 %v2473
        %v2620 = vunpack.c.l.b16 %v2474
        %v2621 = vunpack.c.l.b16 %v2475
        %v2622 = vunpack.c.l.b16 %v2476
        %v2623 = vunpack.c.l.b16 %v2477
        %v2624 = vunpack.c.l.b16 %v2478
        %v2625 = vunpack.c.l.b16 %v2479
        %v2626 = vunpack.c.l.b16 %v2480
        %v2627 = vunpack.c.l.b16 %v2481
        %v2628 = vunpack.c.l.b16 %v2482
        %v2629 = vunpack.c.l.b16 %v2483
        %v2630 = vunpack.c.l.b16 %v2484
        %v2631 = vunpack.c.l.b16 %v2485
        %v2632 = vunpack.c.l.b16 %v2486
        %v2633 = vpack.c.b16 %v2586, %v2585
        %v2634 = vpack.c.b16 %v2588, %v2587
        %v2635 = vpack.c.b16 %v2590, %v2589
        %v2636 = vpack.c.b16 %v2592, %v2591
        %v2637 = vpack.c.b16 %v2594, %v2593
        %v2638 = vpack.c.b16 %v2596, %v2595
        %v2639 = vpack.c.b16 %v2598, %v2597
        %v2640 = vpack.c.b16 %v2600, %v2599
        %v2641 = vpack.c.b16 %v2602, %v2601
        %v2642 = vpack.c.b16 %v2604, %v2603
        %v2643 = vpack.c.b16 %v2606, %v2605
        %v2644 = vpack.c.b16 %v2608, %v2607
        %v2645 = vpack.c.b16 %v2610, %v2609
        %v2646 = vpack.c.b16 %v2612, %v2611
        %v2647 = vpack.c.b16 %v2614, %v2613
        %v2648 = vpack.c.b16 %v2616, %v2615
        %v2649 = vpack.c.b16 %v2618, %v2617
        %v2650 = vpack.c.b16 %v2620, %v2619
        %v2651 = vpack.c.b16 %v2622, %v2621
        %v2652 = vpack.c.b16 %v2624, %v2623
        %v2653 = vpack.c.b16 %v2626, %v2625
        %v2654 = vpack.c.b16 %v2628, %v2627
        %v2655 = vpack.c.b16 %v2630, %v2629
        %v2656 = vpack.c.b16 %v2632, %v2631
        %2681 = vmatprep.subr.bf16.mxu0 0
        %2682 = vmatpush1.bf16.msra.mxu0 %v2633
        %2683 = vmatprep.subr.bf16.mxu0 0
        %2684 = vmatpush1.bf16.msra.mxu0 %v2634
        %2685 = vmatprep.subr.bf16.mxu0 0
        %2686 = vmatpush1.bf16.msra.mxu0 %v2635
        %2687 = vmatprep.subr.bf16.mxu0 0
        %2688 = vmatpush1.bf16.msra.mxu0 %v2636
        %2689 = vmatprep.subr.bf16.mxu0 0
        %2690 = vmatpush1.bf16.msra.mxu0 %v2637
        %2691 = vmatprep.subr.bf16.mxu0 0
        %2692 = vmatpush1.bf16.msra.mxu0 %v2638
        %2693 = vmatprep.subr.bf16.mxu0 0
        %2694 = vmatpush1.bf16.msra.mxu0 %v2639
        %2695 = vmatprep.subr.bf16.mxu0 0
        %2696 = vmatpush1.bf16.msra.mxu0 %v2640
        %2697 = vmatprep.subr.bf16.mxu0 0
        %2698 = vmatpush1.bf16.msra.mxu0 %v2641
        %2699 = vmatprep.subr.bf16.mxu0 0
        %2700 = vmatpush1.bf16.msra.mxu0 %v2642
        %2701 = vmatprep.subr.bf16.mxu0 0
        %2702 = vmatpush1.bf16.msra.mxu0 %v2643
        %2703 = vmatprep.subr.bf16.mxu0 0
        %2704 = vmatpush1.bf16.msra.mxu0 %v2644
        %2705 = vmatprep.subr.bf16.mxu0 0
        %2706 = vmatpush1.bf16.msra.mxu0 %v2645
        %2707 = vmatprep.subr.bf16.mxu0 0
        %2708 = vmatpush1.bf16.msra.mxu0 %v2646
        %2709 = vmatprep.subr.bf16.mxu0 0
        %2710 = vmatpush1.bf16.msra.mxu0 %v2647
        %2711 = vmatprep.subr.bf16.mxu0 0
        %2712 = vmatpush1.bf16.msra.mxu0 %v2648
        %2713 = vmatprep.mubr.bf16.mxu0 %v2526
        %2714 = vmatmul.mubr.bf16.gmra.mrb[0].mxu0 %v2519
        %v2715 = vpop.f32.mrb[0].mxu0
        %v2716 = vadd.f32 %v2512, %v2715
        %v2717 = vpop.f32.mrb[0].mxu0
        %v2718 = vpop.f32.mrb[0].mxu0
        %v2719 = vpop.f32.mrb[0].mxu0
        %2720 = vdwg.mxu0
        %2721 = vmatprep.subr.bf16.mxu0 0
        %2722 = vmatpush1.bf16.msra.mxu0 %v2649
        %2723 = vmatprep.subr.bf16.mxu0 0
        %2724 = vmatpush1.bf16.msra.mxu0 %v2650
        %2725 = vmatprep.subr.bf16.mxu0 0
        %2726 = vmatpush1.bf16.msra.mxu0 %v2651
        %2727 = vmatprep.subr.bf16.mxu0 0
        %2728 = vmatpush1.bf16.msra.mxu0 %v2652
        %2729 = vmatprep.subr.bf16.mxu0 0
        %2730 = vmatpush1.bf16.msra.mxu0 %v2653
        %2731 = vmatprep.subr.bf16.mxu0 0
        %2732 = vmatpush1.bf16.msra.mxu0 %v2654
        %2733 = vmatprep.subr.bf16.mxu0 0
        %2734 = vmatpush1.bf16.msra.mxu0 %v2655
        %2735 = vmatprep.subr.bf16.mxu0 0
        %2736 = vmatpush1.bf16.msra.mxu0 %v2656
        %2737 = vmatprep.subr.bf16.mxu0 0
        %2738 = vmatpush1.bf16.msra.mxu0 0
        %2739 = vmatprep.subr.bf16.mxu0 0
        %2740 = vmatpush1.bf16.msra.mxu0 0
        %2741 = vmatprep.subr.bf16.mxu0 0
        %2742 = vmatpush1.bf16.msra.mxu0 0
        %2743 = vmatprep.subr.bf16.mxu0 0
        %2744 = vmatpush1.bf16.msra.mxu0 0
        %2745 = vmatprep.subr.bf16.mxu0 0
        %2746 = vmatpush1.bf16.msra.mxu0 0
        %2747 = vmatprep.subr.bf16.mxu0 0
        %2748 = vmatpush1.bf16.msra.mxu0 0
        %2749 = vmatprep.subr.bf16.mxu0 0
        %2750 = vmatpush1.bf16.msra.mxu0 0
        %2751 = vmatprep.subr.bf16.mxu0 0
        %2752 = vmatpush1.bf16.msra.mxu0 0
        %2753 = vmatprep.mubr.bf16.mxu0 0
        %2754 = vmatmul.mubr.bf16.gmra.mrb[0].mxu0 %v2533
        %v2755 = vpop.f32.mrb[0].mxu0
        %v2756 = vadd.f32 %v2716, %v2755
        %v2757 = vpop.f32.mrb[0].mxu0
        %v2758 = vpop.f32.mrb[0].mxu0
        %v2759 = vpop.f32.mrb[0].mxu0
        %2760 = vdwg.mxu0
        %v2761 = vadd.f32 %v2113, %v2756
        %v2762 = vmax.f32 %v2761, 0.0
        %s2763 = scalar_lea.vmem %s7, 384
        %v2764 = vld [vmem:[%s2763] sm:$0xf]
        %v2765 = vld [vmem:[%s2763 + $0x4] sm:$0xf]
        %v2766 = vld [vmem:[%s2763 + $0x8] sm:$0xf]
        %v2767 = vld [vmem:[%s2763 + $0xc] sm:$0xf]
        %v2768 = vld [vmem:[%s2763 + $0x10] sm:$0xf]
        %v2769 = vld [vmem:[%s2763 + $0x14] sm:$0xf]
        %v2770 = vld [vmem:[%s2763 + $0x18] sm:$0xf]
        %v2771 = vld [vmem:[%s2763 + $0x1c] sm:$0xf]
        %v2772 = vld [vmem:[%s2763 + $0x20] sm:$0xf]
        %v2773 = vld [vmem:[%s2763 + $0x24] sm:$0xf]
        %v2774 = vld [vmem:[%s2763 + $0x28] sm:$0xf]
        %v2775 = vld [vmem:[%s2763 + $0x2c] sm:$0xf]
        %v2776 = vld [vmem:[%s2763 + $0x30] sm:$0xf]
        %v2777 = vld [vmem:[%s2763 + $0x34] sm:$0xf]
        %v2778 = vld [vmem:[%s2763 + $0x38] sm:$0xf]
        %v2779 = vld [vmem:[%s2763 + $0x3c] sm:$0xf]
        %v2780 = vld [vmem:[%s2763 + $0x40] sm:$0xf]
        %v2781 = vld [vmem:[%s2763 + $0x44] sm:$0xf]
        %v2782 = vld [vmem:[%s2763 + $0x48] sm:$0xf]
        %v2783 = vld [vmem:[%s2763 + $0x4c] sm:$0xf]
        %v2784 = vld [vmem:[%s2763 + $0x50] sm:$0xf]
        %v2785 = vld [vmem:[%s2763 + $0x54] sm:$0xf]
        %v2786 = vld [vmem:[%s2763 + $0x58] sm:$0xf]
        %v2787 = vld [vmem:[%s2763 + $0x5c] sm:$0xf]
        %v2788 = vld [vmem:[%s2763 + $0x60] sm:$0xf]
        %v2789 = vld [vmem:[%s2763 + $0x64] sm:$0xf]
        %v2790 = vld [vmem:[%s2763 + $0x68] sm:$0xf]
        %v2791 = vld [vmem:[%s2763 + $0x6c] sm:$0xf]
        %v2792 = vld [vmem:[%s2763 + $0x70] sm:$0xf]
        %v2793 = vld [vmem:[%s2763 + $0x74] sm:$0xf]
        %v2794 = vld [vmem:[%s2763 + $0x78] sm:$0xf]
        %v2795 = vld [vmem:[%s2763 + $0x7c] sm:$0xf]
        %v2796 = vld [vmem:[%s2763 + $0x80] sm:$0xf]
        %v2797 = vld [vmem:[%s2763 + $0x84] sm:$0xf]
        %v2798 = vld [vmem:[%s2763 + $0x88] sm:$0xf]
        %v2799 = vld [vmem:[%s2763 + $0x8c] sm:$0xf]
        %v2800 = vld [vmem:[%s2763 + $0x90] sm:$0xf]
        %v2801 = vld [vmem:[%s2763 + $0x94] sm:$0xf]
        %v2802 = vld [vmem:[%s2763 + $0x98] sm:$0xf]
        %v2803 = vld [vmem:[%s2763 + $0x9c] sm:$0xf]
        %v2804 = vld [vmem:[%s2763 + $0xa0] sm:$0xf]
        %v2805 = vld [vmem:[%s2763 + $0xa4] sm:$0xf]
        %v2806 = vld [vmem:[%s2763 + $0xa8] sm:$0xf]
        %v2807 = vld [vmem:[%s2763 + $0xac] sm:$0xf]
        %v2808 = vld [vmem:[%s2763 + $0xb0] sm:$0xf]
        %v2809 = vld [vmem:[%s2763 + $0xb4] sm:$0xf]
        %v2810 = vld [vmem:[%s2763 + $0xb8] sm:$0xf]
        %v2811 = vld [vmem:[%s2763 + $0xbc] sm:$0xf]
        %v2812 = vld [vmem:[%s9 + $0x2] sm:$0x1]
        %v2814 = vrot.slane %v2762, 6
        %2816 = vst [vmem:[#allocation3] sm:$0xfc] %v2814
        %2817 = vst [vmem:[#allocation3 + $0x18] sm:$0x3] %v2814
        %v2818 = vrot.slane %v2762, 7
        %2820 = vst [vmem:[#allocation3 + $0x8] sm:$0xfe] %v2818
        %2821 = vst [vmem:[#allocation3 + $0x20] sm:$0x1] %v2818
        %2822 = vst [vmem:[#allocation3 + $0x10] sm:$0xff] %v2762
        %2823 = vst [vmem:[#allocation3 + $0x1] sm:$0x1] 0.0
        %2824 = vst [vmem:[#allocation3 + $0x28] sm:$0x1] 0.0
        %v2825 = vld [vmem:[#allocation3] sm:$0xfe]
        %v2826 = vld [vmem:[#allocation3 + $0x8] sm:$0xfe]
        %v2827 = vld [vmem:[#allocation3 + $0x10] sm:$0xfe]
        %v2828 = vld [vmem:[#allocation3 + $0x18] sm:$0x1]
        %v2829 = vld [vmem:[#allocation3 + $0x20] sm:$0x1]
        %v2830 = vld [vmem:[#allocation3 + $0x28] sm:$0x1]
        %v2831 = vpack.c.bf16 %v2828, %v2825
        %v2832 = vpack.c.bf16 %v2829, %v2826
        %v2833 = vpack.c.bf16 %v2830, %v2827
        %v2834 = vlaneseq
        %v2835 = vshrl.u32 %v2834, 7
        %v2836 = vsub.s32 0, %v2835
        %v2837 = vrot.slane %v2812, %v2836
        %v2839 = vshrl.u32 %v2831, 16
        %v2841 = vshll.u32 %v2831, 16
        %v2843 = vrot.slane %v2841, 1
        %v2844 = vor.u32 %v2839, %v2843
        %v2846 = vshrl.u32 %v2832, 16
        %v2848 = vshll.u32 %v2832, 16
        %v2850 = vrot.slane %v2848, 1
        %v2851 = vor.u32 %v2846, %v2850
        %v2853 = vshrl.u32 %v2833, 16
        %v2855 = vshll.u32 %v2833, 16
        %v2857 = vrot.slane %v2855, 1
        %v2858 = vor.u32 %v2853, %v2857
        %v2910 = vunpack.c.l.b16 %v2764
        %v2911 = vunpack.c.l.b16 %v2765
        %v2912 = vunpack.c.l.b16 %v2766
        %v2913 = vunpack.c.l.b16 %v2767
        %v2914 = vunpack.c.l.b16 %v2768
        %v2915 = vunpack.c.l.b16 %v2769
        %v2916 = vunpack.c.l.b16 %v2770
        %v2917 = vunpack.c.l.b16 %v2771
        %v2918 = vunpack.c.l.b16 %v2772
        %v2919 = vunpack.c.l.b16 %v2773
        %v2920 = vunpack.c.l.b16 %v2774
        %v2921 = vunpack.c.l.b16 %v2775
        %v2922 = vunpack.c.l.b16 %v2776
        %v2923 = vunpack.c.l.b16 %v2777
        %v2924 = vunpack.c.l.b16 %v2778
        %v2925 = vunpack.c.l.b16 %v2779
        %v2926 = vunpack.c.l.b16 %v2780
        %v2927 = vunpack.c.l.b16 %v2781
        %v2928 = vunpack.c.l.b16 %v2782
        %v2929 = vunpack.c.l.b16 %v2783
        %v2930 = vunpack.c.l.b16 %v2784
        %v2931 = vunpack.c.l.b16 %v2785
        %v2932 = vunpack.c.l.b16 %v2786
        %v2933 = vunpack.c.l.b16 %v2787
        %v2934 = vunpack.c.l.b16 %v2788
        %v2935 = vunpack.c.l.b16 %v2789
        %v2936 = vunpack.c.l.b16 %v2790
        %v2937 = vunpack.c.l.b16 %v2791
        %v2938 = vunpack.c.l.b16 %v2792
        %v2939 = vunpack.c.l.b16 %v2793
        %v2940 = vunpack.c.l.b16 %v2794
        %v2941 = vunpack.c.l.b16 %v2795
        %v2942 = vunpack.c.l.b16 %v2796
        %v2943 = vunpack.c.l.b16 %v2797
        %v2944 = vunpack.c.l.b16 %v2798
        %v2945 = vunpack.c.l.b16 %v2799
        %v2946 = vunpack.c.l.b16 %v2800
        %v2947 = vunpack.c.l.b16 %v2801
        %v2948 = vunpack.c.l.b16 %v2802
        %v2949 = vunpack.c.l.b16 %v2803
        %v2950 = vunpack.c.l.b16 %v2804
        %v2951 = vunpack.c.l.b16 %v2805
        %v2952 = vunpack.c.l.b16 %v2806
        %v2953 = vunpack.c.l.b16 %v2807
        %v2954 = vunpack.c.l.b16 %v2808
        %v2955 = vunpack.c.l.b16 %v2809
        %v2956 = vunpack.c.l.b16 %v2810
        %v2957 = vunpack.c.l.b16 %v2811
        %v2958 = vpack.c.b16 %v2911, %v2910
        %v2959 = vpack.c.b16 %v2913, %v2912
        %v2960 = vpack.c.b16 %v2915, %v2914
        %v2961 = vpack.c.b16 %v2917, %v2916
        %v2962 = vpack.c.b16 %v2919, %v2918
        %v2963 = vpack.c.b16 %v2921, %v2920
        %v2964 = vpack.c.b16 %v2923, %v2922
        %v2965 = vpack.c.b16 %v2925, %v2924
        %v2966 = vpack.c.b16 %v2927, %v2926
        %v2967 = vpack.c.b16 %v2929, %v2928
        %v2968 = vpack.c.b16 %v2931, %v2930
        %v2969 = vpack.c.b16 %v2933, %v2932
        %v2970 = vpack.c.b16 %v2935, %v2934
        %v2971 = vpack.c.b16 %v2937, %v2936
        %v2972 = vpack.c.b16 %v2939, %v2938
        %v2973 = vpack.c.b16 %v2941, %v2940
        %v2974 = vpack.c.b16 %v2943, %v2942
        %v2975 = vpack.c.b16 %v2945, %v2944
        %v2976 = vpack.c.b16 %v2947, %v2946
        %v2977 = vpack.c.b16 %v2949, %v2948
        %v2978 = vpack.c.b16 %v2951, %v2950
        %v2979 = vpack.c.b16 %v2953, %v2952
        %v2980 = vpack.c.b16 %v2955, %v2954
        %v2981 = vpack.c.b16 %v2957, %v2956
        %3006 = vmatprep.subr.bf16.mxu0 0
        %3007 = vmatpush1.bf16.msra.mxu0 %v2958
        %3008 = vmatprep.subr.bf16.mxu0 0
        %3009 = vmatpush1.bf16.msra.mxu0 %v2959
        %3010 = vmatprep.subr.bf16.mxu0 0
        %3011 = vmatpush1.bf16.msra.mxu0 %v2960
        %3012 = vmatprep.subr.bf16.mxu0 0
        %3013 = vmatpush1.bf16.msra.mxu0 %v2961
        %3014 = vmatprep.subr.bf16.mxu0 0
        %3015 = vmatpush1.bf16.msra.mxu0 %v2962
        %3016 = vmatprep.subr.bf16.mxu0 0
        %3017 = vmatpush1.bf16.msra.mxu0 %v2963
        %3018 = vmatprep.subr.bf16.mxu0 0
        %3019 = vmatpush1.bf16.msra.mxu0 %v2964
        %3020 = vmatprep.subr.bf16.mxu0 0
        %3021 = vmatpush1.bf16.msra.mxu0 %v2965
        %3022 = vmatprep.subr.bf16.mxu0 0
        %3023 = vmatpush1.bf16.msra.mxu0 %v2966
        %3024 = vmatprep.subr.bf16.mxu0 0
        %3025 = vmatpush1.bf16.msra.mxu0 %v2967
        %3026 = vmatprep.subr.bf16.mxu0 0
        %3027 = vmatpush1.bf16.msra.mxu0 %v2968
        %3028 = vmatprep.subr.bf16.mxu0 0
        %3029 = vmatpush1.bf16.msra.mxu0 %v2969
        %3030 = vmatprep.subr.bf16.mxu0 0
        %3031 = vmatpush1.bf16.msra.mxu0 %v2970
        %3032 = vmatprep.subr.bf16.mxu0 0
        %3033 = vmatpush1.bf16.msra.mxu0 %v2971
        %3034 = vmatprep.subr.bf16.mxu0 0
        %3035 = vmatpush1.bf16.msra.mxu0 %v2972
        %3036 = vmatprep.subr.bf16.mxu0 0
        %3037 = vmatpush1.bf16.msra.mxu0 %v2973
        %3038 = vmatprep.mubr.bf16.mxu0 %v2851
        %3039 = vmatmul.mubr.bf16.gmra.mrb[0].mxu0 %v2844
        %v3040 = vpop.f32.mrb[0].mxu0
        %v3041 = vadd.f32 %v2837, %v3040
        %v3042 = vpop.f32.mrb[0].mxu0
        %v3043 = vpop.f32.mrb[0].mxu0
        %v3044 = vpop.f32.mrb[0].mxu0
        %3045 = vdwg.mxu0
        %3046 = vmatprep.subr.bf16.mxu0 0
        %3047 = vmatpush1.bf16.msra.mxu0 %v2974
        %3048 = vmatprep.subr.bf16.mxu0 0
        %3049 = vmatpush1.bf16.msra.mxu0 %v2975
        %3050 = vmatprep.subr.bf16.mxu0 0
        %3051 = vmatpush1.bf16.msra.mxu0 %v2976
        %3052 = vmatprep.subr.bf16.mxu0 0
        %3053 = vmatpush1.bf16.msra.mxu0 %v2977
        %3054 = vmatprep.subr.bf16.mxu0 0
        %3055 = vmatpush1.bf16.msra.mxu0 %v2978
        %3056 = vmatprep.subr.bf16.mxu0 0
        %3057 = vmatpush1.bf16.msra.mxu0 %v2979
        %3058 = vmatprep.subr.bf16.mxu0 0
        %3059 = vmatpush1.bf16.msra.mxu0 %v2980
        %3060 = vmatprep.subr.bf16.mxu0 0
        %3061 = vmatpush1.bf16.msra.mxu0 %v2981
        %3062 = vmatprep.subr.bf16.mxu0 0
        %3063 = vmatpush1.bf16.msra.mxu0 0
        %3064 = vmatprep.subr.bf16.mxu0 0
        %3065 = vmatpush1.bf16.msra.mxu0 0
        %3066 = vmatprep.subr.bf16.mxu0 0
        %3067 = vmatpush1.bf16.msra.mxu0 0
        %3068 = vmatprep.subr.bf16.mxu0 0
        %3069 = vmatpush1.bf16.msra.mxu0 0
        %3070 = vmatprep.subr.bf16.mxu0 0
        %3071 = vmatpush1.bf16.msra.mxu0 0
        %3072 = vmatprep.subr.bf16.mxu0 0
        %3073 = vmatpush1.bf16.msra.mxu0 0
        %3074 = vmatprep.subr.bf16.mxu0 0
        %3075 = vmatpush1.bf16.msra.mxu0 0
        %3076 = vmatprep.subr.bf16.mxu0 0
        %3077 = vmatpush1.bf16.msra.mxu0 0
        %3078 = vmatprep.mubr.bf16.mxu0 0
        %3079 = vmatmul.mubr.bf16.gmra.mrb[0].mxu0 %v2858
        %v3080 = vpop.f32.mrb[0].mxu0
        %v3081 = vadd.f32 %v3041, %v3080
        %v3082 = vpop.f32.mrb[0].mxu0
        %v3083 = vpop.f32.mrb[0].mxu0
        %v3084 = vpop.f32.mrb[0].mxu0
        %3085 = vdwg.mxu0
        %v3086 = vmax.f32 %v3081, 0.0
        %s3087 = scalar_lea.vmem %s7, 576
        %v3088 = vld [vmem:[%s3087] sm:$0xf]
        %v3089 = vld [vmem:[%s3087 + $0x4] sm:$0xf]
        %v3090 = vld [vmem:[%s3087 + $0x8] sm:$0xf]
        %v3091 = vld [vmem:[%s3087 + $0xc] sm:$0xf]
        %v3092 = vld [vmem:[%s3087 + $0x10] sm:$0xf]
        %v3093 = vld [vmem:[%s3087 + $0x14] sm:$0xf]
        %v3094 = vld [vmem:[%s3087 + $0x18] sm:$0xf]
        %v3095 = vld [vmem:[%s3087 + $0x1c] sm:$0xf]
        %v3096 = vld [vmem:[%s3087 + $0x20] sm:$0xf]
        %v3097 = vld [vmem:[%s3087 + $0x24] sm:$0xf]
        %v3098 = vld [vmem:[%s3087 + $0x28] sm:$0xf]
        %v3099 = vld [vmem:[%s3087 + $0x2c] sm:$0xf]
        %v3100 = vld [vmem:[%s3087 + $0x30] sm:$0xf]
        %v3101 = vld [vmem:[%s3087 + $0x34] sm:$0xf]
        %v3102 = vld [vmem:[%s3087 + $0x38] sm:$0xf]
        %v3103 = vld [vmem:[%s3087 + $0x3c] sm:$0xf]
        %v3104 = vld [vmem:[%s3087 + $0x40] sm:$0xf]
        %v3105 = vld [vmem:[%s3087 + $0x44] sm:$0xf]
        %v3106 = vld [vmem:[%s3087 + $0x48] sm:$0xf]
        %v3107 = vld [vmem:[%s3087 + $0x4c] sm:$0xf]
        %v3108 = vld [vmem:[%s3087 + $0x50] sm:$0xf]
        %v3109 = vld [vmem:[%s3087 + $0x54] sm:$0xf]
        %v3110 = vld [vmem:[%s3087 + $0x58] sm:$0xf]
        %v3111 = vld [vmem:[%s3087 + $0x5c] sm:$0xf]
        %v3112 = vld [vmem:[%s3087 + $0x60] sm:$0xf]
        %v3113 = vld [vmem:[%s3087 + $0x64] sm:$0xf]
        %v3114 = vld [vmem:[%s3087 + $0x68] sm:$0xf]
        %v3115 = vld [vmem:[%s3087 + $0x6c] sm:$0xf]
        %v3116 = vld [vmem:[%s3087 + $0x70] sm:$0xf]
        %v3117 = vld [vmem:[%s3087 + $0x74] sm:$0xf]
        %v3118 = vld [vmem:[%s3087 + $0x78] sm:$0xf]
        %v3119 = vld [vmem:[%s3087 + $0x7c] sm:$0xf]
        %v3120 = vld [vmem:[%s3087 + $0x80] sm:$0xf]
        %v3121 = vld [vmem:[%s3087 + $0x84] sm:$0xf]
        %v3122 = vld [vmem:[%s3087 + $0x88] sm:$0xf]
        %v3123 = vld [vmem:[%s3087 + $0x8c] sm:$0xf]
        %v3124 = vld [vmem:[%s3087 + $0x90] sm:$0xf]
        %v3125 = vld [vmem:[%s3087 + $0x94] sm:$0xf]
        %v3126 = vld [vmem:[%s3087 + $0x98] sm:$0xf]
        %v3127 = vld [vmem:[%s3087 + $0x9c] sm:$0xf]
        %v3128 = vld [vmem:[%s3087 + $0xa0] sm:$0xf]
        %v3129 = vld [vmem:[%s3087 + $0xa4] sm:$0xf]
        %v3130 = vld [vmem:[%s3087 + $0xa8] sm:$0xf]
        %v3131 = vld [vmem:[%s3087 + $0xac] sm:$0xf]
        %v3132 = vld [vmem:[%s3087 + $0xb0] sm:$0xf]
        %v3133 = vld [vmem:[%s3087 + $0xb4] sm:$0xf]
        %v3134 = vld [vmem:[%s3087 + $0xb8] sm:$0xf]
        %v3135 = vld [vmem:[%s3087 + $0xbc] sm:$0xf]
        %v3136 = vld [vmem:[%s9 + $0x3] sm:$0x1]
        %v3138 = vrot.slane %v3086, 6
        %3140 = vst [vmem:[#allocation3] sm:$0xfc] %v3138
        %3141 = vst [vmem:[#allocation3 + $0x18] sm:$0x3] %v3138
        %v3142 = vrot.slane %v3086, 7
        %3144 = vst [vmem:[#allocation3 + $0x8] sm:$0xfe] %v3142
        %3145 = vst [vmem:[#allocation3 + $0x20] sm:$0x1] %v3142
        %3146 = vst [vmem:[#allocation3 + $0x10] sm:$0xff] %v3086
        %3147 = vst [vmem:[#allocation3 + $0x1] sm:$0x1] 0.0
        %3148 = vst [vmem:[#allocation3 + $0x28] sm:$0x1] 0.0
        %v3149 = vld [vmem:[#allocation3] sm:$0xfe]
        %v3150 = vld [vmem:[#allocation3 + $0x8] sm:$0xfe]
        %v3151 = vld [vmem:[#allocation3 + $0x10] sm:$0xfe]
        %v3152 = vld [vmem:[#allocation3 + $0x18] sm:$0x1]
        %v3153 = vld [vmem:[#allocation3 + $0x20] sm:$0x1]
        %v3154 = vld [vmem:[#allocation3 + $0x28] sm:$0x1]
        %v3155 = vpack.c.bf16 %v3152, %v3149
        %v3156 = vpack.c.bf16 %v3153, %v3150
        %v3157 = vpack.c.bf16 %v3154, %v3151
        %v3158 = vlaneseq
        %v3159 = vshrl.u32 %v3158, 7
        %v3160 = vsub.s32 0, %v3159
        %v3161 = vrot.slane %v3136, %v3160
        %v3163 = vshrl.u32 %v3155, 16
        %v3165 = vshll.u32 %v3155, 16
        %v3167 = vrot.slane %v3165, 1
        %v3168 = vor.u32 %v3163, %v3167
        %v3170 = vshrl.u32 %v3156, 16
        %v3172 = vshll.u32 %v3156, 16
        %v3174 = vrot.slane %v3172, 1
        %v3175 = vor.u32 %v3170, %v3174
        %v3177 = vshrl.u32 %v3157, 16
        %v3179 = vshll.u32 %v3157, 16
        %v3181 = vrot.slane %v3179, 1
        %v3182 = vor.u32 %v3177, %v3181
        %v3234 = vunpack.c.l.b16 %v3088
        %v3235 = vunpack.c.l.b16 %v3089
        %v3236 = vunpack.c.l.b16 %v3090
        %v3237 = vunpack.c.l.b16 %v3091
        %v3238 = vunpack.c.l.b16 %v3092
        %v3239 = vunpack.c.l.b16 %v3093
        %v3240 = vunpack.c.l.b16 %v3094
        %v3241 = vunpack.c.l.b16 %v3095
        %v3242 = vunpack.c.l.b16 %v3096
        %v3243 = vunpack.c.l.b16 %v3097
        %v3244 = vunpack.c.l.b16 %v3098
        %v3245 = vunpack.c.l.b16 %v3099
        %v3246 = vunpack.c.l.b16 %v3100
        %v3247 = vunpack.c.l.b16 %v3101
        %v3248 = vunpack.c.l.b16 %v3102
        %v3249 = vunpack.c.l.b16 %v3103
        %v3250 = vunpack.c.l.b16 %v3104
        %v3251 = vunpack.c.l.b16 %v3105
        %v3252 = vunpack.c.l.b16 %v3106
        %v3253 = vunpack.c.l.b16 %v3107
        %v3254 = vunpack.c.l.b16 %v3108
        %v3255 = vunpack.c.l.b16 %v3109
        %v3256 = vunpack.c.l.b16 %v3110
        %v3257 = vunpack.c.l.b16 %v3111
        %v3258 = vunpack.c.l.b16 %v3112
        %v3259 = vunpack.c.l.b16 %v3113
        %v3260 = vunpack.c.l.b16 %v3114
        %v3261 = vunpack.c.l.b16 %v3115
        %v3262 = vunpack.c.l.b16 %v3116
        %v3263 = vunpack.c.l.b16 %v3117
        %v3264 = vunpack.c.l.b16 %v3118
        %v3265 = vunpack.c.l.b16 %v3119
        %v3266 = vunpack.c.l.b16 %v3120
        %v3267 = vunpack.c.l.b16 %v3121
        %v3268 = vunpack.c.l.b16 %v3122
        %v3269 = vunpack.c.l.b16 %v3123
        %v3270 = vunpack.c.l.b16 %v3124
        %v3271 = vunpack.c.l.b16 %v3125
        %v3272 = vunpack.c.l.b16 %v3126
        %v3273 = vunpack.c.l.b16 %v3127
        %v3274 = vunpack.c.l.b16 %v3128
        %v3275 = vunpack.c.l.b16 %v3129
        %v3276 = vunpack.c.l.b16 %v3130
        %v3277 = vunpack.c.l.b16 %v3131
        %v3278 = vunpack.c.l.b16 %v3132
        %v3279 = vunpack.c.l.b16 %v3133
        %v3280 = vunpack.c.l.b16 %v3134
        %v3281 = vunpack.c.l.b16 %v3135
        %v3282 = vpack.c.b16 %v3235, %v3234
        %v3283 = vpack.c.b16 %v3237, %v3236
        %v3284 = vpack.c.b16 %v3239, %v3238
        %v3285 = vpack.c.b16 %v3241, %v3240
        %v3286 = vpack.c.b16 %v3243, %v3242
        %v3287 = vpack.c.b16 %v3245, %v3244
        %v3288 = vpack.c.b16 %v3247, %v3246
        %v3289 = vpack.c.b16 %v3249, %v3248
        %v3290 = vpack.c.b16 %v3251, %v3250
        %v3291 = vpack.c.b16 %v3253, %v3252
        %v3292 = vpack.c.b16 %v3255, %v3254
        %v3293 = vpack.c.b16 %v3257, %v3256
        %v3294 = vpack.c.b16 %v3259, %v3258
        %v3295 = vpack.c.b16 %v3261, %v3260
        %v3296 = vpack.c.b16 %v3263, %v3262
        %v3297 = vpack.c.b16 %v3265, %v3264
        %v3298 = vpack.c.b16 %v3267, %v3266
        %v3299 = vpack.c.b16 %v3269, %v3268
        %v3300 = vpack.c.b16 %v3271, %v3270
        %v3301 = vpack.c.b16 %v3273, %v3272
        %v3302 = vpack.c.b16 %v3275, %v3274
        %v3303 = vpack.c.b16 %v3277, %v3276
        %v3304 = vpack.c.b16 %v3279, %v3278
        %v3305 = vpack.c.b16 %v3281, %v3280
        %3330 = vmatprep.subr.bf16.mxu0 0
        %3331 = vmatpush1.bf16.msra.mxu0 %v3282
        %3332 = vmatprep.subr.bf16.mxu0 0
        %3333 = vmatpush1.bf16.msra.mxu0 %v3283
        %3334 = vmatprep.subr.bf16.mxu0 0
        %3335 = vmatpush1.bf16.msra.mxu0 %v3284
        %3336 = vmatprep.subr.bf16.mxu0 0
        %3337 = vmatpush1.bf16.msra.mxu0 %v3285
        %3338 = vmatprep.subr.bf16.mxu0 0
        %3339 = vmatpush1.bf16.msra.mxu0 %v3286
        %3340 = vmatprep.subr.bf16.mxu0 0
        %3341 = vmatpush1.bf16.msra.mxu0 %v3287
        %3342 = vmatprep.subr.bf16.mxu0 0
        %3343 = vmatpush1.bf16.msra.mxu0 %v3288
        %3344 = vmatprep.subr.bf16.mxu0 0
        %3345 = vmatpush1.bf16.msra.mxu0 %v3289
        %3346 = vmatprep.subr.bf16.mxu0 0
        %3347 = vmatpush1.bf16.msra.mxu0 %v3290
        %3348 = vmatprep.subr.bf16.mxu0 0
        %3349 = vmatpush1.bf16.msra.mxu0 %v3291
        %3350 = vmatprep.subr.bf16.mxu0 0
        %3351 = vmatpush1.bf16.msra.mxu0 %v3292
        %3352 = vmatprep.subr.bf16.mxu0 0
        %3353 = vmatpush1.bf16.msra.mxu0 %v3293
        %3354 = vmatprep.subr.bf16.mxu0 0
        %3355 = vmatpush1.bf16.msra.mxu0 %v3294
        %3356 = vmatprep.subr.bf16.mxu0 0
        %3357 = vmatpush1.bf16.msra.mxu0 %v3295
        %3358 = vmatprep.subr.bf16.mxu0 0
        %3359 = vmatpush1.bf16.msra.mxu0 %v3296
        %3360 = vmatprep.subr.bf16.mxu0 0
        %3361 = vmatpush1.bf16.msra.mxu0 %v3297
        %3362 = vmatprep.mubr.bf16.mxu0 %v3175
        %3363 = vmatmul.mubr.bf16.gmra.mrb[0].mxu0 %v3168
        %v3364 = vpop.f32.mrb[0].mxu0
        %v3365 = vadd.f32 %v3161, %v3364
        %v3366 = vpop.f32.mrb[0].mxu0
        %v3367 = vpop.f32.mrb[0].mxu0
        %v3368 = vpop.f32.mrb[0].mxu0
        %3369 = vdwg.mxu0
        %3370 = vmatprep.subr.bf16.mxu0 0
        %3371 = vmatpush1.bf16.msra.mxu0 %v3298
        %3372 = vmatprep.subr.bf16.mxu0 0
        %3373 = vmatpush1.bf16.msra.mxu0 %v3299
        %3374 = vmatprep.subr.bf16.mxu0 0
        %3375 = vmatpush1.bf16.msra.mxu0 %v3300
        %3376 = vmatprep.subr.bf16.mxu0 0
        %3377 = vmatpush1.bf16.msra.mxu0 %v3301
        %3378 = vmatprep.subr.bf16.mxu0 0
        %3379 = vmatpush1.bf16.msra.mxu0 %v3302
        %3380 = vmatprep.subr.bf16.mxu0 0
        %3381 = vmatpush1.bf16.msra.mxu0 %v3303
        %3382 = vmatprep.subr.bf16.mxu0 0
        %3383 = vmatpush1.bf16.msra.mxu0 %v3304
        %3384 = vmatprep.subr.bf16.mxu0 0
        %3385 = vmatpush1.bf16.msra.mxu0 %v3305
        %3386 = vmatprep.subr.bf16.mxu0 0
        %3387 = vmatpush1.bf16.msra.mxu0 0
        %3388 = vmatprep.subr.bf16.mxu0 0
        %3389 = vmatpush1.bf16.msra.mxu0 0
        %3390 = vmatprep.subr.bf16.mxu0 0
        %3391 = vmatpush1.bf16.msra.mxu0 0
        %3392 = vmatprep.subr.bf16.mxu0 0
        %3393 = vmatpush1.bf16.msra.mxu0 0
        %3394 = vmatprep.subr.bf16.mxu0 0
        %3395 = vmatpush1.bf16.msra.mxu0 0
        %3396 = vmatprep.subr.bf16.mxu0 0
        %3397 = vmatpush1.bf16.msra.mxu0 0
        %3398 = vmatprep.subr.bf16.mxu0 0
        %3399 = vmatpush1.bf16.msra.mxu0 0
        %3400 = vmatprep.subr.bf16.mxu0 0
        %3401 = vmatpush1.bf16.msra.mxu0 0
        %3402 = vmatprep.mubr.bf16.mxu0 0
        %3403 = vmatmul.mubr.bf16.gmra.mrb[0].mxu0 %v3182
        %v3404 = vpop.f32.mrb[0].mxu0
        %v3405 = vadd.f32 %v3365, %v3404
        %v3406 = vpop.f32.mrb[0].mxu0
        %v3407 = vpop.f32.mrb[0].mxu0
        %v3408 = vpop.f32.mrb[0].mxu0
        %3409 = vdwg.mxu0
        %v3410 = vadd.f32 %v2761, %v3405
        %v3411 = vld [vmem:[#allocation15] sm:$0xff]
        %v3412 = vld [vmem:[#allocation15 + $0x8] sm:$0xff]
        %v3413 = vld [vmem:[#allocation15 + $0x10] sm:$0xff]
        %v3414 = vld [vmem:[#allocation15 + $0x18] sm:$0xff]
        %v3415 = vld [vmem:[#allocation15 + $0x20] sm:$0xff]
        %v3416 = vld [vmem:[#allocation15 + $0x28] sm:$0xff]
        %v3417 = vld [vmem:[#allocation15 + $0x30] sm:$0xff]
        %v3418 = vld [vmem:[#allocation15 + $0x38] sm:$0xff]
        %v3419 = vld [vmem:[#allocation15 + $0x40] sm:$0xff]
        %v3420 = vld [vmem:[#allocation15 + $0x48] sm:$0xff]
        %v3421 = vld [vmem:[#allocation15 + $0x50] sm:$0xff]
        %v3422 = vld [vmem:[#allocation15 + $0x58] sm:$0xff]
        %v3423 = vld [vmem:[#allocation15 + $0x60] sm:$0xff]
        %v3424 = vld [vmem:[#allocation15 + $0x68] sm:$0xff]
        %v3425 = vld [vmem:[#allocation15 + $0x70] sm:$0xff]
        %v3426 = vld [vmem:[#allocation15 + $0x78] sm:$0xff]
        %v3427 = vld [vmem:[#allocation15 + $0x80] sm:$0xff]
        %v3428 = vld [vmem:[#allocation15 + $0x88] sm:$0xff]
        %v3429 = vld [vmem:[#allocation15 + $0x90] sm:$0xff]
        %v3430 = vld [vmem:[#allocation15 + $0x98] sm:$0xff]
        %v3431 = vld [vmem:[#allocation15 + $0xa0] sm:$0xff]
        %v3432 = vld [vmem:[#allocation15 + $0xa8] sm:$0xff]
        %v3433 = vld [vmem:[#allocation15 + $0xb0] sm:$0xff]
        %v3434 = vld [vmem:[#allocation15 + $0xb8] sm:$0xff]
        %v3435 = vld [vmem:[#allocation15 + $0xc0] sm:$0xff]
        %v3436 = vld [vmem:[#allocation15 + $0xc8] sm:$0xff]
        %v3437 = vld [vmem:[#allocation15 + $0xd0] sm:$0xff]
        %v3438 = vld [vmem:[#allocation15 + $0xd8] sm:$0xff]
        %v3439 = vld [vmem:[#allocation15 + $0xe0] sm:$0xff]
        %v3440 = vld [vmem:[#allocation15 + $0xe8] sm:$0xff]
        %v3441 = vld [vmem:[#allocation15 + $0xf0] sm:$0xff]
        %v3442 = vld [vmem:[#allocation15 + $0xf8] sm:$0xff]
        %v3443 = vld [vmem:[#allocation15 + $0x100] sm:$0xff]
        %v3444 = vld [vmem:[#allocation15 + $0x108] sm:$0xff]
        %v3445 = vld [vmem:[#allocation15 + $0x110] sm:$0xff]
        %v3446 = vld [vmem:[#allocation15 + $0x118] sm:$0xff]
        %v3447 = vld [vmem:[#allocation15 + $0x120] sm:$0xff]
        %v3448 = vld [vmem:[#allocation15 + $0x128] sm:$0xff]
        %v3449 = vld [vmem:[#allocation15 + $0x130] sm:$0xff]
        %v3450 = vld [vmem:[#allocation15 + $0x138] sm:$0xff]
        %v3451 = vld [vmem:[#allocation15 + $0x140] sm:$0xff]
        %v3452 = vld [vmem:[#allocation15 + $0x148] sm:$0xff]
        %v3453 = vld [vmem:[#allocation15 + $0x150] sm:$0xff]
        %v3454 = vld [vmem:[#allocation15 + $0x158] sm:$0xff]
        %v3455 = vld [vmem:[#allocation15 + $0x160] sm:$0xff]
        %v3456 = vld [vmem:[#allocation15 + $0x168] sm:$0xff]
        %v3457 = vld [vmem:[#allocation15 + $0x170] sm:$0xff]
        %v3458 = vld [vmem:[#allocation15 + $0x178] sm:$0xff]
        %v3459 = vld [vmem:[#allocation16] sm:$0x3]
        %v3461 = vrot.slane %v3410, 6
        %3463 = vst [vmem:[#allocation3] sm:$0xfc] %v3461
        %3464 = vst [vmem:[#allocation3 + $0x18] sm:$0x3] %v3461
        %v3465 = vrot.slane %v3410, 7
        %3467 = vst [vmem:[#allocation3 + $0x8] sm:$0xfe] %v3465
        %3468 = vst [vmem:[#allocation3 + $0x20] sm:$0x1] %v3465
        %3469 = vst [vmem:[#allocation3 + $0x10] sm:$0xff] %v3410
        %3470 = vst [vmem:[#allocation3 + $0x1] sm:$0x1] 0.0
        %3471 = vst [vmem:[#allocation3 + $0x28] sm:$0x1] 0.0
        %v3472 = vld [vmem:[#allocation3] sm:$0xfe]
        %v3473 = vld [vmem:[#allocation3 + $0x8] sm:$0xfe]
        %v3474 = vld [vmem:[#allocation3 + $0x10] sm:$0xfe]
        %v3475 = vld [vmem:[#allocation3 + $0x18] sm:$0x1]
        %v3476 = vld [vmem:[#allocation3 + $0x20] sm:$0x1]
        %v3477 = vld [vmem:[#allocation3 + $0x28] sm:$0x1]
        %v3478 = vpack.c.bf16 %v3475, %v3472
        %v3479 = vpack.c.bf16 %v3476, %v3473
        %v3480 = vpack.c.bf16 %v3477, %v3474
        %v3482 = vlaneseq
        %v3483 = vshrl.u32 %v3482, 7
        %v3484 = vsub.s32 0, %v3483
        %v3485 = vrot.slane %v3459, %v3484
        %v3486 = vlaneseq
        %v3487 = vshrl.u32 %v3486, 7
        %v3488 = vsub.s32 1, %v3487
        %v3489 = vrot.slane %v3459, %v3488
        %v3493 = vshrl.u32 %v3478, 16
        %v3495 = vshll.u32 %v3478, 16
        %v3497 = vrot.slane %v3495, 1
        %v3498 = vor.u32 %v3493, %v3497
        %v3500 = vshrl.u32 %v3479, 16
        %v3502 = vshll.u32 %v3479, 16
        %v3504 = vrot.slane %v3502, 1
        %v3505 = vor.u32 %v3500, %v3504
        %v3507 = vshrl.u32 %v3480, 16
        %v3509 = vshll.u32 %v3480, 16
        %v3511 = vrot.slane %v3509, 1
        %v3512 = vor.u32 %v3507, %v3511
        %v3564 = vunpack.c.l.b16 %v3411
        %v3565 = vunpack.c.h.b16 %v3411
        %v3566 = vunpack.c.l.b16 %v3412
        %v3567 = vunpack.c.h.b16 %v3412
        %v3568 = vunpack.c.l.b16 %v3413
        %v3569 = vunpack.c.h.b16 %v3413
        %v3570 = vunpack.c.l.b16 %v3414
        %v3571 = vunpack.c.h.b16 %v3414
        %v3572 = vunpack.c.l.b16 %v3415
        %v3573 = vunpack.c.h.b16 %v3415
        %v3574 = vunpack.c.l.b16 %v3416
        %v3575 = vunpack.c.h.b16 %v3416
        %v3576 = vunpack.c.l.b16 %v3417
        %v3577 = vunpack.c.h.b16 %v3417
        %v3578 = vunpack.c.l.b16 %v3418
        %v3579 = vunpack.c.h.b16 %v3418
        %v3580 = vunpack.c.l.b16 %v3419
        %v3581 = vunpack.c.h.b16 %v3419
        %v3582 = vunpack.c.l.b16 %v3420
        %v3583 = vunpack.c.h.b16 %v3420
        %v3584 = vunpack.c.l.b16 %v3421
        %v3585 = vunpack.c.h.b16 %v3421
        %v3586 = vunpack.c.l.b16 %v3422
        %v3587 = vunpack.c.h.b16 %v3422
        %v3588 = vunpack.c.l.b16 %v3423
        %v3589 = vunpack.c.h.b16 %v3423
        %v3590 = vunpack.c.l.b16 %v3424
        %v3591 = vunpack.c.h.b16 %v3424
        %v3592 = vunpack.c.l.b16 %v3425
        %v3593 = vunpack.c.h.b16 %v3425
        %v3594 = vunpack.c.l.b16 %v3426
        %v3595 = vunpack.c.h.b16 %v3426
        %v3596 = vunpack.c.l.b16 %v3427
        %v3597 = vunpack.c.h.b16 %v3427
        %v3598 = vunpack.c.l.b16 %v3428
        %v3599 = vunpack.c.h.b16 %v3428
        %v3600 = vunpack.c.l.b16 %v3429
        %v3601 = vunpack.c.h.b16 %v3429
        %v3602 = vunpack.c.l.b16 %v3430
        %v3603 = vunpack.c.h.b16 %v3430
        %v3604 = vunpack.c.l.b16 %v3431
        %v3605 = vunpack.c.h.b16 %v3431
        %v3606 = vunpack.c.l.b16 %v3432
        %v3607 = vunpack.c.h.b16 %v3432
        %v3608 = vunpack.c.l.b16 %v3433
        %v3609 = vunpack.c.h.b16 %v3433
        %v3610 = vunpack.c.l.b16 %v3434
        %v3611 = vunpack.c.h.b16 %v3434
        %v3612 = vunpack.c.l.b16 %v3435
        %v3613 = vunpack.c.h.b16 %v3435
        %v3614 = vunpack.c.l.b16 %v3436
        %v3615 = vunpack.c.h.b16 %v3436
        %v3616 = vunpack.c.l.b16 %v3437
        %v3617 = vunpack.c.h.b16 %v3437
        %v3618 = vunpack.c.l.b16 %v3438
        %v3619 = vunpack.c.h.b16 %v3438
        %v3620 = vunpack.c.l.b16 %v3439
        %v3621 = vunpack.c.h.b16 %v3439
        %v3622 = vunpack.c.l.b16 %v3440
        %v3623 = vunpack.c.h.b16 %v3440
        %v3624 = vunpack.c.l.b16 %v3441
        %v3625 = vunpack.c.h.b16 %v3441
        %v3626 = vunpack.c.l.b16 %v3442
        %v3627 = vunpack.c.h.b16 %v3442
        %v3628 = vunpack.c.l.b16 %v3443
        %v3629 = vunpack.c.h.b16 %v3443
        %v3630 = vunpack.c.l.b16 %v3444
        %v3631 = vunpack.c.h.b16 %v3444
        %v3632 = vunpack.c.l.b16 %v3445
        %v3633 = vunpack.c.h.b16 %v3445
        %v3634 = vunpack.c.l.b16 %v3446
        %v3635 = vunpack.c.h.b16 %v3446
        %v3636 = vunpack.c.l.b16 %v3447
        %v3637 = vunpack.c.h.b16 %v3447
        %v3638 = vunpack.c.l.b16 %v3448
        %v3639 = vunpack.c.h.b16 %v3448
        %v3640 = vunpack.c.l.b16 %v3449
        %v3641 = vunpack.c.h.b16 %v3449
        %v3642 = vunpack.c.l.b16 %v3450
        %v3643 = vunpack.c.h.b16 %v3450
        %v3644 = vunpack.c.l.b16 %v3451
        %v3645 = vunpack.c.h.b16 %v3451
        %v3646 = vunpack.c.l.b16 %v3452
        %v3647 = vunpack.c.h.b16 %v3452
        %v3648 = vunpack.c.l.b16 %v3453
        %v3649 = vunpack.c.h.b16 %v3453
        %v3650 = vunpack.c.l.b16 %v3454
        %v3651 = vunpack.c.h.b16 %v3454
        %v3652 = vunpack.c.l.b16 %v3455
        %v3653 = vunpack.c.h.b16 %v3455
        %v3654 = vunpack.c.l.b16 %v3456
        %v3655 = vunpack.c.h.b16 %v3456
        %v3656 = vunpack.c.l.b16 %v3457
        %v3657 = vunpack.c.h.b16 %v3457
        %v3658 = vunpack.c.l.b16 %v3458
        %v3659 = vunpack.c.h.b16 %v3458
        %v3660 = vpack.c.b16 %v3566, %v3564
        %v3661 = vpack.c.b16 %v3567, %v3565
        %v3662 = vpack.c.b16 %v3570, %v3568
        %v3663 = vpack.c.b16 %v3571, %v3569
        %v3664 = vpack.c.b16 %v3574, %v3572
        %v3665 = vpack.c.b16 %v3575, %v3573
        %v3666 = vpack.c.b16 %v3578, %v3576
        %v3667 = vpack.c.b16 %v3579, %v3577
        %v3668 = vpack.c.b16 %v3582, %v3580
        %v3669 = vpack.c.b16 %v3583, %v3581
        %v3670 = vpack.c.b16 %v3586, %v3584
        %v3671 = vpack.c.b16 %v3587, %v3585
        %v3672 = vpack.c.b16 %v3590, %v3588
        %v3673 = vpack.c.b16 %v3591, %v3589
        %v3674 = vpack.c.b16 %v3594, %v3592
        %v3675 = vpack.c.b16 %v3595, %v3593
        %v3676 = vpack.c.b16 %v3598, %v3596
        %v3677 = vpack.c.b16 %v3599, %v3597
        %v3678 = vpack.c.b16 %v3602, %v3600
        %v3679 = vpack.c.b16 %v3603, %v3601
        %v3680 = vpack.c.b16 %v3606, %v3604
        %v3681 = vpack.c.b16 %v3607, %v3605
        %v3682 = vpack.c.b16 %v3610, %v3608
        %v3683 = vpack.c.b16 %v3611, %v3609
        %v3684 = vpack.c.b16 %v3614, %v3612
        %v3685 = vpack.c.b16 %v3615, %v3613
        %v3686 = vpack.c.b16 %v3618, %v3616
        %v3687 = vpack.c.b16 %v3619, %v3617
        %v3688 = vpack.c.b16 %v3622, %v3620
        %v3689 = vpack.c.b16 %v3623, %v3621
        %v3690 = vpack.c.b16 %v3626, %v3624
        %v3691 = vpack.c.b16 %v3627, %v3625
        %v3692 = vpack.c.b16 %v3630, %v3628
        %v3693 = vpack.c.b16 %v3631, %v3629
        %v3694 = vpack.c.b16 %v3634, %v3632
        %v3695 = vpack.c.b16 %v3635, %v3633
        %v3696 = vpack.c.b16 %v3638, %v3636
        %v3697 = vpack.c.b16 %v3639, %v3637
        %v3698 = vpack.c.b16 %v3642, %v3640
        %v3699 = vpack.c.b16 %v3643, %v3641
        %v3700 = vpack.c.b16 %v3646, %v3644
        %v3701 = vpack.c.b16 %v3647, %v3645
        %v3702 = vpack.c.b16 %v3650, %v3648
        %v3703 = vpack.c.b16 %v3651, %v3649
        %v3704 = vpack.c.b16 %v3654, %v3652
        %v3705 = vpack.c.b16 %v3655, %v3653
        %v3706 = vpack.c.b16 %v3658, %v3656
        %v3707 = vpack.c.b16 %v3659, %v3657
        %3756 = vmatprep.subr.bf16.mxu0 %v3661
        %3757 = vmatpush1.bf16.msra.mxu0 %v3660
        %3758 = vmatprep.subr.bf16.mxu0 %v3663
        %3759 = vmatpush1.bf16.msra.mxu0 %v3662
        %3760 = vmatprep.subr.bf16.mxu0 %v3665
        %3761 = vmatpush1.bf16.msra.mxu0 %v3664
        %3762 = vmatprep.subr.bf16.mxu0 %v3667
        %3763 = vmatpush1.bf16.msra.mxu0 %v3666
        %3764 = vmatprep.subr.bf16.mxu0 %v3669
        %3765 = vmatpush1.bf16.msra.mxu0 %v3668
        %3766 = vmatprep.subr.bf16.mxu0 %v3671
        %3767 = vmatpush1.bf16.msra.mxu0 %v3670
        %3768 = vmatprep.subr.bf16.mxu0 %v3673
        %3769 = vmatpush1.bf16.msra.mxu0 %v3672
        %3770 = vmatprep.subr.bf16.mxu0 %v3675
        %3771 = vmatpush1.bf16.msra.mxu0 %v3674
        %3772 = vmatprep.subr.bf16.mxu0 %v3677
        %3773 = vmatpush1.bf16.msra.mxu0 %v3676
        %3774 = vmatprep.subr.bf16.mxu0 %v3679
        %3775 = vmatpush1.bf16.msra.mxu0 %v3678
        %3776 = vmatprep.subr.bf16.mxu0 %v3681
        %3777 = vmatpush1.bf16.msra.mxu0 %v3680
        %3778 = vmatprep.subr.bf16.mxu0 %v3683
        %3779 = vmatpush1.bf16.msra.mxu0 %v3682
        %3780 = vmatprep.subr.bf16.mxu0 %v3685
        %3781 = vmatpush1.bf16.msra.mxu0 %v3684
        %3782 = vmatprep.subr.bf16.mxu0 %v3687
        %3783 = vmatpush1.bf16.msra.mxu0 %v3686
        %3784 = vmatprep.subr.bf16.mxu0 %v3689
        %3785 = vmatpush1.bf16.msra.mxu0 %v3688
        %3786 = vmatprep.subr.bf16.mxu0 %v3691
        %3787 = vmatpush1.bf16.msra.mxu0 %v3690
        %3788 = vmatprep.mubr.bf16.mxu0 %v3505
        %3789 = vmatmul.mubr.bf16.gmra.mrb[0].mxu0 %v3498
        %v3790 = vpop.f32.mrb[0].mxu0
        %v3791 = vadd.f32 %v3485, %v3790
        %v3792 = vpop.f32.mrb[0].mxu0
        %v3793 = vadd.f32 %v3489, %v3792
        %v3794 = vpop.f32.mrb[0].mxu0
        %v3795 = vpop.f32.mrb[0].mxu0
        %3796 = vdwg.mxu0
        %3797 = vmatprep.subr.bf16.mxu0 %v3693
        %3798 = vmatpush1.bf16.msra.mxu0 %v3692
        %3799 = vmatprep.subr.bf16.mxu0 %v3695
        %3800 = vmatpush1.bf16.msra.mxu0 %v3694
        %3801 = vmatprep.subr.bf16.mxu0 %v3697
        %3802 = vmatpush1.bf16.msra.mxu0 %v3696
        %3803 = vmatprep.subr.bf16.mxu0 %v3699
        %3804 = vmatpush1.bf16.msra.mxu0 %v3698
        %3805 = vmatprep.subr.bf16.mxu0 %v3701
        %3806 = vmatpush1.bf16.msra.mxu0 %v3700
        %3807 = vmatprep.subr.bf16.mxu0 %v3703
        %3808 = vmatpush1.bf16.msra.mxu0 %v3702
        %3809 = vmatprep.subr.bf16.mxu0 %v3705
        %3810 = vmatpush1.bf16.msra.mxu0 %v3704
        %3811 = vmatprep.subr.bf16.mxu0 %v3707
        %3812 = vmatpush1.bf16.msra.mxu0 %v3706
        %3813 = vmatprep.subr.bf16.mxu0 0
        %3814 = vmatpush1.bf16.msra.mxu0 0
        %3815 = vmatprep.subr.bf16.mxu0 0
        %3816 = vmatpush1.bf16.msra.mxu0 0
        %3817 = vmatprep.subr.bf16.mxu0 0
        %3818 = vmatpush1.bf16.msra.mxu0 0
        %3819 = vmatprep.subr.bf16.mxu0 0
        %3820 = vmatpush1.bf16.msra.mxu0 0
        %3821 = vmatprep.subr.bf16.mxu0 0
        %3822 = vmatpush1.bf16.msra.mxu0 0
        %3823 = vmatprep.subr.bf16.mxu0 0
        %3824 = vmatpush1.bf16.msra.mxu0 0
        %3825 = vmatprep.subr.bf16.mxu0 0
        %3826 = vmatpush1.bf16.msra.mxu0 0
        %3827 = vmatprep.subr.bf16.mxu0 0
        %3828 = vmatpush1.bf16.msra.mxu0 0
        %3829 = vmatprep.mubr.bf16.mxu0 0
        %3830 = vmatmul.mubr.bf16.gmra.mrb[0].mxu0 %v3512
        %v3831 = vpop.f32.mrb[0].mxu0
        %v3832 = vadd.f32 %v3791, %v3831
        %v3833 = vpop.f32.mrb[0].mxu0
        %v3834 = vadd.f32 %v3793, %v3833
        %v3835 = vpop.f32.mrb[0].mxu0
        %v3836 = vpop.f32.mrb[0].mxu0
        %3837 = vdwg.mxu0
        %v3838 = vpack.c.bf16 %v3832, %v3832
        %v3839 = vpack.c.bf16 %v3834, %v3834
        %v3840 = vld [vmem:[#allocation21] sm:$0xf]
        %v3841 = vld [vmem:[#allocation21 + $0x4] sm:$0xf]
        %v3842 = vld [vmem:[#allocation21 + $0x8] sm:$0xf]
        %v3843 = vld [vmem:[#allocation21 + $0xc] sm:$0xf]
        %v3844 = vld [vmem:[#allocation21 + $0x10] sm:$0xf]
        %v3845 = vld [vmem:[#allocation21 + $0x14] sm:$0xf]
        %v3846 = vld [vmem:[#allocation21 + $0x18] sm:$0xf]
        %v3847 = vld [vmem:[#allocation21 + $0x1c] sm:$0xf]
        %v3848 = vld [vmem:[#allocation21 + $0x20] sm:$0xf]
        %v3849 = vld [vmem:[#allocation21 + $0x24] sm:$0xf]
        %v3850 = vld [vmem:[#allocation21 + $0x28] sm:$0xf]
        %v3851 = vld [vmem:[#allocation21 + $0x2c] sm:$0xf]
        %v3852 = vld [vmem:[#allocation21 + $0x30] sm:$0xf]
        %v3853 = vld [vmem:[#allocation21 + $0x34] sm:$0xf]
        %v3854 = vld [vmem:[#allocation21 + $0x38] sm:$0xf]
        %v3855 = vld [vmem:[#allocation21 + $0x3c] sm:$0xf]
        %v3856 = vld [vmem:[#allocation21 + $0x40] sm:$0xf]
        %v3857 = vld [vmem:[#allocation21 + $0x44] sm:$0xf]
        %v3858 = vld [vmem:[#allocation21 + $0x48] sm:$0xf]
        %v3859 = vld [vmem:[#allocation21 + $0x4c] sm:$0xf]
        %v3860 = vld [vmem:[#allocation21 + $0x50] sm:$0xf]
        %v3861 = vld [vmem:[#allocation21 + $0x54] sm:$0xf]
        %v3862 = vld [vmem:[#allocation21 + $0x58] sm:$0xf]
        %v3863 = vld [vmem:[#allocation21 + $0x5c] sm:$0xf]
        %v3864 = vld [vmem:[#allocation21 + $0x60] sm:$0xf]
        %v3865 = vld [vmem:[#allocation21 + $0x64] sm:$0xf]
        %v3866 = vld [vmem:[#allocation21 + $0x68] sm:$0xf]
        %v3867 = vld [vmem:[#allocation21 + $0x6c] sm:$0xf]
        %v3868 = vld [vmem:[#allocation21 + $0x70] sm:$0xf]
        %v3869 = vld [vmem:[#allocation21 + $0x74] sm:$0xf]
        %v3870 = vld [vmem:[#allocation21 + $0x78] sm:$0xf]
        %v3871 = vld [vmem:[#allocation21 + $0x7c] sm:$0xf]
        %v3904 = vunpack.c.l.b16 %v3840
        %v3905 = vunpack.c.l.b16 %v3841
        %v3906 = vunpack.c.l.b16 %v3842
        %v3907 = vunpack.c.l.b16 %v3843
        %v3908 = vunpack.c.l.b16 %v3844
        %v3909 = vunpack.c.l.b16 %v3845
        %v3910 = vunpack.c.l.b16 %v3846
        %v3911 = vunpack.c.l.b16 %v3847
        %v3912 = vunpack.c.l.b16 %v3848
        %v3913 = vunpack.c.l.b16 %v3849
        %v3914 = vunpack.c.l.b16 %v3850
        %v3915 = vunpack.c.l.b16 %v3851
        %v3916 = vunpack.c.l.b16 %v3852
        %v3917 = vunpack.c.l.b16 %v3853
        %v3918 = vunpack.c.l.b16 %v3854
        %v3919 = vunpack.c.l.b16 %v3855
        %v3920 = vunpack.c.l.b16 %v3856
        %v3921 = vunpack.c.l.b16 %v3857
        %v3922 = vunpack.c.l.b16 %v3858
        %v3923 = vunpack.c.l.b16 %v3859
        %v3924 = vunpack.c.l.b16 %v3860
        %v3925 = vunpack.c.l.b16 %v3861
        %v3926 = vunpack.c.l.b16 %v3862
        %v3927 = vunpack.c.l.b16 %v3863
        %v3928 = vunpack.c.l.b16 %v3864
        %v3929 = vunpack.c.l.b16 %v3865
        %v3930 = vunpack.c.l.b16 %v3866
        %v3931 = vunpack.c.l.b16 %v3867
        %v3932 = vunpack.c.l.b16 %v3868
        %v3933 = vunpack.c.l.b16 %v3869
        %v3934 = vunpack.c.l.b16 %v3870
        %v3935 = vunpack.c.l.b16 %v3871
        %v3936 = vpack.c.b16 %v3905, %v3904
        %v3937 = vpack.c.b16 %v3907, %v3906
        %v3938 = vpack.c.b16 %v3909, %v3908
        %v3939 = vpack.c.b16 %v3911, %v3910
        %v3940 = vpack.c.b16 %v3913, %v3912
        %v3941 = vpack.c.b16 %v3915, %v3914
        %v3942 = vpack.c.b16 %v3917, %v3916
        %v3943 = vpack.c.b16 %v3919, %v3918
        %v3944 = vpack.c.b16 %v3921, %v3920
        %v3945 = vpack.c.b16 %v3923, %v3922
        %v3946 = vpack.c.b16 %v3925, %v3924
        %v3947 = vpack.c.b16 %v3927, %v3926
        %v3948 = vpack.c.b16 %v3929, %v3928
        %v3949 = vpack.c.b16 %v3931, %v3930
        %v3950 = vpack.c.b16 %v3933, %v3932
        %v3951 = vpack.c.b16 %v3935, %v3934
        %3968 = vmatprep.subr.bf16.mxu0 0
        %3969 = vmatpush1.bf16.msra.mxu0 %v3936
        %3970 = vmatprep.subr.bf16.mxu0 0
        %3971 = vmatpush1.bf16.msra.mxu0 %v3937
        %3972 = vmatprep.subr.bf16.mxu0 0
        %3973 = vmatpush1.bf16.msra.mxu0 %v3938
        %3974 = vmatprep.subr.bf16.mxu0 0
        %3975 = vmatpush1.bf16.msra.mxu0 %v3939
        %3976 = vmatprep.subr.bf16.mxu0 0
        %3977 = vmatpush1.bf16.msra.mxu0 %v3940
        %3978 = vmatprep.subr.bf16.mxu0 0
        %3979 = vmatpush1.bf16.msra.mxu0 %v3941
        %3980 = vmatprep.subr.bf16.mxu0 0
        %3981 = vmatpush1.bf16.msra.mxu0 %v3942
        %3982 = vmatprep.subr.bf16.mxu0 0
        %3983 = vmatpush1.bf16.msra.mxu0 %v3943
        %3984 = vmatprep.subr.bf16.mxu0 0
        %3985 = vmatpush1.bf16.msra.mxu0 %v3944
        %3986 = vmatprep.subr.bf16.mxu0 0
        %3987 = vmatpush1.bf16.msra.mxu0 %v3945
        %3988 = vmatprep.subr.bf16.mxu0 0
        %3989 = vmatpush1.bf16.msra.mxu0 %v3946
        %3990 = vmatprep.subr.bf16.mxu0 0
        %3991 = vmatpush1.bf16.msra.mxu0 %v3947
        %3992 = vmatprep.subr.bf16.mxu0 0
        %3993 = vmatpush1.bf16.msra.mxu0 %v3948
        %3994 = vmatprep.subr.bf16.mxu0 0
        %3995 = vmatpush1.bf16.msra.mxu0 %v3949
        %3996 = vmatprep.subr.bf16.mxu0 0
        %3997 = vmatpush1.bf16.msra.mxu0 %v3950
        %3998 = vmatprep.subr.bf16.mxu0 0
        %3999 = vmatpush1.bf16.msra.mxu0 %v3951
        %4000 = vmatprep.mubr.bf16.mxu0 %v3839
        %4001 = vmatmul.mubr.bf16.gmra.mrb[0].mxu0 %v3838
        %v4002 = vpop.f32.mrb[0].mxu0
        %v4003 = vadd.f32 0.0, %v4002
        %v4004 = vpop.f32.mrb[0].mxu0
        %v4005 = vpop.f32.mrb[0].mxu0
        %v4006 = vpop.f32.mrb[0].mxu0
        %4007 = vdwg.mxu0
        %s4008 = scalar_lea.vmem [#allocation21], 128
        %v4009 = vld [vmem:[%s4008] sm:$0xf]
        %v4010 = vld [vmem:[%s4008 + $0x4] sm:$0xf]
        %v4011 = vld [vmem:[%s4008 + $0x8] sm:$0xf]
        %v4012 = vld [vmem:[%s4008 + $0xc] sm:$0xf]
        %v4013 = vld [vmem:[%s4008 + $0x10] sm:$0xf]
        %v4014 = vld [vmem:[%s4008 + $0x14] sm:$0xf]
        %v4015 = vld [vmem:[%s4008 + $0x18] sm:$0xf]
        %v4016 = vld [vmem:[%s4008 + $0x1c] sm:$0xf]
        %v4017 = vld [vmem:[%s4008 + $0x20] sm:$0xf]
        %v4018 = vld [vmem:[%s4008 + $0x24] sm:$0xf]
        %v4019 = vld [vmem:[%s4008 + $0x28] sm:$0xf]
        %v4020 = vld [vmem:[%s4008 + $0x2c] sm:$0xf]
        %v4021 = vld [vmem:[%s4008 + $0x30] sm:$0xf]
        %v4022 = vld [vmem:[%s4008 + $0x34] sm:$0xf]
        %v4023 = vld [vmem:[%s4008 + $0x38] sm:$0xf]
        %v4024 = vld [vmem:[%s4008 + $0x3c] sm:$0xf]
        %v4025 = vld [vmem:[%s4008 + $0x40] sm:$0xf]
        %v4026 = vld [vmem:[%s4008 + $0x44] sm:$0xf]
        %v4027 = vld [vmem:[%s4008 + $0x48] sm:$0xf]
        %v4028 = vld [vmem:[%s4008 + $0x4c] sm:$0xf]
        %v4029 = vld [vmem:[%s4008 + $0x50] sm:$0xf]
        %v4030 = vld [vmem:[%s4008 + $0x54] sm:$0xf]
        %v4031 = vld [vmem:[%s4008 + $0x58] sm:$0xf]
        %v4032 = vld [vmem:[%s4008 + $0x5c] sm:$0xf]
        %v4033 = vld [vmem:[%s4008 + $0x60] sm:$0xf]
        %v4034 = vld [vmem:[%s4008 + $0x64] sm:$0xf]
        %v4035 = vld [vmem:[%s4008 + $0x68] sm:$0xf]
        %v4036 = vld [vmem:[%s4008 + $0x6c] sm:$0xf]
        %v4037 = vld [vmem:[%s4008 + $0x70] sm:$0xf]
        %v4038 = vld [vmem:[%s4008 + $0x74] sm:$0xf]
        %v4039 = vld [vmem:[%s4008 + $0x78] sm:$0xf]
        %v4040 = vld [vmem:[%s4008 + $0x7c] sm:$0xf]
        %v4073 = vunpack.c.l.b16 %v4009
        %v4074 = vunpack.c.l.b16 %v4010
        %v4075 = vunpack.c.l.b16 %v4011
        %v4076 = vunpack.c.l.b16 %v4012
        %v4077 = vunpack.c.l.b16 %v4013
        %v4078 = vunpack.c.l.b16 %v4014
        %v4079 = vunpack.c.l.b16 %v4015
        %v4080 = vunpack.c.l.b16 %v4016
        %v4081 = vunpack.c.l.b16 %v4017
        %v4082 = vunpack.c.l.b16 %v4018
        %v4083 = vunpack.c.l.b16 %v4019
        %v4084 = vunpack.c.l.b16 %v4020
        %v4085 = vunpack.c.l.b16 %v4021
        %v4086 = vunpack.c.l.b16 %v4022
        %v4087 = vunpack.c.l.b16 %v4023
        %v4088 = vunpack.c.l.b16 %v4024
        %v4089 = vunpack.c.l.b16 %v4025
        %v4090 = vunpack.c.l.b16 %v4026
        %v4091 = vunpack.c.l.b16 %v4027
        %v4092 = vunpack.c.l.b16 %v4028
        %v4093 = vunpack.c.l.b16 %v4029
        %v4094 = vunpack.c.l.b16 %v4030
        %v4095 = vunpack.c.l.b16 %v4031
        %v4096 = vunpack.c.l.b16 %v4032
        %v4097 = vunpack.c.l.b16 %v4033
        %v4098 = vunpack.c.l.b16 %v4034
        %v4099 = vunpack.c.l.b16 %v4035
        %v4100 = vunpack.c.l.b16 %v4036
        %v4101 = vunpack.c.l.b16 %v4037
        %v4102 = vunpack.c.l.b16 %v4038
        %v4103 = vunpack.c.l.b16 %v4039
        %v4104 = vunpack.c.l.b16 %v4040
        %v4105 = vpack.c.b16 %v4074, %v4073
        %v4106 = vpack.c.b16 %v4076, %v4075
        %v4107 = vpack.c.b16 %v4078, %v4077
        %v4108 = vpack.c.b16 %v4080, %v4079
        %v4109 = vpack.c.b16 %v4082, %v4081
        %v4110 = vpack.c.b16 %v4084, %v4083
        %v4111 = vpack.c.b16 %v4086, %v4085
        %v4112 = vpack.c.b16 %v4088, %v4087
        %v4113 = vpack.c.b16 %v4090, %v4089
        %v4114 = vpack.c.b16 %v4092, %v4091
        %v4115 = vpack.c.b16 %v4094, %v4093
        %v4116 = vpack.c.b16 %v4096, %v4095
        %v4117 = vpack.c.b16 %v4098, %v4097
        %v4118 = vpack.c.b16 %v4100, %v4099
        %v4119 = vpack.c.b16 %v4102, %v4101
        %v4120 = vpack.c.b16 %v4104, %v4103
        %4137 = vmatprep.subr.bf16.mxu0 0
        %4138 = vmatpush1.bf16.msra.mxu0 %v4105
        %4139 = vmatprep.subr.bf16.mxu0 0
        %4140 = vmatpush1.bf16.msra.mxu0 %v4106
        %4141 = vmatprep.subr.bf16.mxu0 0
        %4142 = vmatpush1.bf16.msra.mxu0 %v4107
        %4143 = vmatprep.subr.bf16.mxu0 0
        %4144 = vmatpush1.bf16.msra.mxu0 %v4108
        %4145 = vmatprep.subr.bf16.mxu0 0
        %4146 = vmatpush1.bf16.msra.mxu0 %v4109
        %4147 = vmatprep.subr.bf16.mxu0 0
        %4148 = vmatpush1.bf16.msra.mxu0 %v4110
        %4149 = vmatprep.subr.bf16.mxu0 0
        %4150 = vmatpush1.bf16.msra.mxu0 %v4111
        %4151 = vmatprep.subr.bf16.mxu0 0
        %4152 = vmatpush1.bf16.msra.mxu0 %v4112
        %4153 = vmatprep.subr.bf16.mxu0 0
        %4154 = vmatpush1.bf16.msra.mxu0 %v4113
        %4155 = vmatprep.subr.bf16.mxu0 0
        %4156 = vmatpush1.bf16.msra.mxu0 %v4114
        %4157 = vmatprep.subr.bf16.mxu0 0
        %4158 = vmatpush1.bf16.msra.mxu0 %v4115
        %4159 = vmatprep.subr.bf16.mxu0 0
        %4160 = vmatpush1.bf16.msra.mxu0 %v4116
        %4161 = vmatprep.subr.bf16.mxu0 0
        %4162 = vmatpush1.bf16.msra.mxu0 %v4117
        %4163 = vmatprep.subr.bf16.mxu0 0
        %4164 = vmatpush1.bf16.msra.mxu0 %v4118
        %4165 = vmatprep.subr.bf16.mxu0 0
        %4166 = vmatpush1.bf16.msra.mxu0 %v4119
        %4167 = vmatprep.subr.bf16.mxu0 0
        %4168 = vmatpush1.bf16.msra.mxu0 %v4120
        %4169 = vmatprep.mubr.bf16.mxu0 %v3839
        %4170 = vmatmul.mubr.bf16.gmra.mrb[0].mxu0 %v3838
        %v4171 = vpop.f32.mrb[0].mxu0
        %v4172 = vadd.f32 0.0, %v4171
        %v4173 = vpop.f32.mrb[0].mxu0
        %v4174 = vpop.f32.mrb[0].mxu0
        %v4175 = vpop.f32.mrb[0].mxu0
        %4176 = vdwg.mxu0
        %v4177 = vmax.f32 %v4003, %v4172
        %s4178 = scalar_lea.vmem [#allocation21], 256
        %v4179 = vld [vmem:[%s4178] sm:$0xf]
        %v4180 = vld [vmem:[%s4178 + $0x4] sm:$0xf]
        %v4181 = vld [vmem:[%s4178 + $0x8] sm:$0xf]
        %v4182 = vld [vmem:[%s4178 + $0xc] sm:$0xf]
        %v4183 = vld [vmem:[%s4178 + $0x10] sm:$0xf]
        %v4184 = vld [vmem:[%s4178 + $0x14] sm:$0xf]
        %v4185 = vld [vmem:[%s4178 + $0x18] sm:$0xf]
        %v4186 = vld [vmem:[%s4178 + $0x1c] sm:$0xf]
        %v4187 = vld [vmem:[%s4178 + $0x20] sm:$0xf]
        %v4188 = vld [vmem:[%s4178 + $0x24] sm:$0xf]
        %v4189 = vld [vmem:[%s4178 + $0x28] sm:$0xf]
        %v4190 = vld [vmem:[%s4178 + $0x2c] sm:$0xf]
        %v4191 = vld [vmem:[%s4178 + $0x30] sm:$0xf]
        %v4192 = vld [vmem:[%s4178 + $0x34] sm:$0xf]
        %v4193 = vld [vmem:[%s4178 + $0x38] sm:$0xf]
        %v4194 = vld [vmem:[%s4178 + $0x3c] sm:$0xf]
        %v4195 = vld [vmem:[%s4178 + $0x40] sm:$0xf]
        %v4196 = vld [vmem:[%s4178 + $0x44] sm:$0xf]
        %v4197 = vld [vmem:[%s4178 + $0x48] sm:$0xf]
        %v4198 = vld [vmem:[%s4178 + $0x4c] sm:$0xf]
        %v4199 = vld [vmem:[%s4178 + $0x50] sm:$0xf]
        %v4200 = vld [vmem:[%s4178 + $0x54] sm:$0xf]
        %v4201 = vld [vmem:[%s4178 + $0x58] sm:$0xf]
        %v4202 = vld [vmem:[%s4178 + $0x5c] sm:$0xf]
        %v4203 = vld [vmem:[%s4178 + $0x60] sm:$0xf]
        %v4204 = vld [vmem:[%s4178 + $0x64] sm:$0xf]
        %v4205 = vld [vmem:[%s4178 + $0x68] sm:$0xf]
        %v4206 = vld [vmem:[%s4178 + $0x6c] sm:$0xf]
        %v4207 = vld [vmem:[%s4178 + $0x70] sm:$0xf]
        %v4208 = vld [vmem:[%s4178 + $0x74] sm:$0xf]
        %v4209 = vld [vmem:[%s4178 + $0x78] sm:$0xf]
        %v4210 = vld [vmem:[%s4178 + $0x7c] sm:$0xf]
        %v4243 = vunpack.c.l.b16 %v4179
        %v4244 = vunpack.c.l.b16 %v4180
        %v4245 = vunpack.c.l.b16 %v4181
        %v4246 = vunpack.c.l.b16 %v4182
        %v4247 = vunpack.c.l.b16 %v4183
        %v4248 = vunpack.c.l.b16 %v4184
        %v4249 = vunpack.c.l.b16 %v4185
        %v4250 = vunpack.c.l.b16 %v4186
        %v4251 = vunpack.c.l.b16 %v4187
        %v4252 = vunpack.c.l.b16 %v4188
        %v4253 = vunpack.c.l.b16 %v4189
        %v4254 = vunpack.c.l.b16 %v4190
        %v4255 = vunpack.c.l.b16 %v4191
        %v4256 = vunpack.c.l.b16 %v4192
        %v4257 = vunpack.c.l.b16 %v4193
        %v4258 = vunpack.c.l.b16 %v4194
        %v4259 = vunpack.c.l.b16 %v4195
        %v4260 = vunpack.c.l.b16 %v4196
        %v4261 = vunpack.c.l.b16 %v4197
        %v4262 = vunpack.c.l.b16 %v4198
        %v4263 = vunpack.c.l.b16 %v4199
        %v4264 = vunpack.c.l.b16 %v4200
        %v4265 = vunpack.c.l.b16 %v4201
        %v4266 = vunpack.c.l.b16 %v4202
        %v4267 = vunpack.c.l.b16 %v4203
        %v4268 = vunpack.c.l.b16 %v4204
        %v4269 = vunpack.c.l.b16 %v4205
        %v4270 = vunpack.c.l.b16 %v4206
        %v4271 = vunpack.c.l.b16 %v4207
        %v4272 = vunpack.c.l.b16 %v4208
        %v4273 = vunpack.c.l.b16 %v4209
        %v4274 = vunpack.c.l.b16 %v4210
        %v4275 = vpack.c.b16 %v4244, %v4243
        %v4276 = vpack.c.b16 %v4246, %v4245
        %v4277 = vpack.c.b16 %v4248, %v4247
        %v4278 = vpack.c.b16 %v4250, %v4249
        %v4279 = vpack.c.b16 %v4252, %v4251
        %v4280 = vpack.c.b16 %v4254, %v4253
        %v4281 = vpack.c.b16 %v4256, %v4255
        %v4282 = vpack.c.b16 %v4258, %v4257
        %v4283 = vpack.c.b16 %v4260, %v4259
        %v4284 = vpack.c.b16 %v4262, %v4261
        %v4285 = vpack.c.b16 %v4264, %v4263
        %v4286 = vpack.c.b16 %v4266, %v4265
        %v4287 = vpack.c.b16 %v4268, %v4267
        %v4288 = vpack.c.b16 %v4270, %v4269
        %v4289 = vpack.c.b16 %v4272, %v4271
        %v4290 = vpack.c.b16 %v4274, %v4273
        %4307 = vmatprep.subr.bf16.mxu0 0
        %4308 = vmatpush1.bf16.msra.mxu0 %v4275
        %4309 = vmatprep.subr.bf16.mxu0 0
        %4310 = vmatpush1.bf16.msra.mxu0 %v4276
        %4311 = vmatprep.subr.bf16.mxu0 0
        %4312 = vmatpush1.bf16.msra.mxu0 %v4277
        %4313 = vmatprep.subr.bf16.mxu0 0
        %4314 = vmatpush1.bf16.msra.mxu0 %v4278
        %4315 = vmatprep.subr.bf16.mxu0 0
        %4316 = vmatpush1.bf16.msra.mxu0 %v4279
        %4317 = vmatprep.subr.bf16.mxu0 0
        %4318 = vmatpush1.bf16.msra.mxu0 %v4280
        %4319 = vmatprep.subr.bf16.mxu0 0
        %4320 = vmatpush1.bf16.msra.mxu0 %v4281
        %4321 = vmatprep.subr.bf16.mxu0 0
        %4322 = vmatpush1.bf16.msra.mxu0 %v4282
        %4323 = vmatprep.subr.bf16.mxu0 0
        %4324 = vmatpush1.bf16.msra.mxu0 %v4283
        %4325 = vmatprep.subr.bf16.mxu0 0
        %4326 = vmatpush1.bf16.msra.mxu0 %v4284
        %4327 = vmatprep.subr.bf16.mxu0 0
        %4328 = vmatpush1.bf16.msra.mxu0 %v4285
        %4329 = vmatprep.subr.bf16.mxu0 0
        %4330 = vmatpush1.bf16.msra.mxu0 %v4286
        %4331 = vmatprep.subr.bf16.mxu0 0
        %4332 = vmatpush1.bf16.msra.mxu0 %v4287
        %4333 = vmatprep.subr.bf16.mxu0 0
        %4334 = vmatpush1.bf16.msra.mxu0 %v4288
        %4335 = vmatprep.subr.bf16.mxu0 0
        %4336 = vmatpush1.bf16.msra.mxu0 %v4289
        %4337 = vmatprep.subr.bf16.mxu0 0
        %4338 = vmatpush1.bf16.msra.mxu0 %v4290
        %4339 = vmatprep.mubr.bf16.mxu0 %v3839
        %4340 = vmatmul.mubr.bf16.gmra.mrb[0].mxu0 %v3838
        %v4341 = vpop.f32.mrb[0].mxu0
        %v4342 = vadd.f32 0.0, %v4341
        %v4343 = vpop.f32.mrb[0].mxu0
        %v4344 = vpop.f32.mrb[0].mxu0
        %v4345 = vpop.f32.mrb[0].mxu0
        %4346 = vdwg.mxu0
        %v4347 = vmax.f32 %v4177, %v4342
        %v4348 = vpack.c.bf16 %v4347, %v4347
        %v4349 = vld [vmem:[#allocation19] sm:$0x3]
        %vm4350 = vcmask 64512
        %v4352 = vsel %vm4350, %v4349, 0
        %vm4354 = vcmask 1043456
        %v4356 = vsel %vm4354, %v4348, 0
        %4358 = vmatprep.subr.bf16.mxu0 0
        %4359 = vmatpush1.bf16.msra.mxu0 %v4356
        %4360 = vmatprep.subr.bf16.mxu0 0
        %4361 = vmatpush1.bf16.msra.mxu0 0
        %4362 = vmatprep.subr.bf16.mxu0 0
        %4363 = vmatpush1.bf16.msra.mxu0 0
        %4364 = vmatprep.subr.bf16.mxu0 0
        %4365 = vmatpush1.bf16.msra.mxu0 0
        %4366 = vmatprep.subr.bf16.mxu0 0
        %4367 = vmatpush1.bf16.msra.mxu0 0
        %4368 = vmatprep.subr.bf16.mxu0 0
        %4369 = vmatpush1.bf16.msra.mxu0 0
        %4370 = vmatprep.subr.bf16.mxu0 0
        %4371 = vmatpush1.bf16.msra.mxu0 0
        %4372 = vmatprep.subr.bf16.mxu0 0
        %4373 = vmatpush1.bf16.msra.mxu0 0
        %4374 = vmatprep.subr.bf16.mxu0 0
        %4375 = vmatpush1.bf16.msra.mxu0 0
        %4376 = vmatprep.subr.bf16.mxu0 0
        %4377 = vmatpush1.bf16.msra.mxu0 0
        %4378 = vmatprep.subr.bf16.mxu0 0
        %4379 = vmatpush1.bf16.msra.mxu0 0
        %4380 = vmatprep.subr.bf16.mxu0 0
        %4381 = vmatpush1.bf16.msra.mxu0 0
        %4382 = vmatprep.subr.bf16.mxu0 0
        %4383 = vmatpush1.bf16.msra.mxu0 0
        %4384 = vmatprep.subr.bf16.mxu0 0
        %4385 = vmatpush1.bf16.msra.mxu0 0
        %4386 = vmatprep.subr.bf16.mxu0 0
        %4387 = vmatpush1.bf16.msra.mxu0 0
        %4388 = vmatprep.subr.bf16.mxu0 0
        %4389 = vmatpush1.bf16.msra.mxu0 0
        %4390 = vmatprep.mubr.bf16.mxu0 0
        %4391 = vmatmul.mubr.bf16.gmra.mrb[0].mxu0 %v4352
        %v4392 = vpop.f32.mrb[0].mxu0
        %v4393 = vadd.f32 0.0, %v4392
        %v4394 = vpop.f32.mrb[0].mxu0
        %v4395 = vpop.f32.mrb[0].mxu0
        %v4396 = vpop.f32.mrb[0].mxu0
        %4397 = vdwg.mxu0
        %s4398 = scalar_lea.vmem [#allocation19], 2
        %v4399 = vld [vmem:[%s4398] sm:$0x3]
        %v4401 = vsel %vm4350, %v4399, 0
        %4403 = vmatprep.subr.bf16.mxu0 0
        %4404 = vmatpush1.bf16.msra.mxu0 %v4356
        %4405 = vmatprep.subr.bf16.mxu0 0
        %4406 = vmatpush1.bf16.msra.mxu0 0
        %4407 = vmatprep.subr.bf16.mxu0 0
        %4408 = vmatpush1.bf16.msra.mxu0 0
        %4409 = vmatprep.subr.bf16.mxu0 0
        %4410 = vmatpush1.bf16.msra.mxu0 0
        %4411 = vmatprep.subr.bf16.mxu0 0
        %4412 = vmatpush1.bf16.msra.mxu0 0
        %4413 = vmatprep.subr.bf16.mxu0 0
        %4414 = vmatpush1.bf16.msra.mxu0 0
        %4415 = vmatprep.subr.bf16.mxu0 0
        %4416 = vmatpush1.bf16.msra.mxu0 0
        %4417 = vmatprep.subr.bf16.mxu0 0
        %4418 = vmatpush1.bf16.msra.mxu0 0
        %4419 = vmatprep.subr.bf16.mxu0 0
        %4420 = vmatpush1.bf16.msra.mxu0 0
        %4421 = vmatprep.subr.bf16.mxu0 0
        %4422 = vmatpush1.bf16.msra.mxu0 0
        %4423 = vmatprep.subr.bf16.mxu0 0
        %4424 = vmatpush1.bf16.msra.mxu0 0
        %4425 = vmatprep.subr.bf16.mxu0 0
        %4426 = vmatpush1.bf16.msra.mxu0 0
        %4427 = vmatprep.subr.bf16.mxu0 0
        %4428 = vmatpush1.bf16.msra.mxu0 0
        %4429 = vmatprep.subr.bf16.mxu0 0
        %4430 = vmatpush1.bf16.msra.mxu0 0
        %4431 = vmatprep.subr.bf16.mxu0 0
        %4432 = vmatpush1.bf16.msra.mxu0 0
        %4433 = vmatprep.subr.bf16.mxu0 0
        %4434 = vmatpush1.bf16.msra.mxu0 0
        %4435 = vmatprep.mubr.bf16.mxu0 0
        %4436 = vmatmul.mubr.bf16.gmra.mrb[0].mxu0 %v4401
        %v4437 = vpop.f32.mrb[0].mxu0
        %v4438 = vadd.f32 0.0, %v4437
        %v4439 = vpop.f32.mrb[0].mxu0
        %v4440 = vpop.f32.mrb[0].mxu0
        %v4441 = vpop.f32.mrb[0].mxu0
        %4442 = vdwg.mxu0
        %v4443 = vmax.f32 %v4393, %v4438
        %s4444 = scalar_lea.vmem [#allocation19], 4
        %v4445 = vld [vmem:[%s4444] sm:$0x3]
        %v4447 = vsel %vm4350, %v4445, 0
        %4449 = vmatprep.subr.bf16.mxu0 0
        %4450 = vmatpush1.bf16.msra.mxu0 %v4356
        %4451 = vmatprep.subr.bf16.mxu0 0
        %4452 = vmatpush1.bf16.msra.mxu0 0
        %4453 = vmatprep.subr.bf16.mxu0 0
        %4454 = vmatpush1.bf16.msra.mxu0 0
        %4455 = vmatprep.subr.bf16.mxu0 0
        %4456 = vmatpush1.bf16.msra.mxu0 0
        %4457 = vmatprep.subr.bf16.mxu0 0
        %4458 = vmatpush1.bf16.msra.mxu0 0
        %4459 = vmatprep.subr.bf16.mxu0 0
        %4460 = vmatpush1.bf16.msra.mxu0 0
        %4461 = vmatprep.subr.bf16.mxu0 0
        %4462 = vmatpush1.bf16.msra.mxu0 0
        %4463 = vmatprep.subr.bf16.mxu0 0
        %4464 = vmatpush1.bf16.msra.mxu0 0
        %4465 = vmatprep.subr.bf16.mxu0 0
        %4466 = vmatpush1.bf16.msra.mxu0 0
        %4467 = vmatprep.subr.bf16.mxu0 0
        %4468 = vmatpush1.bf16.msra.mxu0 0
        %4469 = vmatprep.subr.bf16.mxu0 0
        %4470 = vmatpush1.bf16.msra.mxu0 0
        %4471 = vmatprep.subr.bf16.mxu0 0
        %4472 = vmatpush1.bf16.msra.mxu0 0
        %4473 = vmatprep.subr.bf16.mxu0 0
        %4474 = vmatpush1.bf16.msra.mxu0 0
        %4475 = vmatprep.subr.bf16.mxu0 0
        %4476 = vmatpush1.bf16.msra.mxu0 0
        %4477 = vmatprep.subr.bf16.mxu0 0
        %4478 = vmatpush1.bf16.msra.mxu0 0
        %4479 = vmatprep.subr.bf16.mxu0 0
        %4480 = vmatpush1.bf16.msra.mxu0 0
        %4481 = vmatprep.mubr.bf16.mxu0 0
        %4482 = vmatmul.mubr.bf16.gmra.mrb[0].mxu0 %v4447
        %v4483 = vpop.f32.mrb[0].mxu0
        %v4484 = vadd.f32 0.0, %v4483
        %v4485 = vpop.f32.mrb[0].mxu0
        %v4486 = vpop.f32.mrb[0].mxu0
        %v4487 = vpop.f32.mrb[0].mxu0
        %4488 = vdwg.mxu0
        %v4489 = vmax.f32 %v4443, %v4484
        %v4490 = vmax.f32 %v4489, 0.0
        %v4491 = vld [vmem:[%s19] sm:$0xf]
        %v4492 = vld [vmem:[%s19 + $0x4] sm:$0xf]
        %v4493 = vld [vmem:[%s19 + $0x8] sm:$0xf]
        %v4494 = vld [vmem:[%s19 + $0xc] sm:$0xf]
        %v4495 = vld [vmem:[%s19 + $0x10] sm:$0xf]
        %v4496 = vld [vmem:[%s19 + $0x14] sm:$0xf]
        %v4497 = vld [vmem:[%s19 + $0x18] sm:$0xf]
        %v4498 = vld [vmem:[%s19 + $0x1c] sm:$0xf]
        %v4499 = vld [vmem:[%s19 + $0x20] sm:$0xf]
        %v4500 = vld [vmem:[%s19 + $0x24] sm:$0xf]
        %v4501 = vld [vmem:[%s19 + $0x28] sm:$0xf]
        %v4502 = vld [vmem:[%s19 + $0x2c] sm:$0xf]
        %v4503 = vld [vmem:[%s19 + $0x30] sm:$0xf]
        %v4504 = vld [vmem:[%s19 + $0x34] sm:$0xf]
        %v4505 = vld [vmem:[%s19 + $0x38] sm:$0xf]
        %v4506 = vld [vmem:[%s19 + $0x3c] sm:$0xf]
        %v4507 = vld [vmem:[%s19 + $0x40] sm:$0xf]
        %v4508 = vld [vmem:[%s19 + $0x44] sm:$0xf]
        %v4509 = vld [vmem:[%s19 + $0x48] sm:$0xf]
        %v4510 = vld [vmem:[%s19 + $0x4c] sm:$0xf]
        %v4511 = vld [vmem:[%s19 + $0x50] sm:$0xf]
        %v4512 = vld [vmem:[%s19 + $0x54] sm:$0xf]
        %v4513 = vld [vmem:[%s19 + $0x58] sm:$0xf]
        %v4514 = vld [vmem:[%s19 + $0x5c] sm:$0xf]
        %v4515 = vld [vmem:[%s19 + $0x60] sm:$0xf]
        %v4516 = vld [vmem:[%s19 + $0x64] sm:$0xf]
        %v4517 = vld [vmem:[%s19 + $0x68] sm:$0xf]
        %v4518 = vld [vmem:[%s19 + $0x6c] sm:$0xf]
        %v4519 = vld [vmem:[%s19 + $0x70] sm:$0xf]
        %v4520 = vld [vmem:[%s19 + $0x74] sm:$0xf]
        %v4521 = vld [vmem:[%s19 + $0x78] sm:$0xf]
        %v4522 = vld [vmem:[%s19 + $0x7c] sm:$0xf]
        %v4523 = vld [vmem:[%s19 + $0x80] sm:$0xf]
        %v4524 = vld [vmem:[%s19 + $0x84] sm:$0xf]
        %v4525 = vld [vmem:[%s19 + $0x88] sm:$0xf]
        %v4526 = vld [vmem:[%s19 + $0x8c] sm:$0xf]
        %v4527 = vld [vmem:[%s19 + $0x90] sm:$0xf]
        %v4528 = vld [vmem:[%s19 + $0x94] sm:$0xf]
        %v4529 = vld [vmem:[%s19 + $0x98] sm:$0xf]
        %v4530 = vld [vmem:[%s19 + $0x9c] sm:$0xf]
        %v4531 = vld [vmem:[%s19 + $0xa0] sm:$0xf]
        %v4532 = vld [vmem:[%s19 + $0xa4] sm:$0xf]
        %v4533 = vld [vmem:[%s19 + $0xa8] sm:$0xf]
        %v4534 = vld [vmem:[%s19 + $0xac] sm:$0xf]
        %v4535 = vld [vmem:[%s19 + $0xb0] sm:$0xf]
        %v4536 = vld [vmem:[%s19 + $0xb4] sm:$0xf]
        %v4537 = vld [vmem:[%s19 + $0xb8] sm:$0xf]
        %v4538 = vld [vmem:[%s19 + $0xbc] sm:$0xf]
        %v4539 = vld [vmem:[#allocation18] sm:$0x1]
        %v4541 = vrot.slane %v4490, 6
        %4543 = vst [vmem:[#allocation4] sm:$0x3c] %v4541
        %v4544 = vrot.slane %v4490, 7
        %4546 = vst [vmem:[#allocation4 + $0x8] sm:$0x1e] %v4544
        %4547 = vst [vmem:[#allocation4 + $0x10] sm:$0xf] %v4490
        %4548 = vst [vmem:[#allocation4 + $0x1] sm:$0x1] 0.0
        %4549 = vst [vmem:[#allocation4 + $0x14] sm:$0x1] 0.0
        %v4550 = vld [vmem:[#allocation4] sm:$0x1e]
        %v4551 = vld [vmem:[#allocation4 + $0x8] sm:$0x1e]
        %v4552 = vld [vmem:[#allocation4 + $0x10] sm:$0x1e]
        %v4553 = vpack.c.bf16 %v4550, %v4550
        %v4554 = vpack.c.bf16 %v4551, %v4551
        %v4555 = vpack.c.bf16 %v4552, %v4552
        %v4556 = vlaneseq
        %v4557 = vshrl.u32 %v4556, 7
        %v4558 = vsub.s32 0, %v4557
        %v4559 = vrot.slane %v4539, %v4558
        %v4561 = vshrl.u32 %v4553, 16
        %v4563 = vshll.u32 %v4553, 16
        %v4565 = vrot.slane %v4563, 1
        %v4566 = vor.u32 %v4561, %v4565
        %v4568 = vshrl.u32 %v4554, 16
        %v4570 = vshll.u32 %v4554, 16
        %v4572 = vrot.slane %v4570, 1
        %v4573 = vor.u32 %v4568, %v4572
        %v4575 = vshrl.u32 %v4555, 16
        %v4577 = vshll.u32 %v4555, 16
        %v4579 = vrot.slane %v4577, 1
        %v4580 = vor.u32 %v4575, %v4579
        %v4632 = vunpack.c.l.b16 %v4491
        %v4633 = vunpack.c.l.b16 %v4492
        %v4634 = vunpack.c.l.b16 %v4493
        %v4635 = vunpack.c.l.b16 %v4494
        %v4636 = vunpack.c.l.b16 %v4495
        %v4637 = vunpack.c.l.b16 %v4496
        %v4638 = vunpack.c.l.b16 %v4497
        %v4639 = vunpack.c.l.b16 %v4498
        %v4640 = vunpack.c.l.b16 %v4499
        %v4641 = vunpack.c.l.b16 %v4500
        %v4642 = vunpack.c.l.b16 %v4501
        %v4643 = vunpack.c.l.b16 %v4502
        %v4644 = vunpack.c.l.b16 %v4503
        %v4645 = vunpack.c.l.b16 %v4504
        %v4646 = vunpack.c.l.b16 %v4505
        %v4647 = vunpack.c.l.b16 %v4506
        %v4648 = vunpack.c.l.b16 %v4507
        %v4649 = vunpack.c.l.b16 %v4508
        %v4650 = vunpack.c.l.b16 %v4509
        %v4651 = vunpack.c.l.b16 %v4510
        %v4652 = vunpack.c.l.b16 %v4511
        %v4653 = vunpack.c.l.b16 %v4512
        %v4654 = vunpack.c.l.b16 %v4513
        %v4655 = vunpack.c.l.b16 %v4514
        %v4656 = vunpack.c.l.b16 %v4515
        %v4657 = vunpack.c.l.b16 %v4516
        %v4658 = vunpack.c.l.b16 %v4517
        %v4659 = vunpack.c.l.b16 %v4518
        %v4660 = vunpack.c.l.b16 %v4519
        %v4661 = vunpack.c.l.b16 %v4520
        %v4662 = vunpack.c.l.b16 %v4521
        %v4663 = vunpack.c.l.b16 %v4522
        %v4664 = vunpack.c.l.b16 %v4523
        %v4665 = vunpack.c.l.b16 %v4524
        %v4666 = vunpack.c.l.b16 %v4525
        %v4667 = vunpack.c.l.b16 %v4526
        %v4668 = vunpack.c.l.b16 %v4527
        %v4669 = vunpack.c.l.b16 %v4528
        %v4670 = vunpack.c.l.b16 %v4529
        %v4671 = vunpack.c.l.b16 %v4530
        %v4672 = vunpack.c.l.b16 %v4531
        %v4673 = vunpack.c.l.b16 %v4532
        %v4674 = vunpack.c.l.b16 %v4533
        %v4675 = vunpack.c.l.b16 %v4534
        %v4676 = vunpack.c.l.b16 %v4535
        %v4677 = vunpack.c.l.b16 %v4536
        %v4678 = vunpack.c.l.b16 %v4537
        %v4679 = vunpack.c.l.b16 %v4538
        %v4680 = vpack.c.b16 %v4633, %v4632
        %v4681 = vpack.c.b16 %v4635, %v4634
        %v4682 = vpack.c.b16 %v4637, %v4636
        %v4683 = vpack.c.b16 %v4639, %v4638
        %v4684 = vpack.c.b16 %v4641, %v4640
        %v4685 = vpack.c.b16 %v4643, %v4642
        %v4686 = vpack.c.b16 %v4645, %v4644
        %v4687 = vpack.c.b16 %v4647, %v4646
        %v4688 = vpack.c.b16 %v4649, %v4648
        %v4689 = vpack.c.b16 %v4651, %v4650
        %v4690 = vpack.c.b16 %v4653, %v4652
        %v4691 = vpack.c.b16 %v4655, %v4654
        %v4692 = vpack.c.b16 %v4657, %v4656
        %v4693 = vpack.c.b16 %v4659, %v4658
        %v4694 = vpack.c.b16 %v4661, %v4660
        %v4695 = vpack.c.b16 %v4663, %v4662
        %v4696 = vpack.c.b16 %v4665, %v4664
        %v4697 = vpack.c.b16 %v4667, %v4666
        %v4698 = vpack.c.b16 %v4669, %v4668
        %v4699 = vpack.c.b16 %v4671, %v4670
        %v4700 = vpack.c.b16 %v4673, %v4672
        %v4701 = vpack.c.b16 %v4675, %v4674
        %v4702 = vpack.c.b16 %v4677, %v4676
        %v4703 = vpack.c.b16 %v4679, %v4678
        %4728 = vmatprep.subr.bf16.mxu0 0
        %4729 = vmatpush1.bf16.msra.mxu0 %v4680
        %4730 = vmatprep.subr.bf16.mxu0 0
        %4731 = vmatpush1.bf16.msra.mxu0 %v4681
        %4732 = vmatprep.subr.bf16.mxu0 0
        %4733 = vmatpush1.bf16.msra.mxu0 %v4682
        %4734 = vmatprep.subr.bf16.mxu0 0
        %4735 = vmatpush1.bf16.msra.mxu0 %v4683
        %4736 = vmatprep.subr.bf16.mxu0 0
        %4737 = vmatpush1.bf16.msra.mxu0 %v4684
        %4738 = vmatprep.subr.bf16.mxu0 0
        %4739 = vmatpush1.bf16.msra.mxu0 %v4685
        %4740 = vmatprep.subr.bf16.mxu0 0
        %4741 = vmatpush1.bf16.msra.mxu0 %v4686
        %4742 = vmatprep.subr.bf16.mxu0 0
        %4743 = vmatpush1.bf16.msra.mxu0 %v4687
        %4744 = vmatprep.subr.bf16.mxu0 0
        %4745 = vmatpush1.bf16.msra.mxu0 %v4688
        %4746 = vmatprep.subr.bf16.mxu0 0
        %4747 = vmatpush1.bf16.msra.mxu0 %v4689
        %4748 = vmatprep.subr.bf16.mxu0 0
        %4749 = vmatpush1.bf16.msra.mxu0 %v4690
        %4750 = vmatprep.subr.bf16.mxu0 0
        %4751 = vmatpush1.bf16.msra.mxu0 %v4691
        %4752 = vmatprep.subr.bf16.mxu0 0
        %4753 = vmatpush1.bf16.msra.mxu0 %v4692
        %4754 = vmatprep.subr.bf16.mxu0 0
        %4755 = vmatpush1.bf16.msra.mxu0 %v4693
        %4756 = vmatprep.subr.bf16.mxu0 0
        %4757 = vmatpush1.bf16.msra.mxu0 %v4694
        %4758 = vmatprep.subr.bf16.mxu0 0
        %4759 = vmatpush1.bf16.msra.mxu0 %v4695
        %4760 = vmatprep.mubr.bf16.mxu0 %v4573
        %4761 = vmatmul.mubr.bf16.gmra.mrb[0].mxu0 %v4566
        %v4762 = vpop.f32.mrb[0].mxu0
        %v4763 = vadd.f32 %v4559, %v4762
        %v4764 = vpop.f32.mrb[0].mxu0
        %v4765 = vpop.f32.mrb[0].mxu0
        %v4766 = vpop.f32.mrb[0].mxu0
        %4767 = vdwg.mxu0
        %4768 = vmatprep.subr.bf16.mxu0 0
        %4769 = vmatpush1.bf16.msra.mxu0 %v4696
        %4770 = vmatprep.subr.bf16.mxu0 0
        %4771 = vmatpush1.bf16.msra.mxu0 %v4697
        %4772 = vmatprep.subr.bf16.mxu0 0
        %4773 = vmatpush1.bf16.msra.mxu0 %v4698
        %4774 = vmatprep.subr.bf16.mxu0 0
        %4775 = vmatpush1.bf16.msra.mxu0 %v4699
        %4776 = vmatprep.subr.bf16.mxu0 0
        %4777 = vmatpush1.bf16.msra.mxu0 %v4700
        %4778 = vmatprep.subr.bf16.mxu0 0
        %4779 = vmatpush1.bf16.msra.mxu0 %v4701
        %4780 = vmatprep.subr.bf16.mxu0 0
        %4781 = vmatpush1.bf16.msra.mxu0 %v4702
        %4782 = vmatprep.subr.bf16.mxu0 0
        %4783 = vmatpush1.bf16.msra.mxu0 %v4703
        %4784 = vmatprep.subr.bf16.mxu0 0
        %4785 = vmatpush1.bf16.msra.mxu0 0
        %4786 = vmatprep.subr.bf16.mxu0 0
        %4787 = vmatpush1.bf16.msra.mxu0 0
        %4788 = vmatprep.subr.bf16.mxu0 0
        %4789 = vmatpush1.bf16.msra.mxu0 0
        %4790 = vmatprep.subr.bf16.mxu0 0
        %4791 = vmatpush1.bf16.msra.mxu0 0
        %4792 = vmatprep.subr.bf16.mxu0 0
        %4793 = vmatpush1.bf16.msra.mxu0 0
        %4794 = vmatprep.subr.bf16.mxu0 0
        %4795 = vmatpush1.bf16.msra.mxu0 0
        %4796 = vmatprep.subr.bf16.mxu0 0
        %4797 = vmatpush1.bf16.msra.mxu0 0
        %4798 = vmatprep.subr.bf16.mxu0 0
        %4799 = vmatpush1.bf16.msra.mxu0 0
        %4800 = vmatprep.mubr.bf16.mxu0 0
        %4801 = vmatmul.mubr.bf16.gmra.mrb[0].mxu0 %v4580
        %v4802 = vpop.f32.mrb[0].mxu0
        %v4803 = vadd.f32 %v4763, %v4802
        %v4804 = vpop.f32.mrb[0].mxu0
        %v4805 = vpop.f32.mrb[0].mxu0
        %v4806 = vpop.f32.mrb[0].mxu0
        %4807 = vdwg.mxu0
        %v4808 = vmax.f32 %v4803, 0.0
        %s4809 = scalar_lea.vmem %s19, 192
        %v4810 = vld [vmem:[%s4809] sm:$0xf]
        %v4811 = vld [vmem:[%s4809 + $0x4] sm:$0xf]
        %v4812 = vld [vmem:[%s4809 + $0x8] sm:$0xf]
        %v4813 = vld [vmem:[%s4809 + $0xc] sm:$0xf]
        %v4814 = vld [vmem:[%s4809 + $0x10] sm:$0xf]
        %v4815 = vld [vmem:[%s4809 + $0x14] sm:$0xf]
        %v4816 = vld [vmem:[%s4809 + $0x18] sm:$0xf]
        %v4817 = vld [vmem:[%s4809 + $0x1c] sm:$0xf]
        %v4818 = vld [vmem:[%s4809 + $0x20] sm:$0xf]
        %v4819 = vld [vmem:[%s4809 + $0x24] sm:$0xf]
        %v4820 = vld [vmem:[%s4809 + $0x28] sm:$0xf]
        %v4821 = vld [vmem:[%s4809 + $0x2c] sm:$0xf]
        %v4822 = vld [vmem:[%s4809 + $0x30] sm:$0xf]
        %v4823 = vld [vmem:[%s4809 + $0x34] sm:$0xf]
        %v4824 = vld [vmem:[%s4809 + $0x38] sm:$0xf]
        %v4825 = vld [vmem:[%s4809 + $0x3c] sm:$0xf]
        %v4826 = vld [vmem:[%s4809 + $0x40] sm:$0xf]
        %v4827 = vld [vmem:[%s4809 + $0x44] sm:$0xf]
        %v4828 = vld [vmem:[%s4809 + $0x48] sm:$0xf]
        %v4829 = vld [vmem:[%s4809 + $0x4c] sm:$0xf]
        %v4830 = vld [vmem:[%s4809 + $0x50] sm:$0xf]
        %v4831 = vld [vmem:[%s4809 + $0x54] sm:$0xf]
        %v4832 = vld [vmem:[%s4809 + $0x58] sm:$0xf]
        %v4833 = vld [vmem:[%s4809 + $0x5c] sm:$0xf]
        %v4834 = vld [vmem:[%s4809 + $0x60] sm:$0xf]
        %v4835 = vld [vmem:[%s4809 + $0x64] sm:$0xf]
        %v4836 = vld [vmem:[%s4809 + $0x68] sm:$0xf]
        %v4837 = vld [vmem:[%s4809 + $0x6c] sm:$0xf]
        %v4838 = vld [vmem:[%s4809 + $0x70] sm:$0xf]
        %v4839 = vld [vmem:[%s4809 + $0x74] sm:$0xf]
        %v4840 = vld [vmem:[%s4809 + $0x78] sm:$0xf]
        %v4841 = vld [vmem:[%s4809 + $0x7c] sm:$0xf]
        %v4842 = vld [vmem:[%s4809 + $0x80] sm:$0xf]
        %v4843 = vld [vmem:[%s4809 + $0x84] sm:$0xf]
        %v4844 = vld [vmem:[%s4809 + $0x88] sm:$0xf]
        %v4845 = vld [vmem:[%s4809 + $0x8c] sm:$0xf]
        %v4846 = vld [vmem:[%s4809 + $0x90] sm:$0xf]
        %v4847 = vld [vmem:[%s4809 + $0x94] sm:$0xf]
        %v4848 = vld [vmem:[%s4809 + $0x98] sm:$0xf]
        %v4849 = vld [vmem:[%s4809 + $0x9c] sm:$0xf]
        %v4850 = vld [vmem:[%s4809 + $0xa0] sm:$0xf]
        %v4851 = vld [vmem:[%s4809 + $0xa4] sm:$0xf]
        %v4852 = vld [vmem:[%s4809 + $0xa8] sm:$0xf]
        %v4853 = vld [vmem:[%s4809 + $0xac] sm:$0xf]
        %v4854 = vld [vmem:[%s4809 + $0xb0] sm:$0xf]
        %v4855 = vld [vmem:[%s4809 + $0xb4] sm:$0xf]
        %v4856 = vld [vmem:[%s4809 + $0xb8] sm:$0xf]
        %v4857 = vld [vmem:[%s4809 + $0xbc] sm:$0xf]
        %v4858 = vld [vmem:[#allocation18 + $0x1] sm:$0x1]
        %v4860 = vrot.slane %v4808, 6
        %4862 = vst [vmem:[#allocation4] sm:$0x3c] %v4860
        %v4863 = vrot.slane %v4808, 7
        %4865 = vst [vmem:[#allocation4 + $0x8] sm:$0x1e] %v4863
        %4866 = vst [vmem:[#allocation4 + $0x10] sm:$0xf] %v4808
        %4867 = vst [vmem:[#allocation4 + $0x1] sm:$0x1] 0.0
        %4868 = vst [vmem:[#allocation4 + $0x14] sm:$0x1] 0.0
        %v4869 = vld [vmem:[#allocation4] sm:$0x1e]
        %v4870 = vld [vmem:[#allocation4 + $0x8] sm:$0x1e]
        %v4871 = vld [vmem:[#allocation4 + $0x10] sm:$0x1e]
        %v4872 = vpack.c.bf16 %v4869, %v4869
        %v4873 = vpack.c.bf16 %v4870, %v4870
        %v4874 = vpack.c.bf16 %v4871, %v4871
        %v4875 = vlaneseq
        %v4876 = vshrl.u32 %v4875, 7
        %v4877 = vsub.s32 0, %v4876
        %v4878 = vrot.slane %v4858, %v4877
        %v4880 = vshrl.u32 %v4872, 16
        %v4882 = vshll.u32 %v4872, 16
        %v4884 = vrot.slane %v4882, 1
        %v4885 = vor.u32 %v4880, %v4884
        %v4887 = vshrl.u32 %v4873, 16
        %v4889 = vshll.u32 %v4873, 16
        %v4891 = vrot.slane %v4889, 1
        %v4892 = vor.u32 %v4887, %v4891
        %v4894 = vshrl.u32 %v4874, 16
        %v4896 = vshll.u32 %v4874, 16
        %v4898 = vrot.slane %v4896, 1
        %v4899 = vor.u32 %v4894, %v4898
        %v4951 = vunpack.c.l.b16 %v4810
        %v4952 = vunpack.c.l.b16 %v4811
        %v4953 = vunpack.c.l.b16 %v4812
        %v4954 = vunpack.c.l.b16 %v4813
        %v4955 = vunpack.c.l.b16 %v4814
        %v4956 = vunpack.c.l.b16 %v4815
        %v4957 = vunpack.c.l.b16 %v4816
        %v4958 = vunpack.c.l.b16 %v4817
        %v4959 = vunpack.c.l.b16 %v4818
        %v4960 = vunpack.c.l.b16 %v4819
        %v4961 = vunpack.c.l.b16 %v4820
        %v4962 = vunpack.c.l.b16 %v4821
        %v4963 = vunpack.c.l.b16 %v4822
        %v4964 = vunpack.c.l.b16 %v4823
        %v4965 = vunpack.c.l.b16 %v4824
        %v4966 = vunpack.c.l.b16 %v4825
        %v4967 = vunpack.c.l.b16 %v4826
        %v4968 = vunpack.c.l.b16 %v4827
        %v4969 = vunpack.c.l.b16 %v4828
        %v4970 = vunpack.c.l.b16 %v4829
        %v4971 = vunpack.c.l.b16 %v4830
        %v4972 = vunpack.c.l.b16 %v4831
        %v4973 = vunpack.c.l.b16 %v4832
        %v4974 = vunpack.c.l.b16 %v4833
        %v4975 = vunpack.c.l.b16 %v4834
        %v4976 = vunpack.c.l.b16 %v4835
        %v4977 = vunpack.c.l.b16 %v4836
        %v4978 = vunpack.c.l.b16 %v4837
        %v4979 = vunpack.c.l.b16 %v4838
        %v4980 = vunpack.c.l.b16 %v4839
        %v4981 = vunpack.c.l.b16 %v4840
        %v4982 = vunpack.c.l.b16 %v4841
        %v4983 = vunpack.c.l.b16 %v4842
        %v4984 = vunpack.c.l.b16 %v4843
        %v4985 = vunpack.c.l.b16 %v4844
        %v4986 = vunpack.c.l.b16 %v4845
        %v4987 = vunpack.c.l.b16 %v4846
        %v4988 = vunpack.c.l.b16 %v4847
        %v4989 = vunpack.c.l.b16 %v4848
        %v4990 = vunpack.c.l.b16 %v4849
        %v4991 = vunpack.c.l.b16 %v4850
        %v4992 = vunpack.c.l.b16 %v4851
        %v4993 = vunpack.c.l.b16 %v4852
        %v4994 = vunpack.c.l.b16 %v4853
        %v4995 = vunpack.c.l.b16 %v4854
        %v4996 = vunpack.c.l.b16 %v4855
        %v4997 = vunpack.c.l.b16 %v4856
        %v4998 = vunpack.c.l.b16 %v4857
        %v4999 = vpack.c.b16 %v4952, %v4951
        %v5000 = vpack.c.b16 %v4954, %v4953
        %v5001 = vpack.c.b16 %v4956, %v4955
        %v5002 = vpack.c.b16 %v4958, %v4957
        %v5003 = vpack.c.b16 %v4960, %v4959
        %v5004 = vpack.c.b16 %v4962, %v4961
        %v5005 = vpack.c.b16 %v4964, %v4963
        %v5006 = vpack.c.b16 %v4966, %v4965
        %v5007 = vpack.c.b16 %v4968, %v4967
        %v5008 = vpack.c.b16 %v4970, %v4969
        %v5009 = vpack.c.b16 %v4972, %v4971
        %v5010 = vpack.c.b16 %v4974, %v4973
        %v5011 = vpack.c.b16 %v4976, %v4975
        %v5012 = vpack.c.b16 %v4978, %v4977
        %v5013 = vpack.c.b16 %v4980, %v4979
        %v5014 = vpack.c.b16 %v4982, %v4981
        %v5015 = vpack.c.b16 %v4984, %v4983
        %v5016 = vpack.c.b16 %v4986, %v4985
        %v5017 = vpack.c.b16 %v4988, %v4987
        %v5018 = vpack.c.b16 %v4990, %v4989
        %v5019 = vpack.c.b16 %v4992, %v4991
        %v5020 = vpack.c.b16 %v4994, %v4993
        %v5021 = vpack.c.b16 %v4996, %v4995
        %v5022 = vpack.c.b16 %v4998, %v4997
        %5047 = vmatprep.subr.bf16.mxu0 0
        %5048 = vmatpush1.bf16.msra.mxu0 %v4999
        %5049 = vmatprep.subr.bf16.mxu0 0
        %5050 = vmatpush1.bf16.msra.mxu0 %v5000
        %5051 = vmatprep.subr.bf16.mxu0 0
        %5052 = vmatpush1.bf16.msra.mxu0 %v5001
        %5053 = vmatprep.subr.bf16.mxu0 0
        %5054 = vmatpush1.bf16.msra.mxu0 %v5002
        %5055 = vmatprep.subr.bf16.mxu0 0
        %5056 = vmatpush1.bf16.msra.mxu0 %v5003
        %5057 = vmatprep.subr.bf16.mxu0 0
        %5058 = vmatpush1.bf16.msra.mxu0 %v5004
        %5059 = vmatprep.subr.bf16.mxu0 0
        %5060 = vmatpush1.bf16.msra.mxu0 %v5005
        %5061 = vmatprep.subr.bf16.mxu0 0
        %5062 = vmatpush1.bf16.msra.mxu0 %v5006
        %5063 = vmatprep.subr.bf16.mxu0 0
        %5064 = vmatpush1.bf16.msra.mxu0 %v5007
        %5065 = vmatprep.subr.bf16.mxu0 0
        %5066 = vmatpush1.bf16.msra.mxu0 %v5008
        %5067 = vmatprep.subr.bf16.mxu0 0
        %5068 = vmatpush1.bf16.msra.mxu0 %v5009
        %5069 = vmatprep.subr.bf16.mxu0 0
        %5070 = vmatpush1.bf16.msra.mxu0 %v5010
        %5071 = vmatprep.subr.bf16.mxu0 0
        %5072 = vmatpush1.bf16.msra.mxu0 %v5011
        %5073 = vmatprep.subr.bf16.mxu0 0
        %5074 = vmatpush1.bf16.msra.mxu0 %v5012
        %5075 = vmatprep.subr.bf16.mxu0 0
        %5076 = vmatpush1.bf16.msra.mxu0 %v5013
        %5077 = vmatprep.subr.bf16.mxu0 0
        %5078 = vmatpush1.bf16.msra.mxu0 %v5014
        %5079 = vmatprep.mubr.bf16.mxu0 %v4892
        %5080 = vmatmul.mubr.bf16.gmra.mrb[0].mxu0 %v4885
        %v5081 = vpop.f32.mrb[0].mxu0
        %v5082 = vadd.f32 %v4878, %v5081
        %v5083 = vpop.f32.mrb[0].mxu0
        %v5084 = vpop.f32.mrb[0].mxu0
        %v5085 = vpop.f32.mrb[0].mxu0
        %5086 = vdwg.mxu0
        %5087 = vmatprep.subr.bf16.mxu0 0
        %5088 = vmatpush1.bf16.msra.mxu0 %v5015
        %5089 = vmatprep.subr.bf16.mxu0 0
        %5090 = vmatpush1.bf16.msra.mxu0 %v5016
        %5091 = vmatprep.subr.bf16.mxu0 0
        %5092 = vmatpush1.bf16.msra.mxu0 %v5017
        %5093 = vmatprep.subr.bf16.mxu0 0
        %5094 = vmatpush1.bf16.msra.mxu0 %v5018
        %5095 = vmatprep.subr.bf16.mxu0 0
        %5096 = vmatpush1.bf16.msra.mxu0 %v5019
        %5097 = vmatprep.subr.bf16.mxu0 0
        %5098 = vmatpush1.bf16.msra.mxu0 %v5020
        %5099 = vmatprep.subr.bf16.mxu0 0
        %5100 = vmatpush1.bf16.msra.mxu0 %v5021
        %5101 = vmatprep.subr.bf16.mxu0 0
        %5102 = vmatpush1.bf16.msra.mxu0 %v5022
        %5103 = vmatprep.subr.bf16.mxu0 0
        %5104 = vmatpush1.bf16.msra.mxu0 0
        %5105 = vmatprep.subr.bf16.mxu0 0
        %5106 = vmatpush1.bf16.msra.mxu0 0
        %5107 = vmatprep.subr.bf16.mxu0 0
        %5108 = vmatpush1.bf16.msra.mxu0 0
        %5109 = vmatprep.subr.bf16.mxu0 0
        %5110 = vmatpush1.bf16.msra.mxu0 0
        %5111 = vmatprep.subr.bf16.mxu0 0
        %5112 = vmatpush1.bf16.msra.mxu0 0
        %5113 = vmatprep.subr.bf16.mxu0 0
        %5114 = vmatpush1.bf16.msra.mxu0 0
        %5115 = vmatprep.subr.bf16.mxu0 0
        %5116 = vmatpush1.bf16.msra.mxu0 0
        %5117 = vmatprep.subr.bf16.mxu0 0
        %5118 = vmatpush1.bf16.msra.mxu0 0
        %5119 = vmatprep.mubr.bf16.mxu0 0
        %5120 = vmatmul.mubr.bf16.gmra.mrb[0].mxu0 %v4899
        %v5121 = vpop.f32.mrb[0].mxu0
        %v5122 = vadd.f32 %v5082, %v5121
        %v5123 = vpop.f32.mrb[0].mxu0
        %v5124 = vpop.f32.mrb[0].mxu0
        %v5125 = vpop.f32.mrb[0].mxu0
        %5126 = vdwg.mxu0
        %v5127 = vadd.f32 %v4489, %v5122
        %v5128 = vmax.f32 %v5127, 0.0
        %s5129 = scalar_lea.vmem %s19, 384
        %v5130 = vld [vmem:[%s5129] sm:$0xf]
        %v5131 = vld [vmem:[%s5129 + $0x4] sm:$0xf]
        %v5132 = vld [vmem:[%s5129 + $0x8] sm:$0xf]
        %v5133 = vld [vmem:[%s5129 + $0xc] sm:$0xf]
        %v5134 = vld [vmem:[%s5129 + $0x10] sm:$0xf]
        %v5135 = vld [vmem:[%s5129 + $0x14] sm:$0xf]
        %v5136 = vld [vmem:[%s5129 + $0x18] sm:$0xf]
        %v5137 = vld [vmem:[%s5129 + $0x1c] sm:$0xf]
        %v5138 = vld [vmem:[%s5129 + $0x20] sm:$0xf]
        %v5139 = vld [vmem:[%s5129 + $0x24] sm:$0xf]
        %v5140 = vld [vmem:[%s5129 + $0x28] sm:$0xf]
        %v5141 = vld [vmem:[%s5129 + $0x2c] sm:$0xf]
        %v5142 = vld [vmem:[%s5129 + $0x30] sm:$0xf]
        %v5143 = vld [vmem:[%s5129 + $0x34] sm:$0xf]
        %v5144 = vld [vmem:[%s5129 + $0x38] sm:$0xf]
        %v5145 = vld [vmem:[%s5129 + $0x3c] sm:$0xf]
        %v5146 = vld [vmem:[%s5129 + $0x40] sm:$0xf]
        %v5147 = vld [vmem:[%s5129 + $0x44] sm:$0xf]
        %v5148 = vld [vmem:[%s5129 + $0x48] sm:$0xf]
        %v5149 = vld [vmem:[%s5129 + $0x4c] sm:$0xf]
        %v5150 = vld [vmem:[%s5129 + $0x50] sm:$0xf]
        %v5151 = vld [vmem:[%s5129 + $0x54] sm:$0xf]
        %v5152 = vld [vmem:[%s5129 + $0x58] sm:$0xf]
        %v5153 = vld [vmem:[%s5129 + $0x5c] sm:$0xf]
        %v5154 = vld [vmem:[%s5129 + $0x60] sm:$0xf]
        %v5155 = vld [vmem:[%s5129 + $0x64] sm:$0xf]
        %v5156 = vld [vmem:[%s5129 + $0x68] sm:$0xf]
        %v5157 = vld [vmem:[%s5129 + $0x6c] sm:$0xf]
        %v5158 = vld [vmem:[%s5129 + $0x70] sm:$0xf]
        %v5159 = vld [vmem:[%s5129 + $0x74] sm:$0xf]
        %v5160 = vld [vmem:[%s5129 + $0x78] sm:$0xf]
        %v5161 = vld [vmem:[%s5129 + $0x7c] sm:$0xf]
        %v5162 = vld [vmem:[%s5129 + $0x80] sm:$0xf]
        %v5163 = vld [vmem:[%s5129 + $0x84] sm:$0xf]
        %v5164 = vld [vmem:[%s5129 + $0x88] sm:$0xf]
        %v5165 = vld [vmem:[%s5129 + $0x8c] sm:$0xf]
        %v5166 = vld [vmem:[%s5129 + $0x90] sm:$0xf]
        %v5167 = vld [vmem:[%s5129 + $0x94] sm:$0xf]
        %v5168 = vld [vmem:[%s5129 + $0x98] sm:$0xf]
        %v5169 = vld [vmem:[%s5129 + $0x9c] sm:$0xf]
        %v5170 = vld [vmem:[%s5129 + $0xa0] sm:$0xf]
        %v5171 = vld [vmem:[%s5129 + $0xa4] sm:$0xf]
        %v5172 = vld [vmem:[%s5129 + $0xa8] sm:$0xf]
        %v5173 = vld [vmem:[%s5129 + $0xac] sm:$0xf]
        %v5174 = vld [vmem:[%s5129 + $0xb0] sm:$0xf]
        %v5175 = vld [vmem:[%s5129 + $0xb4] sm:$0xf]
        %v5176 = vld [vmem:[%s5129 + $0xb8] sm:$0xf]
        %v5177 = vld [vmem:[%s5129 + $0xbc] sm:$0xf]
        %v5178 = vld [vmem:[#allocation18 + $0x2] sm:$0x1]
        %v5180 = vrot.slane %v5128, 6
        %5182 = vst [vmem:[#allocation4] sm:$0x3c] %v5180
        %v5183 = vrot.slane %v5128, 7
        %5185 = vst [vmem:[#allocation4 + $0x8] sm:$0x1e] %v5183
        %5186 = vst [vmem:[#allocation4 + $0x10] sm:$0xf] %v5128
        %5187 = vst [vmem:[#allocation4 + $0x1] sm:$0x1] 0.0
        %5188 = vst [vmem:[#allocation4 + $0x14] sm:$0x1] 0.0
        %v5189 = vld [vmem:[#allocation4] sm:$0x1e]
        %v5190 = vld [vmem:[#allocation4 + $0x8] sm:$0x1e]
        %v5191 = vld [vmem:[#allocation4 + $0x10] sm:$0x1e]
        %v5192 = vpack.c.bf16 %v5189, %v5189
        %v5193 = vpack.c.bf16 %v5190, %v5190
        %v5194 = vpack.c.bf16 %v5191, %v5191
        %v5195 = vlaneseq
        %v5196 = vshrl.u32 %v5195, 7
        %v5197 = vsub.s32 0, %v5196
        %v5198 = vrot.slane %v5178, %v5197
        %v5200 = vshrl.u32 %v5192, 16
        %v5202 = vshll.u32 %v5192, 16
        %v5204 = vrot.slane %v5202, 1
        %v5205 = vor.u32 %v5200, %v5204
        %v5207 = vshrl.u32 %v5193, 16
        %v5209 = vshll.u32 %v5193, 16
        %v5211 = vrot.slane %v5209, 1
        %v5212 = vor.u32 %v5207, %v5211
        %v5214 = vshrl.u32 %v5194, 16
        %v5216 = vshll.u32 %v5194, 16
        %v5218 = vrot.slane %v5216, 1
        %v5219 = vor.u32 %v5214, %v5218
        %v5271 = vunpack.c.l.b16 %v5130
        %v5272 = vunpack.c.l.b16 %v5131
        %v5273 = vunpack.c.l.b16 %v5132
        %v5274 = vunpack.c.l.b16 %v5133
        %v5275 = vunpack.c.l.b16 %v5134
        %v5276 = vunpack.c.l.b16 %v5135
        %v5277 = vunpack.c.l.b16 %v5136
        %v5278 = vunpack.c.l.b16 %v5137
        %v5279 = vunpack.c.l.b16 %v5138
        %v5280 = vunpack.c.l.b16 %v5139
        %v5281 = vunpack.c.l.b16 %v5140
        %v5282 = vunpack.c.l.b16 %v5141
        %v5283 = vunpack.c.l.b16 %v5142
        %v5284 = vunpack.c.l.b16 %v5143
        %v5285 = vunpack.c.l.b16 %v5144
        %v5286 = vunpack.c.l.b16 %v5145
        %v5287 = vunpack.c.l.b16 %v5146
        %v5288 = vunpack.c.l.b16 %v5147
        %v5289 = vunpack.c.l.b16 %v5148
        %v5290 = vunpack.c.l.b16 %v5149
        %v5291 = vunpack.c.l.b16 %v5150
        %v5292 = vunpack.c.l.b16 %v5151
        %v5293 = vunpack.c.l.b16 %v5152
        %v5294 = vunpack.c.l.b16 %v5153
        %v5295 = vunpack.c.l.b16 %v5154
        %v5296 = vunpack.c.l.b16 %v5155
        %v5297 = vunpack.c.l.b16 %v5156
        %v5298 = vunpack.c.l.b16 %v5157
        %v5299 = vunpack.c.l.b16 %v5158
        %v5300 = vunpack.c.l.b16 %v5159
        %v5301 = vunpack.c.l.b16 %v5160
        %v5302 = vunpack.c.l.b16 %v5161
        %v5303 = vunpack.c.l.b16 %v5162
        %v5304 = vunpack.c.l.b16 %v5163
        %v5305 = vunpack.c.l.b16 %v5164
        %v5306 = vunpack.c.l.b16 %v5165
        %v5307 = vunpack.c.l.b16 %v5166
        %v5308 = vunpack.c.l.b16 %v5167
        %v5309 = vunpack.c.l.b16 %v5168
        %v5310 = vunpack.c.l.b16 %v5169
        %v5311 = vunpack.c.l.b16 %v5170
        %v5312 = vunpack.c.l.b16 %v5171
        %v5313 = vunpack.c.l.b16 %v5172
        %v5314 = vunpack.c.l.b16 %v5173
        %v5315 = vunpack.c.l.b16 %v5174
        %v5316 = vunpack.c.l.b16 %v5175
        %v5317 = vunpack.c.l.b16 %v5176
        %v5318 = vunpack.c.l.b16 %v5177
        %v5319 = vpack.c.b16 %v5272, %v5271
        %v5320 = vpack.c.b16 %v5274, %v5273
        %v5321 = vpack.c.b16 %v5276, %v5275
        %v5322 = vpack.c.b16 %v5278, %v5277
        %v5323 = vpack.c.b16 %v5280, %v5279
        %v5324 = vpack.c.b16 %v5282, %v5281
        %v5325 = vpack.c.b16 %v5284, %v5283
        %v5326 = vpack.c.b16 %v5286, %v5285
        %v5327 = vpack.c.b16 %v5288, %v5287
        %v5328 = vpack.c.b16 %v5290, %v5289
        %v5329 = vpack.c.b16 %v5292, %v5291
        %v5330 = vpack.c.b16 %v5294, %v5293
        %v5331 = vpack.c.b16 %v5296, %v5295
        %v5332 = vpack.c.b16 %v5298, %v5297
        %v5333 = vpack.c.b16 %v5300, %v5299
        %v5334 = vpack.c.b16 %v5302, %v5301
        %v5335 = vpack.c.b16 %v5304, %v5303
        %v5336 = vpack.c.b16 %v5306, %v5305
        %v5337 = vpack.c.b16 %v5308, %v5307
        %v5338 = vpack.c.b16 %v5310, %v5309
        %v5339 = vpack.c.b16 %v5312, %v5311
        %v5340 = vpack.c.b16 %v5314, %v5313
        %v5341 = vpack.c.b16 %v5316, %v5315
        %v5342 = vpack.c.b16 %v5318, %v5317
        %5367 = vmatprep.subr.bf16.mxu0 0
        %5368 = vmatpush1.bf16.msra.mxu0 %v5319
        %5369 = vmatprep.subr.bf16.mxu0 0
        %5370 = vmatpush1.bf16.msra.mxu0 %v5320
        %5371 = vmatprep.subr.bf16.mxu0 0
        %5372 = vmatpush1.bf16.msra.mxu0 %v5321
        %5373 = vmatprep.subr.bf16.mxu0 0
        %5374 = vmatpush1.bf16.msra.mxu0 %v5322
        %5375 = vmatprep.subr.bf16.mxu0 0
        %5376 = vmatpush1.bf16.msra.mxu0 %v5323
        %5377 = vmatprep.subr.bf16.mxu0 0
        %5378 = vmatpush1.bf16.msra.mxu0 %v5324
        %5379 = vmatprep.subr.bf16.mxu0 0
        %5380 = vmatpush1.bf16.msra.mxu0 %v5325
        %5381 = vmatprep.subr.bf16.mxu0 0
        %5382 = vmatpush1.bf16.msra.mxu0 %v5326
        %5383 = vmatprep.subr.bf16.mxu0 0
        %5384 = vmatpush1.bf16.msra.mxu0 %v5327
        %5385 = vmatprep.subr.bf16.mxu0 0
        %5386 = vmatpush1.bf16.msra.mxu0 %v5328
        %5387 = vmatprep.subr.bf16.mxu0 0
        %5388 = vmatpush1.bf16.msra.mxu0 %v5329
        %5389 = vmatprep.subr.bf16.mxu0 0
        %5390 = vmatpush1.bf16.msra.mxu0 %v5330
        %5391 = vmatprep.subr.bf16.mxu0 0
        %5392 = vmatpush1.bf16.msra.mxu0 %v5331
        %5393 = vmatprep.subr.bf16.mxu0 0
        %5394 = vmatpush1.bf16.msra.mxu0 %v5332
        %5395 = vmatprep.subr.bf16.mxu0 0
        %5396 = vmatpush1.bf16.msra.mxu0 %v5333
        %5397 = vmatprep.subr.bf16.mxu0 0
        %5398 = vmatpush1.bf16.msra.mxu0 %v5334
        %5399 = vmatprep.mubr.bf16.mxu0 %v5212
        %5400 = vmatmul.mubr.bf16.gmra.mrb[0].mxu0 %v5205
        %v5401 = vpop.f32.mrb[0].mxu0
        %v5402 = vadd.f32 %v5198, %v5401
        %v5403 = vpop.f32.mrb[0].mxu0
        %v5404 = vpop.f32.mrb[0].mxu0
        %v5405 = vpop.f32.mrb[0].mxu0
        %5406 = vdwg.mxu0
        %5407 = vmatprep.subr.bf16.mxu0 0
        %5408 = vmatpush1.bf16.msra.mxu0 %v5335
        %5409 = vmatprep.subr.bf16.mxu0 0
        %5410 = vmatpush1.bf16.msra.mxu0 %v5336
        %5411 = vmatprep.subr.bf16.mxu0 0
        %5412 = vmatpush1.bf16.msra.mxu0 %v5337
        %5413 = vmatprep.subr.bf16.mxu0 0
        %5414 = vmatpush1.bf16.msra.mxu0 %v5338
        %5415 = vmatprep.subr.bf16.mxu0 0
        %5416 = vmatpush1.bf16.msra.mxu0 %v5339
        %5417 = vmatprep.subr.bf16.mxu0 0
        %5418 = vmatpush1.bf16.msra.mxu0 %v5340
        %5419 = vmatprep.subr.bf16.mxu0 0
        %5420 = vmatpush1.bf16.msra.mxu0 %v5341
        %5421 = vmatprep.subr.bf16.mxu0 0
        %5422 = vmatpush1.bf16.msra.mxu0 %v5342
        %5423 = vmatprep.subr.bf16.mxu0 0
        %5424 = vmatpush1.bf16.msra.mxu0 0
        %5425 = vmatprep.subr.bf16.mxu0 0
        %5426 = vmatpush1.bf16.msra.mxu0 0
        %5427 = vmatprep.subr.bf16.mxu0 0
        %5428 = vmatpush1.bf16.msra.mxu0 0
        %5429 = vmatprep.subr.bf16.mxu0 0
        %5430 = vmatpush1.bf16.msra.mxu0 0
        %5431 = vmatprep.subr.bf16.mxu0 0
        %5432 = vmatpush1.bf16.msra.mxu0 0
        %5433 = vmatprep.subr.bf16.mxu0 0
        %5434 = vmatpush1.bf16.msra.mxu0 0
        %5435 = vmatprep.subr.bf16.mxu0 0
        %5436 = vmatpush1.bf16.msra.mxu0 0
        %5437 = vmatprep.subr.bf16.mxu0 0
        %5438 = vmatpush1.bf16.msra.mxu0 0
        %5439 = vmatprep.mubr.bf16.mxu0 0
        %5440 = vmatmul.mubr.bf16.gmra.mrb[0].mxu0 %v5219
        %v5441 = vpop.f32.mrb[0].mxu0
        %v5442 = vadd.f32 %v5402, %v5441
        %v5443 = vpop.f32.mrb[0].mxu0
        %v5444 = vpop.f32.mrb[0].mxu0
        %v5445 = vpop.f32.mrb[0].mxu0
        %5446 = vdwg.mxu0
        %v5447 = vmax.f32 %v5442, 0.0
        %s5448 = scalar_lea.vmem %s19, 576
        %v5449 = vld [vmem:[%s5448] sm:$0xf]
        %v5450 = vld [vmem:[%s5448 + $0x4] sm:$0xf]
        %v5451 = vld [vmem:[%s5448 + $0x8] sm:$0xf]
        %v5452 = vld [vmem:[%s5448 + $0xc] sm:$0xf]
        %v5453 = vld [vmem:[%s5448 + $0x10] sm:$0xf]
        %v5454 = vld [vmem:[%s5448 + $0x14] sm:$0xf]
        %v5455 = vld [vmem:[%s5448 + $0x18] sm:$0xf]
        %v5456 = vld [vmem:[%s5448 + $0x1c] sm:$0xf]
        %v5457 = vld [vmem:[%s5448 + $0x20] sm:$0xf]
        %v5458 = vld [vmem:[%s5448 + $0x24] sm:$0xf]
        %v5459 = vld [vmem:[%s5448 + $0x28] sm:$0xf]
        %v5460 = vld [vmem:[%s5448 + $0x2c] sm:$0xf]
        %v5461 = vld [vmem:[%s5448 + $0x30] sm:$0xf]
        %v5462 = vld [vmem:[%s5448 + $0x34] sm:$0xf]
        %v5463 = vld [vmem:[%s5448 + $0x38] sm:$0xf]
        %v5464 = vld [vmem:[%s5448 + $0x3c] sm:$0xf]
        %v5465 = vld [vmem:[%s5448 + $0x40] sm:$0xf]
        %v5466 = vld [vmem:[%s5448 + $0x44] sm:$0xf]
        %v5467 = vld [vmem:[%s5448 + $0x48] sm:$0xf]
        %v5468 = vld [vmem:[%s5448 + $0x4c] sm:$0xf]
        %v5469 = vld [vmem:[%s5448 + $0x50] sm:$0xf]
        %v5470 = vld [vmem:[%s5448 + $0x54] sm:$0xf]
        %v5471 = vld [vmem:[%s5448 + $0x58] sm:$0xf]
        %v5472 = vld [vmem:[%s5448 + $0x5c] sm:$0xf]
        %v5473 = vld [vmem:[%s5448 + $0x60] sm:$0xf]
        %v5474 = vld [vmem:[%s5448 + $0x64] sm:$0xf]
        %v5475 = vld [vmem:[%s5448 + $0x68] sm:$0xf]
        %v5476 = vld [vmem:[%s5448 + $0x6c] sm:$0xf]
        %v5477 = vld [vmem:[%s5448 + $0x70] sm:$0xf]
        %v5478 = vld [vmem:[%s5448 + $0x74] sm:$0xf]
        %v5479 = vld [vmem:[%s5448 + $0x78] sm:$0xf]
        %v5480 = vld [vmem:[%s5448 + $0x7c] sm:$0xf]
        %v5481 = vld [vmem:[%s5448 + $0x80] sm:$0xf]
        %v5482 = vld [vmem:[%s5448 + $0x84] sm:$0xf]
        %v5483 = vld [vmem:[%s5448 + $0x88] sm:$0xf]
        %v5484 = vld [vmem:[%s5448 + $0x8c] sm:$0xf]
        %v5485 = vld [vmem:[%s5448 + $0x90] sm:$0xf]
        %v5486 = vld [vmem:[%s5448 + $0x94] sm:$0xf]
        %v5487 = vld [vmem:[%s5448 + $0x98] sm:$0xf]
        %v5488 = vld [vmem:[%s5448 + $0x9c] sm:$0xf]
        %v5489 = vld [vmem:[%s5448 + $0xa0] sm:$0xf]
        %v5490 = vld [vmem:[%s5448 + $0xa4] sm:$0xf]
        %v5491 = vld [vmem:[%s5448 + $0xa8] sm:$0xf]
        %v5492 = vld [vmem:[%s5448 + $0xac] sm:$0xf]
        %v5493 = vld [vmem:[%s5448 + $0xb0] sm:$0xf]
        %v5494 = vld [vmem:[%s5448 + $0xb4] sm:$0xf]
        %v5495 = vld [vmem:[%s5448 + $0xb8] sm:$0xf]
        %v5496 = vld [vmem:[%s5448 + $0xbc] sm:$0xf]
        %v5497 = vld [vmem:[#allocation18 + $0x3] sm:$0x1]
        %v5499 = vrot.slane %v5447, 6
        %5501 = vst [vmem:[#allocation4] sm:$0x3c] %v5499
        %v5502 = vrot.slane %v5447, 7
        %5504 = vst [vmem:[#allocation4 + $0x8] sm:$0x1e] %v5502
        %5505 = vst [vmem:[#allocation4 + $0x10] sm:$0xf] %v5447
        %5506 = vst [vmem:[#allocation4 + $0x1] sm:$0x1] 0.0
        %5507 = vst [vmem:[#allocation4 + $0x14] sm:$0x1] 0.0
        %v5508 = vld [vmem:[#allocation4] sm:$0x1e]
        %v5509 = vld [vmem:[#allocation4 + $0x8] sm:$0x1e]
        %v5510 = vld [vmem:[#allocation4 + $0x10] sm:$0x1e]
        %v5511 = vpack.c.bf16 %v5508, %v5508
        %v5512 = vpack.c.bf16 %v5509, %v5509
        %v5513 = vpack.c.bf16 %v5510, %v5510
        %v5514 = vlaneseq
        %v5515 = vshrl.u32 %v5514, 7
        %v5516 = vsub.s32 0, %v5515
        %v5517 = vrot.slane %v5497, %v5516
        %v5519 = vshrl.u32 %v5511, 16
        %v5521 = vshll.u32 %v5511, 16
        %v5523 = vrot.slane %v5521, 1
        %v5524 = vor.u32 %v5519, %v5523
        %v5526 = vshrl.u32 %v5512, 16
        %v5528 = vshll.u32 %v5512, 16
        %v5530 = vrot.slane %v5528, 1
        %v5531 = vor.u32 %v5526, %v5530
        %v5533 = vshrl.u32 %v5513, 16
        %v5535 = vshll.u32 %v5513, 16
        %v5537 = vrot.slane %v5535, 1
        %v5538 = vor.u32 %v5533, %v5537
        %v5590 = vunpack.c.l.b16 %v5449
        %v5591 = vunpack.c.l.b16 %v5450
        %v5592 = vunpack.c.l.b16 %v5451
        %v5593 = vunpack.c.l.b16 %v5452
        %v5594 = vunpack.c.l.b16 %v5453
        %v5595 = vunpack.c.l.b16 %v5454
        %v5596 = vunpack.c.l.b16 %v5455
        %v5597 = vunpack.c.l.b16 %v5456
        %v5598 = vunpack.c.l.b16 %v5457
        %v5599 = vunpack.c.l.b16 %v5458
        %v5600 = vunpack.c.l.b16 %v5459
        %v5601 = vunpack.c.l.b16 %v5460
        %v5602 = vunpack.c.l.b16 %v5461
        %v5603 = vunpack.c.l.b16 %v5462
        %v5604 = vunpack.c.l.b16 %v5463
        %v5605 = vunpack.c.l.b16 %v5464
        %v5606 = vunpack.c.l.b16 %v5465
        %v5607 = vunpack.c.l.b16 %v5466
        %v5608 = vunpack.c.l.b16 %v5467
        %v5609 = vunpack.c.l.b16 %v5468
        %v5610 = vunpack.c.l.b16 %v5469
        %v5611 = vunpack.c.l.b16 %v5470
        %v5612 = vunpack.c.l.b16 %v5471
        %v5613 = vunpack.c.l.b16 %v5472
        %v5614 = vunpack.c.l.b16 %v5473
        %v5615 = vunpack.c.l.b16 %v5474
        %v5616 = vunpack.c.l.b16 %v5475
        %v5617 = vunpack.c.l.b16 %v5476
        %v5618 = vunpack.c.l.b16 %v5477
        %v5619 = vunpack.c.l.b16 %v5478
        %v5620 = vunpack.c.l.b16 %v5479
        %v5621 = vunpack.c.l.b16 %v5480
        %v5622 = vunpack.c.l.b16 %v5481
        %v5623 = vunpack.c.l.b16 %v5482
        %v5624 = vunpack.c.l.b16 %v5483
        %v5625 = vunpack.c.l.b16 %v5484
        %v5626 = vunpack.c.l.b16 %v5485
        %v5627 = vunpack.c.l.b16 %v5486
        %v5628 = vunpack.c.l.b16 %v5487
        %v5629 = vunpack.c.l.b16 %v5488
        %v5630 = vunpack.c.l.b16 %v5489
        %v5631 = vunpack.c.l.b16 %v5490
        %v5632 = vunpack.c.l.b16 %v5491
        %v5633 = vunpack.c.l.b16 %v5492
        %v5634 = vunpack.c.l.b16 %v5493
        %v5635 = vunpack.c.l.b16 %v5494
        %v5636 = vunpack.c.l.b16 %v5495
        %v5637 = vunpack.c.l.b16 %v5496
        %v5638 = vpack.c.b16 %v5591, %v5590
        %v5639 = vpack.c.b16 %v5593, %v5592
        %v5640 = vpack.c.b16 %v5595, %v5594
        %v5641 = vpack.c.b16 %v5597, %v5596
        %v5642 = vpack.c.b16 %v5599, %v5598
        %v5643 = vpack.c.b16 %v5601, %v5600
        %v5644 = vpack.c.b16 %v5603, %v5602
        %v5645 = vpack.c.b16 %v5605, %v5604
        %v5646 = vpack.c.b16 %v5607, %v5606
        %v5647 = vpack.c.b16 %v5609, %v5608
        %v5648 = vpack.c.b16 %v5611, %v5610
        %v5649 = vpack.c.b16 %v5613, %v5612
        %v5650 = vpack.c.b16 %v5615, %v5614
        %v5651 = vpack.c.b16 %v5617, %v5616
        %v5652 = vpack.c.b16 %v5619, %v5618
        %v5653 = vpack.c.b16 %v5621, %v5620
        %v5654 = vpack.c.b16 %v5623, %v5622
        %v5655 = vpack.c.b16 %v5625, %v5624
        %v5656 = vpack.c.b16 %v5627, %v5626
        %v5657 = vpack.c.b16 %v5629, %v5628
        %v5658 = vpack.c.b16 %v5631, %v5630
        %v5659 = vpack.c.b16 %v5633, %v5632
        %v5660 = vpack.c.b16 %v5635, %v5634
        %v5661 = vpack.c.b16 %v5637, %v5636
        %5686 = vmatprep.subr.bf16.mxu0 0
        %5687 = vmatpush1.bf16.msra.mxu0 %v5638
        %5688 = vmatprep.subr.bf16.mxu0 0
        %5689 = vmatpush1.bf16.msra.mxu0 %v5639
        %5690 = vmatprep.subr.bf16.mxu0 0
        %5691 = vmatpush1.bf16.msra.mxu0 %v5640
        %5692 = vmatprep.subr.bf16.mxu0 0
        %5693 = vmatpush1.bf16.msra.mxu0 %v5641
        %5694 = vmatprep.subr.bf16.mxu0 0
        %5695 = vmatpush1.bf16.msra.mxu0 %v5642
        %5696 = vmatprep.subr.bf16.mxu0 0
        %5697 = vmatpush1.bf16.msra.mxu0 %v5643
        %5698 = vmatprep.subr.bf16.mxu0 0
        %5699 = vmatpush1.bf16.msra.mxu0 %v5644
        %5700 = vmatprep.subr.bf16.mxu0 0
        %5701 = vmatpush1.bf16.msra.mxu0 %v5645
        %5702 = vmatprep.subr.bf16.mxu0 0
        %5703 = vmatpush1.bf16.msra.mxu0 %v5646
        %5704 = vmatprep.subr.bf16.mxu0 0
        %5705 = vmatpush1.bf16.msra.mxu0 %v5647
        %5706 = vmatprep.subr.bf16.mxu0 0
        %5707 = vmatpush1.bf16.msra.mxu0 %v5648
        %5708 = vmatprep.subr.bf16.mxu0 0
        %5709 = vmatpush1.bf16.msra.mxu0 %v5649
        %5710 = vmatprep.subr.bf16.mxu0 0
        %5711 = vmatpush1.bf16.msra.mxu0 %v5650
        %5712 = vmatprep.subr.bf16.mxu0 0
        %5713 = vmatpush1.bf16.msra.mxu0 %v5651
        %5714 = vmatprep.subr.bf16.mxu0 0
        %5715 = vmatpush1.bf16.msra.mxu0 %v5652
        %5716 = vmatprep.subr.bf16.mxu0 0
        %5717 = vmatpush1.bf16.msra.mxu0 %v5653
        %5718 = vmatprep.mubr.bf16.mxu0 %v5531
        %5719 = vmatmul.mubr.bf16.gmra.mrb[0].mxu0 %v5524
        %v5720 = vpop.f32.mrb[0].mxu0
        %v5721 = vadd.f32 %v5517, %v5720
        %v5722 = vpop.f32.mrb[0].mxu0
        %v5723 = vpop.f32.mrb[0].mxu0
        %v5724 = vpop.f32.mrb[0].mxu0
        %5725 = vdwg.mxu0
        %5726 = vmatprep.subr.bf16.mxu0 0
        %5727 = vmatpush1.bf16.msra.mxu0 %v5654
        %5728 = vmatprep.subr.bf16.mxu0 0
        %5729 = vmatpush1.bf16.msra.mxu0 %v5655
        %5730 = vmatprep.subr.bf16.mxu0 0
        %5731 = vmatpush1.bf16.msra.mxu0 %v5656
        %5732 = vmatprep.subr.bf16.mxu0 0
        %5733 = vmatpush1.bf16.msra.mxu0 %v5657
        %5734 = vmatprep.subr.bf16.mxu0 0
        %5735 = vmatpush1.bf16.msra.mxu0 %v5658
        %5736 = vmatprep.subr.bf16.mxu0 0
        %5737 = vmatpush1.bf16.msra.mxu0 %v5659
        %5738 = vmatprep.subr.bf16.mxu0 0
        %5739 = vmatpush1.bf16.msra.mxu0 %v5660
        %5740 = vmatprep.subr.bf16.mxu0 0
        %5741 = vmatpush1.bf16.msra.mxu0 %v5661
        %5742 = vmatprep.subr.bf16.mxu0 0
        %5743 = vmatpush1.bf16.msra.mxu0 0
        %5744 = vmatprep.subr.bf16.mxu0 0
        %5745 = vmatpush1.bf16.msra.mxu0 0
        %5746 = vmatprep.subr.bf16.mxu0 0
        %5747 = vmatpush1.bf16.msra.mxu0 0
        %5748 = vmatprep.subr.bf16.mxu0 0
        %5749 = vmatpush1.bf16.msra.mxu0 0
        %5750 = vmatprep.subr.bf16.mxu0 0
        %5751 = vmatpush1.bf16.msra.mxu0 0
        %5752 = vmatprep.subr.bf16.mxu0 0
        %5753 = vmatpush1.bf16.msra.mxu0 0
        %5754 = vmatprep.subr.bf16.mxu0 0
        %5755 = vmatpush1.bf16.msra.mxu0 0
        %5756 = vmatprep.subr.bf16.mxu0 0
        %5757 = vmatpush1.bf16.msra.mxu0 0
        %5758 = vmatprep.mubr.bf16.mxu0 0
        %5759 = vmatmul.mubr.bf16.gmra.mrb[0].mxu0 %v5538
        %v5760 = vpop.f32.mrb[0].mxu0
        %v5761 = vadd.f32 %v5721, %v5760
        %v5762 = vpop.f32.mrb[0].mxu0
        %v5763 = vpop.f32.mrb[0].mxu0
        %v5764 = vpop.f32.mrb[0].mxu0
        %5765 = vdwg.mxu0
        %v5766 = vadd.f32 %v5127, %v5761
        %v5767 = vld [vmem:[#allocation22] sm:$0xf]
        %v5768 = vld [vmem:[#allocation22 + $0x4] sm:$0xf]
        %v5769 = vld [vmem:[#allocation22 + $0x8] sm:$0xf]
        %v5770 = vld [vmem:[#allocation22 + $0xc] sm:$0xf]
        %v5771 = vld [vmem:[#allocation22 + $0x10] sm:$0xf]
        %v5772 = vld [vmem:[#allocation22 + $0x14] sm:$0xf]
        %v5773 = vld [vmem:[#allocation22 + $0x18] sm:$0xf]
        %v5774 = vld [vmem:[#allocation22 + $0x1c] sm:$0xf]
        %v5775 = vld [vmem:[#allocation22 + $0x20] sm:$0xf]
        %v5776 = vld [vmem:[#allocation22 + $0x24] sm:$0xf]
        %v5777 = vld [vmem:[#allocation22 + $0x28] sm:$0xf]
        %v5778 = vld [vmem:[#allocation22 + $0x2c] sm:$0xf]
        %v5779 = vld [vmem:[#allocation22 + $0x30] sm:$0xf]
        %v5780 = vld [vmem:[#allocation22 + $0x34] sm:$0xf]
        %v5781 = vld [vmem:[#allocation22 + $0x38] sm:$0xf]
        %v5782 = vld [vmem:[#allocation22 + $0x3c] sm:$0xf]
        %v5783 = vld [vmem:[#allocation22 + $0x40] sm:$0xf]
        %v5784 = vld [vmem:[#allocation22 + $0x44] sm:$0xf]
        %v5785 = vld [vmem:[#allocation22 + $0x48] sm:$0xf]
        %v5786 = vld [vmem:[#allocation22 + $0x4c] sm:$0xf]
        %v5787 = vld [vmem:[#allocation22 + $0x50] sm:$0xf]
        %v5788 = vld [vmem:[#allocation22 + $0x54] sm:$0xf]
        %v5789 = vld [vmem:[#allocation22 + $0x58] sm:$0xf]
        %v5790 = vld [vmem:[#allocation22 + $0x5c] sm:$0xf]
        %v5791 = vld [vmem:[#allocation22 + $0x60] sm:$0xf]
        %v5792 = vld [vmem:[#allocation22 + $0x64] sm:$0xf]
        %v5793 = vld [vmem:[#allocation22 + $0x68] sm:$0xf]
        %v5794 = vld [vmem:[#allocation22 + $0x6c] sm:$0xf]
        %v5795 = vld [vmem:[#allocation22 + $0x70] sm:$0xf]
        %v5796 = vld [vmem:[#allocation22 + $0x74] sm:$0xf]
        %v5797 = vld [vmem:[#allocation22 + $0x78] sm:$0xf]
        %v5798 = vld [vmem:[#allocation22 + $0x7c] sm:$0xf]
        %v5799 = vld [vmem:[#allocation22 + $0x80] sm:$0xf]
        %v5800 = vld [vmem:[#allocation22 + $0x84] sm:$0xf]
        %v5801 = vld [vmem:[#allocation22 + $0x88] sm:$0xf]
        %v5802 = vld [vmem:[#allocation22 + $0x8c] sm:$0xf]
        %v5803 = vld [vmem:[#allocation22 + $0x90] sm:$0xf]
        %v5804 = vld [vmem:[#allocation22 + $0x94] sm:$0xf]
        %v5805 = vld [vmem:[#allocation22 + $0x98] sm:$0xf]
        %v5806 = vld [vmem:[#allocation22 + $0x9c] sm:$0xf]
        %v5807 = vld [vmem:[#allocation22 + $0xa0] sm:$0xf]
        %v5808 = vld [vmem:[#allocation22 + $0xa4] sm:$0xf]
        %v5809 = vld [vmem:[#allocation22 + $0xa8] sm:$0xf]
        %v5810 = vld [vmem:[#allocation22 + $0xac] sm:$0xf]
        %v5811 = vld [vmem:[#allocation22 + $0xb0] sm:$0xf]
        %v5812 = vld [vmem:[#allocation22 + $0xb4] sm:$0xf]
        %v5813 = vld [vmem:[#allocation22 + $0xb8] sm:$0xf]
        %v5814 = vld [vmem:[#allocation22 + $0xbc] sm:$0xf]
        %v5815 = vld [vmem:[#allocation24] sm:$0x1]
        %v5817 = vrot.slane %v5766, 6
        %5819 = vst [vmem:[#allocation4] sm:$0x3c] %v5817
        %v5820 = vrot.slane %v5766, 7
        %5822 = vst [vmem:[#allocation4 + $0x8] sm:$0x1e] %v5820
        %5823 = vst [vmem:[#allocation4 + $0x10] sm:$0xf] %v5766
        %5824 = vst [vmem:[#allocation4 + $0x1] sm:$0x1] 0.0
        %5825 = vst [vmem:[#allocation4 + $0x14] sm:$0x1] 0.0
        %v5826 = vld [vmem:[#allocation4] sm:$0x1e]
        %v5827 = vld [vmem:[#allocation4 + $0x8] sm:$0x1e]
        %v5828 = vld [vmem:[#allocation4 + $0x10] sm:$0x1e]
        %v5829 = vpack.c.bf16 %v5826, %v5826
        %v5830 = vpack.c.bf16 %v5827, %v5827
        %v5831 = vpack.c.bf16 %v5828, %v5828
        %v5833 = vlaneseq
        %v5834 = vshrl.u32 %v5833, 7
        %v5835 = vsub.s32 0, %v5834
        %v5836 = vrot.slane %v5815, %v5835
        %v5839 = vshrl.u32 %v5829, 16
        %v5841 = vshll.u32 %v5829, 16
        %v5843 = vrot.slane %v5841, 1
        %v5844 = vor.u32 %v5839, %v5843
        %v5846 = vshrl.u32 %v5830, 16
        %v5848 = vshll.u32 %v5830, 16
        %v5850 = vrot.slane %v5848, 1
        %v5851 = vor.u32 %v5846, %v5850
        %v5853 = vshrl.u32 %v5831, 16
        %v5855 = vshll.u32 %v5831, 16
        %v5857 = vrot.slane %v5855, 1
        %v5858 = vor.u32 %v5853, %v5857
        %v5910 = vunpack.c.l.b16 %v5767
        %v5911 = vunpack.c.l.b16 %v5768
        %v5912 = vunpack.c.l.b16 %v5769
        %v5913 = vunpack.c.l.b16 %v5770
        %v5914 = vunpack.c.l.b16 %v5771
        %v5915 = vunpack.c.l.b16 %v5772
        %v5916 = vunpack.c.l.b16 %v5773
        %v5917 = vunpack.c.l.b16 %v5774
        %v5918 = vunpack.c.l.b16 %v5775
        %v5919 = vunpack.c.l.b16 %v5776
        %v5920 = vunpack.c.l.b16 %v5777
        %v5921 = vunpack.c.l.b16 %v5778
        %v5922 = vunpack.c.l.b16 %v5779
        %v5923 = vunpack.c.l.b16 %v5780
        %v5924 = vunpack.c.l.b16 %v5781
        %v5925 = vunpack.c.l.b16 %v5782
        %v5926 = vunpack.c.l.b16 %v5783
        %v5927 = vunpack.c.l.b16 %v5784
        %v5928 = vunpack.c.l.b16 %v5785
        %v5929 = vunpack.c.l.b16 %v5786
        %v5930 = vunpack.c.l.b16 %v5787
        %v5931 = vunpack.c.l.b16 %v5788
        %v5932 = vunpack.c.l.b16 %v5789
        %v5933 = vunpack.c.l.b16 %v5790
        %v5934 = vunpack.c.l.b16 %v5791
        %v5935 = vunpack.c.l.b16 %v5792
        %v5936 = vunpack.c.l.b16 %v5793
        %v5937 = vunpack.c.l.b16 %v5794
        %v5938 = vunpack.c.l.b16 %v5795
        %v5939 = vunpack.c.l.b16 %v5796
        %v5940 = vunpack.c.l.b16 %v5797
        %v5941 = vunpack.c.l.b16 %v5798
        %v5942 = vunpack.c.l.b16 %v5799
        %v5943 = vunpack.c.l.b16 %v5800
        %v5944 = vunpack.c.l.b16 %v5801
        %v5945 = vunpack.c.l.b16 %v5802
        %v5946 = vunpack.c.l.b16 %v5803
        %v5947 = vunpack.c.l.b16 %v5804
        %v5948 = vunpack.c.l.b16 %v5805
        %v5949 = vunpack.c.l.b16 %v5806
        %v5950 = vunpack.c.l.b16 %v5807
        %v5951 = vunpack.c.l.b16 %v5808
        %v5952 = vunpack.c.l.b16 %v5809
        %v5953 = vunpack.c.l.b16 %v5810
        %v5954 = vunpack.c.l.b16 %v5811
        %v5955 = vunpack.c.l.b16 %v5812
        %v5956 = vunpack.c.l.b16 %v5813
        %v5957 = vunpack.c.l.b16 %v5814
        %v5958 = vpack.c.b16 %v5911, %v5910
        %v5959 = vpack.c.b16 %v5913, %v5912
        %v5960 = vpack.c.b16 %v5915, %v5914
        %v5961 = vpack.c.b16 %v5917, %v5916
        %v5962 = vpack.c.b16 %v5919, %v5918
        %v5963 = vpack.c.b16 %v5921, %v5920
        %v5964 = vpack.c.b16 %v5923, %v5922
        %v5965 = vpack.c.b16 %v5925, %v5924
        %v5966 = vpack.c.b16 %v5927, %v5926
        %v5967 = vpack.c.b16 %v5929, %v5928
        %v5968 = vpack.c.b16 %v5931, %v5930
        %v5969 = vpack.c.b16 %v5933, %v5932
        %v5970 = vpack.c.b16 %v5935, %v5934
        %v5971 = vpack.c.b16 %v5937, %v5936
        %v5972 = vpack.c.b16 %v5939, %v5938
        %v5973 = vpack.c.b16 %v5941, %v5940
        %v5974 = vpack.c.b16 %v5943, %v5942
        %v5975 = vpack.c.b16 %v5945, %v5944
        %v5976 = vpack.c.b16 %v5947, %v5946
        %v5977 = vpack.c.b16 %v5949, %v5948
        %v5978 = vpack.c.b16 %v5951, %v5950
        %v5979 = vpack.c.b16 %v5953, %v5952
        %v5980 = vpack.c.b16 %v5955, %v5954
        %v5981 = vpack.c.b16 %v5957, %v5956
        %6006 = vmatprep.subr.bf16.mxu0 0
        %6007 = vmatpush1.bf16.msra.mxu0 %v5958
        %6008 = vmatprep.subr.bf16.mxu0 0
        %6009 = vmatpush1.bf16.msra.mxu0 %v5959
        %6010 = vmatprep.subr.bf16.mxu0 0
        %6011 = vmatpush1.bf16.msra.mxu0 %v5960
        %6012 = vmatprep.subr.bf16.mxu0 0
        %6013 = vmatpush1.bf16.msra.mxu0 %v5961
        %6014 = vmatprep.subr.bf16.mxu0 0
        %6015 = vmatpush1.bf16.msra.mxu0 %v5962
        %6016 = vmatprep.subr.bf16.mxu0 0
        %6017 = vmatpush1.bf16.msra.mxu0 %v5963
        %6018 = vmatprep.subr.bf16.mxu0 0
        %6019 = vmatpush1.bf16.msra.mxu0 %v5964
        %6020 = vmatprep.subr.bf16.mxu0 0
        %6021 = vmatpush1.bf16.msra.mxu0 %v5965
        %6022 = vmatprep.subr.bf16.mxu0 0
        %6023 = vmatpush1.bf16.msra.mxu0 %v5966
        %6024 = vmatprep.subr.bf16.mxu0 0
        %6025 = vmatpush1.bf16.msra.mxu0 %v5967
        %6026 = vmatprep.subr.bf16.mxu0 0
        %6027 = vmatpush1.bf16.msra.mxu0 %v5968
        %6028 = vmatprep.subr.bf16.mxu0 0
        %6029 = vmatpush1.bf16.msra.mxu0 %v5969
        %6030 = vmatprep.subr.bf16.mxu0 0
        %6031 = vmatpush1.bf16.msra.mxu0 %v5970
        %6032 = vmatprep.subr.bf16.mxu0 0
        %6033 = vmatpush1.bf16.msra.mxu0 %v5971
        %6034 = vmatprep.subr.bf16.mxu0 0
        %6035 = vmatpush1.bf16.msra.mxu0 %v5972
        %6036 = vmatprep.subr.bf16.mxu0 0
        %6037 = vmatpush1.bf16.msra.mxu0 %v5973
        %6038 = vmatprep.mubr.bf16.mxu0 %v5851
        %6039 = vmatmul.mubr.bf16.gmra.mrb[0].mxu0 %v5844
        %v6040 = vpop.f32.mrb[0].mxu0
        %v6041 = vadd.f32 %v5836, %v6040
        %v6042 = vpop.f32.mrb[0].mxu0
        %v6043 = vpop.f32.mrb[0].mxu0
        %v6044 = vpop.f32.mrb[0].mxu0
        %6045 = vdwg.mxu0
        %6046 = vmatprep.subr.bf16.mxu0 0
        %6047 = vmatpush1.bf16.msra.mxu0 %v5974
        %6048 = vmatprep.subr.bf16.mxu0 0
        %6049 = vmatpush1.bf16.msra.mxu0 %v5975
        %6050 = vmatprep.subr.bf16.mxu0 0
        %6051 = vmatpush1.bf16.msra.mxu0 %v5976
        %6052 = vmatprep.subr.bf16.mxu0 0
        %6053 = vmatpush1.bf16.msra.mxu0 %v5977
        %6054 = vmatprep.subr.bf16.mxu0 0
        %6055 = vmatpush1.bf16.msra.mxu0 %v5978
        %6056 = vmatprep.subr.bf16.mxu0 0
        %6057 = vmatpush1.bf16.msra.mxu0 %v5979
        %6058 = vmatprep.subr.bf16.mxu0 0
        %6059 = vmatpush1.bf16.msra.mxu0 %v5980
        %6060 = vmatprep.subr.bf16.mxu0 0
        %6061 = vmatpush1.bf16.msra.mxu0 %v5981
        %6062 = vmatprep.subr.bf16.mxu0 0
        %6063 = vmatpush1.bf16.msra.mxu0 0
        %6064 = vmatprep.subr.bf16.mxu0 0
        %6065 = vmatpush1.bf16.msra.mxu0 0
        %6066 = vmatprep.subr.bf16.mxu0 0
        %6067 = vmatpush1.bf16.msra.mxu0 0
        %6068 = vmatprep.subr.bf16.mxu0 0
        %6069 = vmatpush1.bf16.msra.mxu0 0
        %6070 = vmatprep.subr.bf16.mxu0 0
        %6071 = vmatpush1.bf16.msra.mxu0 0
        %6072 = vmatprep.subr.bf16.mxu0 0
        %6073 = vmatpush1.bf16.msra.mxu0 0
        %6074 = vmatprep.subr.bf16.mxu0 0
        %6075 = vmatpush1.bf16.msra.mxu0 0
        %6076 = vmatprep.subr.bf16.mxu0 0
        %6077 = vmatpush1.bf16.msra.mxu0 0
        %6078 = vmatprep.mubr.bf16.mxu0 0
        %6079 = vmatmul.mubr.bf16.gmra.mrb[0].mxu0 %v5858
        %v6080 = vpop.f32.mrb[0].mxu0
        %v6081 = vadd.f32 %v6041, %v6080
        %v6082 = vpop.f32.mrb[0].mxu0
        %v6083 = vpop.f32.mrb[0].mxu0
        %v6084 = vpop.f32.mrb[0].mxu0
        %6085 = vdwg.mxu0
        %v6086 = vpack.c.bf16 %v6081, %v6081
        %v6087 = vld [vmem:[%s37] sm:$0xf]
        %v6088 = vld [vmem:[%s37 + $0x4] sm:$0xf]
        %v6089 = vld [vmem:[%s37 + $0x8] sm:$0xf]
        %v6090 = vld [vmem:[%s37 + $0xc] sm:$0xf]
        %v6091 = vld [vmem:[%s37 + $0x10] sm:$0xf]
        %v6092 = vld [vmem:[%s37 + $0x14] sm:$0xf]
        %v6093 = vld [vmem:[%s37 + $0x18] sm:$0xf]
        %v6094 = vld [vmem:[%s37 + $0x1c] sm:$0xf]
        %v6095 = vld [vmem:[%s37 + $0x20] sm:$0xf]
        %v6096 = vld [vmem:[%s37 + $0x24] sm:$0xf]
        %v6097 = vld [vmem:[%s37 + $0x28] sm:$0xf]
        %v6098 = vld [vmem:[%s37 + $0x2c] sm:$0xf]
        %v6099 = vld [vmem:[%s37 + $0x30] sm:$0xf]
        %v6100 = vld [vmem:[%s37 + $0x34] sm:$0xf]
        %v6101 = vld [vmem:[%s37 + $0x38] sm:$0xf]
        %v6102 = vld [vmem:[%s37 + $0x3c] sm:$0xf]
        %v6119 = vunpack.c.l.b16 %v6087
        %v6120 = vunpack.c.l.b16 %v6088
        %v6121 = vunpack.c.l.b16 %v6089
        %v6122 = vunpack.c.l.b16 %v6090
        %v6123 = vunpack.c.l.b16 %v6091
        %v6124 = vunpack.c.l.b16 %v6092
        %v6125 = vunpack.c.l.b16 %v6093
        %v6126 = vunpack.c.l.b16 %v6094
        %v6127 = vunpack.c.l.b16 %v6095
        %v6128 = vunpack.c.l.b16 %v6096
        %v6129 = vunpack.c.l.b16 %v6097
        %v6130 = vunpack.c.l.b16 %v6098
        %v6131 = vunpack.c.l.b16 %v6099
        %v6132 = vunpack.c.l.b16 %v6100
        %v6133 = vunpack.c.l.b16 %v6101
        %v6134 = vunpack.c.l.b16 %v6102
        %v6135 = vpack.c.b16 %v6120, %v6119
        %v6136 = vpack.c.b16 %v6122, %v6121
        %v6137 = vpack.c.b16 %v6124, %v6123
        %v6138 = vpack.c.b16 %v6126, %v6125
        %v6139 = vpack.c.b16 %v6128, %v6127
        %v6140 = vpack.c.b16 %v6130, %v6129
        %v6141 = vpack.c.b16 %v6132, %v6131
        %v6142 = vpack.c.b16 %v6134, %v6133
        %6151 = vmatprep.subr.bf16.mxu0 0
        %6152 = vmatpush1.bf16.msra.mxu0 %v6135
        %6153 = vmatprep.subr.bf16.mxu0 0
        %6154 = vmatpush1.bf16.msra.mxu0 %v6136
        %6155 = vmatprep.subr.bf16.mxu0 0
        %6156 = vmatpush1.bf16.msra.mxu0 %v6137
        %6157 = vmatprep.subr.bf16.mxu0 0
        %6158 = vmatpush1.bf16.msra.mxu0 %v6138
        %6159 = vmatprep.subr.bf16.mxu0 0
        %6160 = vmatpush1.bf16.msra.mxu0 %v6139
        %6161 = vmatprep.subr.bf16.mxu0 0
        %6162 = vmatpush1.bf16.msra.mxu0 %v6140
        %6163 = vmatprep.subr.bf16.mxu0 0
        %6164 = vmatpush1.bf16.msra.mxu0 %v6141
        %6165 = vmatprep.subr.bf16.mxu0 0
        %6166 = vmatpush1.bf16.msra.mxu0 %v6142
        %6167 = vmatprep.subr.bf16.mxu0 0
        %6168 = vmatpush1.bf16.msra.mxu0 0
        %6169 = vmatprep.subr.bf16.mxu0 0
        %6170 = vmatpush1.bf16.msra.mxu0 0
        %6171 = vmatprep.subr.bf16.mxu0 0
        %6172 = vmatpush1.bf16.msra.mxu0 0
        %6173 = vmatprep.subr.bf16.mxu0 0
        %6174 = vmatpush1.bf16.msra.mxu0 0
        %6175 = vmatprep.subr.bf16.mxu0 0
        %6176 = vmatpush1.bf16.msra.mxu0 0
        %6177 = vmatprep.subr.bf16.mxu0 0
        %6178 = vmatpush1.bf16.msra.mxu0 0
        %6179 = vmatprep.subr.bf16.mxu0 0
        %6180 = vmatpush1.bf16.msra.mxu0 0
        %6181 = vmatprep.subr.bf16.mxu0 0
        %6182 = vmatpush1.bf16.msra.mxu0 0
        %6183 = vmatprep.mubr.bf16.mxu0 0
        %6184 = vmatmul.mubr.bf16.gmra.mrb[0].mxu0 %v6086
        %v6185 = vpop.f32.mrb[0].mxu0
        %v6186 = vadd.f32 0.0, %v6185
        %v6187 = vpop.f32.mrb[0].mxu0
        %v6188 = vpop.f32.mrb[0].mxu0
        %v6189 = vpop.f32.mrb[0].mxu0
        %6190 = vdwg.mxu0
        %s6191 = scalar_lea.vmem %s37, 64
        %v6192 = vld [vmem:[%s6191] sm:$0xf]
        %v6193 = vld [vmem:[%s6191 + $0x4] sm:$0xf]
        %v6194 = vld [vmem:[%s6191 + $0x8] sm:$0xf]
        %v6195 = vld [vmem:[%s6191 + $0xc] sm:$0xf]
        %v6196 = vld [vmem:[%s6191 + $0x10] sm:$0xf]
        %v6197 = vld [vmem:[%s6191 + $0x14] sm:$0xf]
        %v6198 = vld [vmem:[%s6191 + $0x18] sm:$0xf]
        %v6199 = vld [vmem:[%s6191 + $0x1c] sm:$0xf]
        %v6200 = vld [vmem:[%s6191 + $0x20] sm:$0xf]
        %v6201 = vld [vmem:[%s6191 + $0x24] sm:$0xf]
        %v6202 = vld [vmem:[%s6191 + $0x28] sm:$0xf]
        %v6203 = vld [vmem:[%s6191 + $0x2c] sm:$0xf]
        %v6204 = vld [vmem:[%s6191 + $0x30] sm:$0xf]
        %v6205 = vld [vmem:[%s6191 + $0x34] sm:$0xf]
        %v6206 = vld [vmem:[%s6191 + $0x38] sm:$0xf]
        %v6207 = vld [vmem:[%s6191 + $0x3c] sm:$0xf]
        %v6224 = vunpack.c.l.b16 %v6192
        %v6225 = vunpack.c.l.b16 %v6193
        %v6226 = vunpack.c.l.b16 %v6194
        %v6227 = vunpack.c.l.b16 %v6195
        %v6228 = vunpack.c.l.b16 %v6196
        %v6229 = vunpack.c.l.b16 %v6197
        %v6230 = vunpack.c.l.b16 %v6198
        %v6231 = vunpack.c.l.b16 %v6199
        %v6232 = vunpack.c.l.b16 %v6200
        %v6233 = vunpack.c.l.b16 %v6201
        %v6234 = vunpack.c.l.b16 %v6202
        %v6235 = vunpack.c.l.b16 %v6203
        %v6236 = vunpack.c.l.b16 %v6204
        %v6237 = vunpack.c.l.b16 %v6205
        %v6238 = vunpack.c.l.b16 %v6206
        %v6239 = vunpack.c.l.b16 %v6207
        %v6240 = vpack.c.b16 %v6225, %v6224
        %v6241 = vpack.c.b16 %v6227, %v6226
        %v6242 = vpack.c.b16 %v6229, %v6228
        %v6243 = vpack.c.b16 %v6231, %v6230
        %v6244 = vpack.c.b16 %v6233, %v6232
        %v6245 = vpack.c.b16 %v6235, %v6234
        %v6246 = vpack.c.b16 %v6237, %v6236
        %v6247 = vpack.c.b16 %v6239, %v6238
        %6256 = vmatprep.subr.bf16.mxu0 0
        %6257 = vmatpush1.bf16.msra.mxu0 %v6240
        %6258 = vmatprep.subr.bf16.mxu0 0
        %6259 = vmatpush1.bf16.msra.mxu0 %v6241
        %6260 = vmatprep.subr.bf16.mxu0 0
        %6261 = vmatpush1.bf16.msra.mxu0 %v6242
        %6262 = vmatprep.subr.bf16.mxu0 0
        %6263 = vmatpush1.bf16.msra.mxu0 %v6243
        %6264 = vmatprep.subr.bf16.mxu0 0
        %6265 = vmatpush1.bf16.msra.mxu0 %v6244
        %6266 = vmatprep.subr.bf16.mxu0 0
        %6267 = vmatpush1.bf16.msra.mxu0 %v6245
        %6268 = vmatprep.subr.bf16.mxu0 0
        %6269 = vmatpush1.bf16.msra.mxu0 %v6246
        %6270 = vmatprep.subr.bf16.mxu0 0
        %6271 = vmatpush1.bf16.msra.mxu0 %v6247
        %6272 = vmatprep.subr.bf16.mxu0 0
        %6273 = vmatpush1.bf16.msra.mxu0 0
        %6274 = vmatprep.subr.bf16.mxu0 0
        %6275 = vmatpush1.bf16.msra.mxu0 0
        %6276 = vmatprep.subr.bf16.mxu0 0
        %6277 = vmatpush1.bf16.msra.mxu0 0
        %6278 = vmatprep.subr.bf16.mxu0 0
        %6279 = vmatpush1.bf16.msra.mxu0 0
        %6280 = vmatprep.subr.bf16.mxu0 0
        %6281 = vmatpush1.bf16.msra.mxu0 0
        %6282 = vmatprep.subr.bf16.mxu0 0
        %6283 = vmatpush1.bf16.msra.mxu0 0
        %6284 = vmatprep.subr.bf16.mxu0 0
        %6285 = vmatpush1.bf16.msra.mxu0 0
        %6286 = vmatprep.subr.bf16.mxu0 0
        %6287 = vmatpush1.bf16.msra.mxu0 0
        %6288 = vmatprep.mubr.bf16.mxu0 0
        %6289 = vmatmul.mubr.bf16.gmra.mrb[0].mxu0 %v6086
        %v6290 = vpop.f32.mrb[0].mxu0
        %v6291 = vadd.f32 0.0, %v6290
        %v6292 = vpop.f32.mrb[0].mxu0
        %v6293 = vpop.f32.mrb[0].mxu0
        %v6294 = vpop.f32.mrb[0].mxu0
        %6295 = vdwg.mxu0
        %v6296 = vmax.f32 %v6186, %v6291
        %s6297 = scalar_lea.vmem %s37, 128
        %v6298 = vld [vmem:[%s6297] sm:$0xf]
        %v6299 = vld [vmem:[%s6297 + $0x4] sm:$0xf]
        %v6300 = vld [vmem:[%s6297 + $0x8] sm:$0xf]
        %v6301 = vld [vmem:[%s6297 + $0xc] sm:$0xf]
        %v6302 = vld [vmem:[%s6297 + $0x10] sm:$0xf]
        %v6303 = vld [vmem:[%s6297 + $0x14] sm:$0xf]
        %v6304 = vld [vmem:[%s6297 + $0x18] sm:$0xf]
        %v6305 = vld [vmem:[%s6297 + $0x1c] sm:$0xf]
        %v6306 = vld [vmem:[%s6297 + $0x20] sm:$0xf]
        %v6307 = vld [vmem:[%s6297 + $0x24] sm:$0xf]
        %v6308 = vld [vmem:[%s6297 + $0x28] sm:$0xf]
        %v6309 = vld [vmem:[%s6297 + $0x2c] sm:$0xf]
        %v6310 = vld [vmem:[%s6297 + $0x30] sm:$0xf]
        %v6311 = vld [vmem:[%s6297 + $0x34] sm:$0xf]
        %v6312 = vld [vmem:[%s6297 + $0x38] sm:$0xf]
        %v6313 = vld [vmem:[%s6297 + $0x3c] sm:$0xf]
        %v6330 = vunpack.c.l.b16 %v6298
        %v6331 = vunpack.c.l.b16 %v6299
        %v6332 = vunpack.c.l.b16 %v6300
        %v6333 = vunpack.c.l.b16 %v6301
        %v6334 = vunpack.c.l.b16 %v6302
        %v6335 = vunpack.c.l.b16 %v6303
        %v6336 = vunpack.c.l.b16 %v6304
        %v6337 = vunpack.c.l.b16 %v6305
        %v6338 = vunpack.c.l.b16 %v6306
        %v6339 = vunpack.c.l.b16 %v6307
        %v6340 = vunpack.c.l.b16 %v6308
        %v6341 = vunpack.c.l.b16 %v6309
        %v6342 = vunpack.c.l.b16 %v6310
        %v6343 = vunpack.c.l.b16 %v6311
        %v6344 = vunpack.c.l.b16 %v6312
        %v6345 = vunpack.c.l.b16 %v6313
        %v6346 = vpack.c.b16 %v6331, %v6330
        %v6347 = vpack.c.b16 %v6333, %v6332
        %v6348 = vpack.c.b16 %v6335, %v6334
        %v6349 = vpack.c.b16 %v6337, %v6336
        %v6350 = vpack.c.b16 %v6339, %v6338
        %v6351 = vpack.c.b16 %v6341, %v6340
        %v6352 = vpack.c.b16 %v6343, %v6342
        %v6353 = vpack.c.b16 %v6345, %v6344
        %6362 = vmatprep.subr.bf16.mxu0 0
        %6363 = vmatpush1.bf16.msra.mxu0 %v6346
        %6364 = vmatprep.subr.bf16.mxu0 0
        %6365 = vmatpush1.bf16.msra.mxu0 %v6347
        %6366 = vmatprep.subr.bf16.mxu0 0
        %6367 = vmatpush1.bf16.msra.mxu0 %v6348
        %6368 = vmatprep.subr.bf16.mxu0 0
        %6369 = vmatpush1.bf16.msra.mxu0 %v6349
        %6370 = vmatprep.subr.bf16.mxu0 0
        %6371 = vmatpush1.bf16.msra.mxu0 %v6350
        %6372 = vmatprep.subr.bf16.mxu0 0
        %6373 = vmatpush1.bf16.msra.mxu0 %v6351
        %6374 = vmatprep.subr.bf16.mxu0 0
        %6375 = vmatpush1.bf16.msra.mxu0 %v6352
        %6376 = vmatprep.subr.bf16.mxu0 0
        %6377 = vmatpush1.bf16.msra.mxu0 %v6353
        %6378 = vmatprep.subr.bf16.mxu0 0
        %6379 = vmatpush1.bf16.msra.mxu0 0
        %6380 = vmatprep.subr.bf16.mxu0 0
        %6381 = vmatpush1.bf16.msra.mxu0 0
        %6382 = vmatprep.subr.bf16.mxu0 0
        %6383 = vmatpush1.bf16.msra.mxu0 0
        %6384 = vmatprep.subr.bf16.mxu0 0
        %6385 = vmatpush1.bf16.msra.mxu0 0
        %6386 = vmatprep.subr.bf16.mxu0 0
        %6387 = vmatpush1.bf16.msra.mxu0 0
        %6388 = vmatprep.subr.bf16.mxu0 0
        %6389 = vmatpush1.bf16.msra.mxu0 0
        %6390 = vmatprep.subr.bf16.mxu0 0
        %6391 = vmatpush1.bf16.msra.mxu0 0
        %6392 = vmatprep.subr.bf16.mxu0 0
        %6393 = vmatpush1.bf16.msra.mxu0 0
        %6394 = vmatprep.mubr.bf16.mxu0 0
        %6395 = vmatmul.mubr.bf16.gmra.mrb[0].mxu0 %v6086
        %v6396 = vpop.f32.mrb[0].mxu0
        %v6397 = vadd.f32 0.0, %v6396
        %v6398 = vpop.f32.mrb[0].mxu0
        %v6399 = vpop.f32.mrb[0].mxu0
        %v6400 = vpop.f32.mrb[0].mxu0
        %6401 = vdwg.mxu0
        %v6402 = vmax.f32 %v6296, %v6397
        %v6403 = vpack.c.bf16 %v6402, %v6402
        %v6404 = vld [vmem:[#allocation27] sm:$0x1]
        %vm6405 = vcmask 31744
        %v6407 = vsel %vm6405, %v6404, 0
        %v6410 = vsel %vm1211, %v6403, 0
        %6412 = vmatprep.subr.bf16.mxu0 0
        %6413 = vmatpush1.bf16.msra.mxu0 %v6410
        %6414 = vmatprep.subr.bf16.mxu0 0
        %6415 = vmatpush1.bf16.msra.mxu0 0
        %6416 = vmatprep.subr.bf16.mxu0 0
        %6417 = vmatpush1.bf16.msra.mxu0 0
        %6418 = vmatprep.subr.bf16.mxu0 0
        %6419 = vmatpush1.bf16.msra.mxu0 0
        %6420 = vmatprep.subr.bf16.mxu0 0
        %6421 = vmatpush1.bf16.msra.mxu0 0
        %6422 = vmatprep.subr.bf16.mxu0 0
        %6423 = vmatpush1.bf16.msra.mxu0 0
        %6424 = vmatprep.subr.bf16.mxu0 0
        %6425 = vmatpush1.bf16.msra.mxu0 0
        %6426 = vmatprep.subr.bf16.mxu0 0
        %6427 = vmatpush1.bf16.msra.mxu0 0
        %6428 = vmatprep.subr.bf16.mxu0 0
        %6429 = vmatpush1.bf16.msra.mxu0 0
        %6430 = vmatprep.subr.bf16.mxu0 0
        %6431 = vmatpush1.bf16.msra.mxu0 0
        %6432 = vmatprep.subr.bf16.mxu0 0
        %6433 = vmatpush1.bf16.msra.mxu0 0
        %6434 = vmatprep.subr.bf16.mxu0 0
        %6435 = vmatpush1.bf16.msra.mxu0 0
        %6436 = vmatprep.subr.bf16.mxu0 0
        %6437 = vmatpush1.bf16.msra.mxu0 0
        %6438 = vmatprep.subr.bf16.mxu0 0
        %6439 = vmatpush1.bf16.msra.mxu0 0
        %6440 = vmatprep.subr.bf16.mxu0 0
        %6441 = vmatpush1.bf16.msra.mxu0 0
        %6442 = vmatprep.subr.bf16.mxu0 0
        %6443 = vmatpush1.bf16.msra.mxu0 0
        %6444 = vmatprep.mubr.bf16.mxu0 0
        %6445 = vmatmul.mubr.bf16.gmra.mrb[0].mxu0 %v6407
        %v6446 = vpop.f32.mrb[0].mxu0
        %v6447 = vadd.f32 0.0, %v6446
        %v6448 = vpop.f32.mrb[0].mxu0
        %v6449 = vpop.f32.mrb[0].mxu0
        %v6450 = vpop.f32.mrb[0].mxu0
        %6451 = vdwg.mxu0
        %s6452 = scalar_lea.vmem [#allocation27], 1
        %v6453 = vld [vmem:[%s6452] sm:$0x1]
        %v6455 = vsel %vm6405, %v6453, 0
        %6457 = vmatprep.subr.bf16.mxu0 0
        %6458 = vmatpush1.bf16.msra.mxu0 %v6410
        %6459 = vmatprep.subr.bf16.mxu0 0
        %6460 = vmatpush1.bf16.msra.mxu0 0
        %6461 = vmatprep.subr.bf16.mxu0 0
        %6462 = vmatpush1.bf16.msra.mxu0 0
        %6463 = vmatprep.subr.bf16.mxu0 0
        %6464 = vmatpush1.bf16.msra.mxu0 0
        %6465 = vmatprep.subr.bf16.mxu0 0
        %6466 = vmatpush1.bf16.msra.mxu0 0
        %6467 = vmatprep.subr.bf16.mxu0 0
        %6468 = vmatpush1.bf16.msra.mxu0 0
        %6469 = vmatprep.subr.bf16.mxu0 0
        %6470 = vmatpush1.bf16.msra.mxu0 0
        %6471 = vmatprep.subr.bf16.mxu0 0
        %6472 = vmatpush1.bf16.msra.mxu0 0
        %6473 = vmatprep.subr.bf16.mxu0 0
        %6474 = vmatpush1.bf16.msra.mxu0 0
        %6475 = vmatprep.subr.bf16.mxu0 0
        %6476 = vmatpush1.bf16.msra.mxu0 0
        %6477 = vmatprep.subr.bf16.mxu0 0
        %6478 = vmatpush1.bf16.msra.mxu0 0
        %6479 = vmatprep.subr.bf16.mxu0 0
        %6480 = vmatpush1.bf16.msra.mxu0 0
        %6481 = vmatprep.subr.bf16.mxu0 0
        %6482 = vmatpush1.bf16.msra.mxu0 0
        %6483 = vmatprep.subr.bf16.mxu0 0
        %6484 = vmatpush1.bf16.msra.mxu0 0
        %6485 = vmatprep.subr.bf16.mxu0 0
        %6486 = vmatpush1.bf16.msra.mxu0 0
        %6487 = vmatprep.subr.bf16.mxu0 0
        %6488 = vmatpush1.bf16.msra.mxu0 0
        %6489 = vmatprep.mubr.bf16.mxu0 0
        %6490 = vmatmul.mubr.bf16.gmra.mrb[0].mxu0 %v6455
        %v6491 = vpop.f32.mrb[0].mxu0
        %v6492 = vadd.f32 0.0, %v6491
        %v6493 = vpop.f32.mrb[0].mxu0
        %v6494 = vpop.f32.mrb[0].mxu0
        %v6495 = vpop.f32.mrb[0].mxu0
        %6496 = vdwg.mxu0
        %v6497 = vmax.f32 %v6447, %v6492
        %s6498 = scalar_lea.vmem [#allocation27], 2
        %v6499 = vld [vmem:[%s6498] sm:$0x1]
        %v6501 = vsel %vm6405, %v6499, 0
        %6503 = vmatprep.subr.bf16.mxu0 0
        %6504 = vmatpush1.bf16.msra.mxu0 %v6410
        %6505 = vmatprep.subr.bf16.mxu0 0
        %6506 = vmatpush1.bf16.msra.mxu0 0
        %6507 = vmatprep.subr.bf16.mxu0 0
        %6508 = vmatpush1.bf16.msra.mxu0 0
        %6509 = vmatprep.subr.bf16.mxu0 0
        %6510 = vmatpush1.bf16.msra.mxu0 0
        %6511 = vmatprep.subr.bf16.mxu0 0
        %6512 = vmatpush1.bf16.msra.mxu0 0
        %6513 = vmatprep.subr.bf16.mxu0 0
        %6514 = vmatpush1.bf16.msra.mxu0 0
        %6515 = vmatprep.subr.bf16.mxu0 0
        %6516 = vmatpush1.bf16.msra.mxu0 0
        %6517 = vmatprep.subr.bf16.mxu0 0
        %6518 = vmatpush1.bf16.msra.mxu0 0
        %6519 = vmatprep.subr.bf16.mxu0 0
        %6520 = vmatpush1.bf16.msra.mxu0 0
        %6521 = vmatprep.subr.bf16.mxu0 0
        %6522 = vmatpush1.bf16.msra.mxu0 0
        %6523 = vmatprep.subr.bf16.mxu0 0
        %6524 = vmatpush1.bf16.msra.mxu0 0
        %6525 = vmatprep.subr.bf16.mxu0 0
        %6526 = vmatpush1.bf16.msra.mxu0 0
        %6527 = vmatprep.subr.bf16.mxu0 0
        %6528 = vmatpush1.bf16.msra.mxu0 0
        %6529 = vmatprep.subr.bf16.mxu0 0
        %6530 = vmatpush1.bf16.msra.mxu0 0
        %6531 = vmatprep.subr.bf16.mxu0 0
        %6532 = vmatpush1.bf16.msra.mxu0 0
        %6533 = vmatprep.subr.bf16.mxu0 0
        %6534 = vmatpush1.bf16.msra.mxu0 0
        %6535 = vmatprep.mubr.bf16.mxu0 0
        %6536 = vmatmul.mubr.bf16.gmra.mrb[0].mxu0 %v6501
        %v6537 = vpop.f32.mrb[0].mxu0
        %v6538 = vadd.f32 0.0, %v6537
        %v6539 = vpop.f32.mrb[0].mxu0
        %v6540 = vpop.f32.mrb[0].mxu0
        %v6541 = vpop.f32.mrb[0].mxu0
        %6542 = vdwg.mxu0
        %v6543 = vmax.f32 %v6497, %v6538
        %v6544 = vmax.f32 %v6543, 0.0
        %v6545 = vld [vmem:[%s31] sm:$0xf]
        %v6546 = vld [vmem:[%s31 + $0x4] sm:$0xf]
        %v6547 = vld [vmem:[%s31 + $0x8] sm:$0xf]
        %v6548 = vld [vmem:[%s31 + $0xc] sm:$0xf]
        %v6549 = vld [vmem:[%s31 + $0x10] sm:$0xf]
        %v6550 = vld [vmem:[%s31 + $0x14] sm:$0xf]
        %v6551 = vld [vmem:[%s31 + $0x18] sm:$0xf]
        %v6552 = vld [vmem:[%s31 + $0x1c] sm:$0xf]
        %v6553 = vld [vmem:[%s31 + $0x20] sm:$0xf]
        %v6554 = vld [vmem:[%s31 + $0x24] sm:$0xf]
        %v6555 = vld [vmem:[%s31 + $0x28] sm:$0xf]
        %v6556 = vld [vmem:[%s31 + $0x2c] sm:$0xf]
        %v6557 = vld [vmem:[%s31 + $0x30] sm:$0xf]
        %v6558 = vld [vmem:[%s31 + $0x34] sm:$0xf]
        %v6559 = vld [vmem:[%s31 + $0x38] sm:$0xf]
        %v6560 = vld [vmem:[%s31 + $0x3c] sm:$0xf]
        %v6561 = vld [vmem:[%s31 + $0x40] sm:$0xf]
        %v6562 = vld [vmem:[%s31 + $0x44] sm:$0xf]
        %v6563 = vld [vmem:[%s31 + $0x48] sm:$0xf]
        %v6564 = vld [vmem:[%s31 + $0x4c] sm:$0xf]
        %v6565 = vld [vmem:[%s31 + $0x50] sm:$0xf]
        %v6566 = vld [vmem:[%s31 + $0x54] sm:$0xf]
        %v6567 = vld [vmem:[%s31 + $0x58] sm:$0xf]
        %v6568 = vld [vmem:[%s31 + $0x5c] sm:$0xf]
        %v6569 = vld [vmem:[#allocation25] sm:$0x1]
        %v6571 = vrot.slane %v6544, 6
        %vm6573 = vcmask 519170
        %6574 = vst.msk [vmem:[#allocation5] sm:$0xc] %vm6573, %v6571
        %v6575 = vrot.slane %v6544, 7
        %6576 = vrot.lane.b32.xlu0 %v6575, 64
        %v6577 = vpop.permute.xlu0 %6576
        %vm6579 = vcmask 1042945
        %6580 = vst.msk [vmem:[#allocation5] sm:$0x6] %vm6579, %v6577
        %6581 = vst.msk [vmem:[#allocation5 + $0x4] sm:$0x3] %vm1222, %v6544
        %6582 = vst.msk [vmem:[#allocation5 + $0x1] sm:$0x1] %vm1245, 0.0
        %6583 = vst.msk [vmem:[#allocation5 + $0x6] sm:$0x1] %vm1245, 0.0
        %v6584 = vld [vmem:[#allocation5] sm:$0x66]
        %v6586 = vcombine.high %v6584, %v6584
        %v6588 = vpack.c.bf16 %v6584, %v6584
        %v6589 = vpack.c.bf16 %v6586, %v6586
        %v6590 = vlaneseq
        %v6591 = vshrl.u32 %v6590, 7
        %v6592 = vsub.s32 0, %v6591
        %v6593 = vrot.slane %v6569, %v6592
        %v6595 = vshrl.u32 %v6588, 16
        %v6597 = vshll.u32 %v6588, 16
        %v6599 = vrot.slane %v6597, 1
        %v6600 = vor.u32 %v6595, %v6599
        %v6602 = vshrl.u32 %v6589, 16
        %v6604 = vshll.u32 %v6589, 16
        %v6606 = vrot.slane %v6604, 1
        %v6607 = vor.u32 %v6602, %v6606
        %v6633 = vunpack.c.l.b16 %v6545
        %v6634 = vunpack.c.l.b16 %v6546
        %v6635 = vunpack.c.l.b16 %v6547
        %v6636 = vunpack.c.l.b16 %v6548
        %v6637 = vunpack.c.l.b16 %v6549
        %v6638 = vunpack.c.l.b16 %v6550
        %v6639 = vunpack.c.l.b16 %v6551
        %v6640 = vunpack.c.l.b16 %v6552
        %v6641 = vunpack.c.l.b16 %v6553
        %v6642 = vunpack.c.l.b16 %v6554
        %v6643 = vunpack.c.l.b16 %v6555
        %v6644 = vunpack.c.l.b16 %v6556
        %v6645 = vunpack.c.l.b16 %v6557
        %v6646 = vunpack.c.l.b16 %v6558
        %v6647 = vunpack.c.l.b16 %v6559
        %v6648 = vunpack.c.l.b16 %v6560
        %v6649 = vunpack.c.l.b16 %v6561
        %v6650 = vunpack.c.l.b16 %v6562
        %v6651 = vunpack.c.l.b16 %v6563
        %v6652 = vunpack.c.l.b16 %v6564
        %v6653 = vunpack.c.l.b16 %v6565
        %v6654 = vunpack.c.l.b16 %v6566
        %v6655 = vunpack.c.l.b16 %v6567
        %v6656 = vunpack.c.l.b16 %v6568
        %v6657 = vpack.c.b16 %v6634, %v6633
        %v6658 = vpack.c.b16 %v6636, %v6635
        %v6659 = vpack.c.b16 %v6638, %v6637
        %v6660 = vpack.c.b16 %v6640, %v6639
        %v6661 = vpack.c.b16 %v6642, %v6641
        %v6662 = vpack.c.b16 %v6644, %v6643
        %v6663 = vpack.c.b16 %v6646, %v6645
        %v6664 = vpack.c.b16 %v6648, %v6647
        %v6665 = vpack.c.b16 %v6650, %v6649
        %v6666 = vpack.c.b16 %v6652, %v6651
        %v6667 = vpack.c.b16 %v6654, %v6653
        %v6668 = vpack.c.b16 %v6656, %v6655
        %v6682 = vsel %vm1220, %v6607, 0
        %6684 = vmatprep.subr.bf16.mxu0 0
        %6685 = vmatpush1.bf16.msra.mxu0 %v6657
        %6686 = vmatprep.subr.bf16.mxu0 0
        %6687 = vmatpush1.bf16.msra.mxu0 %v6658
        %6688 = vmatprep.subr.bf16.mxu0 0
        %6689 = vmatpush1.bf16.msra.mxu0 %v6659
        %6690 = vmatprep.subr.bf16.mxu0 0
        %6691 = vmatpush1.bf16.msra.mxu0 %v6660
        %6692 = vmatprep.subr.bf16.mxu0 0
        %6693 = vmatpush1.bf16.msra.mxu0 %v6661
        %6694 = vmatprep.subr.bf16.mxu0 0
        %6695 = vmatpush1.bf16.msra.mxu0 %v6662
        %6696 = vmatprep.subr.bf16.mxu0 0
        %6697 = vmatpush1.bf16.msra.mxu0 %v6663
        %6698 = vmatprep.subr.bf16.mxu0 0
        %6699 = vmatpush1.bf16.msra.mxu0 %v6664
        %6700 = vmatprep.subr.bf16.mxu0 0
        %6701 = vmatpush1.bf16.msra.mxu0 %v6665
        %6702 = vmatprep.subr.bf16.mxu0 0
        %6703 = vmatpush1.bf16.msra.mxu0 %v6666
        %6704 = vmatprep.subr.bf16.mxu0 0
        %6705 = vmatpush1.bf16.msra.mxu0 %v6667
        %6706 = vmatprep.subr.bf16.mxu0 0
        %6707 = vmatpush1.bf16.msra.mxu0 %v6668
        %6708 = vmatprep.subr.bf16.mxu0 0
        %6709 = vmatpush1.bf16.msra.mxu0 0
        %6710 = vmatprep.subr.bf16.mxu0 0
        %6711 = vmatpush1.bf16.msra.mxu0 0
        %6712 = vmatprep.subr.bf16.mxu0 0
        %6713 = vmatpush1.bf16.msra.mxu0 0
        %6714 = vmatprep.subr.bf16.mxu0 0
        %6715 = vmatpush1.bf16.msra.mxu0 0
        %6716 = vmatprep.mubr.bf16.mxu0 %v6682
        %6717 = vmatmul.mubr.bf16.gmra.mrb[0].mxu0 %v6600
        %v6718 = vpop.f32.mrb[0].mxu0
        %v6719 = vadd.f32 %v6593, %v6718
        %v6720 = vpop.f32.mrb[0].mxu0
        %v6721 = vpop.f32.mrb[0].mxu0
        %v6722 = vpop.f32.mrb[0].mxu0
        %6723 = vdwg.mxu0
        %v6724 = vmax.f32 %v6719, 0.0
        %s6725 = scalar_lea.vmem %s31, 96
        %v6726 = vld [vmem:[%s6725] sm:$0xf]
        %v6727 = vld [vmem:[%s6725 + $0x4] sm:$0xf]
        %v6728 = vld [vmem:[%s6725 + $0x8] sm:$0xf]
        %v6729 = vld [vmem:[%s6725 + $0xc] sm:$0xf]
        %v6730 = vld [vmem:[%s6725 + $0x10] sm:$0xf]
        %v6731 = vld [vmem:[%s6725 + $0x14] sm:$0xf]
        %v6732 = vld [vmem:[%s6725 + $0x18] sm:$0xf]
        %v6733 = vld [vmem:[%s6725 + $0x1c] sm:$0xf]
        %v6734 = vld [vmem:[%s6725 + $0x20] sm:$0xf]
        %v6735 = vld [vmem:[%s6725 + $0x24] sm:$0xf]
        %v6736 = vld [vmem:[%s6725 + $0x28] sm:$0xf]
        %v6737 = vld [vmem:[%s6725 + $0x2c] sm:$0xf]
        %v6738 = vld [vmem:[%s6725 + $0x30] sm:$0xf]
        %v6739 = vld [vmem:[%s6725 + $0x34] sm:$0xf]
        %v6740 = vld [vmem:[%s6725 + $0x38] sm:$0xf]
        %v6741 = vld [vmem:[%s6725 + $0x3c] sm:$0xf]
        %v6742 = vld [vmem:[%s6725 + $0x40] sm:$0xf]
        %v6743 = vld [vmem:[%s6725 + $0x44] sm:$0xf]
        %v6744 = vld [vmem:[%s6725 + $0x48] sm:$0xf]
        %v6745 = vld [vmem:[%s6725 + $0x4c] sm:$0xf]
        %v6746 = vld [vmem:[%s6725 + $0x50] sm:$0xf]
        %v6747 = vld [vmem:[%s6725 + $0x54] sm:$0xf]
        %v6748 = vld [vmem:[%s6725 + $0x58] sm:$0xf]
        %v6749 = vld [vmem:[%s6725 + $0x5c] sm:$0xf]
        %v6750 = vld [vmem:[#allocation25 + $0x1] sm:$0x1]
        %v6752 = vrot.slane %v6724, 6
        %6754 = vst.msk [vmem:[#allocation5] sm:$0xc] %vm6573, %v6752
        %v6755 = vrot.slane %v6724, 7
        %6756 = vrot.lane.b32.xlu0 %v6755, 64
        %v6757 = vpop.permute.xlu0 %6756
        %6759 = vst.msk [vmem:[#allocation5] sm:$0x6] %vm6579, %v6757
        %6760 = vst.msk [vmem:[#allocation5 + $0x4] sm:$0x3] %vm1222, %v6724
        %6761 = vst.msk [vmem:[#allocation5 + $0x1] sm:$0x1] %vm1245, 0.0
        %6762 = vst.msk [vmem:[#allocation5 + $0x6] sm:$0x1] %vm1245, 0.0
        %v6763 = vld [vmem:[#allocation5] sm:$0x66]
        %v6765 = vcombine.high %v6763, %v6763
        %v6767 = vpack.c.bf16 %v6763, %v6763
        %v6768 = vpack.c.bf16 %v6765, %v6765
        %v6769 = vlaneseq
        %v6770 = vshrl.u32 %v6769, 7
        %v6771 = vsub.s32 0, %v6770
        %v6772 = vrot.slane %v6750, %v6771
        %v6774 = vshrl.u32 %v6767, 16
        %v6776 = vshll.u32 %v6767, 16
        %v6778 = vrot.slane %v6776, 1
        %v6779 = vor.u32 %v6774, %v6778
        %v6781 = vshrl.u32 %v6768, 16
        %v6783 = vshll.u32 %v6768, 16
        %v6785 = vrot.slane %v6783, 1
        %v6786 = vor.u32 %v6781, %v6785
        %v6812 = vunpack.c.l.b16 %v6726
        %v6813 = vunpack.c.l.b16 %v6727
        %v6814 = vunpack.c.l.b16 %v6728
        %v6815 = vunpack.c.l.b16 %v6729
        %v6816 = vunpack.c.l.b16 %v6730
        %v6817 = vunpack.c.l.b16 %v6731
        %v6818 = vunpack.c.l.b16 %v6732
        %v6819 = vunpack.c.l.b16 %v6733
        %v6820 = vunpack.c.l.b16 %v6734
        %v6821 = vunpack.c.l.b16 %v6735
        %v6822 = vunpack.c.l.b16 %v6736
        %v6823 = vunpack.c.l.b16 %v6737
        %v6824 = vunpack.c.l.b16 %v6738
        %v6825 = vunpack.c.l.b16 %v6739
        %v6826 = vunpack.c.l.b16 %v6740
        %v6827 = vunpack.c.l.b16 %v6741
        %v6828 = vunpack.c.l.b16 %v6742
        %v6829 = vunpack.c.l.b16 %v6743
        %v6830 = vunpack.c.l.b16 %v6744
        %v6831 = vunpack.c.l.b16 %v6745
        %v6832 = vunpack.c.l.b16 %v6746
        %v6833 = vunpack.c.l.b16 %v6747
        %v6834 = vunpack.c.l.b16 %v6748
        %v6835 = vunpack.c.l.b16 %v6749
        %v6836 = vpack.c.b16 %v6813, %v6812
        %v6837 = vpack.c.b16 %v6815, %v6814
        %v6838 = vpack.c.b16 %v6817, %v6816
        %v6839 = vpack.c.b16 %v6819, %v6818
        %v6840 = vpack.c.b16 %v6821, %v6820
        %v6841 = vpack.c.b16 %v6823, %v6822
        %v6842 = vpack.c.b16 %v6825, %v6824
        %v6843 = vpack.c.b16 %v6827, %v6826
        %v6844 = vpack.c.b16 %v6829, %v6828
        %v6845 = vpack.c.b16 %v6831, %v6830
        %v6846 = vpack.c.b16 %v6833, %v6832
        %v6847 = vpack.c.b16 %v6835, %v6834
        %v6861 = vsel %vm1220, %v6786, 0
        %6863 = vmatprep.subr.bf16.mxu0 0
        %6864 = vmatpush1.bf16.msra.mxu0 %v6836
        %6865 = vmatprep.subr.bf16.mxu0 0
        %6866 = vmatpush1.bf16.msra.mxu0 %v6837
        %6867 = vmatprep.subr.bf16.mxu0 0
        %6868 = vmatpush1.bf16.msra.mxu0 %v6838
        %6869 = vmatprep.subr.bf16.mxu0 0
        %6870 = vmatpush1.bf16.msra.mxu0 %v6839
        %6871 = vmatprep.subr.bf16.mxu0 0
        %6872 = vmatpush1.bf16.msra.mxu0 %v6840
        %6873 = vmatprep.subr.bf16.mxu0 0
        %6874 = vmatpush1.bf16.msra.mxu0 %v6841
        %6875 = vmatprep.subr.bf16.mxu0 0
        %6876 = vmatpush1.bf16.msra.mxu0 %v6842
        %6877 = vmatprep.subr.bf16.mxu0 0
        %6878 = vmatpush1.bf16.msra.mxu0 %v6843
        %6879 = vmatprep.subr.bf16.mxu0 0
        %6880 = vmatpush1.bf16.msra.mxu0 %v6844
        %6881 = vmatprep.subr.bf16.mxu0 0
        %6882 = vmatpush1.bf16.msra.mxu0 %v6845
        %6883 = vmatprep.subr.bf16.mxu0 0
        %6884 = vmatpush1.bf16.msra.mxu0 %v6846
        %6885 = vmatprep.subr.bf16.mxu0 0
        %6886 = vmatpush1.bf16.msra.mxu0 %v6847
        %6887 = vmatprep.subr.bf16.mxu0 0
        %6888 = vmatpush1.bf16.msra.mxu0 0
        %6889 = vmatprep.subr.bf16.mxu0 0
        %6890 = vmatpush1.bf16.msra.mxu0 0
        %6891 = vmatprep.subr.bf16.mxu0 0
        %6892 = vmatpush1.bf16.msra.mxu0 0
        %6893 = vmatprep.subr.bf16.mxu0 0
        %6894 = vmatpush1.bf16.msra.mxu0 0
        %6895 = vmatprep.mubr.bf16.mxu0 %v6861
        %6896 = vmatmul.mubr.bf16.gmra.mrb[0].mxu0 %v6779
        %v6897 = vpop.f32.mrb[0].mxu0
        %v6898 = vadd.f32 %v6772, %v6897
        %v6899 = vpop.f32.mrb[0].mxu0
        %v6900 = vpop.f32.mrb[0].mxu0
        %v6901 = vpop.f32.mrb[0].mxu0
        %6902 = vdwg.mxu0
        %v6903 = vadd.f32 %v6543, %v6898
        %v6904 = vmax.f32 %v6903, 0.0
        %s6905 = scalar_lea.vmem %s31, 192
        %v6906 = vld [vmem:[%s6905] sm:$0xf]
        %v6907 = vld [vmem:[%s6905 + $0x4] sm:$0xf]
        %v6908 = vld [vmem:[%s6905 + $0x8] sm:$0xf]
        %v6909 = vld [vmem:[%s6905 + $0xc] sm:$0xf]
        %v6910 = vld [vmem:[%s6905 + $0x10] sm:$0xf]
        %v6911 = vld [vmem:[%s6905 + $0x14] sm:$0xf]
        %v6912 = vld [vmem:[%s6905 + $0x18] sm:$0xf]
        %v6913 = vld [vmem:[%s6905 + $0x1c] sm:$0xf]
        %v6914 = vld [vmem:[%s6905 + $0x20] sm:$0xf]
        %v6915 = vld [vmem:[%s6905 + $0x24] sm:$0xf]
        %v6916 = vld [vmem:[%s6905 + $0x28] sm:$0xf]
        %v6917 = vld [vmem:[%s6905 + $0x2c] sm:$0xf]
        %v6918 = vld [vmem:[%s6905 + $0x30] sm:$0xf]
        %v6919 = vld [vmem:[%s6905 + $0x34] sm:$0xf]
        %v6920 = vld [vmem:[%s6905 + $0x38] sm:$0xf]
        %v6921 = vld [vmem:[%s6905 + $0x3c] sm:$0xf]
        %v6922 = vld [vmem:[%s6905 + $0x40] sm:$0xf]
        %v6923 = vld [vmem:[%s6905 + $0x44] sm:$0xf]
        %v6924 = vld [vmem:[%s6905 + $0x48] sm:$0xf]
        %v6925 = vld [vmem:[%s6905 + $0x4c] sm:$0xf]
        %v6926 = vld [vmem:[%s6905 + $0x50] sm:$0xf]
        %v6927 = vld [vmem:[%s6905 + $0x54] sm:$0xf]
        %v6928 = vld [vmem:[%s6905 + $0x58] sm:$0xf]
        %v6929 = vld [vmem:[%s6905 + $0x5c] sm:$0xf]
        %v6930 = vld [vmem:[#allocation25 + $0x2] sm:$0x1]
        %v6932 = vrot.slane %v6904, 6
        %6934 = vst.msk [vmem:[#allocation5] sm:$0xc] %vm6573, %v6932
        %v6935 = vrot.slane %v6904, 7
        %6936 = vrot.lane.b32.xlu0 %v6935, 64
        %v6937 = vpop.permute.xlu0 %6936
        %6939 = vst.msk [vmem:[#allocation5] sm:$0x6] %vm6579, %v6937
        %6940 = vst.msk [vmem:[#allocation5 + $0x4] sm:$0x3] %vm1222, %v6904
        %6941 = vst.msk [vmem:[#allocation5 + $0x1] sm:$0x1] %vm1245, 0.0
        %6942 = vst.msk [vmem:[#allocation5 + $0x6] sm:$0x1] %vm1245, 0.0
        %v6943 = vld [vmem:[#allocation5] sm:$0x66]
        %v6945 = vcombine.high %v6943, %v6943
        %v6947 = vpack.c.bf16 %v6943, %v6943
        %v6948 = vpack.c.bf16 %v6945, %v6945
        %v6949 = vlaneseq
        %v6950 = vshrl.u32 %v6949, 7
        %v6951 = vsub.s32 0, %v6950
        %v6952 = vrot.slane %v6930, %v6951
        %v6954 = vshrl.u32 %v6947, 16
        %v6956 = vshll.u32 %v6947, 16
        %v6958 = vrot.slane %v6956, 1
        %v6959 = vor.u32 %v6954, %v6958
        %v6961 = vshrl.u32 %v6948, 16
        %v6963 = vshll.u32 %v6948, 16
        %v6965 = vrot.slane %v6963, 1
        %v6966 = vor.u32 %v6961, %v6965
        %v6992 = vunpack.c.l.b16 %v6906
        %v6993 = vunpack.c.l.b16 %v6907
        %v6994 = vunpack.c.l.b16 %v6908
        %v6995 = vunpack.c.l.b16 %v6909
        %v6996 = vunpack.c.l.b16 %v6910
        %v6997 = vunpack.c.l.b16 %v6911
        %v6998 = vunpack.c.l.b16 %v6912
        %v6999 = vunpack.c.l.b16 %v6913
        %v7000 = vunpack.c.l.b16 %v6914
        %v7001 = vunpack.c.l.b16 %v6915
        %v7002 = vunpack.c.l.b16 %v6916
        %v7003 = vunpack.c.l.b16 %v6917
        %v7004 = vunpack.c.l.b16 %v6918
        %v7005 = vunpack.c.l.b16 %v6919
        %v7006 = vunpack.c.l.b16 %v6920
        %v7007 = vunpack.c.l.b16 %v6921
        %v7008 = vunpack.c.l.b16 %v6922
        %v7009 = vunpack.c.l.b16 %v6923
        %v7010 = vunpack.c.l.b16 %v6924
        %v7011 = vunpack.c.l.b16 %v6925
        %v7012 = vunpack.c.l.b16 %v6926
        %v7013 = vunpack.c.l.b16 %v6927
        %v7014 = vunpack.c.l.b16 %v6928
        %v7015 = vunpack.c.l.b16 %v6929
        %v7016 = vpack.c.b16 %v6993, %v6992
        %v7017 = vpack.c.b16 %v6995, %v6994
        %v7018 = vpack.c.b16 %v6997, %v6996
        %v7019 = vpack.c.b16 %v6999, %v6998
        %v7020 = vpack.c.b16 %v7001, %v7000
        %v7021 = vpack.c.b16 %v7003, %v7002
        %v7022 = vpack.c.b16 %v7005, %v7004
        %v7023 = vpack.c.b16 %v7007, %v7006
        %v7024 = vpack.c.b16 %v7009, %v7008
        %v7025 = vpack.c.b16 %v7011, %v7010
        %v7026 = vpack.c.b16 %v7013, %v7012
        %v7027 = vpack.c.b16 %v7015, %v7014
        %v7041 = vsel %vm1220, %v6966, 0
        %7043 = vmatprep.subr.bf16.mxu0 0
        %7044 = vmatpush1.bf16.msra.mxu0 %v7016
        %7045 = vmatprep.subr.bf16.mxu0 0
        %7046 = vmatpush1.bf16.msra.mxu0 %v7017
        %7047 = vmatprep.subr.bf16.mxu0 0
        %7048 = vmatpush1.bf16.msra.mxu0 %v7018
        %7049 = vmatprep.subr.bf16.mxu0 0
        %7050 = vmatpush1.bf16.msra.mxu0 %v7019
        %7051 = vmatprep.subr.bf16.mxu0 0
        %7052 = vmatpush1.bf16.msra.mxu0 %v7020
        %7053 = vmatprep.subr.bf16.mxu0 0
        %7054 = vmatpush1.bf16.msra.mxu0 %v7021
        %7055 = vmatprep.subr.bf16.mxu0 0
        %7056 = vmatpush1.bf16.msra.mxu0 %v7022
        %7057 = vmatprep.subr.bf16.mxu0 0
        %7058 = vmatpush1.bf16.msra.mxu0 %v7023
        %7059 = vmatprep.subr.bf16.mxu0 0
        %7060 = vmatpush1.bf16.msra.mxu0 %v7024
        %7061 = vmatprep.subr.bf16.mxu0 0
        %7062 = vmatpush1.bf16.msra.mxu0 %v7025
        %7063 = vmatprep.subr.bf16.mxu0 0
        %7064 = vmatpush1.bf16.msra.mxu0 %v7026
        %7065 = vmatprep.subr.bf16.mxu0 0
        %7066 = vmatpush1.bf16.msra.mxu0 %v7027
        %7067 = vmatprep.subr.bf16.mxu0 0
        %7068 = vmatpush1.bf16.msra.mxu0 0
        %7069 = vmatprep.subr.bf16.mxu0 0
        %7070 = vmatpush1.bf16.msra.mxu0 0
        %7071 = vmatprep.subr.bf16.mxu0 0
        %7072 = vmatpush1.bf16.msra.mxu0 0
        %7073 = vmatprep.subr.bf16.mxu0 0
        %7074 = vmatpush1.bf16.msra.mxu0 0
        %7075 = vmatprep.mubr.bf16.mxu0 %v7041
        %7076 = vmatmul.mubr.bf16.gmra.mrb[0].mxu0 %v6959
        %v7077 = vpop.f32.mrb[0].mxu0
        %v7078 = vadd.f32 %v6952, %v7077
        %v7079 = vpop.f32.mrb[0].mxu0
        %v7080 = vpop.f32.mrb[0].mxu0
        %v7081 = vpop.f32.mrb[0].mxu0
        %7082 = vdwg.mxu0
        %v7083 = vmax.f32 %v7078, 0.0
        %s7084 = scalar_lea.vmem %s31, 288
        %v7085 = vld [vmem:[%s7084] sm:$0xf]
        %v7086 = vld [vmem:[%s7084 + $0x4] sm:$0xf]
        %v7087 = vld [vmem:[%s7084 + $0x8] sm:$0xf]
        %v7088 = vld [vmem:[%s7084 + $0xc] sm:$0xf]
        %v7089 = vld [vmem:[%s7084 + $0x10] sm:$0xf]
        %v7090 = vld [vmem:[%s7084 + $0x14] sm:$0xf]
        %v7091 = vld [vmem:[%s7084 + $0x18] sm:$0xf]
        %v7092 = vld [vmem:[%s7084 + $0x1c] sm:$0xf]
        %v7093 = vld [vmem:[%s7084 + $0x20] sm:$0xf]
        %v7094 = vld [vmem:[%s7084 + $0x24] sm:$0xf]
        %v7095 = vld [vmem:[%s7084 + $0x28] sm:$0xf]
        %v7096 = vld [vmem:[%s7084 + $0x2c] sm:$0xf]
        %v7097 = vld [vmem:[%s7084 + $0x30] sm:$0xf]
        %v7098 = vld [vmem:[%s7084 + $0x34] sm:$0xf]
        %v7099 = vld [vmem:[%s7084 + $0x38] sm:$0xf]
        %v7100 = vld [vmem:[%s7084 + $0x3c] sm:$0xf]
        %v7101 = vld [vmem:[%s7084 + $0x40] sm:$0xf]
        %v7102 = vld [vmem:[%s7084 + $0x44] sm:$0xf]
        %v7103 = vld [vmem:[%s7084 + $0x48] sm:$0xf]
        %v7104 = vld [vmem:[%s7084 + $0x4c] sm:$0xf]
        %v7105 = vld [vmem:[%s7084 + $0x50] sm:$0xf]
        %v7106 = vld [vmem:[%s7084 + $0x54] sm:$0xf]
        %v7107 = vld [vmem:[%s7084 + $0x58] sm:$0xf]
        %v7108 = vld [vmem:[%s7084 + $0x5c] sm:$0xf]
        %v7109 = vld [vmem:[#allocation25 + $0x3] sm:$0x1]
        %v7111 = vrot.slane %v7083, 6
        %7113 = vst.msk [vmem:[#allocation5] sm:$0xc] %vm6573, %v7111
        %v7114 = vrot.slane %v7083, 7
        %7115 = vrot.lane.b32.xlu0 %v7114, 64
        %v7116 = vpop.permute.xlu0 %7115
        %7118 = vst.msk [vmem:[#allocation5] sm:$0x6] %vm6579, %v7116
        %7119 = vst.msk [vmem:[#allocation5 + $0x4] sm:$0x3] %vm1222, %v7083
        %7120 = vst.msk [vmem:[#allocation5 + $0x1] sm:$0x1] %vm1245, 0.0
        %7121 = vst.msk [vmem:[#allocation5 + $0x6] sm:$0x1] %vm1245, 0.0
        %v7122 = vld [vmem:[#allocation5] sm:$0x66]
        %v7124 = vcombine.high %v7122, %v7122
        %v7126 = vpack.c.bf16 %v7122, %v7122
        %v7127 = vpack.c.bf16 %v7124, %v7124
        %v7128 = vlaneseq
        %v7129 = vshrl.u32 %v7128, 7
        %v7130 = vsub.s32 0, %v7129
        %v7131 = vrot.slane %v7109, %v7130
        %v7133 = vshrl.u32 %v7126, 16
        %v7135 = vshll.u32 %v7126, 16
        %v7137 = vrot.slane %v7135, 1
        %v7138 = vor.u32 %v7133, %v7137
        %v7140 = vshrl.u32 %v7127, 16
        %v7142 = vshll.u32 %v7127, 16
        %v7144 = vrot.slane %v7142, 1
        %v7145 = vor.u32 %v7140, %v7144
        %v7171 = vunpack.c.l.b16 %v7085
        %v7172 = vunpack.c.l.b16 %v7086
        %v7173 = vunpack.c.l.b16 %v7087
        %v7174 = vunpack.c.l.b16 %v7088
        %v7175 = vunpack.c.l.b16 %v7089
        %v7176 = vunpack.c.l.b16 %v7090
        %v7177 = vunpack.c.l.b16 %v7091
        %v7178 = vunpack.c.l.b16 %v7092
        %v7179 = vunpack.c.l.b16 %v7093
        %v7180 = vunpack.c.l.b16 %v7094
        %v7181 = vunpack.c.l.b16 %v7095
        %v7182 = vunpack.c.l.b16 %v7096
        %v7183 = vunpack.c.l.b16 %v7097
        %v7184 = vunpack.c.l.b16 %v7098
        %v7185 = vunpack.c.l.b16 %v7099
        %v7186 = vunpack.c.l.b16 %v7100
        %v7187 = vunpack.c.l.b16 %v7101
        %v7188 = vunpack.c.l.b16 %v7102
        %v7189 = vunpack.c.l.b16 %v7103
        %v7190 = vunpack.c.l.b16 %v7104
        %v7191 = vunpack.c.l.b16 %v7105
        %v7192 = vunpack.c.l.b16 %v7106
        %v7193 = vunpack.c.l.b16 %v7107
        %v7194 = vunpack.c.l.b16 %v7108
        %v7195 = vpack.c.b16 %v7172, %v7171
        %v7196 = vpack.c.b16 %v7174, %v7173
        %v7197 = vpack.c.b16 %v7176, %v7175
        %v7198 = vpack.c.b16 %v7178, %v7177
        %v7199 = vpack.c.b16 %v7180, %v7179
        %v7200 = vpack.c.b16 %v7182, %v7181
        %v7201 = vpack.c.b16 %v7184, %v7183
        %v7202 = vpack.c.b16 %v7186, %v7185
        %v7203 = vpack.c.b16 %v7188, %v7187
        %v7204 = vpack.c.b16 %v7190, %v7189
        %v7205 = vpack.c.b16 %v7192, %v7191
        %v7206 = vpack.c.b16 %v7194, %v7193
        %v7220 = vsel %vm1220, %v7145, 0
        %7222 = vmatprep.subr.bf16.mxu0 0
        %7223 = vmatpush1.bf16.msra.mxu0 %v7195
        %7224 = vmatprep.subr.bf16.mxu0 0
        %7225 = vmatpush1.bf16.msra.mxu0 %v7196
        %7226 = vmatprep.subr.bf16.mxu0 0
        %7227 = vmatpush1.bf16.msra.mxu0 %v7197
        %7228 = vmatprep.subr.bf16.mxu0 0
        %7229 = vmatpush1.bf16.msra.mxu0 %v7198
        %7230 = vmatprep.subr.bf16.mxu0 0
        %7231 = vmatpush1.bf16.msra.mxu0 %v7199
        %7232 = vmatprep.subr.bf16.mxu0 0
        %7233 = vmatpush1.bf16.msra.mxu0 %v7200
        %7234 = vmatprep.subr.bf16.mxu0 0
        %7235 = vmatpush1.bf16.msra.mxu0 %v7201
        %7236 = vmatprep.subr.bf16.mxu0 0
        %7237 = vmatpush1.bf16.msra.mxu0 %v7202
        %7238 = vmatprep.subr.bf16.mxu0 0
        %7239 = vmatpush1.bf16.msra.mxu0 %v7203
        %7240 = vmatprep.subr.bf16.mxu0 0
        %7241 = vmatpush1.bf16.msra.mxu0 %v7204
        %7242 = vmatprep.subr.bf16.mxu0 0
        %7243 = vmatpush1.bf16.msra.mxu0 %v7205
        %7244 = vmatprep.subr.bf16.mxu0 0
        %7245 = vmatpush1.bf16.msra.mxu0 %v7206
        %7246 = vmatprep.subr.bf16.mxu0 0
        %7247 = vmatpush1.bf16.msra.mxu0 0
        %7248 = vmatprep.subr.bf16.mxu0 0
        %7249 = vmatpush1.bf16.msra.mxu0 0
        %7250 = vmatprep.subr.bf16.mxu0 0
        %7251 = vmatpush1.bf16.msra.mxu0 0
        %7252 = vmatprep.subr.bf16.mxu0 0
        %7253 = vmatpush1.bf16.msra.mxu0 0
        %7254 = vmatprep.mubr.bf16.mxu0 %v7220
        %7255 = vmatmul.mubr.bf16.gmra.mrb[0].mxu0 %v7138
        %v7256 = vpop.f32.mrb[0].mxu0
        %v7257 = vadd.f32 %v7131, %v7256
        %v7258 = vpop.f32.mrb[0].mxu0
        %v7259 = vpop.f32.mrb[0].mxu0
        %v7260 = vpop.f32.mrb[0].mxu0
        %7261 = vdwg.mxu0
        %v7262 = vadd.f32 %v6903, %v7257
        %v7263 = vmax.f32 %v7262, 0.0
        %7264 = vst.msk [vmem:[#allocation6] sm:$0x3] %vm1222, %v7263
        %v7265 = vld [vmem:[#allocation30] sm:$0x1]
        %v7266 = vld [vmem:[#allocation6] sm:$0x1]
        %v7267 = vpack.c.bf16 %v7266, %v7266
        %v7268 = vld [vmem:[#allocation28] sm:$0xf]
        %v7269 = vld [vmem:[#allocation28 + $0x4] sm:$0xf]
        %v7270 = vld [vmem:[#allocation28 + $0x8] sm:$0xf]
        %v7271 = vld [vmem:[#allocation28 + $0xc] sm:$0xf]
        %v7272 = vld [vmem:[#allocation28 + $0x10] sm:$0xf]
        %v7273 = vld [vmem:[#allocation28 + $0x14] sm:$0xf]
        %v7274 = vld [vmem:[#allocation28 + $0x18] sm:$0xf]
        %v7275 = vld [vmem:[#allocation28 + $0x1c] sm:$0xf]
        %v7284 = vunpack.c.l.b16 %v7268
        %v7285 = vunpack.c.l.b16 %v7269
        %v7286 = vunpack.c.l.b16 %v7270
        %v7287 = vunpack.c.l.b16 %v7271
        %v7288 = vunpack.c.l.b16 %v7272
        %v7289 = vunpack.c.l.b16 %v7273
        %v7290 = vunpack.c.l.b16 %v7274
        %v7291 = vunpack.c.l.b16 %v7275
        %v7292 = vpack.c.b16 %v7285, %v7284
        %v7293 = vpack.c.b16 %v7287, %v7286
        %v7294 = vpack.c.b16 %v7289, %v7288
        %v7295 = vpack.c.b16 %v7291, %v7290
        %v7301 = vsel %vm1220, %v7267, 0
        %7303 = vmatprep.subr.bf16.mxu0 0
        %7304 = vmatpush1.bf16.msra.mxu0 %v7292
        %7305 = vmatprep.subr.bf16.mxu0 0
        %7306 = vmatpush1.bf16.msra.mxu0 %v7293
        %7307 = vmatprep.subr.bf16.mxu0 0
        %7308 = vmatpush1.bf16.msra.mxu0 %v7294
        %7309 = vmatprep.subr.bf16.mxu0 0
        %7310 = vmatpush1.bf16.msra.mxu0 %v7295
        %7311 = vmatprep.subr.bf16.mxu0 0
        %7312 = vmatpush1.bf16.msra.mxu0 0
        %7313 = vmatprep.subr.bf16.mxu0 0
        %7314 = vmatpush1.bf16.msra.mxu0 0
        %7315 = vmatprep.subr.bf16.mxu0 0
        %7316 = vmatpush1.bf16.msra.mxu0 0
        %7317 = vmatprep.subr.bf16.mxu0 0
        %7318 = vmatpush1.bf16.msra.mxu0 0
        %7319 = vmatprep.subr.bf16.mxu0 0
        %7320 = vmatpush1.bf16.msra.mxu0 0
        %7321 = vmatprep.subr.bf16.mxu0 0
        %7322 = vmatpush1.bf16.msra.mxu0 0
        %7323 = vmatprep.subr.bf16.mxu0 0
        %7324 = vmatpush1.bf16.msra.mxu0 0
        %7325 = vmatprep.subr.bf16.mxu0 0
        %7326 = vmatpush1.bf16.msra.mxu0 0
        %7327 = vmatprep.subr.bf16.mxu0 0
        %7328 = vmatpush1.bf16.msra.mxu0 0
        %7329 = vmatprep.subr.bf16.mxu0 0
        %7330 = vmatpush1.bf16.msra.mxu0 0
        %7331 = vmatprep.subr.bf16.mxu0 0
        %7332 = vmatpush1.bf16.msra.mxu0 0
        %7333 = vmatprep.subr.bf16.mxu0 0
        %7334 = vmatpush1.bf16.msra.mxu0 0
        %7335 = vmatprep.mubr.bf16.mxu0 0
        %7336 = vmatmul.mubr.bf16.gmra.mrb[0].mxu0 %v7301
        %v7337 = vpop.f32.mrb[0].mxu0
        %v7338 = vadd.f32 0.0, %v7337
        %v7339 = vpop.f32.mrb[0].mxu0
        %v7340 = vpop.f32.mrb[0].mxu0
        %v7341 = vpop.f32.mrb[0].mxu0
        %7342 = vdwg.mxu0
        %v7343 = vadd.f32 %v7265, %v7338
        %v7344 = vld [vmem:[#allocation6 + $0x1] sm:$0x1]
        %v7345 = vpack.c.bf16 %v7344, %v7344
        %s7346 = scalar_lea.vmem [#allocation28], 32
        %v7347 = vld [vmem:[%s7346] sm:$0xf]
        %v7348 = vld [vmem:[%s7346 + $0x4] sm:$0xf]
        %v7349 = vld [vmem:[%s7346 + $0x8] sm:$0xf]
        %v7350 = vld [vmem:[%s7346 + $0xc] sm:$0xf]
        %v7351 = vld [vmem:[%s7346 + $0x10] sm:$0xf]
        %v7352 = vld [vmem:[%s7346 + $0x14] sm:$0xf]
        %v7353 = vld [vmem:[%s7346 + $0x18] sm:$0xf]
        %v7354 = vld [vmem:[%s7346 + $0x1c] sm:$0xf]
        %v7363 = vunpack.c.l.b16 %v7347
        %v7364 = vunpack.c.l.b16 %v7348
        %v7365 = vunpack.c.l.b16 %v7349
        %v7366 = vunpack.c.l.b16 %v7350
        %v7367 = vunpack.c.l.b16 %v7351
        %v7368 = vunpack.c.l.b16 %v7352
        %v7369 = vunpack.c.l.b16 %v7353
        %v7370 = vunpack.c.l.b16 %v7354
        %v7371 = vpack.c.b16 %v7364, %v7363
        %v7372 = vpack.c.b16 %v7366, %v7365
        %v7373 = vpack.c.b16 %v7368, %v7367
        %v7374 = vpack.c.b16 %v7370, %v7369
        %v7380 = vsel %vm1220, %v7345, 0
        %7382 = vmatprep.subr.bf16.mxu0 0
        %7383 = vmatpush1.bf16.msra.mxu0 %v7371
        %7384 = vmatprep.subr.bf16.mxu0 0
        %7385 = vmatpush1.bf16.msra.mxu0 %v7372
        %7386 = vmatprep.subr.bf16.mxu0 0
        %7387 = vmatpush1.bf16.msra.mxu0 %v7373
        %7388 = vmatprep.subr.bf16.mxu0 0
        %7389 = vmatpush1.bf16.msra.mxu0 %v7374
        %7390 = vmatprep.subr.bf16.mxu0 0
        %7391 = vmatpush1.bf16.msra.mxu0 0
        %7392 = vmatprep.subr.bf16.mxu0 0
        %7393 = vmatpush1.bf16.msra.mxu0 0
        %7394 = vmatprep.subr.bf16.mxu0 0
        %7395 = vmatpush1.bf16.msra.mxu0 0
        %7396 = vmatprep.subr.bf16.mxu0 0
        %7397 = vmatpush1.bf16.msra.mxu0 0
        %7398 = vmatprep.subr.bf16.mxu0 0
        %7399 = vmatpush1.bf16.msra.mxu0 0
        %7400 = vmatprep.subr.bf16.mxu0 0
        %7401 = vmatpush1.bf16.msra.mxu0 0
        %7402 = vmatprep.subr.bf16.mxu0 0
        %7403 = vmatpush1.bf16.msra.mxu0 0
        %7404 = vmatprep.subr.bf16.mxu0 0
        %7405 = vmatpush1.bf16.msra.mxu0 0
        %7406 = vmatprep.subr.bf16.mxu0 0
        %7407 = vmatpush1.bf16.msra.mxu0 0
        %7408 = vmatprep.subr.bf16.mxu0 0
        %7409 = vmatpush1.bf16.msra.mxu0 0
        %7410 = vmatprep.subr.bf16.mxu0 0
        %7411 = vmatpush1.bf16.msra.mxu0 0
        %7412 = vmatprep.subr.bf16.mxu0 0
        %7413 = vmatpush1.bf16.msra.mxu0 0
        %7414 = vmatprep.mubr.bf16.mxu0 0
        %7415 = vmatmul.mubr.bf16.gmra.mrb[0].mxu0 %v7380
        %v7416 = vpop.f32.mrb[0].mxu0
        %v7417 = vadd.f32 0.0, %v7416
        %v7418 = vpop.f32.mrb[0].mxu0
        %v7419 = vpop.f32.mrb[0].mxu0
        %v7420 = vpop.f32.mrb[0].mxu0
        %7421 = vdwg.mxu0
        %v7422 = vadd.f32 %v7343, %v7417
        %v7423 = vmax.f32 %v7422, 0.0
        %v7424 = vpack.c.bf16 %v7423, %v7423
        %v7425 = vld [vmem:[%s43] sm:$0xf]
        %v7426 = vld [vmem:[%s43 + $0x4] sm:$0xf]
        %v7427 = vld [vmem:[%s43 + $0x8] sm:$0xf]
        %v7428 = vld [vmem:[%s43 + $0xc] sm:$0xf]
        %v7429 = vld [vmem:[%s43 + $0x10] sm:$0xf]
        %v7430 = vld [vmem:[%s43 + $0x14] sm:$0xf]
        %v7431 = vld [vmem:[%s43 + $0x18] sm:$0xf]
        %v7432 = vld [vmem:[%s43 + $0x1c] sm:$0xf]
        %v7433 = vld [vmem:[#allocation31] sm:$0x1]
        %v7442 = vunpack.c.l.b16 %v7425
        %v7443 = vunpack.c.l.b16 %v7426
        %v7444 = vunpack.c.l.b16 %v7427
        %v7445 = vunpack.c.l.b16 %v7428
        %v7446 = vunpack.c.l.b16 %v7429
        %v7447 = vunpack.c.l.b16 %v7430
        %v7448 = vunpack.c.l.b16 %v7431
        %v7449 = vunpack.c.l.b16 %v7432
        %v7450 = vpack.c.b16 %v7443, %v7442
        %v7451 = vpack.c.b16 %v7445, %v7444
        %v7452 = vpack.c.b16 %v7447, %v7446
        %v7453 = vpack.c.b16 %v7449, %v7448
        %v7459 = vsel %vm1220, %v7424, 0
        %7461 = vmatprep.subr.bf16.mxu0 0
        %7462 = vmatpush1.bf16.msra.mxu0 %v7450
        %7463 = vmatprep.subr.bf16.mxu0 0
        %7464 = vmatpush1.bf16.msra.mxu0 %v7451
        %7465 = vmatprep.subr.bf16.mxu0 0
        %7466 = vmatpush1.bf16.msra.mxu0 %v7452
        %7467 = vmatprep.subr.bf16.mxu0 0
        %7468 = vmatpush1.bf16.msra.mxu0 %v7453
        %7469 = vmatprep.subr.bf16.mxu0 0
        %7470 = vmatpush1.bf16.msra.mxu0 0
        %7471 = vmatprep.subr.bf16.mxu0 0
        %7472 = vmatpush1.bf16.msra.mxu0 0
        %7473 = vmatprep.subr.bf16.mxu0 0
        %7474 = vmatpush1.bf16.msra.mxu0 0
        %7475 = vmatprep.subr.bf16.mxu0 0
        %7476 = vmatpush1.bf16.msra.mxu0 0
        %7477 = vmatprep.subr.bf16.mxu0 0
        %7478 = vmatpush1.bf16.msra.mxu0 0
        %7479 = vmatprep.subr.bf16.mxu0 0
        %7480 = vmatpush1.bf16.msra.mxu0 0
        %7481 = vmatprep.subr.bf16.mxu0 0
        %7482 = vmatpush1.bf16.msra.mxu0 0
        %7483 = vmatprep.subr.bf16.mxu0 0
        %7484 = vmatpush1.bf16.msra.mxu0 0
        %7485 = vmatprep.subr.bf16.mxu0 0
        %7486 = vmatpush1.bf16.msra.mxu0 0
        %7487 = vmatprep.subr.bf16.mxu0 0
        %7488 = vmatpush1.bf16.msra.mxu0 0
        %7489 = vmatprep.subr.bf16.mxu0 0
        %7490 = vmatpush1.bf16.msra.mxu0 0
        %7491 = vmatprep.subr.bf16.mxu0 0
        %7492 = vmatpush1.bf16.msra.mxu0 0
        %7493 = vmatprep.mubr.bf16.mxu0 0
        %7494 = vmatmul.mubr.bf16.gmra.mrb[0].mxu0 %v7459
        %v7495 = vpop.f32.mrb[0].mxu0
        %v7496 = vadd.f32 %v7433, %v7495
        %v7497 = vpop.f32.mrb[0].mxu0
        %v7498 = vpop.f32.mrb[0].mxu0
        %v7499 = vpop.f32.mrb[0].mxu0
        %7500 = vdwg.mxu0
        %vm7501 = vcmask 122880
        %7502 = vst.msk [vmem:[%s1145] sm:$0x1] %vm7501, %v7496
        %v7503 = vlaneseq
        %v7504 = vand.u32 %v7503, 127
        %v7505 = vld [vmem:[%s47] sm:$0xf]
        %v7506 = vld [vmem:[%s47 + $0x4] sm:$0xf]
        %v7507 = vld [vmem:[%s47 + $0x8] sm:$0xf]
        %v7508 = vld [vmem:[%s47 + $0xc] sm:$0xf]
        %v7509 = vld [vmem:[%s47 + $0x10] sm:$0xf]
        %v7510 = vld [vmem:[%s47 + $0x14] sm:$0xf]
        %v7511 = vld [vmem:[%s47 + $0x18] sm:$0xf]
        %v7512 = vld [vmem:[%s47 + $0x1c] sm:$0xf]
        %v7513 = vld [vmem:[%s49] sm:$0x1]
        %v7522 = vunpack.c.l.b16 %v7505
        %v7523 = vunpack.c.l.b16 %v7506
        %v7524 = vunpack.c.l.b16 %v7507
        %v7525 = vunpack.c.l.b16 %v7508
        %v7526 = vunpack.c.l.b16 %v7509
        %v7527 = vunpack.c.l.b16 %v7510
        %v7528 = vunpack.c.l.b16 %v7511
        %v7529 = vunpack.c.l.b16 %v7512
        %v7530 = vpack.c.b16 %v7523, %v7522
        %v7531 = vpack.c.b16 %v7525, %v7524
        %v7532 = vpack.c.b16 %v7527, %v7526
        %v7533 = vpack.c.b16 %v7529, %v7528
        %7538 = vmatprep.subr.bf16.mxu0 0
        %7539 = vmatpush1.bf16.msra.mxu0 %v7530
        %7540 = vmatprep.subr.bf16.mxu0 0
        %7541 = vmatpush1.bf16.msra.mxu0 %v7531
        %7542 = vmatprep.subr.bf16.mxu0 0
        %7543 = vmatpush1.bf16.msra.mxu0 %v7532
        %7544 = vmatprep.subr.bf16.mxu0 0
        %7545 = vmatpush1.bf16.msra.mxu0 %v7533
        %7546 = vmatprep.subr.bf16.mxu0 0
        %7547 = vmatpush1.bf16.msra.mxu0 0
        %7548 = vmatprep.subr.bf16.mxu0 0
        %7549 = vmatpush1.bf16.msra.mxu0 0
        %7550 = vmatprep.subr.bf16.mxu0 0
        %7551 = vmatpush1.bf16.msra.mxu0 0
        %7552 = vmatprep.subr.bf16.mxu0 0
        %7553 = vmatpush1.bf16.msra.mxu0 0
        %7554 = vmatprep.subr.bf16.mxu0 0
        %7555 = vmatpush1.bf16.msra.mxu0 0
        %7556 = vmatprep.subr.bf16.mxu0 0
        %7557 = vmatpush1.bf16.msra.mxu0 0
        %7558 = vmatprep.subr.bf16.mxu0 0
        %7559 = vmatpush1.bf16.msra.mxu0 0
        %7560 = vmatprep.subr.bf16.mxu0 0
        %7561 = vmatpush1.bf16.msra.mxu0 0
        %7562 = vmatprep.subr.bf16.mxu0 0
        %7563 = vmatpush1.bf16.msra.mxu0 0
        %7564 = vmatprep.subr.bf16.mxu0 0
        %7565 = vmatpush1.bf16.msra.mxu0 0
        %7566 = vmatprep.subr.bf16.mxu0 0
        %7567 = vmatpush1.bf16.msra.mxu0 0
        %7568 = vmatprep.subr.bf16.mxu0 0
        %7569 = vmatpush1.bf16.msra.mxu0 0
        %7570 = vmatprep.mubr.bf16.mxu0 0
        %7571 = vmatmul.mubr.bf16.gmra.mrb[0].mxu0 %v7459
        %v7572 = vpop.f32.mrb[0].mxu0
        %v7573 = vadd.f32 %v7513, %v7572
        %v7574 = vpop.f32.mrb[0].mxu0
        %v7575 = vpop.f32.mrb[0].mxu0
        %v7576 = vpop.f32.mrb[0].mxu0
        %7577 = vdwg.mxu0
        %vm7578 = vcmask 57344
        %v7579 = vsel %vm7578, %v7573, inf
        %7580 = vmin.xlane.f32.xlu0 %v7579
        %v7581 = vpop.xlane.xlu0 %7580
        %vm7582 = vcmp.eq.f32.partialorder %v7573, %v7581
        %v7583 = vsel %vm7582, %v7504, 8
        %v7584 = vsel %vm7578, %v7583, 2147483647
        %v7585 = vand.u32 %v7584, 65535
        %v7586 = vshra.s32 %v7584, 16
        %v7587 = vcvt.s32.f32 %v7585
        %v7588 = vcvt.s32.f32 %v7586
        %7589 = vmin.xlane.f32.xlu0 %v7588
        %v7590 = vpop.xlane.xlu0 %7589
        %vm7591 = vcmp.eq.f32.partialorder %v7588, %v7590
        %v7592 = vsel %vm7591, %v7587, inf
        %7593 = vmin.xlane.f32.xlu0 %v7592
        %v7594 = vpop.xlane.xlu0 %7593
        %v7595 = vcvt.f32.s32 %v7594
        %v7596 = vcvt.f32.s32 %v7590
        %v7597 = vshll.u32 %v7596, 16
        %v7598 = vadd.s32 %v7597, %v7595
        %vm7599 = vcmp.eq.s32.totalorder %v7504, %v7598
        %v7600 = vsel %vm7599, 1, 0
        %v7601 = vcvt.s32.f32 %v7600
        %v7602 = vld [vmem:[%s51] sm:$0xff]
        %v7603 = vadd.f32 %v7601, 0.0
        %vm7604 = vcmp.eq.s32.totalorder %v7504, 0
        %v7605 = vsel %vm7604, %v7598, 0
        %s7606 = scalar_lea.vmem %s47, 32
        %v7607 = vld [vmem:[%s7606] sm:$0xf]
        %v7608 = vld [vmem:[%s7606 + $0x4] sm:$0xf]
        %v7609 = vld [vmem:[%s7606 + $0x8] sm:$0xf]
        %v7610 = vld [vmem:[%s7606 + $0xc] sm:$0xf]
        %v7611 = vld [vmem:[%s7606 + $0x10] sm:$0xf]
        %v7612 = vld [vmem:[%s7606 + $0x14] sm:$0xf]
        %v7613 = vld [vmem:[%s7606 + $0x18] sm:$0xf]
        %v7614 = vld [vmem:[%s7606 + $0x1c] sm:$0xf]
        %v7615 = vld [vmem:[%s49 + $0x1] sm:$0x1]
        %v7624 = vunpack.c.l.b16 %v7607
        %v7625 = vunpack.c.l.b16 %v7608
        %v7626 = vunpack.c.l.b16 %v7609
        %v7627 = vunpack.c.l.b16 %v7610
        %v7628 = vunpack.c.l.b16 %v7611
        %v7629 = vunpack.c.l.b16 %v7612
        %v7630 = vunpack.c.l.b16 %v7613
        %v7631 = vunpack.c.l.b16 %v7614
        %v7632 = vpack.c.b16 %v7625, %v7624
        %v7633 = vpack.c.b16 %v7627, %v7626
        %v7634 = vpack.c.b16 %v7629, %v7628
        %v7635 = vpack.c.b16 %v7631, %v7630
        %7640 = vmatprep.subr.bf16.mxu0 0
        %7641 = vmatpush1.bf16.msra.mxu0 %v7632
        %7642 = vmatprep.subr.bf16.mxu0 0
        %7643 = vmatpush1.bf16.msra.mxu0 %v7633
        %7644 = vmatprep.subr.bf16.mxu0 0
        %7645 = vmatpush1.bf16.msra.mxu0 %v7634
        %7646 = vmatprep.subr.bf16.mxu0 0
        %7647 = vmatpush1.bf16.msra.mxu0 %v7635
        %7648 = vmatprep.subr.bf16.mxu0 0
        %7649 = vmatpush1.bf16.msra.mxu0 0
        %7650 = vmatprep.subr.bf16.mxu0 0
        %7651 = vmatpush1.bf16.msra.mxu0 0
        %7652 = vmatprep.subr.bf16.mxu0 0
        %7653 = vmatpush1.bf16.msra.mxu0 0
        %7654 = vmatprep.subr.bf16.mxu0 0
        %7655 = vmatpush1.bf16.msra.mxu0 0
        %7656 = vmatprep.subr.bf16.mxu0 0
        %7657 = vmatpush1.bf16.msra.mxu0 0
        %7658 = vmatprep.subr.bf16.mxu0 0
        %7659 = vmatpush1.bf16.msra.mxu0 0
        %7660 = vmatprep.subr.bf16.mxu0 0
        %7661 = vmatpush1.bf16.msra.mxu0 0
        %7662 = vmatprep.subr.bf16.mxu0 0
        %7663 = vmatpush1.bf16.msra.mxu0 0
        %7664 = vmatprep.subr.bf16.mxu0 0
        %7665 = vmatpush1.bf16.msra.mxu0 0
        %7666 = vmatprep.subr.bf16.mxu0 0
        %7667 = vmatpush1.bf16.msra.mxu0 0
        %7668 = vmatprep.subr.bf16.mxu0 0
        %7669 = vmatpush1.bf16.msra.mxu0 0
        %7670 = vmatprep.subr.bf16.mxu0 0
        %7671 = vmatpush1.bf16.msra.mxu0 0
        %7672 = vmatprep.mubr.bf16.mxu0 0
        %7673 = vmatmul.mubr.bf16.gmra.mrb[0].mxu0 %v7459
        %v7674 = vpop.f32.mrb[0].mxu0
        %v7675 = vadd.f32 %v7615, %v7674
        %v7676 = vpop.f32.mrb[0].mxu0
        %v7677 = vpop.f32.mrb[0].mxu0
        %v7678 = vpop.f32.mrb[0].mxu0
        %7679 = vdwg.mxu0
        %v7680 = vsel %vm7578, %v7675, inf
        %7681 = vmin.xlane.f32.xlu0 %v7680
        %v7682 = vpop.xlane.xlu0 %7681
        %vm7683 = vcmp.eq.f32.partialorder %v7675, %v7682
        %v7684 = vsel %vm7683, %v7504, 8
        %v7685 = vsel %vm7578, %v7684, 2147483647
        %v7686 = vand.u32 %v7685, 65535
        %v7687 = vshra.s32 %v7685, 16
        %v7688 = vcvt.s32.f32 %v7686
        %v7689 = vcvt.s32.f32 %v7687
        %7690 = vmin.xlane.f32.xlu0 %v7689
        %v7691 = vpop.xlane.xlu0 %7690
        %vm7692 = vcmp.eq.f32.partialorder %v7689, %v7691
        %v7693 = vsel %vm7692, %v7688, inf
        %7694 = vmin.xlane.f32.xlu0 %v7693
        %v7695 = vpop.xlane.xlu0 %7694
        %v7696 = vcvt.f32.s32 %v7695
        %v7697 = vcvt.f32.s32 %v7691
        %v7698 = vshll.u32 %v7697, 16
        %v7699 = vadd.s32 %v7698, %v7696
        %vm7700 = vcmp.eq.s32.totalorder %v7504, %v7699
        %v7701 = vsel %vm7700, 1, 0
        %v7702 = vcvt.s32.f32 %v7701
        %s7703 = scalar_lea.vmem %s51, 8
        %v7704 = vld [vmem:[%s7703] sm:$0xff]
        %v7706 = vsel %vm4350, %v7702, 0
        %7708 = vmatprep.subr.mxu0 0.0
        %7709 = vmatpush1.msra.mxu0 %v7704
        %7710 = vmatprep.subr.mxu0 0.0
        %7711 = vmatpush1.msra.mxu0 0.0
        %7712 = vmatprep.subr.mxu0 0.0
        %7713 = vmatpush1.msra.mxu0 0.0
        %7714 = vmatprep.subr.mxu0 0.0
        %7715 = vmatpush1.msra.mxu0 0.0
        %7716 = vmatprep.subr.mxu0 0.0
        %7717 = vmatpush1.msra.mxu0 0.0
        %7718 = vmatprep.subr.mxu0 0.0
        %7719 = vmatpush1.msra.mxu0 0.0
        %7720 = vmatprep.subr.mxu0 0.0
        %7721 = vmatpush1.msra.mxu0 0.0
        %7722 = vmatprep.subr.mxu0 0.0
        %7723 = vmatpush1.msra.mxu0 0.0
        %7724 = vmatprep.subr.mxu0 0.0
        %7725 = vmatpush1.msra.mxu0 0.0
        %7726 = vmatprep.subr.mxu0 0.0
        %7727 = vmatpush1.msra.mxu0 0.0
        %7728 = vmatprep.subr.mxu0 0.0
        %7729 = vmatpush1.msra.mxu0 0.0
        %7730 = vmatprep.subr.mxu0 0.0
        %7731 = vmatpush1.msra.mxu0 0.0
        %7732 = vmatprep.subr.mxu0 0.0
        %7733 = vmatpush1.msra.mxu0 0.0
        %7734 = vmatprep.subr.mxu0 0.0
        %7735 = vmatpush1.msra.mxu0 0.0
        %7736 = vmatprep.subr.mxu0 0.0
        %7737 = vmatpush1.msra.mxu0 0.0
        %7738 = vmatprep.subr.mxu0 0.0
        %7739 = vmatpush1.msra.mxu0 0.0
        %7740 = vmatprep.subr.mxu0 0.0
        %7741 = vmatpush1.msra.mxu0 0.0
        %7742 = vmatprep.subr.mxu0 0.0
        %7743 = vmatpush1.msra.mxu0 0.0
        %7744 = vmatprep.subr.mxu0 0.0
        %7745 = vmatpush1.msra.mxu0 0.0
        %7746 = vmatprep.subr.mxu0 0.0
        %7747 = vmatpush1.msra.mxu0 0.0
        %7748 = vmatprep.subr.mxu0 0.0
        %7749 = vmatpush1.msra.mxu0 0.0
        %7750 = vmatprep.subr.mxu0 0.0
        %7751 = vmatpush1.msra.mxu0 0.0
        %7752 = vmatprep.subr.mxu0 0.0
        %7753 = vmatpush1.msra.mxu0 0.0
        %7754 = vmatprep.subr.mxu0 0.0
        %7755 = vmatpush1.msra.mxu0 0.0
        %7756 = vmatprep.subr.mxu0 0.0
        %7757 = vmatpush1.msra.mxu0 0.0
        %7758 = vmatprep.subr.mxu0 0.0
        %7759 = vmatpush1.msra.mxu0 0.0
        %7760 = vmatprep.subr.mxu0 0.0
        %7761 = vmatpush1.msra.mxu0 0.0
        %7762 = vmatprep.subr.mxu0 0.0
        %7763 = vmatpush1.msra.mxu0 0.0
        %7764 = vmatprep.subr.mxu0 0.0
        %7765 = vmatpush1.msra.mxu0 0.0
        %7766 = vmatprep.subr.mxu0 0.0
        %7767 = vmatpush1.msra.mxu0 0.0
        %7768 = vmatprep.subr.mxu0 0.0
        %7769 = vmatpush1.msra.mxu0 0.0
        %7770 = vmatprep.subr.mxu0 0.0
        %7771 = vmatpush1.msra.mxu0 0.0
        %7772 = vmatprep.mubr.f32.mxu0 0.0
        %7773 = vmatmul.mubr.f32.gmra.mrb[0].mxu0 %v7706
        %v7774 = vpop.f32.mrb[0].mxu0
        %v7775 = vadd.f32 0.0, %v7774
        %v7776 = vpop.f32.mrb[0].mxu0
        %7777 = vdwg.mxu0
        %v7779 = vsel %vm4350, %v7601, 0
        %7781 = vmatprep.subr.mxu0 0.0
        %7782 = vmatpush1.msra.mxu0 %v7602
        %7783 = vmatprep.subr.mxu0 0.0
        %7784 = vmatpush1.msra.mxu0 0.0
        %7785 = vmatprep.subr.mxu0 0.0
        %7786 = vmatpush1.msra.mxu0 0.0
        %7787 = vmatprep.subr.mxu0 0.0
        %7788 = vmatpush1.msra.mxu0 0.0
        %7789 = vmatprep.subr.mxu0 0.0
        %7790 = vmatpush1.msra.mxu0 0.0
        %7791 = vmatprep.subr.mxu0 0.0
        %7792 = vmatpush1.msra.mxu0 0.0
        %7793 = vmatprep.subr.mxu0 0.0
        %7794 = vmatpush1.msra.mxu0 0.0
        %7795 = vmatprep.subr.mxu0 0.0
        %7796 = vmatpush1.msra.mxu0 0.0
        %7797 = vmatprep.subr.mxu0 0.0
        %7798 = vmatpush1.msra.mxu0 0.0
        %7799 = vmatprep.subr.mxu0 0.0
        %7800 = vmatpush1.msra.mxu0 0.0
        %7801 = vmatprep.subr.mxu0 0.0
        %7802 = vmatpush1.msra.mxu0 0.0
        %7803 = vmatprep.subr.mxu0 0.0
        %7804 = vmatpush1.msra.mxu0 0.0
        %7805 = vmatprep.subr.mxu0 0.0
        %7806 = vmatpush1.msra.mxu0 0.0
        %7807 = vmatprep.subr.mxu0 0.0
        %7808 = vmatpush1.msra.mxu0 0.0
        %7809 = vmatprep.subr.mxu0 0.0
        %7810 = vmatpush1.msra.mxu0 0.0
        %7811 = vmatprep.subr.mxu0 0.0
        %7812 = vmatpush1.msra.mxu0 0.0
        %7813 = vmatprep.subr.mxu0 0.0
        %7814 = vmatpush1.msra.mxu0 0.0
        %7815 = vmatprep.subr.mxu0 0.0
        %7816 = vmatpush1.msra.mxu0 0.0
        %7817 = vmatprep.subr.mxu0 0.0
        %7818 = vmatpush1.msra.mxu0 0.0
        %7819 = vmatprep.subr.mxu0 0.0
        %7820 = vmatpush1.msra.mxu0 0.0
        %7821 = vmatprep.subr.mxu0 0.0
        %7822 = vmatpush1.msra.mxu0 0.0
        %7823 = vmatprep.subr.mxu0 0.0
        %7824 = vmatpush1.msra.mxu0 0.0
        %7825 = vmatprep.subr.mxu0 0.0
        %7826 = vmatpush1.msra.mxu0 0.0
        %7827 = vmatprep.subr.mxu0 0.0
        %7828 = vmatpush1.msra.mxu0 0.0
        %7829 = vmatprep.subr.mxu0 0.0
        %7830 = vmatpush1.msra.mxu0 0.0
        %7831 = vmatprep.subr.mxu0 0.0
        %7832 = vmatpush1.msra.mxu0 0.0
        %7833 = vmatprep.subr.mxu0 0.0
        %7834 = vmatpush1.msra.mxu0 0.0
        %7835 = vmatprep.subr.mxu0 0.0
        %7836 = vmatpush1.msra.mxu0 0.0
        %7837 = vmatprep.subr.mxu0 0.0
        %7838 = vmatpush1.msra.mxu0 0.0
        %7839 = vmatprep.subr.mxu0 0.0
        %7840 = vmatpush1.msra.mxu0 0.0
        %7841 = vmatprep.subr.mxu0 0.0
        %7842 = vmatpush1.msra.mxu0 0.0
        %7843 = vmatprep.subr.mxu0 0.0
        %7844 = vmatpush1.msra.mxu0 0.0
        %7845 = vmatprep.mubr.f32.mxu0 0.0
        %7846 = vmatmul.mubr.f32.gmra.mrb[0].mxu0 %v7779
        %v7847 = vpop.f32.mrb[0].mxu0
        %v7848 = vadd.f32 %v7775, %v7847
        %v7849 = vpop.f32.mrb[0].mxu0
        %7850 = vdwg.mxu0
        %v7851 = vadd.f32 %v7603, %v7702
        %vm7852 = vcmp.eq.s32.totalorder %v7504, 1
        %v7853 = vsel %vm7852, %v7699, %v7605
        %s7854 = scalar_lea.vmem %s47, 64
        %v7855 = vld [vmem:[%s7854] sm:$0xf]
        %v7856 = vld [vmem:[%s7854 + $0x4] sm:$0xf]
        %v7857 = vld [vmem:[%s7854 + $0x8] sm:$0xf]
        %v7858 = vld [vmem:[%s7854 + $0xc] sm:$0xf]
        %v7859 = vld [vmem:[%s7854 + $0x10] sm:$0xf]
        %v7860 = vld [vmem:[%s7854 + $0x14] sm:$0xf]
        %v7861 = vld [vmem:[%s7854 + $0x18] sm:$0xf]
        %v7862 = vld [vmem:[%s7854 + $0x1c] sm:$0xf]
        %v7863 = vld [vmem:[%s49 + $0x2] sm:$0x1]
        %v7872 = vunpack.c.l.b16 %v7855
        %v7873 = vunpack.c.l.b16 %v7856
        %v7874 = vunpack.c.l.b16 %v7857
        %v7875 = vunpack.c.l.b16 %v7858
        %v7876 = vunpack.c.l.b16 %v7859
        %v7877 = vunpack.c.l.b16 %v7860
        %v7878 = vunpack.c.l.b16 %v7861
        %v7879 = vunpack.c.l.b16 %v7862
        %v7880 = vpack.c.b16 %v7873, %v7872
        %v7881 = vpack.c.b16 %v7875, %v7874
        %v7882 = vpack.c.b16 %v7877, %v7876
        %v7883 = vpack.c.b16 %v7879, %v7878
        %7888 = vmatprep.subr.bf16.mxu0 0
        %7889 = vmatpush1.bf16.msra.mxu0 %v7880
        %7890 = vmatprep.subr.bf16.mxu0 0
        %7891 = vmatpush1.bf16.msra.mxu0 %v7881
        %7892 = vmatprep.subr.bf16.mxu0 0
        %7893 = vmatpush1.bf16.msra.mxu0 %v7882
        %7894 = vmatprep.subr.bf16.mxu0 0
        %7895 = vmatpush1.bf16.msra.mxu0 %v7883
        %7896 = vmatprep.subr.bf16.mxu0 0
        %7897 = vmatpush1.bf16.msra.mxu0 0
        %7898 = vmatprep.subr.bf16.mxu0 0
        %7899 = vmatpush1.bf16.msra.mxu0 0
        %7900 = vmatprep.subr.bf16.mxu0 0
        %7901 = vmatpush1.bf16.msra.mxu0 0
        %7902 = vmatprep.subr.bf16.mxu0 0
        %7903 = vmatpush1.bf16.msra.mxu0 0
        %7904 = vmatprep.subr.bf16.mxu0 0
        %7905 = vmatpush1.bf16.msra.mxu0 0
        %7906 = vmatprep.subr.bf16.mxu0 0
        %7907 = vmatpush1.bf16.msra.mxu0 0
        %7908 = vmatprep.subr.bf16.mxu0 0
        %7909 = vmatpush1.bf16.msra.mxu0 0
        %7910 = vmatprep.subr.bf16.mxu0 0
        %7911 = vmatpush1.bf16.msra.mxu0 0
        %7912 = vmatprep.subr.bf16.mxu0 0
        %7913 = vmatpush1.bf16.msra.mxu0 0
        %7914 = vmatprep.subr.bf16.mxu0 0
        %7915 = vmatpush1.bf16.msra.mxu0 0
        %7916 = vmatprep.subr.bf16.mxu0 0
        %7917 = vmatpush1.bf16.msra.mxu0 0
        %7918 = vmatprep.subr.bf16.mxu0 0
        %7919 = vmatpush1.bf16.msra.mxu0 0
        %7920 = vmatprep.mubr.bf16.mxu0 0
        %7921 = vmatmul.mubr.bf16.gmra.mrb[0].mxu0 %v7459
        %v7922 = vpop.f32.mrb[0].mxu0
        %v7923 = vadd.f32 %v7863, %v7922
        %v7924 = vpop.f32.mrb[0].mxu0
        %v7925 = vpop.f32.mrb[0].mxu0
        %v7926 = vpop.f32.mrb[0].mxu0
        %7927 = vdwg.mxu0
        %v7928 = vsel %vm7578, %v7923, inf
        %7929 = vmin.xlane.f32.xlu0 %v7928
        %v7930 = vpop.xlane.xlu0 %7929
        %vm7931 = vcmp.eq.f32.partialorder %v7923, %v7930
        %v7932 = vsel %vm7931, %v7504, 8
        %v7933 = vsel %vm7578, %v7932, 2147483647
        %v7934 = vand.u32 %v7933, 65535
        %v7935 = vshra.s32 %v7933, 16
        %v7936 = vcvt.s32.f32 %v7934
        %v7937 = vcvt.s32.f32 %v7935
        %7938 = vmin.xlane.f32.xlu0 %v7937
        %v7939 = vpop.xlane.xlu0 %7938
        %vm7940 = vcmp.eq.f32.partialorder %v7937, %v7939
        %v7941 = vsel %vm7940, %v7936, inf
        %7942 = vmin.xlane.f32.xlu0 %v7941
        %v7943 = vpop.xlane.xlu0 %7942
        %v7944 = vcvt.f32.s32 %v7943
        %v7945 = vcvt.f32.s32 %v7939
        %v7946 = vshll.u32 %v7945, 16
        %v7947 = vadd.s32 %v7946, %v7944
        %vm7948 = vcmp.eq.s32.totalorder %v7504, %v7947
        %v7949 = vsel %vm7948, 1, 0
        %v7950 = vcvt.s32.f32 %v7949
        %s7951 = scalar_lea.vmem %s51, 16
        %v7952 = vld [vmem:[%s7951] sm:$0xff]
        %v7954 = vsel %vm4350, %v7950, 0
        %7956 = vmatprep.subr.mxu0 0.0
        %7957 = vmatpush1.msra.mxu0 %v7952
        %7958 = vmatprep.subr.mxu0 0.0
        %7959 = vmatpush1.msra.mxu0 0.0
        %7960 = vmatprep.subr.mxu0 0.0
        %7961 = vmatpush1.msra.mxu0 0.0
        %7962 = vmatprep.subr.mxu0 0.0
        %7963 = vmatpush1.msra.mxu0 0.0
        %7964 = vmatprep.subr.mxu0 0.0
        %7965 = vmatpush1.msra.mxu0 0.0
        %7966 = vmatprep.subr.mxu0 0.0
        %7967 = vmatpush1.msra.mxu0 0.0
        %7968 = vmatprep.subr.mxu0 0.0
        %7969 = vmatpush1.msra.mxu0 0.0
        %7970 = vmatprep.subr.mxu0 0.0
        %7971 = vmatpush1.msra.mxu0 0.0
        %7972 = vmatprep.subr.mxu0 0.0
        %7973 = vmatpush1.msra.mxu0 0.0
        %7974 = vmatprep.subr.mxu0 0.0
        %7975 = vmatpush1.msra.mxu0 0.0
        %7976 = vmatprep.subr.mxu0 0.0
        %7977 = vmatpush1.msra.mxu0 0.0
        %7978 = vmatprep.subr.mxu0 0.0
        %7979 = vmatpush1.msra.mxu0 0.0
        %7980 = vmatprep.subr.mxu0 0.0
        %7981 = vmatpush1.msra.mxu0 0.0
        %7982 = vmatprep.subr.mxu0 0.0
        %7983 = vmatpush1.msra.mxu0 0.0
        %7984 = vmatprep.subr.mxu0 0.0
        %7985 = vmatpush1.msra.mxu0 0.0
        %7986 = vmatprep.subr.mxu0 0.0
        %7987 = vmatpush1.msra.mxu0 0.0
        %7988 = vmatprep.subr.mxu0 0.0
        %7989 = vmatpush1.msra.mxu0 0.0
        %7990 = vmatprep.subr.mxu0 0.0
        %7991 = vmatpush1.msra.mxu0 0.0
        %7992 = vmatprep.subr.mxu0 0.0
        %7993 = vmatpush1.msra.mxu0 0.0
        %7994 = vmatprep.subr.mxu0 0.0
        %7995 = vmatpush1.msra.mxu0 0.0
        %7996 = vmatprep.subr.mxu0 0.0
        %7997 = vmatpush1.msra.mxu0 0.0
        %7998 = vmatprep.subr.mxu0 0.0
        %7999 = vmatpush1.msra.mxu0 0.0
        %8000 = vmatprep.subr.mxu0 0.0
        %8001 = vmatpush1.msra.mxu0 0.0
        %8002 = vmatprep.subr.mxu0 0.0
        %8003 = vmatpush1.msra.mxu0 0.0
        %8004 = vmatprep.subr.mxu0 0.0
        %8005 = vmatpush1.msra.mxu0 0.0
        %8006 = vmatprep.subr.mxu0 0.0
        %8007 = vmatpush1.msra.mxu0 0.0
        %8008 = vmatprep.subr.mxu0 0.0
        %8009 = vmatpush1.msra.mxu0 0.0
        %8010 = vmatprep.subr.mxu0 0.0
        %8011 = vmatpush1.msra.mxu0 0.0
        %8012 = vmatprep.subr.mxu0 0.0
        %8013 = vmatpush1.msra.mxu0 0.0
        %8014 = vmatprep.subr.mxu0 0.0
        %8015 = vmatpush1.msra.mxu0 0.0
        %8016 = vmatprep.subr.mxu0 0.0
        %8017 = vmatpush1.msra.mxu0 0.0
        %8018 = vmatprep.subr.mxu0 0.0
        %8019 = vmatpush1.msra.mxu0 0.0
        %8020 = vmatprep.mubr.f32.mxu0 0.0
        %8021 = vmatmul.mubr.f32.gmra.mrb[0].mxu0 %v7954
        %v8022 = vpop.f32.mrb[0].mxu0
        %v8023 = vadd.f32 0.0, %v8022
        %v8024 = vpop.f32.mrb[0].mxu0
        %8025 = vdwg.mxu0
        %v8026 = vadd.f32 %v7848, %v8023
        %v8027 = vadd.s32 %v7947, 8
        %vm8028 = vcmp.eq.s32.totalorder %v7504, %v8027
        %v8029 = vsel %vm8028, 1, 0
        %v8030 = vcvt.s32.f32 %v8029
        %v8031 = vadd.f32 %v7851, %v8030
        %vm8032 = vcmp.eq.s32.totalorder %v7504, 2
        %v8033 = vsel %vm8032, %v7947, %v7853
        %s8034 = scalar_lea.vmem %s47, 96
        %v8035 = vld [vmem:[%s8034] sm:$0xf]
        %v8036 = vld [vmem:[%s8034 + $0x4] sm:$0xf]
        %v8037 = vld [vmem:[%s8034 + $0x8] sm:$0xf]
        %v8038 = vld [vmem:[%s8034 + $0xc] sm:$0xf]
        %v8039 = vld [vmem:[%s8034 + $0x10] sm:$0xf]
        %v8040 = vld [vmem:[%s8034 + $0x14] sm:$0xf]
        %v8041 = vld [vmem:[%s8034 + $0x18] sm:$0xf]
        %v8042 = vld [vmem:[%s8034 + $0x1c] sm:$0xf]
        %v8043 = vld [vmem:[%s49 + $0x3] sm:$0x1]
        %v8052 = vunpack.c.l.b16 %v8035
        %v8053 = vunpack.c.l.b16 %v8036
        %v8054 = vunpack.c.l.b16 %v8037
        %v8055 = vunpack.c.l.b16 %v8038
        %v8056 = vunpack.c.l.b16 %v8039
        %v8057 = vunpack.c.l.b16 %v8040
        %v8058 = vunpack.c.l.b16 %v8041
        %v8059 = vunpack.c.l.b16 %v8042
        %v8060 = vpack.c.b16 %v8053, %v8052
        %v8061 = vpack.c.b16 %v8055, %v8054
        %v8062 = vpack.c.b16 %v8057, %v8056
        %v8063 = vpack.c.b16 %v8059, %v8058
        %8068 = vmatprep.subr.bf16.mxu0 0
        %8069 = vmatpush1.bf16.msra.mxu0 %v8060
        %8070 = vmatprep.subr.bf16.mxu0 0
        %8071 = vmatpush1.bf16.msra.mxu0 %v8061
        %8072 = vmatprep.subr.bf16.mxu0 0
        %8073 = vmatpush1.bf16.msra.mxu0 %v8062
        %8074 = vmatprep.subr.bf16.mxu0 0
        %8075 = vmatpush1.bf16.msra.mxu0 %v8063
        %8076 = vmatprep.subr.bf16.mxu0 0
        %8077 = vmatpush1.bf16.msra.mxu0 0
        %8078 = vmatprep.subr.bf16.mxu0 0
        %8079 = vmatpush1.bf16.msra.mxu0 0
        %8080 = vmatprep.subr.bf16.mxu0 0
        %8081 = vmatpush1.bf16.msra.mxu0 0
        %8082 = vmatprep.subr.bf16.mxu0 0
        %8083 = vmatpush1.bf16.msra.mxu0 0
        %8084 = vmatprep.subr.bf16.mxu0 0
        %8085 = vmatpush1.bf16.msra.mxu0 0
        %8086 = vmatprep.subr.bf16.mxu0 0
        %8087 = vmatpush1.bf16.msra.mxu0 0
        %8088 = vmatprep.subr.bf16.mxu0 0
        %8089 = vmatpush1.bf16.msra.mxu0 0
        %8090 = vmatprep.subr.bf16.mxu0 0
        %8091 = vmatpush1.bf16.msra.mxu0 0
        %8092 = vmatprep.subr.bf16.mxu0 0
        %8093 = vmatpush1.bf16.msra.mxu0 0
        %8094 = vmatprep.subr.bf16.mxu0 0
        %8095 = vmatpush1.bf16.msra.mxu0 0
        %8096 = vmatprep.subr.bf16.mxu0 0
        %8097 = vmatpush1.bf16.msra.mxu0 0
        %8098 = vmatprep.subr.bf16.mxu0 0
        %8099 = vmatpush1.bf16.msra.mxu0 0
        %8100 = vmatprep.mubr.bf16.mxu0 0
        %8101 = vmatmul.mubr.bf16.gmra.mrb[0].mxu0 %v7459
        %v8102 = vpop.f32.mrb[0].mxu0
        %v8103 = vadd.f32 %v8043, %v8102
        %v8104 = vpop.f32.mrb[0].mxu0
        %v8105 = vpop.f32.mrb[0].mxu0
        %v8106 = vpop.f32.mrb[0].mxu0
        %8107 = vdwg.mxu0
        %v8108 = vsel %vm7578, %v8103, inf
        %8109 = vmin.xlane.f32.xlu0 %v8108
        %v8110 = vpop.xlane.xlu0 %8109
        %vm8111 = vcmp.eq.f32.partialorder %v8103, %v8110
        %v8112 = vsel %vm8111, %v7504, 8
        %v8113 = vsel %vm7578, %v8112, 2147483647
        %v8114 = vand.u32 %v8113, 65535
        %v8115 = vshra.s32 %v8113, 16
        %v8116 = vcvt.s32.f32 %v8114
        %v8117 = vcvt.s32.f32 %v8115
        %8118 = vmin.xlane.f32.xlu0 %v8117
        %v8119 = vpop.xlane.xlu0 %8118
        %vm8120 = vcmp.eq.f32.partialorder %v8117, %v8119
        %v8121 = vsel %vm8120, %v8116, inf
        %8122 = vmin.xlane.f32.xlu0 %v8121
        %v8123 = vpop.xlane.xlu0 %8122
        %v8124 = vcvt.f32.s32 %v8123
        %v8125 = vcvt.f32.s32 %v8119
        %v8126 = vshll.u32 %v8125, 16
        %v8127 = vadd.s32 %v8126, %v8124
        %vm8128 = vcmp.eq.s32.totalorder %v7504, %v8127
        %v8129 = vsel %vm8128, 1, 0
        %v8130 = vcvt.s32.f32 %v8129
        %s8131 = scalar_lea.vmem %s51, 24
        %v8132 = vld [vmem:[%s8131] sm:$0xff]
        %v8134 = vsel %vm4350, %v8130, 0
        %8136 = vmatprep.subr.mxu0 0.0
        %8137 = vmatpush1.msra.mxu0 %v8132
        %8138 = vmatprep.subr.mxu0 0.0
        %8139 = vmatpush1.msra.mxu0 0.0
        %8140 = vmatprep.subr.mxu0 0.0
        %8141 = vmatpush1.msra.mxu0 0.0
        %8142 = vmatprep.subr.mxu0 0.0
        %8143 = vmatpush1.msra.mxu0 0.0
        %8144 = vmatprep.subr.mxu0 0.0
        %8145 = vmatpush1.msra.mxu0 0.0
        %8146 = vmatprep.subr.mxu0 0.0
        %8147 = vmatpush1.msra.mxu0 0.0
        %8148 = vmatprep.subr.mxu0 0.0
        %8149 = vmatpush1.msra.mxu0 0.0
        %8150 = vmatprep.subr.mxu0 0.0
        %8151 = vmatpush1.msra.mxu0 0.0
        %8152 = vmatprep.subr.mxu0 0.0
        %8153 = vmatpush1.msra.mxu0 0.0
        %8154 = vmatprep.subr.mxu0 0.0
        %8155 = vmatpush1.msra.mxu0 0.0
        %8156 = vmatprep.subr.mxu0 0.0
        %8157 = vmatpush1.msra.mxu0 0.0
        %8158 = vmatprep.subr.mxu0 0.0
        %8159 = vmatpush1.msra.mxu0 0.0
        %8160 = vmatprep.subr.mxu0 0.0
        %8161 = vmatpush1.msra.mxu0 0.0
        %8162 = vmatprep.subr.mxu0 0.0
        %8163 = vmatpush1.msra.mxu0 0.0
        %8164 = vmatprep.subr.mxu0 0.0
        %8165 = vmatpush1.msra.mxu0 0.0
        %8166 = vmatprep.subr.mxu0 0.0
        %8167 = vmatpush1.msra.mxu0 0.0
        %8168 = vmatprep.subr.mxu0 0.0
        %8169 = vmatpush1.msra.mxu0 0.0
        %8170 = vmatprep.subr.mxu0 0.0
        %8171 = vmatpush1.msra.mxu0 0.0
        %8172 = vmatprep.subr.mxu0 0.0
        %8173 = vmatpush1.msra.mxu0 0.0
        %8174 = vmatprep.subr.mxu0 0.0
        %8175 = vmatpush1.msra.mxu0 0.0
        %8176 = vmatprep.subr.mxu0 0.0
        %8177 = vmatpush1.msra.mxu0 0.0
        %8178 = vmatprep.subr.mxu0 0.0
        %8179 = vmatpush1.msra.mxu0 0.0
        %8180 = vmatprep.subr.mxu0 0.0
        %8181 = vmatpush1.msra.mxu0 0.0
        %8182 = vmatprep.subr.mxu0 0.0
        %8183 = vmatpush1.msra.mxu0 0.0
        %8184 = vmatprep.subr.mxu0 0.0
        %8185 = vmatpush1.msra.mxu0 0.0
        %8186 = vmatprep.subr.mxu0 0.0
        %8187 = vmatpush1.msra.mxu0 0.0
        %8188 = vmatprep.subr.mxu0 0.0
        %8189 = vmatpush1.msra.mxu0 0.0
        %8190 = vmatprep.subr.mxu0 0.0
        %8191 = vmatpush1.msra.mxu0 0.0
        %8192 = vmatprep.subr.mxu0 0.0
        %8193 = vmatpush1.msra.mxu0 0.0
        %8194 = vmatprep.subr.mxu0 0.0
        %8195 = vmatpush1.msra.mxu0 0.0
        %8196 = vmatprep.subr.mxu0 0.0
        %8197 = vmatpush1.msra.mxu0 0.0
        %8198 = vmatprep.subr.mxu0 0.0
        %8199 = vmatpush1.msra.mxu0 0.0
        %8200 = vmatprep.mubr.f32.mxu0 0.0
        %8201 = vmatmul.mubr.f32.gmra.mrb[0].mxu0 %v8134
        %v8202 = vpop.f32.mrb[0].mxu0
        %v8203 = vadd.f32 0.0, %v8202
        %v8204 = vpop.f32.mrb[0].mxu0
        %8205 = vdwg.mxu0
        %v8206 = vadd.f32 %v8026, %v8203
        %v8207 = vadd.s32 %v8127, 8
        %vm8208 = vcmp.eq.s32.totalorder %v7504, %v8207
        %v8209 = vsel %vm8208, 1, 0
        %v8210 = vcvt.s32.f32 %v8209
        %v8211 = vadd.f32 %v8031, %v8210
        %vm8212 = vcmp.eq.s32.totalorder %v7504, 3
        %v8213 = vsel %vm8212, %v8127, %v8033
        %8214 = vst.msk [vmem:[%s1151] sm:$0x1] %vm7501, %v8206
        %vm8215 = vcmask 24576
        %8216 = vst.msk [vmem:[%s1174] sm:$0x1] %vm8215, %v8213
        %8217 = vst.msk [vmem:[%s1180] sm:$0x1] %vm7501, %v8211
        %v8218 = vsub.f32 %v7496, %v8206
        %v8219 = vmul.f32 %v8218, %v8218
        %v8220 = vsel %vm7501, %v8219, 0.0
        %8221 = vadd.xlane.f32.xlu0 %v8220
        %v8222 = vpop.xlane.xlu0 %8221
        %vm8223 = vcmask 0
        %8224 = vst.msk [vmem:[%s1177] sm:$0x1] %vm8223, %v8222
        %s8225 = sand.u32 %s647, 1
        %s8226 = scalar_lea.sflag [#allocation9], %s8225
        %s8227 = sand.u32 %s647, 1
        %s8228 = scalar_lea.vmem [#allocation33], %s8227
        %s8229 = sand.u32 %s673, 1
        %s8230 = scalar_lea.sflag [#allocation35], %s8229
        %s8231 = sand.u32 %s673, 1
        %s8232 = scalar_lea.vmem [#allocation34], %s8231
        %p8233 = scmp.lt.s32.totalorder %s88, 1
        %s8234 = scalar_select %p8233, %s88, 1
        %s8235 = scalar_lea.vmem %s57, %s8234
        %p8236 = scmp.lt.s32.totalorder %s88, 1
        %s8237 = scalar_select %p8236, %s88, 1
        %s8238 = scalar_lea.vmem %s59, %s8237
        %p8239 = scmp.lt.s32.totalorder %s88, 1
        %s8240 = scalar_select %p8239, %s88, 1
        %s8241 = scalar_lea.vmem %s61, %s8240
        // Predicated region
        $region189: #{idm_forward.1} parent=123 // pred_check
          %p8242 = pneg %p657
        $region190: #{idm_forward.1} parent=123 // pred_check_branch
          %8244 = sbr.rel (%p8242) target = $region192
        $region191: #{idm_forward.1} parent=123 // pred_region
          %s8246 = ssub.s32 16, 16
          %8247 = vsyncadd %s8226, %s8246
          %s8248 = smul.addr %s88, 16
          %s8249 = scalar_lea.hbm %s53, %s8248
          %s8251 = sshll.u32 %s8228, 4
          %s8252 = int_to_ptr.vmem [resolvable:$true] %s8251
          %8254 = dma.vmem_to_hbm [thread:$0]  %s8252, 16, %s8249, %s8226
        $region192: #{idm_forward.1} parent=123 // pred_fallthru
          _
        // Predicated region
        $region193: #{idm_forward.1} parent=123 // pred_check
          %p8255 = pneg %p683
        $region194: #{idm_forward.1} parent=123 // pred_check_branch
          %8257 = sbr.rel (%p8255) target = $region196
        $region195: #{idm_forward.1} parent=123 // pred_region
          %s8259 = ssub.s32 16, 16
          %8260 = vsyncadd %s8230, %s8259
          %s8261 = smul.addr %s88, 16
          %s8262 = scalar_lea.hbm %s55, %s8261
          %s8264 = sshll.u32 %s8232, 4
          %s8265 = int_to_ptr.vmem [resolvable:$true] %s8264
          %8267 = dma.vmem_to_hbm [thread:$0]  %s8265, 16, %s8262, %s8230
        $region196: #{idm_forward.1} parent=123 // pred_fallthru
          _
        // Predicated region
        $region197: #{idm_forward.1} parent=123 // pred_check
          %p8268 = pneg %p709
        $region198: #{idm_forward.1} parent=123 // pred_check_branch
          %8270 = sbr.rel (%p8268) target = $region200
        $region199: #{idm_forward.1} parent=123 // pred_region
          _
        $region200: #{idm_forward.1} parent=123 // pred_fallthru
          _
        // Predicated region
        $region201: #{idm_forward.1} parent=123 // pred_check
          %p8271 = pneg %p735
        $region202: #{idm_forward.1} parent=123 // pred_check_branch
          %8273 = sbr.rel (%p8271) target = $region204
        $region203: #{idm_forward.1} parent=123 // pred_region
          _
        $region204: #{idm_forward.1} parent=123 // pred_fallthru
          _
        // Predicated region
        $region205: #{idm_forward.1} parent=123 // pred_check
          %p8274 = pneg %p761
        $region206: #{idm_forward.1} parent=123 // pred_check_branch
          %8276 = sbr.rel (%p8274) target = $region208
        $region207: #{idm_forward.1} parent=123 // pred_region
          _
        $region208: #{idm_forward.1} parent=123 // pred_fallthru
          _
      $region124: #{idm_forward.1} parent=5 // pred_fallthru
        _
      %p8277 = scmp.le.s32.totalorder 2, %s83
      // Predicated region
      $region209: #{idm_forward.1} parent=5 // pred_check
        %p8278 = pneg %p8277
      $region210: #{idm_forward.1} parent=5 // pred_check_branch
        %8280 = sbr.rel (%p8278) target = $region212
      $region211: #{idm_forward.1} parent=5 // pred_region
        %s8281 = ssub.s32 %s83, 2
        // Predicated region
        $region213: #{idm_forward.1} parent=211 // pred_check
          %p8282 = pneg %p663
        $region214: #{idm_forward.1} parent=211 // pred_check_branch
          %8284 = sbr.rel (%p8282) target = $region216
        $region215: #{idm_forward.1} parent=211 // pred_region
          %s8285 = sand.u32 %s648, 1
          %s8286 = scalar_lea.sflag [#allocation9], %s8285
          %s8287 = sand.u32 %s648, 1
          %s8288 = scalar_lea.vmem [#allocation33], %s8287
          %8289 = dma.done %s8286, 16
        $region216: #{idm_forward.1} parent=211 // pred_fallthru
          _
        // Predicated region
        $region217: #{idm_forward.1} parent=211 // pred_check
          %p8290 = pneg %p689
        $region218: #{idm_forward.1} parent=211 // pred_check_branch
          %8292 = sbr.rel (%p8290) target = $region220
        $region219: #{idm_forward.1} parent=211 // pred_region
          %s8293 = sand.u32 %s674, 1
          %s8294 = scalar_lea.sflag [#allocation35], %s8293
          %s8295 = sand.u32 %s674, 1
          %s8296 = scalar_lea.vmem [#allocation34], %s8295
          %8297 = dma.done %s8294, 16
        $region220: #{idm_forward.1} parent=211 // pred_fallthru
          _
        // Predicated region
        $region221: #{idm_forward.1} parent=211 // pred_check
          %p8298 = pneg %p715
        $region222: #{idm_forward.1} parent=211 // pred_check_branch
          %8300 = sbr.rel (%p8298) target = $region224
        $region223: #{idm_forward.1} parent=211 // pred_region
          %p8301 = scmp.lt.s32.totalorder %s89, 1
          %s8302 = scalar_select %p8301, %s89, 1
          %s8303 = scalar_lea.vmem %s57, %s8302
        $region224: #{idm_forward.1} parent=211 // pred_fallthru
          _
        // Predicated region
        $region225: #{idm_forward.1} parent=211 // pred_check
          %p8304 = pneg %p741
        $region226: #{idm_forward.1} parent=211 // pred_check_branch
          %8306 = sbr.rel (%p8304) target = $region228
        $region227: #{idm_forward.1} parent=211 // pred_region
          %p8307 = scmp.lt.s32.totalorder %s89, 1
          %s8308 = scalar_select %p8307, %s89, 1
          %s8309 = scalar_lea.vmem %s59, %s8308
        $region228: #{idm_forward.1} parent=211 // pred_fallthru
          _
        // Predicated region
        $region229: #{idm_forward.1} parent=211 // pred_check
          %p8310 = pneg %p767
        $region230: #{idm_forward.1} parent=211 // pred_check_branch
          %8312 = sbr.rel (%p8310) target = $region232
        $region231: #{idm_forward.1} parent=211 // pred_region
          %p8313 = scmp.lt.s32.totalorder %s89, 1
          %s8314 = scalar_select %p8313, %s89, 1
          %s8315 = scalar_lea.vmem %s61, %s8314
        $region232: #{idm_forward.1} parent=211 // pred_fallthru
          _
      $region212: #{idm_forward.1} parent=5 // pred_fallthru
        _
    $region6: #{idm_forward.1} parent=1 // loop_footer
      %s87 = sadd.s32 1, %s83
    $region7: #{idm_forward.1} parent=1 // loop_footer_branch
      %82 = sbr.rel target = $region3
    $region8: #{idm_forward.1} parent=1 // loop_exit
      _
    %8316 = vsyncpa [#allocation8], 1
    %s8317 = scalar_lea.sflag [#allocation8], 1
    %8318 = vsyncpa %s8317, 1
    %8319 = vsyncpa [#allocation11], 1
    %8320 = vsyncpa [#allocation14], 1
    %8321 = vsyncpa [#allocation17], 1
    %8322 = vsyncpa [#allocation20], 1
    %8323 = vsyncpa [#allocation23], 1
    %8324 = vsyncpa [#allocation26], 1
    %8325 = vsyncpa [#allocation29], 1
    %8326 = vsyncpa [#allocation32], 1
    %8327 = vsyncpa [#allocation9], 1
    %s8328 = scalar_lea.sflag [#allocation9], 1
    %8329 = vsyncpa %s8328, 1
    %8330 = vsyncpa [#allocation35], 1
    %s8331 = scalar_lea.sflag [#allocation35], 1
    %8332 = vsyncpa %s8331, 1

</llo_original>
